<compile_context>
chip_gen: v6e
topology: v6e:2x2x1
jax: 0.10.0
libtpu: 0.0.40
codegen_flags: <defaults>
</compile_context>

<pallas_src>
import jax
import jax.numpy as jnp
from jax.experimental import pallas as pl
from jax.experimental.pallas import tpu as pltpu


def _round_up(x, m):
    return ((x + m - 1) // m) * m


# --------------------------- in-kernel conv body ---------------------------


def _make_conv_body(KH, KW, stride, Ho, Wo, Hq, Wq, Cin, Coutp):
    """Per-image conv accumulator.

    x_ref block: (1, stride*stride*Hq, Wq, Cin)  bf16 polyphase input
    w_ref block: (KH*KW, Cin, Coutp)             bf16 per-tap weights
    returns: (Ho*Wo, Coutp) f32 accumulator.
    """
    R = Ho * Wo

    def body(x_ref, w_ref):
        acc = jnp.zeros((R, Coutp), jnp.float32)
        t = 0
        for kh in range(KH):
            for kw in range(KW):
                phase = (kh % stride) * stride + (kw % stride)
                row0 = phase * Hq + kh // stride
                col0 = kw // stride
                # Static contiguous slice of the polyphase image (no strides,
                # no dynamic offsets) -> robust Mosaic lowering.
                xs = x_ref[0, row0:row0 + Ho, col0:col0 + Wo, :]
                xs = xs.reshape(R, Cin)
                acc = acc + jnp.dot(xs, w_ref[t],
                                    preferred_element_type=jnp.float32)
                t += 1
        return acc

    return body


# --------------------------------- wrapper ---------------------------------


def conv2d_forward(x_nchw, w_oihw, *, stride, padding, bias=None,
                   bn_gamma=None, bn_beta=None, bn_eps=1e-5):
    """Conv_2d.forward: Conv2d(k, stride, padding, bias) [+ BatchNorm2d]."""
    batchnorm = bn_gamma is not None

    N, Cin, H, W = x_nchw.shape
    Cout, _, KH, KW = w_oihw.shape
    s = stride
    Ho = (H + 2 * padding - KH) // s + 1
    Wo = (W + 2 * padding - KW) // s + 1
    Hq = Ho + (KH - 1) // s          # polyphase image height (with tap halo)
    Wq = Wo + (KW - 1) // s
    P = s * s                        # number of phases
    T = KH * KW                      # number of taps
    R = Ho * Wo                      # output rows per image
    Coutp = _round_up(Cout, 128)     # lane-dense MXU output width

    # ---- glue (plain JAX, one pass, no im2col blowup) ----
    # NCHW -> NHWC, bf16 (half the HBM bytes), pad+crop to s*Hq x s*Wq,
    # polyphase split: x_poly[(r1*s+r2)*Hq + a, b, c] = xp[a*s+r1, b*s+r2, c].
    x = jnp.transpose(x_nchw, (0, 2, 3, 1)).astype(jnp.bfloat16)
    eh = max(0, s * Hq - (H + 2 * padding))
    ew = max(0, s * Wq - (W + 2 * padding))
    xp = jnp.pad(x, ((0, 0), (padding, padding + eh),
                     (padding, padding + ew), (0, 0)))
    xp = xp[:, :s * Hq, :s * Wq, :]
    xpoly = (xp.reshape(N, Hq, s, Wq, s, Cin)
               .transpose(0, 2, 4, 1, 3, 5)
               .reshape(N, P * Hq, Wq, Cin))

    # Weights OIHW -> (tap, cin, cout), cout zero-padded to Coutp, bf16.
    wk = jnp.transpose(w_oihw, (2, 3, 1, 0)).reshape(T, Cin, Cout)
    wk = jnp.pad(wk, ((0, 0), (0, 0), (0, Coutp - Cout))).astype(jnp.bfloat16)

    conv_body = _make_conv_body(KH, KW, s, Ho, Wo, Hq, Wq, Cin, Coutp)

    x_block = (1, P * Hq, Wq, Cin)
    w_block = (T, Cin, Coutp)

    # Explicit VMEM budget (double-buffered blocks + f32 temporaries), clamped
    # so it also fits v7x's 64 MiB physical VMEM.
    in_b = P * Hq * Wq * Cin * 2
    w_b = T * Cin * Coutp * 2
    y_b = R * Cout * 4
    vmem_limit = int(min(max(2 * in_b + 2 * w_b + 2 * y_b
                             + 6 * R * Coutp * 4 + (4 << 20), 32 << 20),
                         48 << 20))

    if batchnorm:
        # NB: a conv bias (if present) cancels exactly in train-mode BN
        # normalization, so it is ignored on this path.
        NC = 2 if (N % 2 == 0 and N >= 2) else 1   # per-core stat partials
        NPC = N // NC

        def bn_kernel(x_ref, w_ref, y_ref, sum_ref, sumsq_ref):
            @pl.when(pl.program_id(1) == 0)
            def _():
                sum_ref[...] = jnp.zeros_like(sum_ref)
                sumsq_ref[...] = jnp.zeros_like(sumsq_ref)

            acc = conv_body(x_ref, w_ref)                     # (R, Coutp) f32
            # bf16 intermediate, cropped to real Cout (no padded-channel HBM).
            y_ref[0] = acc[:, :Cout].astype(y_ref.dtype)
            # All R rows are real outputs (no padded rows) -> mask-free stats.
            sum_ref[0] += jnp.sum(acc, axis=0, keepdims=True)
            sumsq_ref[0] += jnp.sum(acc * acc, axis=0, keepdims=True)

        y, csum, csumsq = pl.pallas_call(
            bn_kernel,
            out_shape=(jax.ShapeDtypeStruct((N, R, Cout), jnp.bfloat16),
                       jax.ShapeDtypeStruct((NC, 1, Coutp), jnp.float32),
                       jax.ShapeDtypeStruct((NC, 1, Coutp), jnp.float32)),
            grid_spec=pltpu.PrefetchScalarGridSpec(
                num_scalar_prefetch=0,
                grid=(NC, NPC),
                in_specs=[
                    pl.BlockSpec(x_block, lambda c, i: (c * NPC + i, 0, 0, 0)),
                    pl.BlockSpec(w_block, lambda c, i: (0, 0, 0)),
                ],
                out_specs=(
                    pl.BlockSpec((1, R, Cout), lambda c, i: (c * NPC + i, 0, 0)),
                    pl.BlockSpec((1, 1, Coutp), lambda c, i: (c, 0, 0)),
                    pl.BlockSpec((1, 1, Coutp), lambda c, i: (c, 0, 0)),
                )),
            compiler_params=pltpu.CompilerParams(
                dimension_semantics=("parallel", "arbitrary"),
                vmem_limit_bytes=vmem_limit),
        )(xpoly, wk)

        # Finalize: reduce per-core partials, fold into scale/shift (tiny glue).
        # Sum-of-squares variance in f32 is adequate for near-zero-mean
        # post-conv activations (documented correctness caveat).
        inv_m = 1.0 / float(N * R)
        total = jnp.sum(csum, axis=0)[:, :Cout]
        totsq = jnp.sum(csumsq, axis=0)[:, :Cout]
        mean = total * inv_m
        var = totsq * inv_m - mean * mean                 # biased (train-mode)
        gamma = bn_gamma.astype(jnp.float32).reshape(1, Cout)
        beta = bn_beta.astype(jnp.float32).reshape(1, Cout)
        scale = gamma * jax.lax.rsqrt(var + bn_eps)
        shift = beta - mean * scale

        def ss_kernel(y_ref, sc_ref, sh_ref, o_ref):
            o_ref[0] = (y_ref[0].astype(jnp.float32) * sc_ref[...]
                        + sh_ref[...]).astype(o_ref.dtype)

        out = pl.pallas_call(
            ss_kernel,
            out_shape=jax.ShapeDtypeStruct((N, R, Cout), jnp.float32),
            grid_spec=pltpu.PrefetchScalarGridSpec(
                num_scalar_prefetch=0,
                grid=(N,),
                in_specs=[pl.BlockSpec((1, R, Cout), lambda n: (n, 0, 0)),
                          pl.BlockSpec((1, Cout), lambda n: (0, 0)),
                          pl.BlockSpec((1, Cout), lambda n: (0, 0))],
                out_specs=pl.BlockSpec((1, R, Cout), lambda n: (n, 0, 0))),
            compiler_params=pltpu.CompilerParams(
                dimension_semantics=("parallel",),
                vmem_limit_bytes=vmem_limit),
        )(y, scale, shift)
    else:
        b = bias if bias is not None else jnp.zeros((Cout,), jnp.float32)
        b = b.astype(jnp.float32).reshape(1, Cout)

        def bias_kernel(x_ref, w_ref, b_ref, o_ref):
            acc = conv_body(x_ref, w_ref)                     # (R, Coutp) f32
            o_ref[0] = (acc[:, :Cout] + b_ref[...]).astype(o_ref.dtype)

        out = pl.pallas_call(
            bias_kernel,
            out_shape=jax.ShapeDtypeStruct((N, R, Cout), jnp.float32),
            grid_spec=pltpu.PrefetchScalarGridSpec(
                num_scalar_prefetch=0,
                grid=(N,),
                in_specs=[pl.BlockSpec(x_block, lambda n: (n, 0, 0, 0)),
                          pl.BlockSpec(w_block, lambda n: (0, 0, 0)),
                          pl.BlockSpec((1, Cout), lambda n: (0, 0))],
                out_specs=pl.BlockSpec((1, R, Cout), lambda n: (n, 0, 0))),
            compiler_params=pltpu.CompilerParams(
                dimension_semantics=("parallel",),
                vmem_limit_bytes=vmem_limit),
        )(xpoly, wk, b)

    out = out.reshape(N, Ho, Wo, Cout)
    return jnp.transpose(out, (0, 3, 1, 2))               # NHWC -> NCHW


# ----------------------- pure-JAX reference (checking) -----------------------


def _ref_conv2d_forward(x_nchw, w_oihw, *, stride, padding, bias=None,
                        bn_gamma=None, bn_beta=None, bn_eps=1e-5):
    x = jnp.transpose(x_nchw, (0, 2, 3, 1))
    w = jnp.transpose(w_oihw, (2, 3, 1, 0))
    y = jax.lax.conv_general_dilated(
        x, w, window_strides=(stride, stride),
        padding=((padding, padding), (padding, padding)),
        dimension_numbers=("NHWC", "HWIO", "NHWC"))
    if bias is not None and bn_gamma is None:
        y = y + bias.reshape(1, 1, 1, -1)
    if bn_gamma is not None:
        mean = jnp.mean(y, axis=(0, 1, 2), keepdims=True)
        var = jnp.mean((y - mean) ** 2, axis=(0, 1, 2), keepdims=True)
        y = (y - mean) * jax.lax.rsqrt(var + bn_eps)
        y = y * bn_gamma.reshape(1, 1, 1, -1) + bn_beta.reshape(1, 1, 1, -1)
    return jnp.transpose(y, (0, 3, 1, 2))


if __name__ == "__main__":
    key = jax.random.PRNGKey(0)

    # Config 1 (TecoGAN discriminator-style):
    #   Conv_2d(4, 64, kernel_size=4, stride=2, padding=1, bias=False,
    #           batchnorm=True)  -- stride-2 polyphase + cross-image BN stats.
    N, Cin, H, W, Cout = 2, 4, 32, 32, 64
    key, kx, kw_, kg, kb = jax.random.split(key, 5)
    x1 = jax.random.normal(kx, (N, Cin, H, W), dtype=jnp.float32)
    w1 = jax.random.normal(kw_, (Cout, Cin, 4, 4), dtype=jnp.float32) * 0.05
    gamma1 = 1.0 + 0.1 * jax.random.normal(kg, (Cout,), dtype=jnp.float32)
    beta1 = 0.1 * jax.random.normal(kb, (Cout,), dtype=jnp.float32)

    out1 = jax.block_until_ready(
        conv2d_forward(x1, w1, stride=2, padding=1,
                       bn_gamma=gamma1, bn_beta=beta1))
    ref1 = _ref_conv2d_forward(x1, w1, stride=2, padding=1,
                               bn_gamma=gamma1, bn_beta=beta1)
    assert out1.shape == (N, Cout, H // 2, W // 2), out1.shape
    # bf16 MXU inputs / bf16 intermediate (f32 accumulation) vs f32 reference
    # -> relaxed tolerance.
    assert jnp.allclose(out1, ref1, rtol=5e-2, atol=5e-2), \
        float(jnp.max(jnp.abs(out1 - ref1)))

    # Config 2: Conv_2d(4, 32, kernel_size=3, stride=1, padding=1, bias=True,
    #                   batchnorm=False)
    Cout2 = 32
    key, kx2, kw2, kb2 = jax.random.split(key, 4)
    x2 = jax.random.normal(kx2, (2, 4, 16, 16), dtype=jnp.float32)
    w2 = jax.random.normal(kw2, (Cout2, 4, 3, 3), dtype=jnp.float32) * 0.1
    b2 = 0.1 * jax.random.normal(kb2, (Cout2,), dtype=jnp.float32)

    out2 = jax.block_until_ready(
        conv2d_forward(x2, w2, stride=1, padding=1, bias=b2))
    ref2 = _ref_conv2d_forward(x2, w2, stride=1, padding=1, bias=b2)
    assert out2.shape == (2, Cout2, 16, 16), out2.shape
    assert jnp.allclose(out2, ref2, rtol=5e-2, atol=5e-2), \
        float(jnp.max(jnp.abs(out2 - ref2)))

    print("KERNEL_OK")
</pallas_src>

<mosaic_0001>
module attributes {stable_mosaic.version = 11 : i64} {
  func.func @bn_kernel(%arg0: i32, %arg1: i32, %arg2: memref<1x68x17x4xbf16, #tpu.memory_space<vmem>>, %arg3: memref<16x4x128xbf16, #tpu.memory_space<vmem>>, %arg4: memref<1x256x64xbf16, #tpu.memory_space<vmem>>, %arg5: memref<1x1x128xf32, #tpu.memory_space<vmem>>, %arg6: memref<1x1x128xf32, #tpu.memory_space<vmem>>) attributes {dimension_semantics = [#tpu.dimension_semantics<parallel>, #tpu.dimension_semantics<arbitrary>], iteration_bounds = array<i64: 2, 1>, scalar_prefetch = 0 : i64, scratch_operands = 0 : i64, tpu.core_type = #tpu.core_type<tc>, window_params = [{transform_indices = @transform_0, window_bounds = array<i64: 1, 68, 17, 4>}, {pipeline_mode = #tpu.pipeline_mode<synchronous>, transform_indices = @transform_1, window_bounds = array<i64: 16, 4, 128>}, {transform_indices = @transform_2, window_bounds = array<i64: 1, 256, 64>}, {transform_indices = @transform_3, window_bounds = array<i64: 1, 1, 128>}, {transform_indices = @transform_4, window_bounds = array<i64: 1, 1, 128>}]} {
    %c0_i32 = arith.constant 0 : i32
    %0 = arith.cmpi eq, %arg1, %c0_i32 : i32
    %1 = arith.extui %0 : i1 to i32
    %c0_i32_0 = arith.constant 0 : i32
    %2 = arith.cmpi ne, %1, %c0_i32_0 : i32
    scf.if %2 {
      %cst_124 = arith.constant 0.000000e+00 : f32
      %138 = vector.broadcast %cst_124 : f32 to vector<1x1x128xf32>
      %c0_125 = arith.constant 0 : index
      %c0_126 = arith.constant 0 : index
      %c0_127 = arith.constant 0 : index
      %139 = vector.load %arg5[%c0_125, %c0_126, %c0_127] : memref<1x1x128xf32, #tpu.memory_space<vmem>>, vector<1x1x128xf32>
      tpu.vector_store %arg5[%c0_125, %c0_126, %c0_127], %138 {strides = array<i32>} : memref<1x1x128xf32, #tpu.memory_space<vmem>>, vector<1x1x128xf32>,
      %cst_128 = arith.constant 0.000000e+00 : f32
      %140 = vector.broadcast %cst_128 : f32 to vector<1x1x128xf32>
      %c0_129 = arith.constant 0 : index
      %c0_130 = arith.constant 0 : index
      %c0_131 = arith.constant 0 : index
      %141 = vector.load %arg6[%c0_129, %c0_130, %c0_131] : memref<1x1x128xf32, #tpu.memory_space<vmem>>, vector<1x1x128xf32>
      tpu.vector_store %arg6[%c0_129, %c0_130, %c0_131], %140 {strides = array<i32>} : memref<1x1x128xf32, #tpu.memory_space<vmem>>, vector<1x1x128xf32>,
    } else {
    }
    %cst = arith.constant 0.000000e+00 : f32
    %3 = vector.broadcast %cst : f32 to vector<256x128xf32>
    %c0 = arith.constant 0 : index
    %c0_1 = arith.constant 0 : index
    %c0_2 = arith.constant 0 : index
    %c0_3 = arith.constant 0 : index
    %4 = vector.load %arg2[%c0, %c0_1, %c0_2, %c0_3] : memref<1x68x17x4xbf16, #tpu.memory_space<vmem>>, vector<1x16x16x4xbf16>
    %5 = vector.shape_cast %4 : vector<1x16x16x4xbf16> to vector<16x16x4xbf16>
    %6 = vector.shape_cast %5 : vector<16x16x4xbf16> to vector<256x4xbf16>
    %c0_4 = arith.constant 0 : index
    %c0_5 = arith.constant 0 : index
    %c0_6 = arith.constant 0 : index
    %7 = vector.load %arg3[%c0_4, %c0_5, %c0_6] : memref<16x4x128xbf16, #tpu.memory_space<vmem>>, vector<1x4x128xbf16>
    %8 = vector.shape_cast %7 : vector<1x4x128xbf16> to vector<4x128xbf16>
    %cst_7 = arith.constant dense<0.000000e+00> : vector<256x128xf32>
    %9 = tpu.matmul %6, %8, %cst_7 {dimension_numbers = #tpu.dot_dimension_numbers<[1], [0], [0], [1], [0, 0, 1, 1], [], []>} : vector<256x4xbf16>, vector<4x128xbf16>, vector<256x128xf32> -> vector<256x128xf32>
    %10 = arith.addf %3, %9 : vector<256x128xf32>
    %c0_8 = arith.constant 0 : index
    %c17 = arith.constant 17 : index
    %c0_9 = arith.constant 0 : index
    %c0_10 = arith.constant 0 : index
    %11 = vector.load %arg2[%c0_8, %c17, %c0_9, %c0_10] : memref<1x68x17x4xbf16, #tpu.memory_space<vmem>>, vector<1x16x16x4xbf16>
    %12 = vector.shape_cast %11 : vector<1x16x16x4xbf16> to vector<16x16x4xbf16>
    %13 = vector.shape_cast %12 : vector<16x16x4xbf16> to vector<256x4xbf16>
    %c1 = arith.constant 1 : index
    %c0_11 = arith.constant 0 : index
    %c0_12 = arith.constant 0 : index
    %14 = vector.load %arg3[%c1, %c0_11, %c0_12] : memref<16x4x128xbf16, #tpu.memory_space<vmem>>, vector<1x4x128xbf16>
    %15 = vector.shape_cast %14 : vector<1x4x128xbf16> to vector<4x128xbf16>
    %cst_13 = arith.constant dense<0.000000e+00> : vector<256x128xf32>
    %16 = tpu.matmul %13, %15, %cst_13 {dimension_numbers = #tpu.dot_dimension_numbers<[1], [0], [0], [1], [0, 0, 1, 1], [], []>} : vector<256x4xbf16>, vector<4x128xbf16>, vector<256x128xf32> -> vector<256x128xf32>
    %17 = arith.addf %10, %16 : vector<256x128xf32>
    %c0_14 = arith.constant 0 : index
    %c0_15 = arith.constant 0 : index
    %c1_16 = arith.constant 1 : index
    %c0_17 = arith.constant 0 : index
    %18 = vector.load %arg2[%c0_14, %c0_15, %c1_16, %c0_17] : memref<1x68x17x4xbf16, #tpu.memory_space<vmem>>, vector<1x16x16x4xbf16>
    %19 = vector.shape_cast %18 : vector<1x16x16x4xbf16> to vector<16x16x4xbf16>
    %20 = vector.shape_cast %19 : vector<16x16x4xbf16> to vector<256x4xbf16>
    %c2 = arith.constant 2 : index
    %c0_18 = arith.constant 0 : index
    %c0_19 = arith.constant 0 : index
    %21 = vector.load %arg3[%c2, %c0_18, %c0_19] : memref<16x4x128xbf16, #tpu.memory_space<vmem>>, vector<1x4x128xbf16>
    %22 = vector.shape_cast %21 : vector<1x4x128xbf16> to vector<4x128xbf16>
    %cst_20 = arith.constant dense<0.000000e+00> : vector<256x128xf32>
    %23 = tpu.matmul %20, %22, %cst_20 {dimension_numbers = #tpu.dot_dimension_numbers<[1], [0], [0], [1], [0, 0, 1, 1], [], []>} : vector<256x4xbf16>, vector<4x128xbf16>, vector<256x128xf32> -> vector<256x128xf32>
    %24 = arith.addf %17, %23 : vector<256x128xf32>
    %c0_21 = arith.constant 0 : index
    %c17_22 = arith.constant 17 : index
    %c1_23 = arith.constant 1 : index
    %c0_24 = arith.constant 0 : index
    %25 = vector.load %arg2[%c0_21, %c17_22, %c1_23, %c0_24] : memref<1x68x17x4xbf16, #tpu.memory_space<vmem>>, vector<1x16x16x4xbf16>
    %26 = vector.shape_cast %25 : vector<1x16x16x4xbf16> to vector<16x16x4xbf16>
    %27 = vector.shape_cast %26 : vector<16x16x4xbf16> to vector<256x4xbf16>
    %c3 = arith.constant 3 : index
    %c0_25 = arith.constant 0 : index
    %c0_26 = arith.constant 0 : index
    %28 = vector.load %arg3[%c3, %c0_25, %c0_26] : memref<16x4x128xbf16, #tpu.memory_space<vmem>>, vector<1x4x128xbf16>
    %29 = vector.shape_cast %28 : vector<1x4x128xbf16> to vector<4x128xbf16>
    %cst_27 = arith.constant dense<0.000000e+00> : vector<256x128xf32>
    %30 = tpu.matmul %27, %29, %cst_27 {dimension_numbers = #tpu.dot_dimension_numbers<[1], [0], [0], [1], [0, 0, 1, 1], [], []>} : vector<256x4xbf16>, vector<4x128xbf16>, vector<256x128xf32> -> vector<256x128xf32>
    %31 = arith.addf %24, %30 : vector<256x128xf32>
    %c0_28 = arith.constant 0 : index
    %c34 = arith.constant 34 : index
    %c0_29 = arith.constant 0 : index
    %c0_30 = arith.constant 0 : index
    %32 = vector.load %arg2[%c0_28, %c34, %c0_29, %c0_30] : memref<1x68x17x4xbf16, #tpu.memory_space<vmem>>, vector<1x16x16x4xbf16>
    %33 = vector.shape_cast %32 : vector<1x16x16x4xbf16> to vector<16x16x4xbf16>
    %34 = vector.shape_cast %33 : vector<16x16x4xbf16> to vector<256x4xbf16>
    %c4 = arith.constant 4 : index
    %c0_31 = arith.constant 0 : index
    %c0_32 = arith.constant 0 : index
    %35 = vector.load %arg3[%c4, %c0_31, %c0_32] : memref<16x4x128xbf16, #tpu.memory_space<vmem>>, vector<1x4x128xbf16>
    %36 = vector.shape_cast %35 : vector<1x4x128xbf16> to vector<4x128xbf16>
    %cst_33 = arith.constant dense<0.000000e+00> : vector<256x128xf32>
    %37 = tpu.matmul %34, %36, %cst_33 {dimension_numbers = #tpu.dot_dimension_numbers<[1], [0], [0], [1], [0, 0, 1, 1], [], []>} : vector<256x4xbf16>, vector<4x128xbf16>, vector<256x128xf32> -> vector<256x128xf32>
    %38 = arith.addf %31, %37 : vector<256x128xf32>
    %c0_34 = arith.constant 0 : index
    %c51 = arith.constant 51 : index
    %c0_35 = arith.constant 0 : index
    %c0_36 = arith.constant 0 : index
    %39 = vector.load %arg2[%c0_34, %c51, %c0_35, %c0_36] : memref<1x68x17x4xbf16, #tpu.memory_space<vmem>>, vector<1x16x16x4xbf16>
    %40 = vector.shape_cast %39 : vector<1x16x16x4xbf16> to vector<16x16x4xbf16>
    %41 = vector.shape_cast %40 : vector<16x16x4xbf16> to vector<256x4xbf16>
    %c5 = arith.constant 5 : index
    %c0_37 = arith.constant 0 : index
    %c0_38 = arith.constant 0 : index
    %42 = vector.load %arg3[%c5, %c0_37, %c0_38] : memref<16x4x128xbf16, #tpu.memory_space<vmem>>, vector<1x4x128xbf16>
    %43 = vector.shape_cast %42 : vector<1x4x128xbf16> to vector<4x128xbf16>
    %cst_39 = arith.constant dense<0.000000e+00> : vector<256x128xf32>
    %44 = tpu.matmul %41, %43, %cst_39 {dimension_numbers = #tpu.dot_dimension_numbers<[1], [0], [0], [1], [0, 0, 1, 1], [], []>} : vector<256x4xbf16>, vector<4x128xbf16>, vector<256x128xf32> -> vector<256x128xf32>
    %45 = arith.addf %38, %44 : vector<256x128xf32>
    %c0_40 = arith.constant 0 : index
    %c34_41 = arith.constant 34 : index
    %c1_42 = arith.constant 1 : index
    %c0_43 = arith.constant 0 : index
    %46 = vector.load %arg2[%c0_40, %c34_41, %c1_42, %c0_43] : memref<1x68x17x4xbf16, #tpu.memory_space<vmem>>, vector<1x16x16x4xbf16>
    %47 = vector.shape_cast %46 : vector<1x16x16x4xbf16> to vector<16x16x4xbf16>
    %48 = vector.shape_cast %47 : vector<16x16x4xbf16> to vector<256x4xbf16>
    %c6 = arith.constant 6 : index
    %c0_44 = arith.constant 0 : index
    %c0_45 = arith.constant 0 : index
    %49 = vector.load %arg3[%c6, %c0_44, %c0_45] : memref<16x4x128xbf16, #tpu.memory_space<vmem>>, vector<1x4x128xbf16>
    %50 = vector.shape_cast %49 : vector<1x4x128xbf16> to vector<4x128xbf16>
    %cst_46 = arith.constant dense<0.000000e+00> : vector<256x128xf32>
    %51 = tpu.matmul %48, %50, %cst_46 {dimension_numbers = #tpu.dot_dimension_numbers<[1], [0], [0], [1], [0, 0, 1, 1], [], []>} : vector<256x4xbf16>, vector<4x128xbf16>, vector<256x128xf32> -> vector<256x128xf32>
    %52 = arith.addf %45, %51 : vector<256x128xf32>
    %c0_47 = arith.constant 0 : index
    %c51_48 = arith.constant 51 : index
    %c1_49 = arith.constant 1 : index
    %c0_50 = arith.constant 0 : index
    %53 = vector.load %arg2[%c0_47, %c51_48, %c1_49, %c0_50] : memref<1x68x17x4xbf16, #tpu.memory_space<vmem>>, vector<1x16x16x4xbf16>
    %54 = vector.shape_cast %53 : vector<1x16x16x4xbf16> to vector<16x16x4xbf16>
    %55 = vector.shape_cast %54 : vector<16x16x4xbf16> to vector<256x4xbf16>
    %c7 = arith.constant 7 : index
    %c0_51 = arith.constant 0 : index
    %c0_52 = arith.constant 0 : index
    %56 = vector.load %arg3[%c7, %c0_51, %c0_52] : memref<16x4x128xbf16, #tpu.memory_space<vmem>>, vector<1x4x128xbf16>
    %57 = vector.shape_cast %56 : vector<1x4x128xbf16> to vector<4x128xbf16>
    %cst_53 = arith.constant dense<0.000000e+00> : vector<256x128xf32>
    %58 = tpu.matmul %55, %57, %cst_53 {dimension_numbers = #tpu.dot_dimension_numbers<[1], [0], [0], [1], [0, 0, 1, 1], [], []>} : vector<256x4xbf16>, vector<4x128xbf16>, vector<256x128xf32> -> vector<256x128xf32>
    %59 = arith.addf %52, %58 : vector<256x128xf32>
    %c0_54 = arith.constant 0 : index
    %c1_55 = arith.constant 1 : index
    %c0_56 = arith.constant 0 : index
    %c0_57 = arith.constant 0 : index
    %60 = vector.load %arg2[%c0_54, %c1_55, %c0_56, %c0_57] : memref<1x68x17x4xbf16, #tpu.memory_space<vmem>>, vector<1x16x16x4xbf16>
    %61 = vector.shape_cast %60 : vector<1x16x16x4xbf16> to vector<16x16x4xbf16>
    %62 = vector.shape_cast %61 : vector<16x16x4xbf16> to vector<256x4xbf16>
    %c8 = arith.constant 8 : index
    %c0_58 = arith.constant 0 : index
    %c0_59 = arith.constant 0 : index
    %63 = vector.load %arg3[%c8, %c0_58, %c0_59] : memref<16x4x128xbf16, #tpu.memory_space<vmem>>, vector<1x4x128xbf16>
    %64 = vector.shape_cast %63 : vector<1x4x128xbf16> to vector<4x128xbf16>
    %cst_60 = arith.constant dense<0.000000e+00> : vector<256x128xf32>
    %65 = tpu.matmul %62, %64, %cst_60 {dimension_numbers = #tpu.dot_dimension_numbers<[1], [0], [0], [1], [0, 0, 1, 1], [], []>} : vector<256x4xbf16>, vector<4x128xbf16>, vector<256x128xf32> -> vector<256x128xf32>
    %66 = arith.addf %59, %65 : vector<256x128xf32>
    %c0_61 = arith.constant 0 : index
    %c18 = arith.constant 18 : index
    %c0_62 = arith.constant 0 : index
    %c0_63 = arith.constant 0 : index
    %67 = vector.load %arg2[%c0_61, %c18, %c0_62, %c0_63] : memref<1x68x17x4xbf16, #tpu.memory_space<vmem>>, vector<1x16x16x4xbf16>
    %68 = vector.shape_cast %67 : vector<1x16x16x4xbf16> to vector<16x16x4xbf16>
    %69 = vector.shape_cast %68 : vector<16x16x4xbf16> to vector<256x4xbf16>
    %c9 = arith.constant 9 : index
    %c0_64 = arith.constant 0 : index
    %c0_65 = arith.constant 0 : index
    %70 = vector.load %arg3[%c9, %c0_64, %c0_65] : memref<16x4x128xbf16, #tpu.memory_space<vmem>>, vector<1x4x128xbf16>
    %71 = vector.shape_cast %70 : vector<1x4x128xbf16> to vector<4x128xbf16>
    %cst_66 = arith.constant dense<0.000000e+00> : vector<256x128xf32>
    %72 = tpu.matmul %69, %71, %cst_66 {dimension_numbers = #tpu.dot_dimension_numbers<[1], [0], [0], [1], [0, 0, 1, 1], [], []>} : vector<256x4xbf16>, vector<4x128xbf16>, vector<256x128xf32> -> vector<256x128xf32>
    %73 = arith.addf %66, %72 : vector<256x128xf32>
    %c0_67 = arith.constant 0 : index
    %c1_68 = arith.constant 1 : index
    %c1_69 = arith.constant 1 : index
    %c0_70 = arith.constant 0 : index
    %74 = vector.load %arg2[%c0_67, %c1_68, %c1_69, %c0_70] : memref<1x68x17x4xbf16, #tpu.memory_space<vmem>>, vector<1x16x16x4xbf16>
    %75 = vector.shape_cast %74 : vector<1x16x16x4xbf16> to vector<16x16x4xbf16>
    %76 = vector.shape_cast %75 : vector<16x16x4xbf16> to vector<256x4xbf16>
    %c10 = arith.constant 10 : index
    %c0_71 = arith.constant 0 : index
    %c0_72 = arith.constant 0 : index
    %77 = vector.load %arg3[%c10, %c0_71, %c0_72] : memref<16x4x128xbf16, #tpu.memory_space<vmem>>, vector<1x4x128xbf16>
    %78 = vector.shape_cast %77 : vector<1x4x128xbf16> to vector<4x128xbf16>
    %cst_73 = arith.constant dense<0.000000e+00> : vector<256x128xf32>
    %79 = tpu.matmul %76, %78, %cst_73 {dimension_numbers = #tpu.dot_dimension_numbers<[1], [0], [0], [1], [0, 0, 1, 1], [], []>} : vector<256x4xbf16>, vector<4x128xbf16>, vector<256x128xf32> -> vector<256x128xf32>
    %80 = arith.addf %73, %79 : vector<256x128xf32>
    %c0_74 = arith.constant 0 : index
    %c18_75 = arith.constant 18 : index
    %c1_76 = arith.constant 1 : index
    %c0_77 = arith.constant 0 : index
    %81 = vector.load %arg2[%c0_74, %c18_75, %c1_76, %c0_77] : memref<1x68x17x4xbf16, #tpu.memory_space<vmem>>, vector<1x16x16x4xbf16>
    %82 = vector.shape_cast %81 : vector<1x16x16x4xbf16> to vector<16x16x4xbf16>
    %83 = vector.shape_cast %82 : vector<16x16x4xbf16> to vector<256x4xbf16>
    %c11 = arith.constant 11 : index
    %c0_78 = arith.constant 0 : index
    %c0_79 = arith.constant 0 : index
    %84 = vector.load %arg3[%c11, %c0_78, %c0_79] : memref<16x4x128xbf16, #tpu.memory_space<vmem>>, vector<1x4x128xbf16>
    %85 = vector.shape_cast %84 : vector<1x4x128xbf16> to vector<4x128xbf16>
    %cst_80 = arith.constant dense<0.000000e+00> : vector<256x128xf32>
    %86 = tpu.matmul %83, %85, %cst_80 {dimension_numbers = #tpu.dot_dimension_numbers<[1], [0], [0], [1], [0, 0, 1, 1], [], []>} : vector<256x4xbf16>, vector<4x128xbf16>, vector<256x128xf32> -> vector<256x128xf32>
    %87 = arith.addf %80, %86 : vector<256x128xf32>
    %c0_81 = arith.constant 0 : index
    %c35 = arith.constant 35 : index
    %c0_82 = arith.constant 0 : index
    %c0_83 = arith.constant 0 : index
    %88 = vector.load %arg2[%c0_81, %c35, %c0_82, %c0_83] : memref<1x68x17x4xbf16, #tpu.memory_space<vmem>>, vector<1x16x16x4xbf16>
    %89 = vector.shape_cast %88 : vector<1x16x16x4xbf16> to vector<16x16x4xbf16>
    %90 = vector.shape_cast %89 : vector<16x16x4xbf16> to vector<256x4xbf16>
    %c12 = arith.constant 12 : index
    %c0_84 = arith.constant 0 : index
    %c0_85 = arith.constant 0 : index
    %91 = vector.load %arg3[%c12, %c0_84, %c0_85] : memref<16x4x128xbf16, #tpu.memory_space<vmem>>, vector<1x4x128xbf16>
    %92 = vector.shape_cast %91 : vector<1x4x128xbf16> to vector<4x128xbf16>
    %cst_86 = arith.constant dense<0.000000e+00> : vector<256x128xf32>
    %93 = tpu.matmul %90, %92, %cst_86 {dimension_numbers = #tpu.dot_dimension_numbers<[1], [0], [0], [1], [0, 0, 1, 1], [], []>} : vector<256x4xbf16>, vector<4x128xbf16>, vector<256x128xf32> -> vector<256x128xf32>
    %94 = arith.addf %87, %93 : vector<256x128xf32>
    %c0_87 = arith.constant 0 : index
    %c52 = arith.constant 52 : index
    %c0_88 = arith.constant 0 : index
    %c0_89 = arith.constant 0 : index
    %95 = vector.load %arg2[%c0_87, %c52, %c0_88, %c0_89] : memref<1x68x17x4xbf16, #tpu.memory_space<vmem>>, vector<1x16x16x4xbf16>
    %96 = vector.shape_cast %95 : vector<1x16x16x4xbf16> to vector<16x16x4xbf16>
    %97 = vector.shape_cast %96 : vector<16x16x4xbf16> to vector<256x4xbf16>
    %c13 = arith.constant 13 : index
    %c0_90 = arith.constant 0 : index
    %c0_91 = arith.constant 0 : index
    %98 = vector.load %arg3[%c13, %c0_90, %c0_91] : memref<16x4x128xbf16, #tpu.memory_space<vmem>>, vector<1x4x128xbf16>
    %99 = vector.shape_cast %98 : vector<1x4x128xbf16> to vector<4x128xbf16>
    %cst_92 = arith.constant dense<0.000000e+00> : vector<256x128xf32>
    %100 = tpu.matmul %97, %99, %cst_92 {dimension_numbers = #tpu.dot_dimension_numbers<[1], [0], [0], [1], [0, 0, 1, 1], [], []>} : vector<256x4xbf16>, vector<4x128xbf16>, vector<256x128xf32> -> vector<256x128xf32>
    %101 = arith.addf %94, %100 : vector<256x128xf32>
    %c0_93 = arith.constant 0 : index
    %c35_94 = arith.constant 35 : index
    %c1_95 = arith.constant 1 : index
    %c0_96 = arith.constant 0 : index
    %102 = vector.load %arg2[%c0_93, %c35_94, %c1_95, %c0_96] : memref<1x68x17x4xbf16, #tpu.memory_space<vmem>>, vector<1x16x16x4xbf16>
    %103 = vector.shape_cast %102 : vector<1x16x16x4xbf16> to vector<16x16x4xbf16>
    %104 = vector.shape_cast %103 : vector<16x16x4xbf16> to vector<256x4xbf16>
    %c14 = arith.constant 14 : index
    %c0_97 = arith.constant 0 : index
    %c0_98 = arith.constant 0 : index
    %105 = vector.load %arg3[%c14, %c0_97, %c0_98] : memref<16x4x128xbf16, #tpu.memory_space<vmem>>, vector<1x4x128xbf16>
    %106 = vector.shape_cast %105 : vector<1x4x128xbf16> to vector<4x128xbf16>
    %cst_99 = arith.constant dense<0.000000e+00> : vector<256x128xf32>
    %107 = tpu.matmul %104, %106, %cst_99 {dimension_numbers = #tpu.dot_dimension_numbers<[1], [0], [0], [1], [0, 0, 1, 1], [], []>} : vector<256x4xbf16>, vector<4x128xbf16>, vector<256x128xf32> -> vector<256x128xf32>
    %108 = arith.addf %101, %107 : vector<256x128xf32>
    %c0_100 = arith.constant 0 : index
    %c52_101 = arith.constant 52 : index
    %c1_102 = arith.constant 1 : index
    %c0_103 = arith.constant 0 : index
    %109 = vector.load %arg2[%c0_100, %c52_101, %c1_102, %c0_103] : memref<1x68x17x4xbf16, #tpu.memory_space<vmem>>, vector<1x16x16x4xbf16>
    %110 = vector.shape_cast %109 : vector<1x16x16x4xbf16> to vector<16x16x4xbf16>
    %111 = vector.shape_cast %110 : vector<16x16x4xbf16> to vector<256x4xbf16>
    %c15 = arith.constant 15 : index
    %c0_104 = arith.constant 0 : index
    %c0_105 = arith.constant 0 : index
    %112 = vector.load %arg3[%c15, %c0_104, %c0_105] : memref<16x4x128xbf16, #tpu.memory_space<vmem>>, vector<1x4x128xbf16>
    %113 = vector.shape_cast %112 : vector<1x4x128xbf16> to vector<4x128xbf16>
    %cst_106 = arith.constant dense<0.000000e+00> : vector<256x128xf32>
    %114 = tpu.matmul %111, %113, %cst_106 {dimension_numbers = #tpu.dot_dimension_numbers<[1], [0], [0], [1], [0, 0, 1, 1], [], []>} : vector<256x4xbf16>, vector<4x128xbf16>, vector<256x128xf32> -> vector<256x128xf32>
    %115 = arith.addf %108, %114 : vector<256x128xf32>
    %116 = vector.extract_strided_slice %115 {offsets = [0, 0], sizes = [256, 64], strides = [1, 1]} : vector<256x128xf32> to vector<256x64xf32>
    %117 = arith.truncf %116 : vector<256x64xf32> to vector<256x64xbf16>
    %c0_107 = arith.constant 0 : index
    %c0_108 = arith.constant 0 : index
    %c0_109 = arith.constant 0 : index
    %118 = vector.load %arg4[%c0_107, %c0_108, %c0_109] : memref<1x256x64xbf16, #tpu.memory_space<vmem>>, vector<1x256x64xbf16>
    %119 = vector.shape_cast %118 : vector<1x256x64xbf16> to vector<256x64xbf16>
    %120 = vector.shape_cast %117 : vector<256x64xbf16> to vector<1x256x64xbf16>
    tpu.vector_store %arg4[%c0_107, %c0_108, %c0_109], %120 {strides = array<i32>} : memref<1x256x64xbf16, #tpu.memory_space<vmem>>, vector<1x256x64xbf16>,
    %c0_110 = arith.constant 0 : index
    %c0_111 = arith.constant 0 : index
    %c0_112 = arith.constant 0 : index
    %121 = vector.load %arg5[%c0_110, %c0_111, %c0_112] : memref<1x1x128xf32, #tpu.memory_space<vmem>>, vector<1x1x128xf32>
    %122 = vector.shape_cast %121 : vector<1x1x128xf32> to vector<1x128xf32>
    %cst_113 = arith.constant dense<0.000000e+00> : vector<128xf32>
    %123 = vector.multi_reduction <add>, %115, %cst_113 [0] : vector<256x128xf32> to vector<128xf32>
    %124 = vector.shape_cast %123 : vector<128xf32> to vector<1x128xf32>
    %125 = arith.addf %122, %124 : vector<1x128xf32>
    %c0_114 = arith.constant 0 : index
    %c0_115 = arith.constant 0 : index
    %c0_116 = arith.constant 0 : index
    %126 = vector.load %arg5[%c0_114, %c0_115, %c0_116] : memref<1x1x128xf32, #tpu.memory_space<vmem>>, vector<1x1x128xf32>
    %127 = vector.shape_cast %126 : vector<1x1x128xf32> to vector<1x128xf32>
    %128 = vector.shape_cast %125 : vector<1x128xf32> to vector<1x1x128xf32>
    tpu.vector_store %arg5[%c0_114, %c0_115, %c0_116], %128 {strides = array<i32>} : memref<1x1x128xf32, #tpu.memory_space<vmem>>, vector<1x1x128xf32>,
    %c0_117 = arith.constant 0 : index
    %c0_118 = arith.constant 0 : index
    %c0_119 = arith.constant 0 : index
    %129 = vector.load %arg6[%c0_117, %c0_118, %c0_119] : memref<1x1x128xf32, #tpu.memory_space<vmem>>, vector<1x1x128xf32>
    %130 = vector.shape_cast %129 : vector<1x1x128xf32> to vector<1x128xf32>
    %131 = arith.mulf %115, %115 : vector<256x128xf32>
    %cst_120 = arith.constant dense<0.000000e+00> : vector<128xf32>
    %132 = vector.multi_reduction <add>, %131, %cst_120 [0] : vector<256x128xf32> to vector<128xf32>
    %133 = vector.shape_cast %132 : vector<128xf32> to vector<1x128xf32>
    %134 = arith.addf %130, %133 : vector<1x128xf32>
    %c0_121 = arith.constant 0 : index
    %c0_122 = arith.constant 0 : index
    %c0_123 = arith.constant 0 : index
    %135 = vector.load %arg6[%c0_121, %c0_122, %c0_123] : memref<1x1x128xf32, #tpu.memory_space<vmem>>, vector<1x1x128xf32>
    %136 = vector.shape_cast %135 : vector<1x1x128xf32> to vector<1x128xf32>
    %137 = vector.shape_cast %134 : vector<1x128xf32> to vector<1x1x128xf32>
    tpu.vector_store %arg6[%c0_121, %c0_122, %c0_123], %137 {strides = array<i32>} : memref<1x1x128xf32, #tpu.memory_space<vmem>>, vector<1x1x128xf32>,
    return
  }
  func.func @transform_0(%arg0: i32, %arg1: i32) -> (i32, i32, i32, i32) {
    %c1_i32 = arith.constant 1 : i32
    %0 = arith.muli %arg0, %c1_i32 : i32
    %1 = arith.addi %0, %arg1 : i32
    %c0_i32 = arith.constant 0 : i32
    %c0_i32_0 = arith.constant 0 : i32
    %c0_i32_1 = arith.constant 0 : i32
    %c0_i32_2 = arith.constant 0 : i32
    return %1, %c0_i32, %c0_i32_0, %c0_i32_1 : i32, i32, i32, i32
  }
  func.func @transform_1(%arg0: i32, %arg1: i32) -> (i32, i32, i32) {
    %c0_i32 = arith.constant 0 : i32
    %c0_i32_0 = arith.constant 0 : i32
    %c0_i32_1 = arith.constant 0 : i32
    %c0_i32_2 = arith.constant 0 : i32
    return %c0_i32, %c0_i32_0, %c0_i32_1 : i32, i32, i32
  }
  func.func @transform_2(%arg0: i32, %arg1: i32) -> (i32, i32, i32) {
    %c1_i32 = arith.constant 1 : i32
    %0 = arith.muli %arg0, %c1_i32 : i32
    %1 = arith.addi %0, %arg1 : i32
    %c0_i32 = arith.constant 0 : i32
    %c0_i32_0 = arith.constant 0 : i32
    %c0_i32_1 = arith.constant 0 : i32
    return %1, %c0_i32, %c0_i32_0 : i32, i32, i32
  }
  func.func @transform_3(%arg0: i32, %arg1: i32) -> (i32, i32, i32) {
    %c0_i32 = arith.constant 0 : i32
    %c0_i32_0 = arith.constant 0 : i32
    %c0_i32_1 = arith.constant 0 : i32
    return %arg0, %c0_i32, %c0_i32_0 : i32, i32, i32
  }
  func.func @transform_4(%arg0: i32, %arg1: i32) -> (i32, i32, i32) {
    %c0_i32 = arith.constant 0 : i32
    %c0_i32_0 = arith.constant 0 : i32
    %c0_i32_1 = arith.constant 0 : i32
    return %arg0, %c0_i32, %c0_i32_0 : i32, i32, i32
  }
}

</mosaic_0001>

<llo_original>
// kernel: tpu_custom_call.1
$region0: #{tpu_custom_call.1}
  #allocation0 [shape = 'u32[]', space=smem, size = 0x4, offset = 0x4, fixed_abs, tag = 'smem constant byte address 0x4 - core index']
  #allocation1 [shape = 'u32[144,128]{1,0:T(1,128)}', space=vmem, size = 0x12000, scoped, tag = 'internal scratch']
  %s0 = inlined_call_operand.vmem [shape: bf16[2,68,17,4], index: 0, kind: input, shape index: {}]
  %s1 = inlined_call_operand.vmem [shape: bf16[16,4,128], index: 1, kind: input, shape index: {}]
  %s2 = inlined_call_operand.vmem [shape: bf16[2,256,64], index: 2, kind: output, shape index: {0}]
  %s3 = inlined_call_operand.hbm [shape: f32[2,1,128], index: 3, kind: output, shape index: {1}]
  %s4 = inlined_call_operand.hbm [shape: f32[2,1,128], index: 4, kind: output, shape index: {2}]
  %5 = xla_tuple %s2, %s3, %s4
  %s6 = sld [smem:[#allocation0]]
  $region61: #{tpu_custom_call.1} parent=0
    _
  %s8 = ssub.s32 1, %s6
  %s9 = scalar_select 0, %s8, %s6
  $region1: #{tpu_custom_call.1} parent=0
    #allocation2 [shape = 'u8[1024]{0}', space=vmem, size = 0x400, scoped, tag = 'output window, operand 1']
    #allocation3 [shape = 's32[2]{0}', space=sflag, size = 0x8, scoped, tag = 'scoped memory for tpu_custom_call.1']
    #allocation4 [shape = 'u8[1024]{0}', space=vmem, size = 0x400, scoped, tag = 'output window, operand 2']
    #allocation5 [shape = 's32[2]{0}', space=sflag, size = 0x8, scoped, tag = 'scoped memory for tpu_custom_call.1']
    %10 = vsyncpa [#allocation3], 0
    %s11 = scalar_lea.sflag [#allocation3], 1
    %12 = vsyncpa %s11, 0
    %13 = vsyncpa [#allocation5], 0
    %s14 = scalar_lea.sflag [#allocation5], 1
    %15 = vsyncpa %s14, 0
    loop: start=0, step=1, limit=4
    $region2: #{tpu_custom_call.1} parent=1 // loop_pre_header
      _
    $region3: #{tpu_custom_call.1} parent=1 // loop_header
      %s17 = sphi 0, %s21
      %p18 = scmp.ge.s32.totalorder %s17, 4
      %s24 = sphi 0, %s36
      %s25 = sphi 0, %s32
      %s26 = sphi 0, %s24
      %s27 = sphi 0, %s25
      %s28 = sphi 0, %s26
      %s29 = sphi 0, %s27
      %s41 = sphi 0, %s43
      %s44 = sphi 0, %s41
      %s45 = sphi 0, %s44
      %s61 = sphi 0, %s45
      %s65 = sphi 0, %s65
      %s67 = sphi 0, %s65
      %s68 = sphi 0, %s67
      %s82 = sphi 0, %s68
      %s90 = sphi 0, %s92
      %s93 = sphi 0, %s90
      %s94 = sphi 0, %s93
      %s110 = sphi 0, %s94
      %s116 = sphi 0, %s118
      %s119 = sphi 0, %s116
      %s120 = sphi 0, %s119
      %s136 = sphi 0, %s120
      %s142 = sphi 0, %s144
      %s145 = sphi 0, %s142
      %s146 = sphi 0, %s145
      %s162 = sphi 0, %s146
    $region4: #{tpu_custom_call.1} parent=1 // loop_header_branch
      %20 = sbr.rel (%p18) target = $region8
    $region5: #{tpu_custom_call.1} parent=1 // loop_body
      %s22 = ssub.s32 %s17, 1
      %s23 = ssub.s32 %s17, 2
      %s30 = sadd.s32 1, %s25
      %p31 = scmp.ge.s32.totalorder %s30, 1
      %s32 = scalar_select %p31, 0, %s30
      %s33 = sadd.s32 1, %s24
      %s34 = scalar_select %p31, %s33, %s24
      %p35 = scmp.ge.s32.totalorder %s34, 2
      %s36 = scalar_select %p35, 0, %s34
      %s37 = sadd.s32 %s24, %s25
      %s38 = sadd.s32 %s36, %s32
      %s39 = ssub.s32 %s37, %s38
      %p40 = scmp.eq.s32.totalorder %s39, 0
      %s42 = sadd.s32 %s41, 1
      %s43 = scalar_select %p40, %s41, %s42
      %p46 = pneg %p40
      %p47 = scmp.eq.s32.totalorder %s17, 1
      %p48 = por %p46, %p47
      %p49 = scmp.ne.s32.totalorder %s41, %s44
      %p50 = scmp.eq.s32.totalorder %s17, 0
      %p51 = por %p49, %p50
      %p52 = scmp.ne.s32.totalorder %s41, %s44
      %p53 = scmp.eq.s32.totalorder %s22, 1
      %p54 = por %p52, %p53
      %p55 = scmp.ne.s32.totalorder %s44, %s45
      %p56 = scmp.eq.s32.totalorder %s22, 0
      %p57 = por %p55, %p56
      %p58 = scmp.ne.s32.totalorder %s44, %s45
      %p59 = scmp.eq.s32.totalorder %s23, 1
      %p60 = por %p58, %p59
      %p62 = scmp.ne.s32.totalorder %s45, %s61
      %p63 = scmp.eq.s32.totalorder %s23, 0
      %p64 = por %p62, %p63
      %s66 = sadd.s32 %s65, 1
      %p69 = scmp.eq.s32.totalorder %s17, 1
      %p70 = scmp.ne.s32.totalorder %s65, %s67
      %p71 = scmp.eq.s32.totalorder %s17, 0
      %p72 = por %p70, %p71
      %p73 = scmp.ne.s32.totalorder %s65, %s67
      %p74 = scmp.eq.s32.totalorder %s22, 1
      %p75 = por %p73, %p74
      %p76 = scmp.ne.s32.totalorder %s67, %s68
      %p77 = scmp.eq.s32.totalorder %s22, 0
      %p78 = por %p76, %p77
      %p79 = scmp.ne.s32.totalorder %s67, %s68
      %p80 = scmp.eq.s32.totalorder %s23, 1
      %p81 = por %p79, %p80
      %p83 = scmp.ne.s32.totalorder %s68, %s82
      %p84 = scmp.eq.s32.totalorder %s23, 0
      %p85 = por %p83, %p84
      %s86 = sadd.s32 %s24, %s25
      %s87 = sadd.s32 %s36, %s32
      %s88 = ssub.s32 %s86, %s87
      %p89 = scmp.eq.s32.totalorder %s88, 0
      %s91 = sadd.s32 %s90, 1
      %s92 = scalar_select %p89, %s90, %s91
      %p95 = pneg %p89
      %p96 = scmp.eq.s32.totalorder %s17, 1
      %p97 = por %p95, %p96
      %p98 = scmp.ne.s32.totalorder %s90, %s93
      %p99 = scmp.eq.s32.totalorder %s17, 0
      %p100 = por %p98, %p99
      %p101 = scmp.ne.s32.totalorder %s90, %s93
      %p102 = scmp.eq.s32.totalorder %s22, 1
      %p103 = por %p101, %p102
      %p104 = scmp.ne.s32.totalorder %s93, %s94
      %p105 = scmp.eq.s32.totalorder %s22, 0
      %p106 = por %p104, %p105
      %p107 = scmp.ne.s32.totalorder %s93, %s94
      %p108 = scmp.eq.s32.totalorder %s23, 1
      %p109 = por %p107, %p108
      %p111 = scmp.ne.s32.totalorder %s94, %s110
      %p112 = scmp.eq.s32.totalorder %s23, 0
      %p113 = por %p111, %p112
      %s114 = ssub.s32 %s24, %s36
      %p115 = scmp.eq.s32.totalorder %s114, 0
      %s117 = sadd.s32 %s116, 1
      %s118 = scalar_select %p115, %s116, %s117
      %p121 = pneg %p115
      %p122 = scmp.eq.s32.totalorder %s17, 1
      %p123 = por %p121, %p122
      %p124 = scmp.ne.s32.totalorder %s116, %s119
      %p125 = scmp.eq.s32.totalorder %s17, 0
      %p126 = por %p124, %p125
      %p127 = scmp.ne.s32.totalorder %s116, %s119
      %p128 = scmp.eq.s32.totalorder %s22, 1
      %p129 = por %p127, %p128
      %p130 = scmp.ne.s32.totalorder %s119, %s120
      %p131 = scmp.eq.s32.totalorder %s22, 0
      %p132 = por %p130, %p131
      %p133 = scmp.ne.s32.totalorder %s119, %s120
      %p134 = scmp.eq.s32.totalorder %s23, 1
      %p135 = por %p133, %p134
      %p137 = scmp.ne.s32.totalorder %s120, %s136
      %p138 = scmp.eq.s32.totalorder %s23, 0
      %p139 = por %p137, %p138
      %s140 = ssub.s32 %s24, %s36
      %p141 = scmp.eq.s32.totalorder %s140, 0
      %s143 = sadd.s32 %s142, 1
      %s144 = scalar_select %p141, %s142, %s143
      %p147 = pneg %p141
      %p148 = scmp.eq.s32.totalorder %s17, 1
      %p149 = por %p147, %p148
      %p150 = scmp.ne.s32.totalorder %s142, %s145
      %p151 = scmp.eq.s32.totalorder %s17, 0
      %p152 = por %p150, %p151
      %p153 = scmp.ne.s32.totalorder %s142, %s145
      %p154 = scmp.eq.s32.totalorder %s22, 1
      %p155 = por %p153, %p154
      %p156 = scmp.ne.s32.totalorder %s145, %s146
      %p157 = scmp.eq.s32.totalorder %s22, 0
      %p158 = por %p156, %p157
      %p159 = scmp.ne.s32.totalorder %s145, %s146
      %p160 = scmp.eq.s32.totalorder %s23, 1
      %p161 = por %p159, %p160
      %p163 = scmp.ne.s32.totalorder %s146, %s162
      %p164 = scmp.eq.s32.totalorder %s23, 0
      %p165 = por %p163, %p164
      %p166 = scmp.le.s32.totalorder 1, %s17
      %p167 = scmp.lt.s32.totalorder %s17, 3
      %p168 = pnand %p166, %p167
      %p169 = pneg %p168
      // Predicated region
      $region9: #{tpu_custom_call.1} parent=5 // pred_check
        _
      $region10: #{tpu_custom_call.1} parent=5 // pred_check_branch
        %171 = sbr.rel (%p168) target = $region12
      $region11: #{tpu_custom_call.1} parent=5 // pred_region
        %s172 = ssub.s32 %s17, 1
        // Predicated region
        $region13: #{tpu_custom_call.1} parent=11 // pred_check
          %p173 = pneg %p78
        $region14: #{tpu_custom_call.1} parent=11 // pred_check_branch
          %175 = sbr.rel (%p173) target = $region16
        $region15: #{tpu_custom_call.1} parent=11 // pred_region
          _
        $region16: #{tpu_custom_call.1} parent=11 // pred_fallthru
          _
      $region12: #{tpu_custom_call.1} parent=5 // pred_fallthru
        _
      %p176 = scmp.lt.s32.totalorder %s17, 2
      // Predicated region
      $region17: #{tpu_custom_call.1} parent=5 // pred_check
        %p177 = pneg %p176
      $region18: #{tpu_custom_call.1} parent=5 // pred_check_branch
        %179 = sbr.rel (%p177) target = $region20
      $region19: #{tpu_custom_call.1} parent=5 // pred_region
        // Predicated region
        $region21: #{tpu_custom_call.1} parent=19 // pred_check
          %p180 = pneg %p51
        $region22: #{tpu_custom_call.1} parent=19 // pred_check_branch
          %182 = sbr.rel (%p180) target = $region24
        $region23: #{tpu_custom_call.1} parent=19 // pred_region
          %s183 = sadd.s32 %s24, %s25
          %p184 = scmp.lt.s32.totalorder %s183, 1
          %s185 = scalar_select %p184, %s183, 1
          %s186 = smul.addr %s185, 204
          %s187 = smul.addr %s186, 4
          %s188 = scalar_lea.vmem %s0, %s187
          %s189 = sadd.s32 %s24, %s25
        $region24: #{tpu_custom_call.1} parent=19 // pred_fallthru
          _
      $region20: #{tpu_custom_call.1} parent=5 // pred_fallthru
        _
      %p190 = scmp.le.s32.totalorder 1, %s17
      %p191 = scmp.lt.s32.totalorder %s17, 3
      %p192 = pnand %p190, %p191
      %p193 = pneg %p192
      // Predicated region
      $region25: #{tpu_custom_call.1} parent=5 // pred_check
        _
      $region26: #{tpu_custom_call.1} parent=5 // pred_check_branch
        %195 = sbr.rel (%p192) target = $region28
      $region27: #{tpu_custom_call.1} parent=5 // pred_region
        %s196 = ssub.s32 %s17, 1
        %s197 = sadd.s32 %s26, %s27
        %p198 = scmp.lt.s32.totalorder %s197, 1
        %s199 = scalar_select %p198, %s197, 1
        %s200 = smul.addr %s199, 204
        %s201 = smul.addr %s200, 4
        %s202 = scalar_lea.vmem %s0, %s201
        %p203 = pneg %p57
        %p204 = pneg %p54
        %p205 = pneg %p78
        %p206 = pneg %p75
        %p207 = pneg %p106
        %p208 = pneg %p103
        %s209 = sadd.s32 %s26, %s27
        %p210 = scmp.lt.s32.totalorder %s209, 1
        %s211 = scalar_select %p210, %s209, 1
        %s212 = smul.addr %s211, 32
        %s213 = smul.addr %s212, 4
        %s214 = scalar_lea.vmem %s2, %s213
        %p215 = pneg %p132
        %p216 = pneg %p129
        %s217 = sand.u32 %s119, 1
        %s218 = scalar_lea.sflag [#allocation3], %s217
        %s219 = sand.u32 %s119, 1
        %s220 = scalar_lea.vmem [#allocation2], %s219
        %p221 = pneg %p158
        %p222 = pneg %p155
        %s223 = sand.u32 %s145, 1
        %s224 = scalar_lea.sflag [#allocation5], %s223
        %s225 = sand.u32 %s145, 1
        %s226 = scalar_lea.vmem [#allocation4], %s225
        %s227 = sadd.s32 %s26, %s27
        %p228 = scmp.lt.s32.totalorder %s227, 1
        %s229 = scalar_select %p228, %s227, 1
        %s230 = smul.addr %s229, 204
        %s231 = smul.addr %s230, 4
        %s232 = scalar_lea.vmem %s0, %s231
        %s233 = sadd.s32 %s26, %s27
        %s234 = sadd.s32 %s26, %s27
        %p235 = scmp.lt.s32.totalorder %s234, 1
        %s236 = scalar_select %p235, %s234, 1
        %s237 = smul.addr %s236, 32
        %s238 = smul.addr %s237, 4
        %s239 = scalar_lea.vmem %s2, %s238
        %s240 = sadd.s32 %s26, %s27
        %p242 = scmp.eq.s32.totalorder %s27, 0
        // Predicated region
        $region29: #{tpu_custom_call.1} parent=27 // pred_check
          %p243 = pneg %p242
        $region30: #{tpu_custom_call.1} parent=27 // pred_check_branch
          %245 = sbr.rel (%p243) target = $region32
        $region31: #{tpu_custom_call.1} parent=27 // pred_region
          %246 = vst [vmem:[%s220] sm:$0x1] 0.0
          %247 = vst [vmem:[%s226] sm:$0x1] 0.0
        $region32: #{tpu_custom_call.1} parent=27 // pred_fallthru
          _
        %v248 = vld [vmem:[%s232] sm:$0xf]
        %v249 = vld [vmem:[%s232 + $0x4] sm:$0xf]
        %v250 = vld [vmem:[%s232 + $0xc] sm:$0xf]
        %v251 = vld [vmem:[%s232 + $0x10] sm:$0xf]
        %v252 = vld [vmem:[%s232 + $0x18] sm:$0xf]
        %v253 = vld [vmem:[%s232 + $0x1c] sm:$0xf]
        %v254 = vld [vmem:[%s232 + $0x24] sm:$0xf]
        %v255 = vld [vmem:[%s232 + $0x28] sm:$0xf]
        %v256 = vld [vmem:[%s232 + $0x30] sm:$0xf]
        %v257 = vld [vmem:[%s232 + $0x34] sm:$0xf]
        %v258 = vld [vmem:[%s232 + $0x3c] sm:$0xf]
        %v259 = vld [vmem:[%s232 + $0x40] sm:$0xf]
        %v260 = vld [vmem:[%s232 + $0x48] sm:$0xf]
        %v261 = vld [vmem:[%s232 + $0x4c] sm:$0xf]
        %v262 = vld [vmem:[%s232 + $0x54] sm:$0xf]
        %v263 = vld [vmem:[%s232 + $0x58] sm:$0xf]
        %v264 = vld [vmem:[%s232 + $0x60] sm:$0xf]
        %v265 = vld [vmem:[%s232 + $0x64] sm:$0xf]
        %v266 = vld [vmem:[%s232 + $0x6c] sm:$0xf]
        %v267 = vld [vmem:[%s232 + $0x70] sm:$0xf]
        %v268 = vld [vmem:[%s232 + $0x78] sm:$0xf]
        %v269 = vld [vmem:[%s232 + $0x7c] sm:$0xf]
        %v270 = vld [vmem:[%s232 + $0x84] sm:$0xf]
        %v271 = vld [vmem:[%s232 + $0x88] sm:$0xf]
        %v272 = vld [vmem:[%s232 + $0x90] sm:$0xf]
        %v273 = vld [vmem:[%s232 + $0x94] sm:$0xf]
        %v274 = vld [vmem:[%s232 + $0x9c] sm:$0xf]
        %v275 = vld [vmem:[%s232 + $0xa0] sm:$0xf]
        %v276 = vld [vmem:[%s232 + $0xa8] sm:$0xf]
        %v277 = vld [vmem:[%s232 + $0xac] sm:$0xf]
        %v278 = vld [vmem:[%s232 + $0xb4] sm:$0xf]
        %v279 = vld [vmem:[%s232 + $0xb8] sm:$0xf]
        %v280 = vld [vmem:[%s1] sm:$0x3]
        %s281 = scalar_lea.vmem %s232, 204
        %v282 = vld [vmem:[%s281] sm:$0xf]
        %v283 = vld [vmem:[%s281 + $0x4] sm:$0xf]
        %v284 = vld [vmem:[%s281 + $0xc] sm:$0xf]
        %v285 = vld [vmem:[%s281 + $0x10] sm:$0xf]
        %v286 = vld [vmem:[%s281 + $0x18] sm:$0xf]
        %v287 = vld [vmem:[%s281 + $0x1c] sm:$0xf]
        %v288 = vld [vmem:[%s281 + $0x24] sm:$0xf]
        %v289 = vld [vmem:[%s281 + $0x28] sm:$0xf]
        %v290 = vld [vmem:[%s281 + $0x30] sm:$0xf]
        %v291 = vld [vmem:[%s281 + $0x34] sm:$0xf]
        %v292 = vld [vmem:[%s281 + $0x3c] sm:$0xf]
        %v293 = vld [vmem:[%s281 + $0x40] sm:$0xf]
        %v294 = vld [vmem:[%s281 + $0x48] sm:$0xf]
        %v295 = vld [vmem:[%s281 + $0x4c] sm:$0xf]
        %v296 = vld [vmem:[%s281 + $0x54] sm:$0xf]
        %v297 = vld [vmem:[%s281 + $0x58] sm:$0xf]
        %v298 = vld [vmem:[%s281 + $0x60] sm:$0xf]
        %v299 = vld [vmem:[%s281 + $0x64] sm:$0xf]
        %v300 = vld [vmem:[%s281 + $0x6c] sm:$0xf]
        %v301 = vld [vmem:[%s281 + $0x70] sm:$0xf]
        %v302 = vld [vmem:[%s281 + $0x78] sm:$0xf]
        %v303 = vld [vmem:[%s281 + $0x7c] sm:$0xf]
        %v304 = vld [vmem:[%s281 + $0x84] sm:$0xf]
        %v305 = vld [vmem:[%s281 + $0x88] sm:$0xf]
        %v306 = vld [vmem:[%s281 + $0x90] sm:$0xf]
        %v307 = vld [vmem:[%s281 + $0x94] sm:$0xf]
        %v308 = vld [vmem:[%s281 + $0x9c] sm:$0xf]
        %v309 = vld [vmem:[%s281 + $0xa0] sm:$0xf]
        %v310 = vld [vmem:[%s281 + $0xa8] sm:$0xf]
        %v311 = vld [vmem:[%s281 + $0xac] sm:$0xf]
        %v312 = vld [vmem:[%s281 + $0xb4] sm:$0xf]
        %v313 = vld [vmem:[%s281 + $0xb8] sm:$0xf]
        %s314 = scalar_lea.vmem %s1, 2
        %v315 = vld [vmem:[%s314] sm:$0x3]
        %v348 = vunpack.c.l.b16 %v282
        %v349 = vunpack.c.l.b16 %v283
        %v350 = vunpack.c.l.b16 %v284
        %v351 = vunpack.c.l.b16 %v285
        %v352 = vunpack.c.l.b16 %v286
        %v353 = vunpack.c.l.b16 %v287
        %v354 = vunpack.c.l.b16 %v288
        %v355 = vunpack.c.l.b16 %v289
        %v356 = vunpack.c.l.b16 %v290
        %v357 = vunpack.c.l.b16 %v291
        %v358 = vunpack.c.l.b16 %v292
        %v359 = vunpack.c.l.b16 %v293
        %v360 = vunpack.c.l.b16 %v294
        %v361 = vunpack.c.l.b16 %v295
        %v362 = vunpack.c.l.b16 %v296
        %v363 = vunpack.c.l.b16 %v297
        %v364 = vunpack.c.l.b16 %v298
        %v365 = vunpack.c.l.b16 %v299
        %v366 = vunpack.c.l.b16 %v300
        %v367 = vunpack.c.l.b16 %v301
        %v368 = vunpack.c.l.b16 %v302
        %v369 = vunpack.c.l.b16 %v303
        %v370 = vunpack.c.l.b16 %v304
        %v371 = vunpack.c.l.b16 %v305
        %v372 = vunpack.c.l.b16 %v306
        %v373 = vunpack.c.l.b16 %v307
        %v374 = vunpack.c.l.b16 %v308
        %v375 = vunpack.c.l.b16 %v309
        %v376 = vunpack.c.l.b16 %v310
        %v377 = vunpack.c.l.b16 %v311
        %v378 = vunpack.c.l.b16 %v312
        %v379 = vunpack.c.l.b16 %v313
        %v380 = vpack.c.b16 %v349, %v348
        %v381 = vpack.c.b16 %v351, %v350
        %v382 = vpack.c.b16 %v353, %v352
        %v383 = vpack.c.b16 %v355, %v354
        %v384 = vpack.c.b16 %v357, %v356
        %v385 = vpack.c.b16 %v359, %v358
        %v386 = vpack.c.b16 %v361, %v360
        %v387 = vpack.c.b16 %v363, %v362
        %v388 = vpack.c.b16 %v365, %v364
        %v389 = vpack.c.b16 %v367, %v366
        %v390 = vpack.c.b16 %v369, %v368
        %v391 = vpack.c.b16 %v371, %v370
        %v392 = vpack.c.b16 %v373, %v372
        %v393 = vpack.c.b16 %v375, %v374
        %v394 = vpack.c.b16 %v377, %v376
        %v395 = vpack.c.b16 %v379, %v378
        %vm396 = vcmask 31744
        %v398 = vsel %vm396, %v380, 0
        %v401 = vsel %vm396, %v381, 0
        %v404 = vsel %vm396, %v382, 0
        %v407 = vsel %vm396, %v383, 0
        %v410 = vsel %vm396, %v384, 0
        %v413 = vsel %vm396, %v385, 0
        %v416 = vsel %vm396, %v386, 0
        %v419 = vsel %vm396, %v387, 0
        %v422 = vsel %vm396, %v388, 0
        %v425 = vsel %vm396, %v389, 0
        %v428 = vsel %vm396, %v390, 0
        %v431 = vsel %vm396, %v391, 0
        %v434 = vsel %vm396, %v392, 0
        %v437 = vsel %vm396, %v393, 0
        %v440 = vsel %vm396, %v394, 0
        %v443 = vsel %vm396, %v395, 0
        %vm445 = vcmask 1041408
        %v447 = vsel %vm445, %v315, 0
        %449 = vmatprep.subr.bf16.mxu0 0
        %450 = vmatpush1.bf16.msra.mxu0 0
        %451 = vmatprep.subr.bf16.mxu0 0
        %452 = vmatpush1.bf16.msra.mxu0 0
        %453 = vmatprep.subr.bf16.mxu0 0
        %454 = vmatpush1.bf16.msra.mxu0 0
        %455 = vmatprep.subr.bf16.mxu0 0
        %456 = vmatpush1.bf16.msra.mxu0 0
        %457 = vmatprep.subr.bf16.mxu0 0
        %458 = vmatpush1.bf16.msra.mxu0 0
        %459 = vmatprep.subr.bf16.mxu0 0
        %460 = vmatpush1.bf16.msra.mxu0 0
        %461 = vmatprep.subr.bf16.mxu0 0
        %462 = vmatpush1.bf16.msra.mxu0 0
        %463 = vmatprep.subr.bf16.mxu0 0
        %464 = vmatpush1.bf16.msra.mxu0 %v447
        %465 = vmatprep.subr.bf16.mxu0 0
        %466 = vmatpush2.bf16.msra.mxu0 0
        %467 = vmatprep.subr.bf16.mxu0 0
        %468 = vmatpush2.bf16.msra.mxu0 0
        %469 = vmatprep.subr.bf16.mxu0 0
        %470 = vmatpush2.bf16.msra.mxu0 0
        %471 = vmatprep.subr.bf16.mxu0 0
        %472 = vmatpush2.bf16.msra.mxu0 0
        %473 = vmatprep.subr.bf16.mxu0 0
        %474 = vmatpush2.bf16.msra.mxu0 0
        %475 = vmatprep.subr.bf16.mxu0 0
        %476 = vmatpush2.bf16.msra.mxu0 0
        %477 = vmatprep.subr.bf16.mxu0 0
        %478 = vmatpush2.bf16.msra.mxu0 0
        %479 = vmatprep.subr.bf16.mxu0 0
        %480 = vmatpush2.bf16.msra.mxu0 0
        %481 = vmatprep.mubr.bf16.mxu0 0
        %482 = vmatmul.mubr.bf16.gmra.mxu0 %v398
        %v483 = vpop.f32.mrf.mxu0
        %v484 = vadd.f32 0.0, %v483
        %v485 = vpop.f32.mrf.mxu0
        %v486 = vpop.f32.mrf.mxu0
        %v487 = vadd.f32 0.0, %v486
        %v488 = vpop.f32.mrf.mxu0
        %489 = vmatprep.mubr.bf16.mxu0 0
        %490 = vmatmul.mubr.bf16.gmra.mxu0 %v401
        %v491 = vpop.f32.mrf.mxu0
        %v492 = vadd.f32 0.0, %v491
        %v493 = vpop.f32.mrf.mxu0
        %v494 = vpop.f32.mrf.mxu0
        %v495 = vadd.f32 0.0, %v494
        %v496 = vpop.f32.mrf.mxu0
        %497 = vmatprep.mubr.bf16.mxu0 0
        %498 = vmatmul.mubr.bf16.gmra.mxu0 %v404
        %v499 = vpop.f32.mrf.mxu0
        %v500 = vadd.f32 0.0, %v499
        %v501 = vpop.f32.mrf.mxu0
        %v502 = vpop.f32.mrf.mxu0
        %v503 = vadd.f32 0.0, %v502
        %v504 = vpop.f32.mrf.mxu0
        %505 = vmatprep.mubr.bf16.mxu0 0
        %506 = vmatmul.mubr.bf16.gmra.mxu0 %v407
        %v507 = vpop.f32.mrf.mxu0
        %v508 = vadd.f32 0.0, %v507
        %v509 = vpop.f32.mrf.mxu0
        %v510 = vpop.f32.mrf.mxu0
        %v511 = vadd.f32 0.0, %v510
        %v512 = vpop.f32.mrf.mxu0
        %513 = vmatprep.mubr.bf16.mxu0 0
        %514 = vmatmul.mubr.bf16.gmra.mxu0 %v410
        %v515 = vpop.f32.mrf.mxu0
        %v516 = vadd.f32 0.0, %v515
        %v517 = vpop.f32.mrf.mxu0
        %v518 = vpop.f32.mrf.mxu0
        %v519 = vadd.f32 0.0, %v518
        %v520 = vpop.f32.mrf.mxu0
        %521 = vmatprep.mubr.bf16.mxu0 0
        %522 = vmatmul.mubr.bf16.gmra.mxu0 %v413
        %v523 = vpop.f32.mrf.mxu0
        %v524 = vadd.f32 0.0, %v523
        %v525 = vpop.f32.mrf.mxu0
        %v526 = vpop.f32.mrf.mxu0
        %v527 = vadd.f32 0.0, %v526
        %v528 = vpop.f32.mrf.mxu0
        %529 = vmatprep.mubr.bf16.mxu0 0
        %530 = vmatmul.mubr.bf16.gmra.mxu0 %v416
        %v531 = vpop.f32.mrf.mxu0
        %v532 = vadd.f32 0.0, %v531
        %v533 = vpop.f32.mrf.mxu0
        %v534 = vpop.f32.mrf.mxu0
        %v535 = vadd.f32 0.0, %v534
        %v536 = vpop.f32.mrf.mxu0
        %537 = vmatprep.mubr.bf16.mxu0 0
        %538 = vmatmul.mubr.bf16.gmra.mxu0 %v419
        %v539 = vpop.f32.mrf.mxu0
        %v540 = vadd.f32 0.0, %v539
        %v541 = vpop.f32.mrf.mxu0
        %v542 = vpop.f32.mrf.mxu0
        %v543 = vadd.f32 0.0, %v542
        %v544 = vpop.f32.mrf.mxu0
        %545 = vmatprep.mubr.bf16.mxu0 0
        %546 = vmatmul.mubr.bf16.gmra.mxu0 %v422
        %v547 = vpop.f32.mrf.mxu0
        %v548 = vadd.f32 0.0, %v547
        %v549 = vpop.f32.mrf.mxu0
        %v550 = vpop.f32.mrf.mxu0
        %v551 = vadd.f32 0.0, %v550
        %v552 = vpop.f32.mrf.mxu0
        %553 = vmatprep.mubr.bf16.mxu0 0
        %554 = vmatmul.mubr.bf16.gmra.mxu0 %v425
        %v555 = vpop.f32.mrf.mxu0
        %v556 = vadd.f32 0.0, %v555
        %v557 = vpop.f32.mrf.mxu0
        %v558 = vpop.f32.mrf.mxu0
        %v559 = vadd.f32 0.0, %v558
        %v560 = vpop.f32.mrf.mxu0
        %561 = vmatprep.mubr.bf16.mxu0 0
        %562 = vmatmul.mubr.bf16.gmra.mxu0 %v428
        %v563 = vpop.f32.mrf.mxu0
        %v564 = vadd.f32 0.0, %v563
        %v565 = vpop.f32.mrf.mxu0
        %v566 = vpop.f32.mrf.mxu0
        %v567 = vadd.f32 0.0, %v566
        %v568 = vpop.f32.mrf.mxu0
        %569 = vmatprep.mubr.bf16.mxu0 0
        %570 = vmatmul.mubr.bf16.gmra.mxu0 %v431
        %v571 = vpop.f32.mrf.mxu0
        %v572 = vadd.f32 0.0, %v571
        %v573 = vpop.f32.mrf.mxu0
        %v574 = vpop.f32.mrf.mxu0
        %v575 = vadd.f32 0.0, %v574
        %v576 = vpop.f32.mrf.mxu0
        %577 = vmatprep.mubr.bf16.mxu0 0
        %578 = vmatmul.mubr.bf16.gmra.mxu0 %v434
        %v579 = vpop.f32.mrf.mxu0
        %v580 = vadd.f32 0.0, %v579
        %v581 = vpop.f32.mrf.mxu0
        %v582 = vpop.f32.mrf.mxu0
        %v583 = vadd.f32 0.0, %v582
        %v584 = vpop.f32.mrf.mxu0
        %585 = vmatprep.mubr.bf16.mxu0 0
        %586 = vmatmul.mubr.bf16.gmra.mxu0 %v437
        %v587 = vpop.f32.mrf.mxu0
        %v588 = vadd.f32 0.0, %v587
        %v589 = vpop.f32.mrf.mxu0
        %v590 = vpop.f32.mrf.mxu0
        %v591 = vadd.f32 0.0, %v590
        %v592 = vpop.f32.mrf.mxu0
        %593 = vmatprep.mubr.bf16.mxu0 0
        %594 = vmatmul.mubr.bf16.gmra.mxu0 %v440
        %v595 = vpop.f32.mrf.mxu0
        %v596 = vadd.f32 0.0, %v595
        %v597 = vpop.f32.mrf.mxu0
        %v598 = vpop.f32.mrf.mxu0
        %v599 = vadd.f32 0.0, %v598
        %v600 = vpop.f32.mrf.mxu0
        %601 = vmatprep.mubr.bf16.mxu0 0
        %602 = vmatmul.mubr.bf16.gmra.mxu0 %v443
        %v603 = vpop.f32.mrf.mxu0
        %v604 = vadd.f32 0.0, %v603
        %v605 = vpop.f32.mrf.mxu0
        %v606 = vpop.f32.mrf.mxu0
        %v607 = vadd.f32 0.0, %v606
        %v608 = vpop.f32.mrf.mxu0
        %609 = vdwg.mxu0
        %v642 = vunpack.c.l.b16 %v248
        %v643 = vunpack.c.l.b16 %v249
        %v644 = vunpack.c.l.b16 %v250
        %v645 = vunpack.c.l.b16 %v251
        %v646 = vunpack.c.l.b16 %v252
        %v647 = vunpack.c.l.b16 %v253
        %v648 = vunpack.c.l.b16 %v254
        %v649 = vunpack.c.l.b16 %v255
        %v650 = vunpack.c.l.b16 %v256
        %v651 = vunpack.c.l.b16 %v257
        %v652 = vunpack.c.l.b16 %v258
        %v653 = vunpack.c.l.b16 %v259
        %v654 = vunpack.c.l.b16 %v260
        %v655 = vunpack.c.l.b16 %v261
        %v656 = vunpack.c.l.b16 %v262
        %v657 = vunpack.c.l.b16 %v263
        %v658 = vunpack.c.l.b16 %v264
        %v659 = vunpack.c.l.b16 %v265
        %v660 = vunpack.c.l.b16 %v266
        %v661 = vunpack.c.l.b16 %v267
        %v662 = vunpack.c.l.b16 %v268
        %v663 = vunpack.c.l.b16 %v269
        %v664 = vunpack.c.l.b16 %v270
        %v665 = vunpack.c.l.b16 %v271
        %v666 = vunpack.c.l.b16 %v272
        %v667 = vunpack.c.l.b16 %v273
        %v668 = vunpack.c.l.b16 %v274
        %v669 = vunpack.c.l.b16 %v275
        %v670 = vunpack.c.l.b16 %v276
        %v671 = vunpack.c.l.b16 %v277
        %v672 = vunpack.c.l.b16 %v278
        %v673 = vunpack.c.l.b16 %v279
        %v674 = vpack.c.b16 %v643, %v642
        %v675 = vpack.c.b16 %v645, %v644
        %v676 = vpack.c.b16 %v647, %v646
        %v677 = vpack.c.b16 %v649, %v648
        %v678 = vpack.c.b16 %v651, %v650
        %v679 = vpack.c.b16 %v653, %v652
        %v680 = vpack.c.b16 %v655, %v654
        %v681 = vpack.c.b16 %v657, %v656
        %v682 = vpack.c.b16 %v659, %v658
        %v683 = vpack.c.b16 %v661, %v660
        %v684 = vpack.c.b16 %v663, %v662
        %v685 = vpack.c.b16 %v665, %v664
        %v686 = vpack.c.b16 %v667, %v666
        %v687 = vpack.c.b16 %v669, %v668
        %v688 = vpack.c.b16 %v671, %v670
        %v689 = vpack.c.b16 %v673, %v672
        %v691 = vsel %vm396, %v674, 0
        %v694 = vsel %vm396, %v675, 0
        %v697 = vsel %vm396, %v676, 0
        %v700 = vsel %vm396, %v677, 0
        %v703 = vsel %vm396, %v678, 0
        %v706 = vsel %vm396, %v679, 0
        %v709 = vsel %vm396, %v680, 0
        %v712 = vsel %vm396, %v681, 0
        %v715 = vsel %vm396, %v682, 0
        %v718 = vsel %vm396, %v683, 0
        %v721 = vsel %vm396, %v684, 0
        %v724 = vsel %vm396, %v685, 0
        %v727 = vsel %vm396, %v686, 0
        %v730 = vsel %vm396, %v687, 0
        %v733 = vsel %vm396, %v688, 0
        %v736 = vsel %vm396, %v689, 0
        %v739 = vsel %vm445, %v280, 0
        %741 = vmatprep.subr.bf16.mxu0 0
        %742 = vmatpush1.bf16.msra.mxu0 0
        %743 = vmatprep.subr.bf16.mxu0 0
        %744 = vmatpush1.bf16.msra.mxu0 0
        %745 = vmatprep.subr.bf16.mxu0 0
        %746 = vmatpush1.bf16.msra.mxu0 0
        %747 = vmatprep.subr.bf16.mxu0 0
        %748 = vmatpush1.bf16.msra.mxu0 0
        %749 = vmatprep.subr.bf16.mxu0 0
        %750 = vmatpush1.bf16.msra.mxu0 0
        %751 = vmatprep.subr.bf16.mxu0 0
        %752 = vmatpush1.bf16.msra.mxu0 0
        %753 = vmatprep.subr.bf16.mxu0 0
        %754 = vmatpush1.bf16.msra.mxu0 0
        %755 = vmatprep.subr.bf16.mxu0 0
        %756 = vmatpush1.bf16.msra.mxu0 %v739
        %757 = vmatprep.subr.bf16.mxu0 0
        %758 = vmatpush2.bf16.msra.mxu0 0
        %759 = vmatprep.subr.bf16.mxu0 0
        %760 = vmatpush2.bf16.msra.mxu0 0
        %761 = vmatprep.subr.bf16.mxu0 0
        %762 = vmatpush2.bf16.msra.mxu0 0
        %763 = vmatprep.subr.bf16.mxu0 0
        %764 = vmatpush2.bf16.msra.mxu0 0
        %765 = vmatprep.subr.bf16.mxu0 0
        %766 = vmatpush2.bf16.msra.mxu0 0
        %767 = vmatprep.subr.bf16.mxu0 0
        %768 = vmatpush2.bf16.msra.mxu0 0
        %769 = vmatprep.subr.bf16.mxu0 0
        %770 = vmatpush2.bf16.msra.mxu0 0
        %771 = vmatprep.subr.bf16.mxu0 0
        %772 = vmatpush2.bf16.msra.mxu0 0
        %773 = vmatprep.mubr.bf16.mxu0 0
        %774 = vmatmul.mubr.bf16.gmra.mxu0 %v691
        %v775 = vpop.f32.mrf.mxu0
        %v776 = vadd.f32 %v484, %v775
        %v777 = vpop.f32.mrf.mxu0
        %v778 = vpop.f32.mrf.mxu0
        %v779 = vadd.f32 %v487, %v778
        %v780 = vpop.f32.mrf.mxu0
        %781 = vmatprep.mubr.bf16.mxu0 0
        %782 = vmatmul.mubr.bf16.gmra.mxu0 %v694
        %v783 = vpop.f32.mrf.mxu0
        %v784 = vadd.f32 %v492, %v783
        %v785 = vpop.f32.mrf.mxu0
        %v786 = vpop.f32.mrf.mxu0
        %v787 = vadd.f32 %v495, %v786
        %v788 = vpop.f32.mrf.mxu0
        %789 = vmatprep.mubr.bf16.mxu0 0
        %790 = vmatmul.mubr.bf16.gmra.mxu0 %v697
        %v791 = vpop.f32.mrf.mxu0
        %v792 = vadd.f32 %v500, %v791
        %v793 = vpop.f32.mrf.mxu0
        %v794 = vpop.f32.mrf.mxu0
        %v795 = vadd.f32 %v503, %v794
        %v796 = vpop.f32.mrf.mxu0
        %797 = vmatprep.mubr.bf16.mxu0 0
        %798 = vmatmul.mubr.bf16.gmra.mxu0 %v700
        %v799 = vpop.f32.mrf.mxu0
        %v800 = vadd.f32 %v508, %v799
        %v801 = vpop.f32.mrf.mxu0
        %v802 = vpop.f32.mrf.mxu0
        %v803 = vadd.f32 %v511, %v802
        %v804 = vpop.f32.mrf.mxu0
        %805 = vmatprep.mubr.bf16.mxu0 0
        %806 = vmatmul.mubr.bf16.gmra.mxu0 %v703
        %v807 = vpop.f32.mrf.mxu0
        %v808 = vadd.f32 %v516, %v807
        %v809 = vpop.f32.mrf.mxu0
        %v810 = vpop.f32.mrf.mxu0
        %v811 = vadd.f32 %v519, %v810
        %v812 = vpop.f32.mrf.mxu0
        %813 = vmatprep.mubr.bf16.mxu0 0
        %814 = vmatmul.mubr.bf16.gmra.mxu0 %v706
        %v815 = vpop.f32.mrf.mxu0
        %v816 = vadd.f32 %v524, %v815
        %v817 = vpop.f32.mrf.mxu0
        %v818 = vpop.f32.mrf.mxu0
        %v819 = vadd.f32 %v527, %v818
        %v820 = vpop.f32.mrf.mxu0
        %821 = vmatprep.mubr.bf16.mxu0 0
        %822 = vmatmul.mubr.bf16.gmra.mxu0 %v709
        %v823 = vpop.f32.mrf.mxu0
        %v824 = vadd.f32 %v532, %v823
        %v825 = vpop.f32.mrf.mxu0
        %v826 = vpop.f32.mrf.mxu0
        %v827 = vadd.f32 %v535, %v826
        %v828 = vpop.f32.mrf.mxu0
        %829 = vmatprep.mubr.bf16.mxu0 0
        %830 = vmatmul.mubr.bf16.gmra.mxu0 %v712
        %v831 = vpop.f32.mrf.mxu0
        %v832 = vadd.f32 %v540, %v831
        %v833 = vpop.f32.mrf.mxu0
        %v834 = vpop.f32.mrf.mxu0
        %v835 = vadd.f32 %v543, %v834
        %v836 = vpop.f32.mrf.mxu0
        %837 = vmatprep.mubr.bf16.mxu0 0
        %838 = vmatmul.mubr.bf16.gmra.mxu0 %v715
        %v839 = vpop.f32.mrf.mxu0
        %v840 = vadd.f32 %v548, %v839
        %v841 = vpop.f32.mrf.mxu0
        %v842 = vpop.f32.mrf.mxu0
        %v843 = vadd.f32 %v551, %v842
        %v844 = vpop.f32.mrf.mxu0
        %845 = vmatprep.mubr.bf16.mxu0 0
        %846 = vmatmul.mubr.bf16.gmra.mxu0 %v718
        %v847 = vpop.f32.mrf.mxu0
        %v848 = vadd.f32 %v556, %v847
        %v849 = vpop.f32.mrf.mxu0
        %v850 = vpop.f32.mrf.mxu0
        %v851 = vadd.f32 %v559, %v850
        %v852 = vpop.f32.mrf.mxu0
        %853 = vmatprep.mubr.bf16.mxu0 0
        %854 = vmatmul.mubr.bf16.gmra.mxu0 %v721
        %v855 = vpop.f32.mrf.mxu0
        %v856 = vadd.f32 %v564, %v855
        %v857 = vpop.f32.mrf.mxu0
        %v858 = vpop.f32.mrf.mxu0
        %v859 = vadd.f32 %v567, %v858
        %v860 = vpop.f32.mrf.mxu0
        %861 = vmatprep.mubr.bf16.mxu0 0
        %862 = vmatmul.mubr.bf16.gmra.mxu0 %v724
        %v863 = vpop.f32.mrf.mxu0
        %v864 = vadd.f32 %v572, %v863
        %v865 = vpop.f32.mrf.mxu0
        %v866 = vpop.f32.mrf.mxu0
        %v867 = vadd.f32 %v575, %v866
        %v868 = vpop.f32.mrf.mxu0
        %869 = vmatprep.mubr.bf16.mxu0 0
        %870 = vmatmul.mubr.bf16.gmra.mxu0 %v727
        %v871 = vpop.f32.mrf.mxu0
        %v872 = vadd.f32 %v580, %v871
        %v873 = vpop.f32.mrf.mxu0
        %v874 = vpop.f32.mrf.mxu0
        %v875 = vadd.f32 %v583, %v874
        %v876 = vpop.f32.mrf.mxu0
        %877 = vmatprep.mubr.bf16.mxu0 0
        %878 = vmatmul.mubr.bf16.gmra.mxu0 %v730
        %v879 = vpop.f32.mrf.mxu0
        %v880 = vadd.f32 %v588, %v879
        %v881 = vpop.f32.mrf.mxu0
        %v882 = vpop.f32.mrf.mxu0
        %v883 = vadd.f32 %v591, %v882
        %v884 = vpop.f32.mrf.mxu0
        %885 = vmatprep.mubr.bf16.mxu0 0
        %886 = vmatmul.mubr.bf16.gmra.mxu0 %v733
        %v887 = vpop.f32.mrf.mxu0
        %v888 = vadd.f32 %v596, %v887
        %v889 = vpop.f32.mrf.mxu0
        %v890 = vpop.f32.mrf.mxu0
        %v891 = vadd.f32 %v599, %v890
        %v892 = vpop.f32.mrf.mxu0
        %893 = vmatprep.mubr.bf16.mxu0 0
        %894 = vmatmul.mubr.bf16.gmra.mxu0 %v736
        %v895 = vpop.f32.mrf.mxu0
        %v896 = vadd.f32 %v604, %v895
        %v897 = vpop.f32.mrf.mxu0
        %v898 = vpop.f32.mrf.mxu0
        %v899 = vadd.f32 %v607, %v898
        %v900 = vpop.f32.mrf.mxu0
        %901 = vdwg.mxu0
        %v902 = vld [vmem:[%s232] sm:$0xf]
        %v903 = vld [vmem:[%s232 + $0x4] sm:$0xf]
        %v904 = vld [vmem:[%s232 + $0x8] sm:$0x1]
        %v905 = vld [vmem:[%s232 + $0xc] sm:$0xf]
        %v906 = vld [vmem:[%s232 + $0x10] sm:$0xf]
        %v907 = vld [vmem:[%s232 + $0x14] sm:$0x1]
        %v908 = vld [vmem:[%s232 + $0x18] sm:$0xf]
        %v909 = vld [vmem:[%s232 + $0x1c] sm:$0xf]
        %v910 = vld [vmem:[%s232 + $0x20] sm:$0x1]
        %v911 = vld [vmem:[%s232 + $0x24] sm:$0xf]
        %v912 = vld [vmem:[%s232 + $0x28] sm:$0xf]
        %v913 = vld [vmem:[%s232 + $0x2c] sm:$0x1]
        %v914 = vld [vmem:[%s232 + $0x30] sm:$0xf]
        %v915 = vld [vmem:[%s232 + $0x34] sm:$0xf]
        %v916 = vld [vmem:[%s232 + $0x38] sm:$0x1]
        %v917 = vld [vmem:[%s232 + $0x3c] sm:$0xf]
        %v918 = vld [vmem:[%s232 + $0x40] sm:$0xf]
        %v919 = vld [vmem:[%s232 + $0x44] sm:$0x1]
        %v920 = vld [vmem:[%s232 + $0x48] sm:$0xf]
        %v921 = vld [vmem:[%s232 + $0x4c] sm:$0xf]
        %v922 = vld [vmem:[%s232 + $0x50] sm:$0x1]
        %v923 = vld [vmem:[%s232 + $0x54] sm:$0xf]
        %v924 = vld [vmem:[%s232 + $0x58] sm:$0xf]
        %v925 = vld [vmem:[%s232 + $0x5c] sm:$0x1]
        %v926 = vld [vmem:[%s232 + $0x60] sm:$0xf]
        %v927 = vld [vmem:[%s232 + $0x64] sm:$0xf]
        %v928 = vld [vmem:[%s232 + $0x68] sm:$0x1]
        %v929 = vld [vmem:[%s232 + $0x6c] sm:$0xf]
        %v930 = vld [vmem:[%s232 + $0x70] sm:$0xf]
        %v931 = vld [vmem:[%s232 + $0x74] sm:$0x1]
        %v932 = vld [vmem:[%s232 + $0x78] sm:$0xf]
        %v933 = vld [vmem:[%s232 + $0x7c] sm:$0xf]
        %v934 = vld [vmem:[%s232 + $0x80] sm:$0x1]
        %v935 = vld [vmem:[%s232 + $0x84] sm:$0xf]
        %v936 = vld [vmem:[%s232 + $0x88] sm:$0xf]
        %v937 = vld [vmem:[%s232 + $0x8c] sm:$0x1]
        %v938 = vld [vmem:[%s232 + $0x90] sm:$0xf]
        %v939 = vld [vmem:[%s232 + $0x94] sm:$0xf]
        %v940 = vld [vmem:[%s232 + $0x98] sm:$0x1]
        %v941 = vld [vmem:[%s232 + $0x9c] sm:$0xf]
        %v942 = vld [vmem:[%s232 + $0xa0] sm:$0xf]
        %v943 = vld [vmem:[%s232 + $0xa4] sm:$0x1]
        %v944 = vld [vmem:[%s232 + $0xa8] sm:$0xf]
        %v945 = vld [vmem:[%s232 + $0xac] sm:$0xf]
        %v946 = vld [vmem:[%s232 + $0xb0] sm:$0x1]
        %v947 = vld [vmem:[%s232 + $0xb4] sm:$0xf]
        %v948 = vld [vmem:[%s232 + $0xb8] sm:$0xf]
        %v949 = vld [vmem:[%s232 + $0xbc] sm:$0x1]
        %vm950 = vsmask.f32 3328
        %vm951 = vsmask.f32 7440
        %vm952 = vmor %vm950, %vm951
        %v954 = vshrl.u32 %v902, 16
        %v956 = vrot.slane %v954, 4
        %v957 = vshll.u32 %v902, 16
        %v959 = vrot.slane %v957, 5
        %v960 = vor.u32 %v956, %v959
        %v961 = vrot.slane %v960, 4
        %v963 = vshll.u32 %v903, 16
        %v965 = vrot.slane %v963, 5
        %v966 = vsel %vm952, %v961, %v965
        %v967 = vshrl.u32 %v903, 16
        %v969 = vrot.slane %v967, 4
        %v970 = vor.u32 %v969, %v965
        %v971 = vrot.slane %v970, 4
        %v973 = vshll.u32 %v904, 16
        %v975 = vrot.slane %v973, 5
        %v976 = vsel %vm952, %v971, %v975
        %v978 = vshrl.u32 %v905, 16
        %v980 = vrot.slane %v978, 4
        %v981 = vshll.u32 %v905, 16
        %v983 = vrot.slane %v981, 5
        %v984 = vor.u32 %v980, %v983
        %v985 = vrot.slane %v984, 4
        %v987 = vshll.u32 %v906, 16
        %v989 = vrot.slane %v987, 5
        %v990 = vsel %vm952, %v985, %v989
        %v991 = vshrl.u32 %v906, 16
        %v993 = vrot.slane %v991, 4
        %v994 = vor.u32 %v993, %v989
        %v995 = vrot.slane %v994, 4
        %v997 = vshll.u32 %v907, 16
        %v999 = vrot.slane %v997, 5
        %v1000 = vsel %vm952, %v995, %v999
        %v1002 = vshrl.u32 %v908, 16
        %v1004 = vrot.slane %v1002, 4
        %v1005 = vshll.u32 %v908, 16
        %v1007 = vrot.slane %v1005, 5
        %v1008 = vor.u32 %v1004, %v1007
        %v1009 = vrot.slane %v1008, 4
        %v1011 = vshll.u32 %v909, 16
        %v1013 = vrot.slane %v1011, 5
        %v1014 = vsel %vm952, %v1009, %v1013
        %v1015 = vshrl.u32 %v909, 16
        %v1017 = vrot.slane %v1015, 4
        %v1018 = vor.u32 %v1017, %v1013
        %v1019 = vrot.slane %v1018, 4
        %v1021 = vshll.u32 %v910, 16
        %v1023 = vrot.slane %v1021, 5
        %v1024 = vsel %vm952, %v1019, %v1023
        %v1026 = vshrl.u32 %v911, 16
        %v1028 = vrot.slane %v1026, 4
        %v1029 = vshll.u32 %v911, 16
        %v1031 = vrot.slane %v1029, 5
        %v1032 = vor.u32 %v1028, %v1031
        %v1033 = vrot.slane %v1032, 4
        %v1035 = vshll.u32 %v912, 16
        %v1037 = vrot.slane %v1035, 5
        %v1038 = vsel %vm952, %v1033, %v1037
        %v1039 = vshrl.u32 %v912, 16
        %v1041 = vrot.slane %v1039, 4
        %v1042 = vor.u32 %v1041, %v1037
        %v1043 = vrot.slane %v1042, 4
        %v1045 = vshll.u32 %v913, 16
        %v1047 = vrot.slane %v1045, 5
        %v1048 = vsel %vm952, %v1043, %v1047
        %v1050 = vshrl.u32 %v914, 16
        %v1052 = vrot.slane %v1050, 4
        %v1053 = vshll.u32 %v914, 16
        %v1055 = vrot.slane %v1053, 5
        %v1056 = vor.u32 %v1052, %v1055
        %v1057 = vrot.slane %v1056, 4
        %v1059 = vshll.u32 %v915, 16
        %v1061 = vrot.slane %v1059, 5
        %v1062 = vsel %vm952, %v1057, %v1061
        %v1063 = vshrl.u32 %v915, 16
        %v1065 = vrot.slane %v1063, 4
        %v1066 = vor.u32 %v1065, %v1061
        %v1067 = vrot.slane %v1066, 4
        %v1069 = vshll.u32 %v916, 16
        %v1071 = vrot.slane %v1069, 5
        %v1072 = vsel %vm952, %v1067, %v1071
        %v1074 = vshrl.u32 %v917, 16
        %v1076 = vrot.slane %v1074, 4
        %v1077 = vshll.u32 %v917, 16
        %v1079 = vrot.slane %v1077, 5
        %v1080 = vor.u32 %v1076, %v1079
        %v1081 = vrot.slane %v1080, 4
        %v1083 = vshll.u32 %v918, 16
        %v1085 = vrot.slane %v1083, 5
        %v1086 = vsel %vm952, %v1081, %v1085
        %v1087 = vshrl.u32 %v918, 16
        %v1089 = vrot.slane %v1087, 4
        %v1090 = vor.u32 %v1089, %v1085
        %v1091 = vrot.slane %v1090, 4
        %v1093 = vshll.u32 %v919, 16
        %v1095 = vrot.slane %v1093, 5
        %v1096 = vsel %vm952, %v1091, %v1095
        %v1098 = vshrl.u32 %v920, 16
        %v1100 = vrot.slane %v1098, 4
        %v1101 = vshll.u32 %v920, 16
        %v1103 = vrot.slane %v1101, 5
        %v1104 = vor.u32 %v1100, %v1103
        %v1105 = vrot.slane %v1104, 4
        %v1107 = vshll.u32 %v921, 16
        %v1109 = vrot.slane %v1107, 5
        %v1110 = vsel %vm952, %v1105, %v1109
        %v1111 = vshrl.u32 %v921, 16
        %v1113 = vrot.slane %v1111, 4
        %v1114 = vor.u32 %v1113, %v1109
        %v1115 = vrot.slane %v1114, 4
        %v1117 = vshll.u32 %v922, 16
        %v1119 = vrot.slane %v1117, 5
        %v1120 = vsel %vm952, %v1115, %v1119
        %v1122 = vshrl.u32 %v923, 16
        %v1124 = vrot.slane %v1122, 4
        %v1125 = vshll.u32 %v923, 16
        %v1127 = vrot.slane %v1125, 5
        %v1128 = vor.u32 %v1124, %v1127
        %v1129 = vrot.slane %v1128, 4
        %v1131 = vshll.u32 %v924, 16
        %v1133 = vrot.slane %v1131, 5
        %v1134 = vsel %vm952, %v1129, %v1133
        %v1135 = vshrl.u32 %v924, 16
        %v1137 = vrot.slane %v1135, 4
        %v1138 = vor.u32 %v1137, %v1133
        %v1139 = vrot.slane %v1138, 4
        %v1141 = vshll.u32 %v925, 16
        %v1143 = vrot.slane %v1141, 5
        %v1144 = vsel %vm952, %v1139, %v1143
        %v1146 = vshrl.u32 %v926, 16
        %v1148 = vrot.slane %v1146, 4
        %v1149 = vshll.u32 %v926, 16
        %v1151 = vrot.slane %v1149, 5
        %v1152 = vor.u32 %v1148, %v1151
        %v1153 = vrot.slane %v1152, 4
        %v1155 = vshll.u32 %v927, 16
        %v1157 = vrot.slane %v1155, 5
        %v1158 = vsel %vm952, %v1153, %v1157
        %v1159 = vshrl.u32 %v927, 16
        %v1161 = vrot.slane %v1159, 4
        %v1162 = vor.u32 %v1161, %v1157
        %v1163 = vrot.slane %v1162, 4
        %v1165 = vshll.u32 %v928, 16
        %v1167 = vrot.slane %v1165, 5
        %v1168 = vsel %vm952, %v1163, %v1167
        %v1170 = vshrl.u32 %v929, 16
        %v1172 = vrot.slane %v1170, 4
        %v1173 = vshll.u32 %v929, 16
        %v1175 = vrot.slane %v1173, 5
        %v1176 = vor.u32 %v1172, %v1175
        %v1177 = vrot.slane %v1176, 4
        %v1179 = vshll.u32 %v930, 16
        %v1181 = vrot.slane %v1179, 5
        %v1182 = vsel %vm952, %v1177, %v1181
        %v1183 = vshrl.u32 %v930, 16
        %v1185 = vrot.slane %v1183, 4
        %v1186 = vor.u32 %v1185, %v1181
        %v1187 = vrot.slane %v1186, 4
        %v1189 = vshll.u32 %v931, 16
        %v1191 = vrot.slane %v1189, 5
        %v1192 = vsel %vm952, %v1187, %v1191
        %v1194 = vshrl.u32 %v932, 16
        %v1196 = vrot.slane %v1194, 4
        %v1197 = vshll.u32 %v932, 16
        %v1199 = vrot.slane %v1197, 5
        %v1200 = vor.u32 %v1196, %v1199
        %v1201 = vrot.slane %v1200, 4
        %v1203 = vshll.u32 %v933, 16
        %v1205 = vrot.slane %v1203, 5
        %v1206 = vsel %vm952, %v1201, %v1205
        %v1207 = vshrl.u32 %v933, 16
        %v1209 = vrot.slane %v1207, 4
        %v1210 = vor.u32 %v1209, %v1205
        %v1211 = vrot.slane %v1210, 4
        %v1213 = vshll.u32 %v934, 16
        %v1215 = vrot.slane %v1213, 5
        %v1216 = vsel %vm952, %v1211, %v1215
        %v1218 = vshrl.u32 %v935, 16
        %v1220 = vrot.slane %v1218, 4
        %v1221 = vshll.u32 %v935, 16
        %v1223 = vrot.slane %v1221, 5
        %v1224 = vor.u32 %v1220, %v1223
        %v1225 = vrot.slane %v1224, 4
        %v1227 = vshll.u32 %v936, 16
        %v1229 = vrot.slane %v1227, 5
        %v1230 = vsel %vm952, %v1225, %v1229
        %v1231 = vshrl.u32 %v936, 16
        %v1233 = vrot.slane %v1231, 4
        %v1234 = vor.u32 %v1233, %v1229
        %v1235 = vrot.slane %v1234, 4
        %v1237 = vshll.u32 %v937, 16
        %v1239 = vrot.slane %v1237, 5
        %v1240 = vsel %vm952, %v1235, %v1239
        %v1242 = vshrl.u32 %v938, 16
        %v1244 = vrot.slane %v1242, 4
        %v1245 = vshll.u32 %v938, 16
        %v1247 = vrot.slane %v1245, 5
        %v1248 = vor.u32 %v1244, %v1247
        %v1249 = vrot.slane %v1248, 4
        %v1251 = vshll.u32 %v939, 16
        %v1253 = vrot.slane %v1251, 5
        %v1254 = vsel %vm952, %v1249, %v1253
        %v1255 = vshrl.u32 %v939, 16
        %v1257 = vrot.slane %v1255, 4
        %v1258 = vor.u32 %v1257, %v1253
        %v1259 = vrot.slane %v1258, 4
        %v1261 = vshll.u32 %v940, 16
        %v1263 = vrot.slane %v1261, 5
        %v1264 = vsel %vm952, %v1259, %v1263
        %v1266 = vshrl.u32 %v941, 16
        %v1268 = vrot.slane %v1266, 4
        %v1269 = vshll.u32 %v941, 16
        %v1271 = vrot.slane %v1269, 5
        %v1272 = vor.u32 %v1268, %v1271
        %v1273 = vrot.slane %v1272, 4
        %v1275 = vshll.u32 %v942, 16
        %v1277 = vrot.slane %v1275, 5
        %v1278 = vsel %vm952, %v1273, %v1277
        %v1279 = vshrl.u32 %v942, 16
        %v1281 = vrot.slane %v1279, 4
        %v1282 = vor.u32 %v1281, %v1277
        %v1283 = vrot.slane %v1282, 4
        %v1285 = vshll.u32 %v943, 16
        %v1287 = vrot.slane %v1285, 5
        %v1288 = vsel %vm952, %v1283, %v1287
        %v1290 = vshrl.u32 %v944, 16
        %v1292 = vrot.slane %v1290, 4
        %v1293 = vshll.u32 %v944, 16
        %v1295 = vrot.slane %v1293, 5
        %v1296 = vor.u32 %v1292, %v1295
        %v1297 = vrot.slane %v1296, 4
        %v1299 = vshll.u32 %v945, 16
        %v1301 = vrot.slane %v1299, 5
        %v1302 = vsel %vm952, %v1297, %v1301
        %v1303 = vshrl.u32 %v945, 16
        %v1305 = vrot.slane %v1303, 4
        %v1306 = vor.u32 %v1305, %v1301
        %v1307 = vrot.slane %v1306, 4
        %v1309 = vshll.u32 %v946, 16
        %v1311 = vrot.slane %v1309, 5
        %v1312 = vsel %vm952, %v1307, %v1311
        %v1314 = vshrl.u32 %v947, 16
        %v1316 = vrot.slane %v1314, 4
        %v1317 = vshll.u32 %v947, 16
        %v1319 = vrot.slane %v1317, 5
        %v1320 = vor.u32 %v1316, %v1319
        %v1321 = vrot.slane %v1320, 4
        %v1323 = vshll.u32 %v948, 16
        %v1325 = vrot.slane %v1323, 5
        %v1326 = vsel %vm952, %v1321, %v1325
        %v1327 = vshrl.u32 %v948, 16
        %v1329 = vrot.slane %v1327, 4
        %v1330 = vor.u32 %v1329, %v1325
        %v1331 = vrot.slane %v1330, 4
        %v1333 = vshll.u32 %v949, 16
        %v1335 = vrot.slane %v1333, 5
        %v1336 = vsel %vm952, %v1331, %v1335
        %s1337 = scalar_lea.vmem %s1, 4
        %v1338 = vld [vmem:[%s1337] sm:$0x3]
        %v1339 = vunpack.c.l.b16 %v966
        %v1340 = vunpack.c.l.b16 %v976
        %v1341 = vunpack.c.l.b16 %v990
        %v1342 = vunpack.c.l.b16 %v1000
        %v1343 = vunpack.c.l.b16 %v1014
        %v1344 = vunpack.c.l.b16 %v1024
        %v1345 = vunpack.c.l.b16 %v1038
        %v1346 = vunpack.c.l.b16 %v1048
        %v1347 = vunpack.c.l.b16 %v1062
        %v1348 = vunpack.c.l.b16 %v1072
        %v1349 = vunpack.c.l.b16 %v1086
        %v1350 = vunpack.c.l.b16 %v1096
        %v1351 = vunpack.c.l.b16 %v1110
        %v1352 = vunpack.c.l.b16 %v1120
        %v1353 = vunpack.c.l.b16 %v1134
        %v1354 = vunpack.c.l.b16 %v1144
        %v1355 = vunpack.c.l.b16 %v1158
        %v1356 = vunpack.c.l.b16 %v1168
        %v1357 = vunpack.c.l.b16 %v1182
        %v1358 = vunpack.c.l.b16 %v1192
        %v1359 = vunpack.c.l.b16 %v1206
        %v1360 = vunpack.c.l.b16 %v1216
        %v1361 = vunpack.c.l.b16 %v1230
        %v1362 = vunpack.c.l.b16 %v1240
        %v1363 = vunpack.c.l.b16 %v1254
        %v1364 = vunpack.c.l.b16 %v1264
        %v1365 = vunpack.c.l.b16 %v1278
        %v1366 = vunpack.c.l.b16 %v1288
        %v1367 = vunpack.c.l.b16 %v1302
        %v1368 = vunpack.c.l.b16 %v1312
        %v1369 = vunpack.c.l.b16 %v1326
        %v1370 = vunpack.c.l.b16 %v1336
        %v1371 = vpack.c.b16 %v1340, %v1339
        %v1372 = vpack.c.b16 %v1342, %v1341
        %v1373 = vpack.c.b16 %v1344, %v1343
        %v1374 = vpack.c.b16 %v1346, %v1345
        %v1375 = vpack.c.b16 %v1348, %v1347
        %v1376 = vpack.c.b16 %v1350, %v1349
        %v1377 = vpack.c.b16 %v1352, %v1351
        %v1378 = vpack.c.b16 %v1354, %v1353
        %v1379 = vpack.c.b16 %v1356, %v1355
        %v1380 = vpack.c.b16 %v1358, %v1357
        %v1381 = vpack.c.b16 %v1360, %v1359
        %v1382 = vpack.c.b16 %v1362, %v1361
        %v1383 = vpack.c.b16 %v1364, %v1363
        %v1384 = vpack.c.b16 %v1366, %v1365
        %v1385 = vpack.c.b16 %v1368, %v1367
        %v1386 = vpack.c.b16 %v1370, %v1369
        %v1388 = vsel %vm396, %v1371, 0
        %v1391 = vsel %vm396, %v1372, 0
        %v1394 = vsel %vm396, %v1373, 0
        %v1397 = vsel %vm396, %v1374, 0
        %v1400 = vsel %vm396, %v1375, 0
        %v1403 = vsel %vm396, %v1376, 0
        %v1406 = vsel %vm396, %v1377, 0
        %v1409 = vsel %vm396, %v1378, 0
        %v1412 = vsel %vm396, %v1379, 0
        %v1415 = vsel %vm396, %v1380, 0
        %v1418 = vsel %vm396, %v1381, 0
        %v1421 = vsel %vm396, %v1382, 0
        %v1424 = vsel %vm396, %v1383, 0
        %v1427 = vsel %vm396, %v1384, 0
        %v1430 = vsel %vm396, %v1385, 0
        %v1433 = vsel %vm396, %v1386, 0
        %v1436 = vsel %vm445, %v1338, 0
        %1438 = vmatprep.subr.bf16.mxu0 0
        %1439 = vmatpush1.bf16.msra.mxu0 0
        %1440 = vmatprep.subr.bf16.mxu0 0
        %1441 = vmatpush1.bf16.msra.mxu0 0
        %1442 = vmatprep.subr.bf16.mxu0 0
        %1443 = vmatpush1.bf16.msra.mxu0 0
        %1444 = vmatprep.subr.bf16.mxu0 0
        %1445 = vmatpush1.bf16.msra.mxu0 0
        %1446 = vmatprep.subr.bf16.mxu0 0
        %1447 = vmatpush1.bf16.msra.mxu0 0
        %1448 = vmatprep.subr.bf16.mxu0 0
        %1449 = vmatpush1.bf16.msra.mxu0 0
        %1450 = vmatprep.subr.bf16.mxu0 0
        %1451 = vmatpush1.bf16.msra.mxu0 0
        %1452 = vmatprep.subr.bf16.mxu0 0
        %1453 = vmatpush1.bf16.msra.mxu0 %v1436
        %1454 = vmatprep.subr.bf16.mxu0 0
        %1455 = vmatpush2.bf16.msra.mxu0 0
        %1456 = vmatprep.subr.bf16.mxu0 0
        %1457 = vmatpush2.bf16.msra.mxu0 0
        %1458 = vmatprep.subr.bf16.mxu0 0
        %1459 = vmatpush2.bf16.msra.mxu0 0
        %1460 = vmatprep.subr.bf16.mxu0 0
        %1461 = vmatpush2.bf16.msra.mxu0 0
        %1462 = vmatprep.subr.bf16.mxu0 0
        %1463 = vmatpush2.bf16.msra.mxu0 0
        %1464 = vmatprep.subr.bf16.mxu0 0
        %1465 = vmatpush2.bf16.msra.mxu0 0
        %1466 = vmatprep.subr.bf16.mxu0 0
        %1467 = vmatpush2.bf16.msra.mxu0 0
        %1468 = vmatprep.subr.bf16.mxu0 0
        %1469 = vmatpush2.bf16.msra.mxu0 0
        %1470 = vmatprep.mubr.bf16.mxu0 0
        %1471 = vmatmul.mubr.bf16.gmra.mxu0 %v1388
        %v1472 = vpop.f32.mrf.mxu0
        %v1473 = vadd.f32 0.0, %v1472
        %v1474 = vpop.f32.mrf.mxu0
        %v1475 = vpop.f32.mrf.mxu0
        %v1476 = vadd.f32 0.0, %v1475
        %v1477 = vpop.f32.mrf.mxu0
        %1478 = vmatprep.mubr.bf16.mxu0 0
        %1479 = vmatmul.mubr.bf16.gmra.mxu0 %v1391
        %v1480 = vpop.f32.mrf.mxu0
        %v1481 = vadd.f32 0.0, %v1480
        %v1482 = vpop.f32.mrf.mxu0
        %v1483 = vpop.f32.mrf.mxu0
        %v1484 = vadd.f32 0.0, %v1483
        %v1485 = vpop.f32.mrf.mxu0
        %1486 = vmatprep.mubr.bf16.mxu0 0
        %1487 = vmatmul.mubr.bf16.gmra.mxu0 %v1394
        %v1488 = vpop.f32.mrf.mxu0
        %v1489 = vadd.f32 0.0, %v1488
        %v1490 = vpop.f32.mrf.mxu0
        %v1491 = vpop.f32.mrf.mxu0
        %v1492 = vadd.f32 0.0, %v1491
        %v1493 = vpop.f32.mrf.mxu0
        %1494 = vmatprep.mubr.bf16.mxu0 0
        %1495 = vmatmul.mubr.bf16.gmra.mxu0 %v1397
        %v1496 = vpop.f32.mrf.mxu0
        %v1497 = vadd.f32 0.0, %v1496
        %v1498 = vpop.f32.mrf.mxu0
        %v1499 = vpop.f32.mrf.mxu0
        %v1500 = vadd.f32 0.0, %v1499
        %v1501 = vpop.f32.mrf.mxu0
        %1502 = vmatprep.mubr.bf16.mxu0 0
        %1503 = vmatmul.mubr.bf16.gmra.mxu0 %v1400
        %v1504 = vpop.f32.mrf.mxu0
        %v1505 = vadd.f32 0.0, %v1504
        %v1506 = vpop.f32.mrf.mxu0
        %v1507 = vpop.f32.mrf.mxu0
        %v1508 = vadd.f32 0.0, %v1507
        %v1509 = vpop.f32.mrf.mxu0
        %1510 = vmatprep.mubr.bf16.mxu0 0
        %1511 = vmatmul.mubr.bf16.gmra.mxu0 %v1403
        %v1512 = vpop.f32.mrf.mxu0
        %v1513 = vadd.f32 0.0, %v1512
        %v1514 = vpop.f32.mrf.mxu0
        %v1515 = vpop.f32.mrf.mxu0
        %v1516 = vadd.f32 0.0, %v1515
        %v1517 = vpop.f32.mrf.mxu0
        %1518 = vmatprep.mubr.bf16.mxu0 0
        %1519 = vmatmul.mubr.bf16.gmra.mxu0 %v1406
        %v1520 = vpop.f32.mrf.mxu0
        %v1521 = vadd.f32 0.0, %v1520
        %v1522 = vpop.f32.mrf.mxu0
        %v1523 = vpop.f32.mrf.mxu0
        %v1524 = vadd.f32 0.0, %v1523
        %v1525 = vpop.f32.mrf.mxu0
        %1526 = vmatprep.mubr.bf16.mxu0 0
        %1527 = vmatmul.mubr.bf16.gmra.mxu0 %v1409
        %v1528 = vpop.f32.mrf.mxu0
        %v1529 = vadd.f32 0.0, %v1528
        %v1530 = vpop.f32.mrf.mxu0
        %v1531 = vpop.f32.mrf.mxu0
        %v1532 = vadd.f32 0.0, %v1531
        %v1533 = vpop.f32.mrf.mxu0
        %1534 = vmatprep.mubr.bf16.mxu0 0
        %1535 = vmatmul.mubr.bf16.gmra.mxu0 %v1412
        %v1536 = vpop.f32.mrf.mxu0
        %v1537 = vadd.f32 0.0, %v1536
        %v1538 = vpop.f32.mrf.mxu0
        %v1539 = vpop.f32.mrf.mxu0
        %v1540 = vadd.f32 0.0, %v1539
        %v1541 = vpop.f32.mrf.mxu0
        %1542 = vmatprep.mubr.bf16.mxu0 0
        %1543 = vmatmul.mubr.bf16.gmra.mxu0 %v1415
        %v1544 = vpop.f32.mrf.mxu0
        %v1545 = vadd.f32 0.0, %v1544
        %v1546 = vpop.f32.mrf.mxu0
        %v1547 = vpop.f32.mrf.mxu0
        %v1548 = vadd.f32 0.0, %v1547
        %v1549 = vpop.f32.mrf.mxu0
        %1550 = vmatprep.mubr.bf16.mxu0 0
        %1551 = vmatmul.mubr.bf16.gmra.mxu0 %v1418
        %v1552 = vpop.f32.mrf.mxu0
        %v1553 = vadd.f32 0.0, %v1552
        %v1554 = vpop.f32.mrf.mxu0
        %v1555 = vpop.f32.mrf.mxu0
        %v1556 = vadd.f32 0.0, %v1555
        %v1557 = vpop.f32.mrf.mxu0
        %1558 = vmatprep.mubr.bf16.mxu0 0
        %1559 = vmatmul.mubr.bf16.gmra.mxu0 %v1421
        %v1560 = vpop.f32.mrf.mxu0
        %v1561 = vadd.f32 0.0, %v1560
        %v1562 = vpop.f32.mrf.mxu0
        %v1563 = vpop.f32.mrf.mxu0
        %v1564 = vadd.f32 0.0, %v1563
        %v1565 = vpop.f32.mrf.mxu0
        %1566 = vmatprep.mubr.bf16.mxu0 0
        %1567 = vmatmul.mubr.bf16.gmra.mxu0 %v1424
        %v1568 = vpop.f32.mrf.mxu0
        %v1569 = vadd.f32 0.0, %v1568
        %v1570 = vpop.f32.mrf.mxu0
        %v1571 = vpop.f32.mrf.mxu0
        %v1572 = vadd.f32 0.0, %v1571
        %v1573 = vpop.f32.mrf.mxu0
        %1574 = vmatprep.mubr.bf16.mxu0 0
        %1575 = vmatmul.mubr.bf16.gmra.mxu0 %v1427
        %v1576 = vpop.f32.mrf.mxu0
        %v1577 = vadd.f32 0.0, %v1576
        %v1578 = vpop.f32.mrf.mxu0
        %v1579 = vpop.f32.mrf.mxu0
        %v1580 = vadd.f32 0.0, %v1579
        %v1581 = vpop.f32.mrf.mxu0
        %1582 = vmatprep.mubr.bf16.mxu0 0
        %1583 = vmatmul.mubr.bf16.gmra.mxu0 %v1430
        %v1584 = vpop.f32.mrf.mxu0
        %v1585 = vadd.f32 0.0, %v1584
        %v1586 = vpop.f32.mrf.mxu0
        %v1587 = vpop.f32.mrf.mxu0
        %v1588 = vadd.f32 0.0, %v1587
        %v1589 = vpop.f32.mrf.mxu0
        %1590 = vmatprep.mubr.bf16.mxu0 0
        %1591 = vmatmul.mubr.bf16.gmra.mxu0 %v1433
        %v1592 = vpop.f32.mrf.mxu0
        %v1593 = vadd.f32 0.0, %v1592
        %v1594 = vpop.f32.mrf.mxu0
        %v1595 = vpop.f32.mrf.mxu0
        %v1596 = vadd.f32 0.0, %v1595
        %v1597 = vpop.f32.mrf.mxu0
        %1598 = vdwg.mxu0
        %v1599 = vadd.f32 %v776, %v1473
        %v1600 = vadd.f32 %v779, %v1476
        %v1601 = vadd.f32 %v784, %v1481
        %v1602 = vadd.f32 %v787, %v1484
        %v1603 = vadd.f32 %v792, %v1489
        %v1604 = vadd.f32 %v795, %v1492
        %v1605 = vadd.f32 %v800, %v1497
        %v1606 = vadd.f32 %v803, %v1500
        %v1607 = vadd.f32 %v808, %v1505
        %v1608 = vadd.f32 %v811, %v1508
        %v1609 = vadd.f32 %v816, %v1513
        %v1610 = vadd.f32 %v819, %v1516
        %v1611 = vadd.f32 %v824, %v1521
        %v1612 = vadd.f32 %v827, %v1524
        %v1613 = vadd.f32 %v832, %v1529
        %v1614 = vadd.f32 %v835, %v1532
        %v1615 = vadd.f32 %v840, %v1537
        %v1616 = vadd.f32 %v843, %v1540
        %v1617 = vadd.f32 %v848, %v1545
        %v1618 = vadd.f32 %v851, %v1548
        %v1619 = vadd.f32 %v856, %v1553
        %v1620 = vadd.f32 %v859, %v1556
        %v1621 = vadd.f32 %v864, %v1561
        %v1622 = vadd.f32 %v867, %v1564
        %v1623 = vadd.f32 %v872, %v1569
        %v1624 = vadd.f32 %v875, %v1572
        %v1625 = vadd.f32 %v880, %v1577
        %v1626 = vadd.f32 %v883, %v1580
        %v1627 = vadd.f32 %v888, %v1585
        %v1628 = vadd.f32 %v891, %v1588
        %v1629 = vadd.f32 %v896, %v1593
        %v1630 = vadd.f32 %v899, %v1596
        %v1631 = vld [vmem:[%s281] sm:$0xf]
        %v1632 = vld [vmem:[%s281 + $0x4] sm:$0xf]
        %v1633 = vld [vmem:[%s281 + $0x8] sm:$0x1]
        %v1634 = vld [vmem:[%s281 + $0xc] sm:$0xf]
        %v1635 = vld [vmem:[%s281 + $0x10] sm:$0xf]
        %v1636 = vld [vmem:[%s281 + $0x14] sm:$0x1]
        %v1637 = vld [vmem:[%s281 + $0x18] sm:$0xf]
        %v1638 = vld [vmem:[%s281 + $0x1c] sm:$0xf]
        %v1639 = vld [vmem:[%s281 + $0x20] sm:$0x1]
        %v1640 = vld [vmem:[%s281 + $0x24] sm:$0xf]
        %v1641 = vld [vmem:[%s281 + $0x28] sm:$0xf]
        %v1642 = vld [vmem:[%s281 + $0x2c] sm:$0x1]
        %v1643 = vld [vmem:[%s281 + $0x30] sm:$0xf]
        %v1644 = vld [vmem:[%s281 + $0x34] sm:$0xf]
        %v1645 = vld [vmem:[%s281 + $0x38] sm:$0x1]
        %v1646 = vld [vmem:[%s281 + $0x3c] sm:$0xf]
        %v1647 = vld [vmem:[%s281 + $0x40] sm:$0xf]
        %v1648 = vld [vmem:[%s281 + $0x44] sm:$0x1]
        %v1649 = vld [vmem:[%s281 + $0x48] sm:$0xf]
        %v1650 = vld [vmem:[%s281 + $0x4c] sm:$0xf]
        %v1651 = vld [vmem:[%s281 + $0x50] sm:$0x1]
        %v1652 = vld [vmem:[%s281 + $0x54] sm:$0xf]
        %v1653 = vld [vmem:[%s281 + $0x58] sm:$0xf]
        %v1654 = vld [vmem:[%s281 + $0x5c] sm:$0x1]
        %v1655 = vld [vmem:[%s281 + $0x60] sm:$0xf]
        %v1656 = vld [vmem:[%s281 + $0x64] sm:$0xf]
        %v1657 = vld [vmem:[%s281 + $0x68] sm:$0x1]
        %v1658 = vld [vmem:[%s281 + $0x6c] sm:$0xf]
        %v1659 = vld [vmem:[%s281 + $0x70] sm:$0xf]
        %v1660 = vld [vmem:[%s281 + $0x74] sm:$0x1]
        %v1661 = vld [vmem:[%s281 + $0x78] sm:$0xf]
        %v1662 = vld [vmem:[%s281 + $0x7c] sm:$0xf]
        %v1663 = vld [vmem:[%s281 + $0x80] sm:$0x1]
        %v1664 = vld [vmem:[%s281 + $0x84] sm:$0xf]
        %v1665 = vld [vmem:[%s281 + $0x88] sm:$0xf]
        %v1666 = vld [vmem:[%s281 + $0x8c] sm:$0x1]
        %v1667 = vld [vmem:[%s281 + $0x90] sm:$0xf]
        %v1668 = vld [vmem:[%s281 + $0x94] sm:$0xf]
        %v1669 = vld [vmem:[%s281 + $0x98] sm:$0x1]
        %v1670 = vld [vmem:[%s281 + $0x9c] sm:$0xf]
        %v1671 = vld [vmem:[%s281 + $0xa0] sm:$0xf]
        %v1672 = vld [vmem:[%s281 + $0xa4] sm:$0x1]
        %v1673 = vld [vmem:[%s281 + $0xa8] sm:$0xf]
        %v1674 = vld [vmem:[%s281 + $0xac] sm:$0xf]
        %v1675 = vld [vmem:[%s281 + $0xb0] sm:$0x1]
        %v1676 = vld [vmem:[%s281 + $0xb4] sm:$0xf]
        %v1677 = vld [vmem:[%s281 + $0xb8] sm:$0xf]
        %v1678 = vld [vmem:[%s281 + $0xbc] sm:$0x1]
        %v1680 = vshrl.u32 %v1631, 16
        %v1682 = vrot.slane %v1680, 4
        %v1683 = vshll.u32 %v1631, 16
        %v1685 = vrot.slane %v1683, 5
        %v1686 = vor.u32 %v1682, %v1685
        %v1687 = vrot.slane %v1686, 4
        %v1689 = vshll.u32 %v1632, 16
        %v1691 = vrot.slane %v1689, 5
        %v1692 = vsel %vm952, %v1687, %v1691
        %v1693 = vshrl.u32 %v1632, 16
        %v1695 = vrot.slane %v1693, 4
        %v1696 = vor.u32 %v1695, %v1691
        %v1697 = vrot.slane %v1696, 4
        %v1699 = vshll.u32 %v1633, 16
        %v1701 = vrot.slane %v1699, 5
        %v1702 = vsel %vm952, %v1697, %v1701
        %v1704 = vshrl.u32 %v1634, 16
        %v1706 = vrot.slane %v1704, 4
        %v1707 = vshll.u32 %v1634, 16
        %v1709 = vrot.slane %v1707, 5
        %v1710 = vor.u32 %v1706, %v1709
        %v1711 = vrot.slane %v1710, 4
        %v1713 = vshll.u32 %v1635, 16
        %v1715 = vrot.slane %v1713, 5
        %v1716 = vsel %vm952, %v1711, %v1715
        %v1717 = vshrl.u32 %v1635, 16
        %v1719 = vrot.slane %v1717, 4
        %v1720 = vor.u32 %v1719, %v1715
        %v1721 = vrot.slane %v1720, 4
        %v1723 = vshll.u32 %v1636, 16
        %v1725 = vrot.slane %v1723, 5
        %v1726 = vsel %vm952, %v1721, %v1725
        %v1728 = vshrl.u32 %v1637, 16
        %v1730 = vrot.slane %v1728, 4
        %v1731 = vshll.u32 %v1637, 16
        %v1733 = vrot.slane %v1731, 5
        %v1734 = vor.u32 %v1730, %v1733
        %v1735 = vrot.slane %v1734, 4
        %v1737 = vshll.u32 %v1638, 16
        %v1739 = vrot.slane %v1737, 5
        %v1740 = vsel %vm952, %v1735, %v1739
        %v1741 = vshrl.u32 %v1638, 16
        %v1743 = vrot.slane %v1741, 4
        %v1744 = vor.u32 %v1743, %v1739
        %v1745 = vrot.slane %v1744, 4
        %v1747 = vshll.u32 %v1639, 16
        %v1749 = vrot.slane %v1747, 5
        %v1750 = vsel %vm952, %v1745, %v1749
        %v1752 = vshrl.u32 %v1640, 16
        %v1754 = vrot.slane %v1752, 4
        %v1755 = vshll.u32 %v1640, 16
        %v1757 = vrot.slane %v1755, 5
        %v1758 = vor.u32 %v1754, %v1757
        %v1759 = vrot.slane %v1758, 4
        %v1761 = vshll.u32 %v1641, 16
        %v1763 = vrot.slane %v1761, 5
        %v1764 = vsel %vm952, %v1759, %v1763
        %v1765 = vshrl.u32 %v1641, 16
        %v1767 = vrot.slane %v1765, 4
        %v1768 = vor.u32 %v1767, %v1763
        %v1769 = vrot.slane %v1768, 4
        %v1771 = vshll.u32 %v1642, 16
        %v1773 = vrot.slane %v1771, 5
        %v1774 = vsel %vm952, %v1769, %v1773
        %v1776 = vshrl.u32 %v1643, 16
        %v1778 = vrot.slane %v1776, 4
        %v1779 = vshll.u32 %v1643, 16
        %v1781 = vrot.slane %v1779, 5
        %v1782 = vor.u32 %v1778, %v1781
        %v1783 = vrot.slane %v1782, 4
        %v1785 = vshll.u32 %v1644, 16
        %v1787 = vrot.slane %v1785, 5
        %v1788 = vsel %vm952, %v1783, %v1787
        %v1789 = vshrl.u32 %v1644, 16
        %v1791 = vrot.slane %v1789, 4
        %v1792 = vor.u32 %v1791, %v1787
        %v1793 = vrot.slane %v1792, 4
        %v1795 = vshll.u32 %v1645, 16
        %v1797 = vrot.slane %v1795, 5
        %v1798 = vsel %vm952, %v1793, %v1797
        %v1800 = vshrl.u32 %v1646, 16
        %v1802 = vrot.slane %v1800, 4
        %v1803 = vshll.u32 %v1646, 16
        %v1805 = vrot.slane %v1803, 5
        %v1806 = vor.u32 %v1802, %v1805
        %v1807 = vrot.slane %v1806, 4
        %v1809 = vshll.u32 %v1647, 16
        %v1811 = vrot.slane %v1809, 5
        %v1812 = vsel %vm952, %v1807, %v1811
        %v1813 = vshrl.u32 %v1647, 16
        %v1815 = vrot.slane %v1813, 4
        %v1816 = vor.u32 %v1815, %v1811
        %v1817 = vrot.slane %v1816, 4
        %v1819 = vshll.u32 %v1648, 16
        %v1821 = vrot.slane %v1819, 5
        %v1822 = vsel %vm952, %v1817, %v1821
        %v1824 = vshrl.u32 %v1649, 16
        %v1826 = vrot.slane %v1824, 4
        %v1827 = vshll.u32 %v1649, 16
        %v1829 = vrot.slane %v1827, 5
        %v1830 = vor.u32 %v1826, %v1829
        %v1831 = vrot.slane %v1830, 4
        %v1833 = vshll.u32 %v1650, 16
        %v1835 = vrot.slane %v1833, 5
        %v1836 = vsel %vm952, %v1831, %v1835
        %v1837 = vshrl.u32 %v1650, 16
        %v1839 = vrot.slane %v1837, 4
        %v1840 = vor.u32 %v1839, %v1835
        %v1841 = vrot.slane %v1840, 4
        %v1843 = vshll.u32 %v1651, 16
        %v1845 = vrot.slane %v1843, 5
        %v1846 = vsel %vm952, %v1841, %v1845
        %v1848 = vshrl.u32 %v1652, 16
        %v1850 = vrot.slane %v1848, 4
        %v1851 = vshll.u32 %v1652, 16
        %v1853 = vrot.slane %v1851, 5
        %v1854 = vor.u32 %v1850, %v1853
        %v1855 = vrot.slane %v1854, 4
        %v1857 = vshll.u32 %v1653, 16
        %v1859 = vrot.slane %v1857, 5
        %v1860 = vsel %vm952, %v1855, %v1859
        %v1861 = vshrl.u32 %v1653, 16
        %v1863 = vrot.slane %v1861, 4
        %v1864 = vor.u32 %v1863, %v1859
        %v1865 = vrot.slane %v1864, 4
        %v1867 = vshll.u32 %v1654, 16
        %v1869 = vrot.slane %v1867, 5
        %v1870 = vsel %vm952, %v1865, %v1869
        %v1872 = vshrl.u32 %v1655, 16
        %v1874 = vrot.slane %v1872, 4
        %v1875 = vshll.u32 %v1655, 16
        %v1877 = vrot.slane %v1875, 5
        %v1878 = vor.u32 %v1874, %v1877
        %v1879 = vrot.slane %v1878, 4
        %v1881 = vshll.u32 %v1656, 16
        %v1883 = vrot.slane %v1881, 5
        %v1884 = vsel %vm952, %v1879, %v1883
        %v1885 = vshrl.u32 %v1656, 16
        %v1887 = vrot.slane %v1885, 4
        %v1888 = vor.u32 %v1887, %v1883
        %v1889 = vrot.slane %v1888, 4
        %v1891 = vshll.u32 %v1657, 16
        %v1893 = vrot.slane %v1891, 5
        %v1894 = vsel %vm952, %v1889, %v1893
        %v1896 = vshrl.u32 %v1658, 16
        %v1898 = vrot.slane %v1896, 4
        %v1899 = vshll.u32 %v1658, 16
        %v1901 = vrot.slane %v1899, 5
        %v1902 = vor.u32 %v1898, %v1901
        %v1903 = vrot.slane %v1902, 4
        %v1905 = vshll.u32 %v1659, 16
        %v1907 = vrot.slane %v1905, 5
        %v1908 = vsel %vm952, %v1903, %v1907
        %v1909 = vshrl.u32 %v1659, 16
        %v1911 = vrot.slane %v1909, 4
        %v1912 = vor.u32 %v1911, %v1907
        %v1913 = vrot.slane %v1912, 4
        %v1915 = vshll.u32 %v1660, 16
        %v1917 = vrot.slane %v1915, 5
        %v1918 = vsel %vm952, %v1913, %v1917
        %v1920 = vshrl.u32 %v1661, 16
        %v1922 = vrot.slane %v1920, 4
        %v1923 = vshll.u32 %v1661, 16
        %v1925 = vrot.slane %v1923, 5
        %v1926 = vor.u32 %v1922, %v1925
        %v1927 = vrot.slane %v1926, 4
        %v1929 = vshll.u32 %v1662, 16
        %v1931 = vrot.slane %v1929, 5
        %v1932 = vsel %vm952, %v1927, %v1931
        %v1933 = vshrl.u32 %v1662, 16
        %v1935 = vrot.slane %v1933, 4
        %v1936 = vor.u32 %v1935, %v1931
        %v1937 = vrot.slane %v1936, 4
        %v1939 = vshll.u32 %v1663, 16
        %v1941 = vrot.slane %v1939, 5
        %v1942 = vsel %vm952, %v1937, %v1941
        %v1944 = vshrl.u32 %v1664, 16
        %v1946 = vrot.slane %v1944, 4
        %v1947 = vshll.u32 %v1664, 16
        %v1949 = vrot.slane %v1947, 5
        %v1950 = vor.u32 %v1946, %v1949
        %v1951 = vrot.slane %v1950, 4
        %v1953 = vshll.u32 %v1665, 16
        %v1955 = vrot.slane %v1953, 5
        %v1956 = vsel %vm952, %v1951, %v1955
        %v1957 = vshrl.u32 %v1665, 16
        %v1959 = vrot.slane %v1957, 4
        %v1960 = vor.u32 %v1959, %v1955
        %v1961 = vrot.slane %v1960, 4
        %v1963 = vshll.u32 %v1666, 16
        %v1965 = vrot.slane %v1963, 5
        %v1966 = vsel %vm952, %v1961, %v1965
        %v1968 = vshrl.u32 %v1667, 16
        %v1970 = vrot.slane %v1968, 4
        %v1971 = vshll.u32 %v1667, 16
        %v1973 = vrot.slane %v1971, 5
        %v1974 = vor.u32 %v1970, %v1973
        %v1975 = vrot.slane %v1974, 4
        %v1977 = vshll.u32 %v1668, 16
        %v1979 = vrot.slane %v1977, 5
        %v1980 = vsel %vm952, %v1975, %v1979
        %v1981 = vshrl.u32 %v1668, 16
        %v1983 = vrot.slane %v1981, 4
        %v1984 = vor.u32 %v1983, %v1979
        %v1985 = vrot.slane %v1984, 4
        %v1987 = vshll.u32 %v1669, 16
        %v1989 = vrot.slane %v1987, 5
        %v1990 = vsel %vm952, %v1985, %v1989
        %v1992 = vshrl.u32 %v1670, 16
        %v1994 = vrot.slane %v1992, 4
        %v1995 = vshll.u32 %v1670, 16
        %v1997 = vrot.slane %v1995, 5
        %v1998 = vor.u32 %v1994, %v1997
        %v1999 = vrot.slane %v1998, 4
        %v2001 = vshll.u32 %v1671, 16
        %v2003 = vrot.slane %v2001, 5
        %v2004 = vsel %vm952, %v1999, %v2003
        %v2005 = vshrl.u32 %v1671, 16
        %v2007 = vrot.slane %v2005, 4
        %v2008 = vor.u32 %v2007, %v2003
        %v2009 = vrot.slane %v2008, 4
        %v2011 = vshll.u32 %v1672, 16
        %v2013 = vrot.slane %v2011, 5
        %v2014 = vsel %vm952, %v2009, %v2013
        %v2016 = vshrl.u32 %v1673, 16
        %v2018 = vrot.slane %v2016, 4
        %v2019 = vshll.u32 %v1673, 16
        %v2021 = vrot.slane %v2019, 5
        %v2022 = vor.u32 %v2018, %v2021
        %v2023 = vrot.slane %v2022, 4
        %v2025 = vshll.u32 %v1674, 16
        %v2027 = vrot.slane %v2025, 5
        %v2028 = vsel %vm952, %v2023, %v2027
        %v2029 = vshrl.u32 %v1674, 16
        %v2031 = vrot.slane %v2029, 4
        %v2032 = vor.u32 %v2031, %v2027
        %v2033 = vrot.slane %v2032, 4
        %v2035 = vshll.u32 %v1675, 16
        %v2037 = vrot.slane %v2035, 5
        %v2038 = vsel %vm952, %v2033, %v2037
        %v2040 = vshrl.u32 %v1676, 16
        %v2042 = vrot.slane %v2040, 4
        %v2043 = vshll.u32 %v1676, 16
        %v2045 = vrot.slane %v2043, 5
        %v2046 = vor.u32 %v2042, %v2045
        %v2047 = vrot.slane %v2046, 4
        %v2049 = vshll.u32 %v1677, 16
        %v2051 = vrot.slane %v2049, 5
        %v2052 = vsel %vm952, %v2047, %v2051
        %v2053 = vshrl.u32 %v1677, 16
        %v2055 = vrot.slane %v2053, 4
        %v2056 = vor.u32 %v2055, %v2051
        %v2057 = vrot.slane %v2056, 4
        %v2059 = vshll.u32 %v1678, 16
        %v2061 = vrot.slane %v2059, 5
        %v2062 = vsel %vm952, %v2057, %v2061
        %s2063 = scalar_lea.vmem %s1, 6
        %v2064 = vld [vmem:[%s2063] sm:$0x3]
        %v2065 = vunpack.c.l.b16 %v1692
        %v2066 = vunpack.c.l.b16 %v1702
        %v2067 = vunpack.c.l.b16 %v1716
        %v2068 = vunpack.c.l.b16 %v1726
        %v2069 = vunpack.c.l.b16 %v1740
        %v2070 = vunpack.c.l.b16 %v1750
        %v2071 = vunpack.c.l.b16 %v1764
        %v2072 = vunpack.c.l.b16 %v1774
        %v2073 = vunpack.c.l.b16 %v1788
        %v2074 = vunpack.c.l.b16 %v1798
        %v2075 = vunpack.c.l.b16 %v1812
        %v2076 = vunpack.c.l.b16 %v1822
        %v2077 = vunpack.c.l.b16 %v1836
        %v2078 = vunpack.c.l.b16 %v1846
        %v2079 = vunpack.c.l.b16 %v1860
        %v2080 = vunpack.c.l.b16 %v1870
        %v2081 = vunpack.c.l.b16 %v1884
        %v2082 = vunpack.c.l.b16 %v1894
        %v2083 = vunpack.c.l.b16 %v1908
        %v2084 = vunpack.c.l.b16 %v1918
        %v2085 = vunpack.c.l.b16 %v1932
        %v2086 = vunpack.c.l.b16 %v1942
        %v2087 = vunpack.c.l.b16 %v1956
        %v2088 = vunpack.c.l.b16 %v1966
        %v2089 = vunpack.c.l.b16 %v1980
        %v2090 = vunpack.c.l.b16 %v1990
        %v2091 = vunpack.c.l.b16 %v2004
        %v2092 = vunpack.c.l.b16 %v2014
        %v2093 = vunpack.c.l.b16 %v2028
        %v2094 = vunpack.c.l.b16 %v2038
        %v2095 = vunpack.c.l.b16 %v2052
        %v2096 = vunpack.c.l.b16 %v2062
        %v2097 = vpack.c.b16 %v2066, %v2065
        %v2098 = vpack.c.b16 %v2068, %v2067
        %v2099 = vpack.c.b16 %v2070, %v2069
        %v2100 = vpack.c.b16 %v2072, %v2071
        %v2101 = vpack.c.b16 %v2074, %v2073
        %v2102 = vpack.c.b16 %v2076, %v2075
        %v2103 = vpack.c.b16 %v2078, %v2077
        %v2104 = vpack.c.b16 %v2080, %v2079
        %v2105 = vpack.c.b16 %v2082, %v2081
        %v2106 = vpack.c.b16 %v2084, %v2083
        %v2107 = vpack.c.b16 %v2086, %v2085
        %v2108 = vpack.c.b16 %v2088, %v2087
        %v2109 = vpack.c.b16 %v2090, %v2089
        %v2110 = vpack.c.b16 %v2092, %v2091
        %v2111 = vpack.c.b16 %v2094, %v2093
        %v2112 = vpack.c.b16 %v2096, %v2095
        %v2114 = vsel %vm396, %v2097, 0
        %v2117 = vsel %vm396, %v2098, 0
        %v2120 = vsel %vm396, %v2099, 0
        %v2123 = vsel %vm396, %v2100, 0
        %v2126 = vsel %vm396, %v2101, 0
        %v2129 = vsel %vm396, %v2102, 0
        %v2132 = vsel %vm396, %v2103, 0
        %v2135 = vsel %vm396, %v2104, 0
        %v2138 = vsel %vm396, %v2105, 0
        %v2141 = vsel %vm396, %v2106, 0
        %v2144 = vsel %vm396, %v2107, 0
        %v2147 = vsel %vm396, %v2108, 0
        %v2150 = vsel %vm396, %v2109, 0
        %v2153 = vsel %vm396, %v2110, 0
        %v2156 = vsel %vm396, %v2111, 0
        %v2159 = vsel %vm396, %v2112, 0
        %v2162 = vsel %vm445, %v2064, 0
        %2164 = vmatprep.subr.bf16.mxu0 0
        %2165 = vmatpush1.bf16.msra.mxu0 0
        %2166 = vmatprep.subr.bf16.mxu0 0
        %2167 = vmatpush1.bf16.msra.mxu0 0
        %2168 = vmatprep.subr.bf16.mxu0 0
        %2169 = vmatpush1.bf16.msra.mxu0 0
        %2170 = vmatprep.subr.bf16.mxu0 0
        %2171 = vmatpush1.bf16.msra.mxu0 0
        %2172 = vmatprep.subr.bf16.mxu0 0
        %2173 = vmatpush1.bf16.msra.mxu0 0
        %2174 = vmatprep.subr.bf16.mxu0 0
        %2175 = vmatpush1.bf16.msra.mxu0 0
        %2176 = vmatprep.subr.bf16.mxu0 0
        %2177 = vmatpush1.bf16.msra.mxu0 0
        %2178 = vmatprep.subr.bf16.mxu0 0
        %2179 = vmatpush1.bf16.msra.mxu0 %v2162
        %2180 = vmatprep.subr.bf16.mxu0 0
        %2181 = vmatpush2.bf16.msra.mxu0 0
        %2182 = vmatprep.subr.bf16.mxu0 0
        %2183 = vmatpush2.bf16.msra.mxu0 0
        %2184 = vmatprep.subr.bf16.mxu0 0
        %2185 = vmatpush2.bf16.msra.mxu0 0
        %2186 = vmatprep.subr.bf16.mxu0 0
        %2187 = vmatpush2.bf16.msra.mxu0 0
        %2188 = vmatprep.subr.bf16.mxu0 0
        %2189 = vmatpush2.bf16.msra.mxu0 0
        %2190 = vmatprep.subr.bf16.mxu0 0
        %2191 = vmatpush2.bf16.msra.mxu0 0
        %2192 = vmatprep.subr.bf16.mxu0 0
        %2193 = vmatpush2.bf16.msra.mxu0 0
        %2194 = vmatprep.subr.bf16.mxu0 0
        %2195 = vmatpush2.bf16.msra.mxu0 0
        %2196 = vmatprep.mubr.bf16.mxu0 0
        %2197 = vmatmul.mubr.bf16.gmra.mxu0 %v2114
        %v2198 = vpop.f32.mrf.mxu0
        %v2199 = vadd.f32 0.0, %v2198
        %v2200 = vpop.f32.mrf.mxu0
        %v2201 = vpop.f32.mrf.mxu0
        %v2202 = vadd.f32 0.0, %v2201
        %v2203 = vpop.f32.mrf.mxu0
        %2204 = vmatprep.mubr.bf16.mxu0 0
        %2205 = vmatmul.mubr.bf16.gmra.mxu0 %v2117
        %v2206 = vpop.f32.mrf.mxu0
        %v2207 = vadd.f32 0.0, %v2206
        %v2208 = vpop.f32.mrf.mxu0
        %v2209 = vpop.f32.mrf.mxu0
        %v2210 = vadd.f32 0.0, %v2209
        %v2211 = vpop.f32.mrf.mxu0
        %2212 = vmatprep.mubr.bf16.mxu0 0
        %2213 = vmatmul.mubr.bf16.gmra.mxu0 %v2120
        %v2214 = vpop.f32.mrf.mxu0
        %v2215 = vadd.f32 0.0, %v2214
        %v2216 = vpop.f32.mrf.mxu0
        %v2217 = vpop.f32.mrf.mxu0
        %v2218 = vadd.f32 0.0, %v2217
        %v2219 = vpop.f32.mrf.mxu0
        %2220 = vmatprep.mubr.bf16.mxu0 0
        %2221 = vmatmul.mubr.bf16.gmra.mxu0 %v2123
        %v2222 = vpop.f32.mrf.mxu0
        %v2223 = vadd.f32 0.0, %v2222
        %v2224 = vpop.f32.mrf.mxu0
        %v2225 = vpop.f32.mrf.mxu0
        %v2226 = vadd.f32 0.0, %v2225
        %v2227 = vpop.f32.mrf.mxu0
        %2228 = vmatprep.mubr.bf16.mxu0 0
        %2229 = vmatmul.mubr.bf16.gmra.mxu0 %v2126
        %v2230 = vpop.f32.mrf.mxu0
        %v2231 = vadd.f32 0.0, %v2230
        %v2232 = vpop.f32.mrf.mxu0
        %v2233 = vpop.f32.mrf.mxu0
        %v2234 = vadd.f32 0.0, %v2233
        %v2235 = vpop.f32.mrf.mxu0
        %2236 = vmatprep.mubr.bf16.mxu0 0
        %2237 = vmatmul.mubr.bf16.gmra.mxu0 %v2129
        %v2238 = vpop.f32.mrf.mxu0
        %v2239 = vadd.f32 0.0, %v2238
        %v2240 = vpop.f32.mrf.mxu0
        %v2241 = vpop.f32.mrf.mxu0
        %v2242 = vadd.f32 0.0, %v2241
        %v2243 = vpop.f32.mrf.mxu0
        %2244 = vmatprep.mubr.bf16.mxu0 0
        %2245 = vmatmul.mubr.bf16.gmra.mxu0 %v2132
        %v2246 = vpop.f32.mrf.mxu0
        %v2247 = vadd.f32 0.0, %v2246
        %v2248 = vpop.f32.mrf.mxu0
        %v2249 = vpop.f32.mrf.mxu0
        %v2250 = vadd.f32 0.0, %v2249
        %v2251 = vpop.f32.mrf.mxu0
        %2252 = vmatprep.mubr.bf16.mxu0 0
        %2253 = vmatmul.mubr.bf16.gmra.mxu0 %v2135
        %v2254 = vpop.f32.mrf.mxu0
        %v2255 = vadd.f32 0.0, %v2254
        %v2256 = vpop.f32.mrf.mxu0
        %v2257 = vpop.f32.mrf.mxu0
        %v2258 = vadd.f32 0.0, %v2257
        %v2259 = vpop.f32.mrf.mxu0
        %2260 = vmatprep.mubr.bf16.mxu0 0
        %2261 = vmatmul.mubr.bf16.gmra.mxu0 %v2138
        %v2262 = vpop.f32.mrf.mxu0
        %v2263 = vadd.f32 0.0, %v2262
        %v2264 = vpop.f32.mrf.mxu0
        %v2265 = vpop.f32.mrf.mxu0
        %v2266 = vadd.f32 0.0, %v2265
        %v2267 = vpop.f32.mrf.mxu0
        %2268 = vmatprep.mubr.bf16.mxu0 0
        %2269 = vmatmul.mubr.bf16.gmra.mxu0 %v2141
        %v2270 = vpop.f32.mrf.mxu0
        %v2271 = vadd.f32 0.0, %v2270
        %v2272 = vpop.f32.mrf.mxu0
        %v2273 = vpop.f32.mrf.mxu0
        %v2274 = vadd.f32 0.0, %v2273
        %v2275 = vpop.f32.mrf.mxu0
        %2276 = vmatprep.mubr.bf16.mxu0 0
        %2277 = vmatmul.mubr.bf16.gmra.mxu0 %v2144
        %v2278 = vpop.f32.mrf.mxu0
        %v2279 = vadd.f32 0.0, %v2278
        %v2280 = vpop.f32.mrf.mxu0
        %v2281 = vpop.f32.mrf.mxu0
        %v2282 = vadd.f32 0.0, %v2281
        %v2283 = vpop.f32.mrf.mxu0
        %2284 = vmatprep.mubr.bf16.mxu0 0
        %2285 = vmatmul.mubr.bf16.gmra.mxu0 %v2147
        %v2286 = vpop.f32.mrf.mxu0
        %v2287 = vadd.f32 0.0, %v2286
        %v2288 = vpop.f32.mrf.mxu0
        %v2289 = vpop.f32.mrf.mxu0
        %v2290 = vadd.f32 0.0, %v2289
        %v2291 = vpop.f32.mrf.mxu0
        %2292 = vmatprep.mubr.bf16.mxu0 0
        %2293 = vmatmul.mubr.bf16.gmra.mxu0 %v2150
        %v2294 = vpop.f32.mrf.mxu0
        %v2295 = vadd.f32 0.0, %v2294
        %v2296 = vpop.f32.mrf.mxu0
        %v2297 = vpop.f32.mrf.mxu0
        %v2298 = vadd.f32 0.0, %v2297
        %v2299 = vpop.f32.mrf.mxu0
        %2300 = vmatprep.mubr.bf16.mxu0 0
        %2301 = vmatmul.mubr.bf16.gmra.mxu0 %v2153
        %v2302 = vpop.f32.mrf.mxu0
        %v2303 = vadd.f32 0.0, %v2302
        %v2304 = vpop.f32.mrf.mxu0
        %v2305 = vpop.f32.mrf.mxu0
        %v2306 = vadd.f32 0.0, %v2305
        %v2307 = vpop.f32.mrf.mxu0
        %2308 = vmatprep.mubr.bf16.mxu0 0
        %2309 = vmatmul.mubr.bf16.gmra.mxu0 %v2156
        %v2310 = vpop.f32.mrf.mxu0
        %v2311 = vadd.f32 0.0, %v2310
        %v2312 = vpop.f32.mrf.mxu0
        %v2313 = vpop.f32.mrf.mxu0
        %v2314 = vadd.f32 0.0, %v2313
        %v2315 = vpop.f32.mrf.mxu0
        %2316 = vmatprep.mubr.bf16.mxu0 0
        %2317 = vmatmul.mubr.bf16.gmra.mxu0 %v2159
        %v2318 = vpop.f32.mrf.mxu0
        %v2319 = vadd.f32 0.0, %v2318
        %v2320 = vpop.f32.mrf.mxu0
        %v2321 = vpop.f32.mrf.mxu0
        %v2322 = vadd.f32 0.0, %v2321
        %v2323 = vpop.f32.mrf.mxu0
        %2324 = vdwg.mxu0
        %v2325 = vadd.f32 %v1599, %v2199
        %v2326 = vadd.f32 %v1600, %v2202
        %v2327 = vadd.f32 %v1601, %v2207
        %v2328 = vadd.f32 %v1602, %v2210
        %v2329 = vadd.f32 %v1603, %v2215
        %v2330 = vadd.f32 %v1604, %v2218
        %v2331 = vadd.f32 %v1605, %v2223
        %v2332 = vadd.f32 %v1606, %v2226
        %v2333 = vadd.f32 %v1607, %v2231
        %v2334 = vadd.f32 %v1608, %v2234
        %v2335 = vadd.f32 %v1609, %v2239
        %v2336 = vadd.f32 %v1610, %v2242
        %v2337 = vadd.f32 %v1611, %v2247
        %v2338 = vadd.f32 %v1612, %v2250
        %v2339 = vadd.f32 %v1613, %v2255
        %v2340 = vadd.f32 %v1614, %v2258
        %v2341 = vadd.f32 %v1615, %v2263
        %v2342 = vadd.f32 %v1616, %v2266
        %v2343 = vadd.f32 %v1617, %v2271
        %v2344 = vadd.f32 %v1618, %v2274
        %v2345 = vadd.f32 %v1619, %v2279
        %v2346 = vadd.f32 %v1620, %v2282
        %v2347 = vadd.f32 %v1621, %v2287
        %v2348 = vadd.f32 %v1622, %v2290
        %v2349 = vadd.f32 %v1623, %v2295
        %v2350 = vadd.f32 %v1624, %v2298
        %v2351 = vadd.f32 %v1625, %v2303
        %v2352 = vadd.f32 %v1626, %v2306
        %v2353 = vadd.f32 %v1627, %v2311
        %v2354 = vadd.f32 %v1628, %v2314
        %v2355 = vadd.f32 %v1629, %v2319
        %v2356 = vadd.f32 %v1630, %v2322
        %s2357 = scalar_lea.vmem %s232, 408
        %v2358 = vld [vmem:[%s2357] sm:$0xf]
        %v2359 = vld [vmem:[%s2357 + $0x4] sm:$0xf]
        %v2360 = vld [vmem:[%s2357 + $0xc] sm:$0xf]
        %v2361 = vld [vmem:[%s2357 + $0x10] sm:$0xf]
        %v2362 = vld [vmem:[%s2357 + $0x18] sm:$0xf]
        %v2363 = vld [vmem:[%s2357 + $0x1c] sm:$0xf]
        %v2364 = vld [vmem:[%s2357 + $0x24] sm:$0xf]
        %v2365 = vld [vmem:[%s2357 + $0x28] sm:$0xf]
        %v2366 = vld [vmem:[%s2357 + $0x30] sm:$0xf]
        %v2367 = vld [vmem:[%s2357 + $0x34] sm:$0xf]
        %v2368 = vld [vmem:[%s2357 + $0x3c] sm:$0xf]
        %v2369 = vld [vmem:[%s2357 + $0x40] sm:$0xf]
        %v2370 = vld [vmem:[%s2357 + $0x48] sm:$0xf]
        %v2371 = vld [vmem:[%s2357 + $0x4c] sm:$0xf]
        %v2372 = vld [vmem:[%s2357 + $0x54] sm:$0xf]
        %v2373 = vld [vmem:[%s2357 + $0x58] sm:$0xf]
        %v2374 = vld [vmem:[%s2357 + $0x60] sm:$0xf]
        %v2375 = vld [vmem:[%s2357 + $0x64] sm:$0xf]
        %v2376 = vld [vmem:[%s2357 + $0x6c] sm:$0xf]
        %v2377 = vld [vmem:[%s2357 + $0x70] sm:$0xf]
        %v2378 = vld [vmem:[%s2357 + $0x78] sm:$0xf]
        %v2379 = vld [vmem:[%s2357 + $0x7c] sm:$0xf]
        %v2380 = vld [vmem:[%s2357 + $0x84] sm:$0xf]
        %v2381 = vld [vmem:[%s2357 + $0x88] sm:$0xf]
        %v2382 = vld [vmem:[%s2357 + $0x90] sm:$0xf]
        %v2383 = vld [vmem:[%s2357 + $0x94] sm:$0xf]
        %v2384 = vld [vmem:[%s2357 + $0x9c] sm:$0xf]
        %v2385 = vld [vmem:[%s2357 + $0xa0] sm:$0xf]
        %v2386 = vld [vmem:[%s2357 + $0xa8] sm:$0xf]
        %v2387 = vld [vmem:[%s2357 + $0xac] sm:$0xf]
        %v2388 = vld [vmem:[%s2357 + $0xb4] sm:$0xf]
        %v2389 = vld [vmem:[%s2357 + $0xb8] sm:$0xf]
        %s2390 = scalar_lea.vmem %s1, 8
        %v2391 = vld [vmem:[%s2390] sm:$0x3]
        %v2424 = vunpack.c.l.b16 %v2358
        %v2425 = vunpack.c.l.b16 %v2359
        %v2426 = vunpack.c.l.b16 %v2360
        %v2427 = vunpack.c.l.b16 %v2361
        %v2428 = vunpack.c.l.b16 %v2362
        %v2429 = vunpack.c.l.b16 %v2363
        %v2430 = vunpack.c.l.b16 %v2364
        %v2431 = vunpack.c.l.b16 %v2365
        %v2432 = vunpack.c.l.b16 %v2366
        %v2433 = vunpack.c.l.b16 %v2367
        %v2434 = vunpack.c.l.b16 %v2368
        %v2435 = vunpack.c.l.b16 %v2369
        %v2436 = vunpack.c.l.b16 %v2370
        %v2437 = vunpack.c.l.b16 %v2371
        %v2438 = vunpack.c.l.b16 %v2372
        %v2439 = vunpack.c.l.b16 %v2373
        %v2440 = vunpack.c.l.b16 %v2374
        %v2441 = vunpack.c.l.b16 %v2375
        %v2442 = vunpack.c.l.b16 %v2376
        %v2443 = vunpack.c.l.b16 %v2377
        %v2444 = vunpack.c.l.b16 %v2378
        %v2445 = vunpack.c.l.b16 %v2379
        %v2446 = vunpack.c.l.b16 %v2380
        %v2447 = vunpack.c.l.b16 %v2381
        %v2448 = vunpack.c.l.b16 %v2382
        %v2449 = vunpack.c.l.b16 %v2383
        %v2450 = vunpack.c.l.b16 %v2384
        %v2451 = vunpack.c.l.b16 %v2385
        %v2452 = vunpack.c.l.b16 %v2386
        %v2453 = vunpack.c.l.b16 %v2387
        %v2454 = vunpack.c.l.b16 %v2388
        %v2455 = vunpack.c.l.b16 %v2389
        %v2456 = vpack.c.b16 %v2425, %v2424
        %v2457 = vpack.c.b16 %v2427, %v2426
        %v2458 = vpack.c.b16 %v2429, %v2428
        %v2459 = vpack.c.b16 %v2431, %v2430
        %v2460 = vpack.c.b16 %v2433, %v2432
        %v2461 = vpack.c.b16 %v2435, %v2434
        %v2462 = vpack.c.b16 %v2437, %v2436
        %v2463 = vpack.c.b16 %v2439, %v2438
        %v2464 = vpack.c.b16 %v2441, %v2440
        %v2465 = vpack.c.b16 %v2443, %v2442
        %v2466 = vpack.c.b16 %v2445, %v2444
        %v2467 = vpack.c.b16 %v2447, %v2446
        %v2468 = vpack.c.b16 %v2449, %v2448
        %v2469 = vpack.c.b16 %v2451, %v2450
        %v2470 = vpack.c.b16 %v2453, %v2452
        %v2471 = vpack.c.b16 %v2455, %v2454
        %v2473 = vsel %vm396, %v2456, 0
        %v2476 = vsel %vm396, %v2457, 0
        %v2479 = vsel %vm396, %v2458, 0
        %v2482 = vsel %vm396, %v2459, 0
        %v2485 = vsel %vm396, %v2460, 0
        %v2488 = vsel %vm396, %v2461, 0
        %v2491 = vsel %vm396, %v2462, 0
        %v2494 = vsel %vm396, %v2463, 0
        %v2497 = vsel %vm396, %v2464, 0
        %v2500 = vsel %vm396, %v2465, 0
        %v2503 = vsel %vm396, %v2466, 0
        %v2506 = vsel %vm396, %v2467, 0
        %v2509 = vsel %vm396, %v2468, 0
        %v2512 = vsel %vm396, %v2469, 0
        %v2515 = vsel %vm396, %v2470, 0
        %v2518 = vsel %vm396, %v2471, 0
        %v2521 = vsel %vm445, %v2391, 0
        %2523 = vmatprep.subr.bf16.mxu0 0
        %2524 = vmatpush1.bf16.msra.mxu0 0
        %2525 = vmatprep.subr.bf16.mxu0 0
        %2526 = vmatpush1.bf16.msra.mxu0 0
        %2527 = vmatprep.subr.bf16.mxu0 0
        %2528 = vmatpush1.bf16.msra.mxu0 0
        %2529 = vmatprep.subr.bf16.mxu0 0
        %2530 = vmatpush1.bf16.msra.mxu0 0
        %2531 = vmatprep.subr.bf16.mxu0 0
        %2532 = vmatpush1.bf16.msra.mxu0 0
        %2533 = vmatprep.subr.bf16.mxu0 0
        %2534 = vmatpush1.bf16.msra.mxu0 0
        %2535 = vmatprep.subr.bf16.mxu0 0
        %2536 = vmatpush1.bf16.msra.mxu0 0
        %2537 = vmatprep.subr.bf16.mxu0 0
        %2538 = vmatpush1.bf16.msra.mxu0 %v2521
        %2539 = vmatprep.subr.bf16.mxu0 0
        %2540 = vmatpush2.bf16.msra.mxu0 0
        %2541 = vmatprep.subr.bf16.mxu0 0
        %2542 = vmatpush2.bf16.msra.mxu0 0
        %2543 = vmatprep.subr.bf16.mxu0 0
        %2544 = vmatpush2.bf16.msra.mxu0 0
        %2545 = vmatprep.subr.bf16.mxu0 0
        %2546 = vmatpush2.bf16.msra.mxu0 0
        %2547 = vmatprep.subr.bf16.mxu0 0
        %2548 = vmatpush2.bf16.msra.mxu0 0
        %2549 = vmatprep.subr.bf16.mxu0 0
        %2550 = vmatpush2.bf16.msra.mxu0 0
        %2551 = vmatprep.subr.bf16.mxu0 0
        %2552 = vmatpush2.bf16.msra.mxu0 0
        %2553 = vmatprep.subr.bf16.mxu0 0
        %2554 = vmatpush2.bf16.msra.mxu0 0
        %2555 = vmatprep.mubr.bf16.mxu0 0
        %2556 = vmatmul.mubr.bf16.gmra.mxu0 %v2473
        %v2557 = vpop.f32.mrf.mxu0
        %v2558 = vadd.f32 0.0, %v2557
        %v2559 = vpop.f32.mrf.mxu0
        %v2560 = vpop.f32.mrf.mxu0
        %v2561 = vadd.f32 0.0, %v2560
        %v2562 = vpop.f32.mrf.mxu0
        %2563 = vmatprep.mubr.bf16.mxu0 0
        %2564 = vmatmul.mubr.bf16.gmra.mxu0 %v2476
        %v2565 = vpop.f32.mrf.mxu0
        %v2566 = vadd.f32 0.0, %v2565
        %v2567 = vpop.f32.mrf.mxu0
        %v2568 = vpop.f32.mrf.mxu0
        %v2569 = vadd.f32 0.0, %v2568
        %v2570 = vpop.f32.mrf.mxu0
        %2571 = vmatprep.mubr.bf16.mxu0 0
        %2572 = vmatmul.mubr.bf16.gmra.mxu0 %v2479
        %v2573 = vpop.f32.mrf.mxu0
        %v2574 = vadd.f32 0.0, %v2573
        %v2575 = vpop.f32.mrf.mxu0
        %v2576 = vpop.f32.mrf.mxu0
        %v2577 = vadd.f32 0.0, %v2576
        %v2578 = vpop.f32.mrf.mxu0
        %2579 = vmatprep.mubr.bf16.mxu0 0
        %2580 = vmatmul.mubr.bf16.gmra.mxu0 %v2482
        %v2581 = vpop.f32.mrf.mxu0
        %v2582 = vadd.f32 0.0, %v2581
        %v2583 = vpop.f32.mrf.mxu0
        %v2584 = vpop.f32.mrf.mxu0
        %v2585 = vadd.f32 0.0, %v2584
        %v2586 = vpop.f32.mrf.mxu0
        %2587 = vmatprep.mubr.bf16.mxu0 0
        %2588 = vmatmul.mubr.bf16.gmra.mxu0 %v2485
        %v2589 = vpop.f32.mrf.mxu0
        %v2590 = vadd.f32 0.0, %v2589
        %v2591 = vpop.f32.mrf.mxu0
        %v2592 = vpop.f32.mrf.mxu0
        %v2593 = vadd.f32 0.0, %v2592
        %v2594 = vpop.f32.mrf.mxu0
        %2595 = vmatprep.mubr.bf16.mxu0 0
        %2596 = vmatmul.mubr.bf16.gmra.mxu0 %v2488
        %v2597 = vpop.f32.mrf.mxu0
        %v2598 = vadd.f32 0.0, %v2597
        %v2599 = vpop.f32.mrf.mxu0
        %v2600 = vpop.f32.mrf.mxu0
        %v2601 = vadd.f32 0.0, %v2600
        %v2602 = vpop.f32.mrf.mxu0
        %2603 = vmatprep.mubr.bf16.mxu0 0
        %2604 = vmatmul.mubr.bf16.gmra.mxu0 %v2491
        %v2605 = vpop.f32.mrf.mxu0
        %v2606 = vadd.f32 0.0, %v2605
        %v2607 = vpop.f32.mrf.mxu0
        %v2608 = vpop.f32.mrf.mxu0
        %v2609 = vadd.f32 0.0, %v2608
        %v2610 = vpop.f32.mrf.mxu0
        %2611 = vmatprep.mubr.bf16.mxu0 0
        %2612 = vmatmul.mubr.bf16.gmra.mxu0 %v2494
        %v2613 = vpop.f32.mrf.mxu0
        %v2614 = vadd.f32 0.0, %v2613
        %v2615 = vpop.f32.mrf.mxu0
        %v2616 = vpop.f32.mrf.mxu0
        %v2617 = vadd.f32 0.0, %v2616
        %v2618 = vpop.f32.mrf.mxu0
        %2619 = vmatprep.mubr.bf16.mxu0 0
        %2620 = vmatmul.mubr.bf16.gmra.mxu0 %v2497
        %v2621 = vpop.f32.mrf.mxu0
        %v2622 = vadd.f32 0.0, %v2621
        %v2623 = vpop.f32.mrf.mxu0
        %v2624 = vpop.f32.mrf.mxu0
        %v2625 = vadd.f32 0.0, %v2624
        %v2626 = vpop.f32.mrf.mxu0
        %2627 = vmatprep.mubr.bf16.mxu0 0
        %2628 = vmatmul.mubr.bf16.gmra.mxu0 %v2500
        %v2629 = vpop.f32.mrf.mxu0
        %v2630 = vadd.f32 0.0, %v2629
        %v2631 = vpop.f32.mrf.mxu0
        %v2632 = vpop.f32.mrf.mxu0
        %v2633 = vadd.f32 0.0, %v2632
        %v2634 = vpop.f32.mrf.mxu0
        %2635 = vmatprep.mubr.bf16.mxu0 0
        %2636 = vmatmul.mubr.bf16.gmra.mxu0 %v2503
        %v2637 = vpop.f32.mrf.mxu0
        %v2638 = vadd.f32 0.0, %v2637
        %v2639 = vpop.f32.mrf.mxu0
        %v2640 = vpop.f32.mrf.mxu0
        %v2641 = vadd.f32 0.0, %v2640
        %v2642 = vpop.f32.mrf.mxu0
        %2643 = vmatprep.mubr.bf16.mxu0 0
        %2644 = vmatmul.mubr.bf16.gmra.mxu0 %v2506
        %v2645 = vpop.f32.mrf.mxu0
        %v2646 = vadd.f32 0.0, %v2645
        %v2647 = vpop.f32.mrf.mxu0
        %v2648 = vpop.f32.mrf.mxu0
        %v2649 = vadd.f32 0.0, %v2648
        %v2650 = vpop.f32.mrf.mxu0
        %2651 = vmatprep.mubr.bf16.mxu0 0
        %2652 = vmatmul.mubr.bf16.gmra.mxu0 %v2509
        %v2653 = vpop.f32.mrf.mxu0
        %v2654 = vadd.f32 0.0, %v2653
        %v2655 = vpop.f32.mrf.mxu0
        %v2656 = vpop.f32.mrf.mxu0
        %v2657 = vadd.f32 0.0, %v2656
        %v2658 = vpop.f32.mrf.mxu0
        %2659 = vmatprep.mubr.bf16.mxu0 0
        %2660 = vmatmul.mubr.bf16.gmra.mxu0 %v2512
        %v2661 = vpop.f32.mrf.mxu0
        %v2662 = vadd.f32 0.0, %v2661
        %v2663 = vpop.f32.mrf.mxu0
        %v2664 = vpop.f32.mrf.mxu0
        %v2665 = vadd.f32 0.0, %v2664
        %v2666 = vpop.f32.mrf.mxu0
        %2667 = vmatprep.mubr.bf16.mxu0 0
        %2668 = vmatmul.mubr.bf16.gmra.mxu0 %v2515
        %v2669 = vpop.f32.mrf.mxu0
        %v2670 = vadd.f32 0.0, %v2669
        %v2671 = vpop.f32.mrf.mxu0
        %v2672 = vpop.f32.mrf.mxu0
        %v2673 = vadd.f32 0.0, %v2672
        %v2674 = vpop.f32.mrf.mxu0
        %2675 = vmatprep.mubr.bf16.mxu0 0
        %2676 = vmatmul.mubr.bf16.gmra.mxu0 %v2518
        %v2677 = vpop.f32.mrf.mxu0
        %v2678 = vadd.f32 0.0, %v2677
        %v2679 = vpop.f32.mrf.mxu0
        %v2680 = vpop.f32.mrf.mxu0
        %v2681 = vadd.f32 0.0, %v2680
        %v2682 = vpop.f32.mrf.mxu0
        %2683 = vdwg.mxu0
        %v2684 = vadd.f32 %v2325, %v2558
        %v2685 = vadd.f32 %v2326, %v2561
        %v2686 = vadd.f32 %v2327, %v2566
        %v2687 = vadd.f32 %v2328, %v2569
        %v2688 = vadd.f32 %v2329, %v2574
        %v2689 = vadd.f32 %v2330, %v2577
        %v2690 = vadd.f32 %v2331, %v2582
        %v2691 = vadd.f32 %v2332, %v2585
        %v2692 = vadd.f32 %v2333, %v2590
        %v2693 = vadd.f32 %v2334, %v2593
        %v2694 = vadd.f32 %v2335, %v2598
        %v2695 = vadd.f32 %v2336, %v2601
        %v2696 = vadd.f32 %v2337, %v2606
        %v2697 = vadd.f32 %v2338, %v2609
        %v2698 = vadd.f32 %v2339, %v2614
        %v2699 = vadd.f32 %v2340, %v2617
        %v2700 = vadd.f32 %v2341, %v2622
        %v2701 = vadd.f32 %v2342, %v2625
        %v2702 = vadd.f32 %v2343, %v2630
        %v2703 = vadd.f32 %v2344, %v2633
        %v2704 = vadd.f32 %v2345, %v2638
        %v2705 = vadd.f32 %v2346, %v2641
        %v2706 = vadd.f32 %v2347, %v2646
        %v2707 = vadd.f32 %v2348, %v2649
        %v2708 = vadd.f32 %v2349, %v2654
        %v2709 = vadd.f32 %v2350, %v2657
        %v2710 = vadd.f32 %v2351, %v2662
        %v2711 = vadd.f32 %v2352, %v2665
        %v2712 = vadd.f32 %v2353, %v2670
        %v2713 = vadd.f32 %v2354, %v2673
        %v2714 = vadd.f32 %v2355, %v2678
        %v2715 = vadd.f32 %v2356, %v2681
        %s2716 = scalar_lea.vmem %s232, 612
        %v2717 = vld [vmem:[%s2716] sm:$0xf]
        %v2718 = vld [vmem:[%s2716 + $0x4] sm:$0xf]
        %v2719 = vld [vmem:[%s2716 + $0xc] sm:$0xf]
        %v2720 = vld [vmem:[%s2716 + $0x10] sm:$0xf]
        %v2721 = vld [vmem:[%s2716 + $0x18] sm:$0xf]
        %v2722 = vld [vmem:[%s2716 + $0x1c] sm:$0xf]
        %v2723 = vld [vmem:[%s2716 + $0x24] sm:$0xf]
        %v2724 = vld [vmem:[%s2716 + $0x28] sm:$0xf]
        %v2725 = vld [vmem:[%s2716 + $0x30] sm:$0xf]
        %v2726 = vld [vmem:[%s2716 + $0x34] sm:$0xf]
        %v2727 = vld [vmem:[%s2716 + $0x3c] sm:$0xf]
        %v2728 = vld [vmem:[%s2716 + $0x40] sm:$0xf]
        %v2729 = vld [vmem:[%s2716 + $0x48] sm:$0xf]
        %v2730 = vld [vmem:[%s2716 + $0x4c] sm:$0xf]
        %v2731 = vld [vmem:[%s2716 + $0x54] sm:$0xf]
        %v2732 = vld [vmem:[%s2716 + $0x58] sm:$0xf]
        %v2733 = vld [vmem:[%s2716 + $0x60] sm:$0xf]
        %v2734 = vld [vmem:[%s2716 + $0x64] sm:$0xf]
        %v2735 = vld [vmem:[%s2716 + $0x6c] sm:$0xf]
        %v2736 = vld [vmem:[%s2716 + $0x70] sm:$0xf]
        %v2737 = vld [vmem:[%s2716 + $0x78] sm:$0xf]
        %v2738 = vld [vmem:[%s2716 + $0x7c] sm:$0xf]
        %v2739 = vld [vmem:[%s2716 + $0x84] sm:$0xf]
        %v2740 = vld [vmem:[%s2716 + $0x88] sm:$0xf]
        %v2741 = vld [vmem:[%s2716 + $0x90] sm:$0xf]
        %v2742 = vld [vmem:[%s2716 + $0x94] sm:$0xf]
        %v2743 = vld [vmem:[%s2716 + $0x9c] sm:$0xf]
        %v2744 = vld [vmem:[%s2716 + $0xa0] sm:$0xf]
        %v2745 = vld [vmem:[%s2716 + $0xa8] sm:$0xf]
        %v2746 = vld [vmem:[%s2716 + $0xac] sm:$0xf]
        %v2747 = vld [vmem:[%s2716 + $0xb4] sm:$0xf]
        %v2748 = vld [vmem:[%s2716 + $0xb8] sm:$0xf]
        %s2749 = scalar_lea.vmem %s1, 10
        %v2750 = vld [vmem:[%s2749] sm:$0x3]
        %v2783 = vunpack.c.l.b16 %v2717
        %v2784 = vunpack.c.l.b16 %v2718
        %v2785 = vunpack.c.l.b16 %v2719
        %v2786 = vunpack.c.l.b16 %v2720
        %v2787 = vunpack.c.l.b16 %v2721
        %v2788 = vunpack.c.l.b16 %v2722
        %v2789 = vunpack.c.l.b16 %v2723
        %v2790 = vunpack.c.l.b16 %v2724
        %v2791 = vunpack.c.l.b16 %v2725
        %v2792 = vunpack.c.l.b16 %v2726
        %v2793 = vunpack.c.l.b16 %v2727
        %v2794 = vunpack.c.l.b16 %v2728
        %v2795 = vunpack.c.l.b16 %v2729
        %v2796 = vunpack.c.l.b16 %v2730
        %v2797 = vunpack.c.l.b16 %v2731
        %v2798 = vunpack.c.l.b16 %v2732
        %v2799 = vunpack.c.l.b16 %v2733
        %v2800 = vunpack.c.l.b16 %v2734
        %v2801 = vunpack.c.l.b16 %v2735
        %v2802 = vunpack.c.l.b16 %v2736
        %v2803 = vunpack.c.l.b16 %v2737
        %v2804 = vunpack.c.l.b16 %v2738
        %v2805 = vunpack.c.l.b16 %v2739
        %v2806 = vunpack.c.l.b16 %v2740
        %v2807 = vunpack.c.l.b16 %v2741
        %v2808 = vunpack.c.l.b16 %v2742
        %v2809 = vunpack.c.l.b16 %v2743
        %v2810 = vunpack.c.l.b16 %v2744
        %v2811 = vunpack.c.l.b16 %v2745
        %v2812 = vunpack.c.l.b16 %v2746
        %v2813 = vunpack.c.l.b16 %v2747
        %v2814 = vunpack.c.l.b16 %v2748
        %v2815 = vpack.c.b16 %v2784, %v2783
        %v2816 = vpack.c.b16 %v2786, %v2785
        %v2817 = vpack.c.b16 %v2788, %v2787
        %v2818 = vpack.c.b16 %v2790, %v2789
        %v2819 = vpack.c.b16 %v2792, %v2791
        %v2820 = vpack.c.b16 %v2794, %v2793
        %v2821 = vpack.c.b16 %v2796, %v2795
        %v2822 = vpack.c.b16 %v2798, %v2797
        %v2823 = vpack.c.b16 %v2800, %v2799
        %v2824 = vpack.c.b16 %v2802, %v2801
        %v2825 = vpack.c.b16 %v2804, %v2803
        %v2826 = vpack.c.b16 %v2806, %v2805
        %v2827 = vpack.c.b16 %v2808, %v2807
        %v2828 = vpack.c.b16 %v2810, %v2809
        %v2829 = vpack.c.b16 %v2812, %v2811
        %v2830 = vpack.c.b16 %v2814, %v2813
        %v2832 = vsel %vm396, %v2815, 0
        %v2835 = vsel %vm396, %v2816, 0
        %v2838 = vsel %vm396, %v2817, 0
        %v2841 = vsel %vm396, %v2818, 0
        %v2844 = vsel %vm396, %v2819, 0
        %v2847 = vsel %vm396, %v2820, 0
        %v2850 = vsel %vm396, %v2821, 0
        %v2853 = vsel %vm396, %v2822, 0
        %v2856 = vsel %vm396, %v2823, 0
        %v2859 = vsel %vm396, %v2824, 0
        %v2862 = vsel %vm396, %v2825, 0
        %v2865 = vsel %vm396, %v2826, 0
        %v2868 = vsel %vm396, %v2827, 0
        %v2871 = vsel %vm396, %v2828, 0
        %v2874 = vsel %vm396, %v2829, 0
        %v2877 = vsel %vm396, %v2830, 0
        %v2880 = vsel %vm445, %v2750, 0
        %2882 = vmatprep.subr.bf16.mxu0 0
        %2883 = vmatpush1.bf16.msra.mxu0 0
        %2884 = vmatprep.subr.bf16.mxu0 0
        %2885 = vmatpush1.bf16.msra.mxu0 0
        %2886 = vmatprep.subr.bf16.mxu0 0
        %2887 = vmatpush1.bf16.msra.mxu0 0
        %2888 = vmatprep.subr.bf16.mxu0 0
        %2889 = vmatpush1.bf16.msra.mxu0 0
        %2890 = vmatprep.subr.bf16.mxu0 0
        %2891 = vmatpush1.bf16.msra.mxu0 0
        %2892 = vmatprep.subr.bf16.mxu0 0
        %2893 = vmatpush1.bf16.msra.mxu0 0
        %2894 = vmatprep.subr.bf16.mxu0 0
        %2895 = vmatpush1.bf16.msra.mxu0 0
        %2896 = vmatprep.subr.bf16.mxu0 0
        %2897 = vmatpush1.bf16.msra.mxu0 %v2880
        %2898 = vmatprep.subr.bf16.mxu0 0
        %2899 = vmatpush2.bf16.msra.mxu0 0
        %2900 = vmatprep.subr.bf16.mxu0 0
        %2901 = vmatpush2.bf16.msra.mxu0 0
        %2902 = vmatprep.subr.bf16.mxu0 0
        %2903 = vmatpush2.bf16.msra.mxu0 0
        %2904 = vmatprep.subr.bf16.mxu0 0
        %2905 = vmatpush2.bf16.msra.mxu0 0
        %2906 = vmatprep.subr.bf16.mxu0 0
        %2907 = vmatpush2.bf16.msra.mxu0 0
        %2908 = vmatprep.subr.bf16.mxu0 0
        %2909 = vmatpush2.bf16.msra.mxu0 0
        %2910 = vmatprep.subr.bf16.mxu0 0
        %2911 = vmatpush2.bf16.msra.mxu0 0
        %2912 = vmatprep.subr.bf16.mxu0 0
        %2913 = vmatpush2.bf16.msra.mxu0 0
        %2914 = vmatprep.mubr.bf16.mxu0 0
        %2915 = vmatmul.mubr.bf16.gmra.mxu0 %v2832
        %v2916 = vpop.f32.mrf.mxu0
        %v2917 = vadd.f32 0.0, %v2916
        %v2918 = vpop.f32.mrf.mxu0
        %v2919 = vpop.f32.mrf.mxu0
        %v2920 = vadd.f32 0.0, %v2919
        %v2921 = vpop.f32.mrf.mxu0
        %2922 = vmatprep.mubr.bf16.mxu0 0
        %2923 = vmatmul.mubr.bf16.gmra.mxu0 %v2835
        %v2924 = vpop.f32.mrf.mxu0
        %v2925 = vadd.f32 0.0, %v2924
        %v2926 = vpop.f32.mrf.mxu0
        %v2927 = vpop.f32.mrf.mxu0
        %v2928 = vadd.f32 0.0, %v2927
        %v2929 = vpop.f32.mrf.mxu0
        %2930 = vmatprep.mubr.bf16.mxu0 0
        %2931 = vmatmul.mubr.bf16.gmra.mxu0 %v2838
        %v2932 = vpop.f32.mrf.mxu0
        %v2933 = vadd.f32 0.0, %v2932
        %v2934 = vpop.f32.mrf.mxu0
        %v2935 = vpop.f32.mrf.mxu0
        %v2936 = vadd.f32 0.0, %v2935
        %v2937 = vpop.f32.mrf.mxu0
        %2938 = vmatprep.mubr.bf16.mxu0 0
        %2939 = vmatmul.mubr.bf16.gmra.mxu0 %v2841
        %v2940 = vpop.f32.mrf.mxu0
        %v2941 = vadd.f32 0.0, %v2940
        %v2942 = vpop.f32.mrf.mxu0
        %v2943 = vpop.f32.mrf.mxu0
        %v2944 = vadd.f32 0.0, %v2943
        %v2945 = vpop.f32.mrf.mxu0
        %2946 = vmatprep.mubr.bf16.mxu0 0
        %2947 = vmatmul.mubr.bf16.gmra.mxu0 %v2844
        %v2948 = vpop.f32.mrf.mxu0
        %v2949 = vadd.f32 0.0, %v2948
        %v2950 = vpop.f32.mrf.mxu0
        %v2951 = vpop.f32.mrf.mxu0
        %v2952 = vadd.f32 0.0, %v2951
        %v2953 = vpop.f32.mrf.mxu0
        %2954 = vmatprep.mubr.bf16.mxu0 0
        %2955 = vmatmul.mubr.bf16.gmra.mxu0 %v2847
        %v2956 = vpop.f32.mrf.mxu0
        %v2957 = vadd.f32 0.0, %v2956
        %v2958 = vpop.f32.mrf.mxu0
        %v2959 = vpop.f32.mrf.mxu0
        %v2960 = vadd.f32 0.0, %v2959
        %v2961 = vpop.f32.mrf.mxu0
        %2962 = vmatprep.mubr.bf16.mxu0 0
        %2963 = vmatmul.mubr.bf16.gmra.mxu0 %v2850
        %v2964 = vpop.f32.mrf.mxu0
        %v2965 = vadd.f32 0.0, %v2964
        %v2966 = vpop.f32.mrf.mxu0
        %v2967 = vpop.f32.mrf.mxu0
        %v2968 = vadd.f32 0.0, %v2967
        %v2969 = vpop.f32.mrf.mxu0
        %2970 = vmatprep.mubr.bf16.mxu0 0
        %2971 = vmatmul.mubr.bf16.gmra.mxu0 %v2853
        %v2972 = vpop.f32.mrf.mxu0
        %v2973 = vadd.f32 0.0, %v2972
        %v2974 = vpop.f32.mrf.mxu0
        %v2975 = vpop.f32.mrf.mxu0
        %v2976 = vadd.f32 0.0, %v2975
        %v2977 = vpop.f32.mrf.mxu0
        %2978 = vmatprep.mubr.bf16.mxu0 0
        %2979 = vmatmul.mubr.bf16.gmra.mxu0 %v2856
        %v2980 = vpop.f32.mrf.mxu0
        %v2981 = vadd.f32 0.0, %v2980
        %v2982 = vpop.f32.mrf.mxu0
        %v2983 = vpop.f32.mrf.mxu0
        %v2984 = vadd.f32 0.0, %v2983
        %v2985 = vpop.f32.mrf.mxu0
        %2986 = vmatprep.mubr.bf16.mxu0 0
        %2987 = vmatmul.mubr.bf16.gmra.mxu0 %v2859
        %v2988 = vpop.f32.mrf.mxu0
        %v2989 = vadd.f32 0.0, %v2988
        %v2990 = vpop.f32.mrf.mxu0
        %v2991 = vpop.f32.mrf.mxu0
        %v2992 = vadd.f32 0.0, %v2991
        %v2993 = vpop.f32.mrf.mxu0
        %2994 = vmatprep.mubr.bf16.mxu0 0
        %2995 = vmatmul.mubr.bf16.gmra.mxu0 %v2862
        %v2996 = vpop.f32.mrf.mxu0
        %v2997 = vadd.f32 0.0, %v2996
        %v2998 = vpop.f32.mrf.mxu0
        %v2999 = vpop.f32.mrf.mxu0
        %v3000 = vadd.f32 0.0, %v2999
        %v3001 = vpop.f32.mrf.mxu0
        %3002 = vmatprep.mubr.bf16.mxu0 0
        %3003 = vmatmul.mubr.bf16.gmra.mxu0 %v2865
        %v3004 = vpop.f32.mrf.mxu0
        %v3005 = vadd.f32 0.0, %v3004
        %v3006 = vpop.f32.mrf.mxu0
        %v3007 = vpop.f32.mrf.mxu0
        %v3008 = vadd.f32 0.0, %v3007
        %v3009 = vpop.f32.mrf.mxu0
        %3010 = vmatprep.mubr.bf16.mxu0 0
        %3011 = vmatmul.mubr.bf16.gmra.mxu0 %v2868
        %v3012 = vpop.f32.mrf.mxu0
        %v3013 = vadd.f32 0.0, %v3012
        %v3014 = vpop.f32.mrf.mxu0
        %v3015 = vpop.f32.mrf.mxu0
        %v3016 = vadd.f32 0.0, %v3015
        %v3017 = vpop.f32.mrf.mxu0
        %3018 = vmatprep.mubr.bf16.mxu0 0
        %3019 = vmatmul.mubr.bf16.gmra.mxu0 %v2871
        %v3020 = vpop.f32.mrf.mxu0
        %v3021 = vadd.f32 0.0, %v3020
        %v3022 = vpop.f32.mrf.mxu0
        %v3023 = vpop.f32.mrf.mxu0
        %v3024 = vadd.f32 0.0, %v3023
        %v3025 = vpop.f32.mrf.mxu0
        %3026 = vmatprep.mubr.bf16.mxu0 0
        %3027 = vmatmul.mubr.bf16.gmra.mxu0 %v2874
        %v3028 = vpop.f32.mrf.mxu0
        %v3029 = vadd.f32 0.0, %v3028
        %v3030 = vpop.f32.mrf.mxu0
        %v3031 = vpop.f32.mrf.mxu0
        %v3032 = vadd.f32 0.0, %v3031
        %v3033 = vpop.f32.mrf.mxu0
        %3034 = vmatprep.mubr.bf16.mxu0 0
        %3035 = vmatmul.mubr.bf16.gmra.mxu0 %v2877
        %v3036 = vpop.f32.mrf.mxu0
        %v3037 = vadd.f32 0.0, %v3036
        %v3038 = vpop.f32.mrf.mxu0
        %v3039 = vpop.f32.mrf.mxu0
        %v3040 = vadd.f32 0.0, %v3039
        %v3041 = vpop.f32.mrf.mxu0
        %3042 = vdwg.mxu0
        %v3043 = vadd.f32 %v2684, %v2917
        %v3044 = vadd.f32 %v2685, %v2920
        %v3045 = vadd.f32 %v2686, %v2925
        %v3046 = vadd.f32 %v2687, %v2928
        %v3047 = vadd.f32 %v2688, %v2933
        %v3048 = vadd.f32 %v2689, %v2936
        %v3049 = vadd.f32 %v2690, %v2941
        %v3050 = vadd.f32 %v2691, %v2944
        %v3051 = vadd.f32 %v2692, %v2949
        %v3052 = vadd.f32 %v2693, %v2952
        %v3053 = vadd.f32 %v2694, %v2957
        %v3054 = vadd.f32 %v2695, %v2960
        %v3055 = vadd.f32 %v2696, %v2965
        %v3056 = vadd.f32 %v2697, %v2968
        %v3057 = vadd.f32 %v2698, %v2973
        %v3058 = vadd.f32 %v2699, %v2976
        %v3059 = vadd.f32 %v2700, %v2981
        %v3060 = vadd.f32 %v2701, %v2984
        %v3061 = vadd.f32 %v2702, %v2989
        %v3062 = vadd.f32 %v2703, %v2992
        %v3063 = vadd.f32 %v2704, %v2997
        %v3064 = vadd.f32 %v2705, %v3000
        %v3065 = vadd.f32 %v2706, %v3005
        %v3066 = vadd.f32 %v2707, %v3008
        %v3067 = vadd.f32 %v2708, %v3013
        %v3068 = vadd.f32 %v2709, %v3016
        %v3069 = vadd.f32 %v2710, %v3021
        %v3070 = vadd.f32 %v2711, %v3024
        %v3071 = vadd.f32 %v2712, %v3029
        %v3072 = vadd.f32 %v2713, %v3032
        %v3073 = vadd.f32 %v2714, %v3037
        %v3074 = vadd.f32 %v2715, %v3040
        %v3075 = vld [vmem:[%s2357] sm:$0xf]
        %v3076 = vld [vmem:[%s2357 + $0x4] sm:$0xf]
        %v3077 = vld [vmem:[%s2357 + $0x8] sm:$0x1]
        %v3078 = vld [vmem:[%s2357 + $0xc] sm:$0xf]
        %v3079 = vld [vmem:[%s2357 + $0x10] sm:$0xf]
        %v3080 = vld [vmem:[%s2357 + $0x14] sm:$0x1]
        %v3081 = vld [vmem:[%s2357 + $0x18] sm:$0xf]
        %v3082 = vld [vmem:[%s2357 + $0x1c] sm:$0xf]
        %v3083 = vld [vmem:[%s2357 + $0x20] sm:$0x1]
        %v3084 = vld [vmem:[%s2357 + $0x24] sm:$0xf]
        %v3085 = vld [vmem:[%s2357 + $0x28] sm:$0xf]
        %v3086 = vld [vmem:[%s2357 + $0x2c] sm:$0x1]
        %v3087 = vld [vmem:[%s2357 + $0x30] sm:$0xf]
        %v3088 = vld [vmem:[%s2357 + $0x34] sm:$0xf]
        %v3089 = vld [vmem:[%s2357 + $0x38] sm:$0x1]
        %v3090 = vld [vmem:[%s2357 + $0x3c] sm:$0xf]
        %v3091 = vld [vmem:[%s2357 + $0x40] sm:$0xf]
        %v3092 = vld [vmem:[%s2357 + $0x44] sm:$0x1]
        %v3093 = vld [vmem:[%s2357 + $0x48] sm:$0xf]
        %v3094 = vld [vmem:[%s2357 + $0x4c] sm:$0xf]
        %v3095 = vld [vmem:[%s2357 + $0x50] sm:$0x1]
        %v3096 = vld [vmem:[%s2357 + $0x54] sm:$0xf]
        %v3097 = vld [vmem:[%s2357 + $0x58] sm:$0xf]
        %v3098 = vld [vmem:[%s2357 + $0x5c] sm:$0x1]
        %v3099 = vld [vmem:[%s2357 + $0x60] sm:$0xf]
        %v3100 = vld [vmem:[%s2357 + $0x64] sm:$0xf]
        %v3101 = vld [vmem:[%s2357 + $0x68] sm:$0x1]
        %v3102 = vld [vmem:[%s2357 + $0x6c] sm:$0xf]
        %v3103 = vld [vmem:[%s2357 + $0x70] sm:$0xf]
        %v3104 = vld [vmem:[%s2357 + $0x74] sm:$0x1]
        %v3105 = vld [vmem:[%s2357 + $0x78] sm:$0xf]
        %v3106 = vld [vmem:[%s2357 + $0x7c] sm:$0xf]
        %v3107 = vld [vmem:[%s2357 + $0x80] sm:$0x1]
        %v3108 = vld [vmem:[%s2357 + $0x84] sm:$0xf]
        %v3109 = vld [vmem:[%s2357 + $0x88] sm:$0xf]
        %v3110 = vld [vmem:[%s2357 + $0x8c] sm:$0x1]
        %v3111 = vld [vmem:[%s2357 + $0x90] sm:$0xf]
        %v3112 = vld [vmem:[%s2357 + $0x94] sm:$0xf]
        %v3113 = vld [vmem:[%s2357 + $0x98] sm:$0x1]
        %v3114 = vld [vmem:[%s2357 + $0x9c] sm:$0xf]
        %v3115 = vld [vmem:[%s2357 + $0xa0] sm:$0xf]
        %v3116 = vld [vmem:[%s2357 + $0xa4] sm:$0x1]
        %v3117 = vld [vmem:[%s2357 + $0xa8] sm:$0xf]
        %v3118 = vld [vmem:[%s2357 + $0xac] sm:$0xf]
        %v3119 = vld [vmem:[%s2357 + $0xb0] sm:$0x1]
        %v3120 = vld [vmem:[%s2357 + $0xb4] sm:$0xf]
        %v3121 = vld [vmem:[%s2357 + $0xb8] sm:$0xf]
        %v3122 = vld [vmem:[%s2357 + $0xbc] sm:$0x1]
        %v3124 = vshrl.u32 %v3075, 16
        %v3126 = vrot.slane %v3124, 4
        %v3127 = vshll.u32 %v3075, 16
        %v3129 = vrot.slane %v3127, 5
        %v3130 = vor.u32 %v3126, %v3129
        %v3131 = vrot.slane %v3130, 4
        %v3133 = vshll.u32 %v3076, 16
        %v3135 = vrot.slane %v3133, 5
        %v3136 = vsel %vm952, %v3131, %v3135
        %v3137 = vshrl.u32 %v3076, 16
        %v3139 = vrot.slane %v3137, 4
        %v3140 = vor.u32 %v3139, %v3135
        %v3141 = vrot.slane %v3140, 4
        %v3143 = vshll.u32 %v3077, 16
        %v3145 = vrot.slane %v3143, 5
        %v3146 = vsel %vm952, %v3141, %v3145
        %v3148 = vshrl.u32 %v3078, 16
        %v3150 = vrot.slane %v3148, 4
        %v3151 = vshll.u32 %v3078, 16
        %v3153 = vrot.slane %v3151, 5
        %v3154 = vor.u32 %v3150, %v3153
        %v3155 = vrot.slane %v3154, 4
        %v3157 = vshll.u32 %v3079, 16
        %v3159 = vrot.slane %v3157, 5
        %v3160 = vsel %vm952, %v3155, %v3159
        %v3161 = vshrl.u32 %v3079, 16
        %v3163 = vrot.slane %v3161, 4
        %v3164 = vor.u32 %v3163, %v3159
        %v3165 = vrot.slane %v3164, 4
        %v3167 = vshll.u32 %v3080, 16
        %v3169 = vrot.slane %v3167, 5
        %v3170 = vsel %vm952, %v3165, %v3169
        %v3172 = vshrl.u32 %v3081, 16
        %v3174 = vrot.slane %v3172, 4
        %v3175 = vshll.u32 %v3081, 16
        %v3177 = vrot.slane %v3175, 5
        %v3178 = vor.u32 %v3174, %v3177
        %v3179 = vrot.slane %v3178, 4
        %v3181 = vshll.u32 %v3082, 16
        %v3183 = vrot.slane %v3181, 5
        %v3184 = vsel %vm952, %v3179, %v3183
        %v3185 = vshrl.u32 %v3082, 16
        %v3187 = vrot.slane %v3185, 4
        %v3188 = vor.u32 %v3187, %v3183
        %v3189 = vrot.slane %v3188, 4
        %v3191 = vshll.u32 %v3083, 16
        %v3193 = vrot.slane %v3191, 5
        %v3194 = vsel %vm952, %v3189, %v3193
        %v3196 = vshrl.u32 %v3084, 16
        %v3198 = vrot.slane %v3196, 4
        %v3199 = vshll.u32 %v3084, 16
        %v3201 = vrot.slane %v3199, 5
        %v3202 = vor.u32 %v3198, %v3201
        %v3203 = vrot.slane %v3202, 4
        %v3205 = vshll.u32 %v3085, 16
        %v3207 = vrot.slane %v3205, 5
        %v3208 = vsel %vm952, %v3203, %v3207
        %v3209 = vshrl.u32 %v3085, 16
        %v3211 = vrot.slane %v3209, 4
        %v3212 = vor.u32 %v3211, %v3207
        %v3213 = vrot.slane %v3212, 4
        %v3215 = vshll.u32 %v3086, 16
        %v3217 = vrot.slane %v3215, 5
        %v3218 = vsel %vm952, %v3213, %v3217
        %v3220 = vshrl.u32 %v3087, 16
        %v3222 = vrot.slane %v3220, 4
        %v3223 = vshll.u32 %v3087, 16
        %v3225 = vrot.slane %v3223, 5
        %v3226 = vor.u32 %v3222, %v3225
        %v3227 = vrot.slane %v3226, 4
        %v3229 = vshll.u32 %v3088, 16
        %v3231 = vrot.slane %v3229, 5
        %v3232 = vsel %vm952, %v3227, %v3231
        %v3233 = vshrl.u32 %v3088, 16
        %v3235 = vrot.slane %v3233, 4
        %v3236 = vor.u32 %v3235, %v3231
        %v3237 = vrot.slane %v3236, 4
        %v3239 = vshll.u32 %v3089, 16
        %v3241 = vrot.slane %v3239, 5
        %v3242 = vsel %vm952, %v3237, %v3241
        %v3244 = vshrl.u32 %v3090, 16
        %v3246 = vrot.slane %v3244, 4
        %v3247 = vshll.u32 %v3090, 16
        %v3249 = vrot.slane %v3247, 5
        %v3250 = vor.u32 %v3246, %v3249
        %v3251 = vrot.slane %v3250, 4
        %v3253 = vshll.u32 %v3091, 16
        %v3255 = vrot.slane %v3253, 5
        %v3256 = vsel %vm952, %v3251, %v3255
        %v3257 = vshrl.u32 %v3091, 16
        %v3259 = vrot.slane %v3257, 4
        %v3260 = vor.u32 %v3259, %v3255
        %v3261 = vrot.slane %v3260, 4
        %v3263 = vshll.u32 %v3092, 16
        %v3265 = vrot.slane %v3263, 5
        %v3266 = vsel %vm952, %v3261, %v3265
        %v3268 = vshrl.u32 %v3093, 16
        %v3270 = vrot.slane %v3268, 4
        %v3271 = vshll.u32 %v3093, 16
        %v3273 = vrot.slane %v3271, 5
        %v3274 = vor.u32 %v3270, %v3273
        %v3275 = vrot.slane %v3274, 4
        %v3277 = vshll.u32 %v3094, 16
        %v3279 = vrot.slane %v3277, 5
        %v3280 = vsel %vm952, %v3275, %v3279
        %v3281 = vshrl.u32 %v3094, 16
        %v3283 = vrot.slane %v3281, 4
        %v3284 = vor.u32 %v3283, %v3279
        %v3285 = vrot.slane %v3284, 4
        %v3287 = vshll.u32 %v3095, 16
        %v3289 = vrot.slane %v3287, 5
        %v3290 = vsel %vm952, %v3285, %v3289
        %v3292 = vshrl.u32 %v3096, 16
        %v3294 = vrot.slane %v3292, 4
        %v3295 = vshll.u32 %v3096, 16
        %v3297 = vrot.slane %v3295, 5
        %v3298 = vor.u32 %v3294, %v3297
        %v3299 = vrot.slane %v3298, 4
        %v3301 = vshll.u32 %v3097, 16
        %v3303 = vrot.slane %v3301, 5
        %v3304 = vsel %vm952, %v3299, %v3303
        %v3305 = vshrl.u32 %v3097, 16
        %v3307 = vrot.slane %v3305, 4
        %v3308 = vor.u32 %v3307, %v3303
        %v3309 = vrot.slane %v3308, 4
        %v3311 = vshll.u32 %v3098, 16
        %v3313 = vrot.slane %v3311, 5
        %v3314 = vsel %vm952, %v3309, %v3313
        %v3316 = vshrl.u32 %v3099, 16
        %v3318 = vrot.slane %v3316, 4
        %v3319 = vshll.u32 %v3099, 16
        %v3321 = vrot.slane %v3319, 5
        %v3322 = vor.u32 %v3318, %v3321
        %v3323 = vrot.slane %v3322, 4
        %v3325 = vshll.u32 %v3100, 16
        %v3327 = vrot.slane %v3325, 5
        %v3328 = vsel %vm952, %v3323, %v3327
        %v3329 = vshrl.u32 %v3100, 16
        %v3331 = vrot.slane %v3329, 4
        %v3332 = vor.u32 %v3331, %v3327
        %v3333 = vrot.slane %v3332, 4
        %v3335 = vshll.u32 %v3101, 16
        %v3337 = vrot.slane %v3335, 5
        %v3338 = vsel %vm952, %v3333, %v3337
        %v3340 = vshrl.u32 %v3102, 16
        %v3342 = vrot.slane %v3340, 4
        %v3343 = vshll.u32 %v3102, 16
        %v3345 = vrot.slane %v3343, 5
        %v3346 = vor.u32 %v3342, %v3345
        %v3347 = vrot.slane %v3346, 4
        %v3349 = vshll.u32 %v3103, 16
        %v3351 = vrot.slane %v3349, 5
        %v3352 = vsel %vm952, %v3347, %v3351
        %v3353 = vshrl.u32 %v3103, 16
        %v3355 = vrot.slane %v3353, 4
        %v3356 = vor.u32 %v3355, %v3351
        %v3357 = vrot.slane %v3356, 4
        %v3359 = vshll.u32 %v3104, 16
        %v3361 = vrot.slane %v3359, 5
        %v3362 = vsel %vm952, %v3357, %v3361
        %v3364 = vshrl.u32 %v3105, 16
        %v3366 = vrot.slane %v3364, 4
        %v3367 = vshll.u32 %v3105, 16
        %v3369 = vrot.slane %v3367, 5
        %v3370 = vor.u32 %v3366, %v3369
        %v3371 = vrot.slane %v3370, 4
        %v3373 = vshll.u32 %v3106, 16
        %v3375 = vrot.slane %v3373, 5
        %v3376 = vsel %vm952, %v3371, %v3375
        %v3377 = vshrl.u32 %v3106, 16
        %v3379 = vrot.slane %v3377, 4
        %v3380 = vor.u32 %v3379, %v3375
        %v3381 = vrot.slane %v3380, 4
        %v3383 = vshll.u32 %v3107, 16
        %v3385 = vrot.slane %v3383, 5
        %v3386 = vsel %vm952, %v3381, %v3385
        %v3388 = vshrl.u32 %v3108, 16
        %v3390 = vrot.slane %v3388, 4
        %v3391 = vshll.u32 %v3108, 16
        %v3393 = vrot.slane %v3391, 5
        %v3394 = vor.u32 %v3390, %v3393
        %v3395 = vrot.slane %v3394, 4
        %v3397 = vshll.u32 %v3109, 16
        %v3399 = vrot.slane %v3397, 5
        %v3400 = vsel %vm952, %v3395, %v3399
        %v3401 = vshrl.u32 %v3109, 16
        %v3403 = vrot.slane %v3401, 4
        %v3404 = vor.u32 %v3403, %v3399
        %v3405 = vrot.slane %v3404, 4
        %v3407 = vshll.u32 %v3110, 16
        %v3409 = vrot.slane %v3407, 5
        %v3410 = vsel %vm952, %v3405, %v3409
        %v3412 = vshrl.u32 %v3111, 16
        %v3414 = vrot.slane %v3412, 4
        %v3415 = vshll.u32 %v3111, 16
        %v3417 = vrot.slane %v3415, 5
        %v3418 = vor.u32 %v3414, %v3417
        %v3419 = vrot.slane %v3418, 4
        %v3421 = vshll.u32 %v3112, 16
        %v3423 = vrot.slane %v3421, 5
        %v3424 = vsel %vm952, %v3419, %v3423
        %v3425 = vshrl.u32 %v3112, 16
        %v3427 = vrot.slane %v3425, 4
        %v3428 = vor.u32 %v3427, %v3423
        %v3429 = vrot.slane %v3428, 4
        %v3431 = vshll.u32 %v3113, 16
        %v3433 = vrot.slane %v3431, 5
        %v3434 = vsel %vm952, %v3429, %v3433
        %v3436 = vshrl.u32 %v3114, 16
        %v3438 = vrot.slane %v3436, 4
        %v3439 = vshll.u32 %v3114, 16
        %v3441 = vrot.slane %v3439, 5
        %v3442 = vor.u32 %v3438, %v3441
        %v3443 = vrot.slane %v3442, 4
        %v3445 = vshll.u32 %v3115, 16
        %v3447 = vrot.slane %v3445, 5
        %v3448 = vsel %vm952, %v3443, %v3447
        %v3449 = vshrl.u32 %v3115, 16
        %v3451 = vrot.slane %v3449, 4
        %v3452 = vor.u32 %v3451, %v3447
        %v3453 = vrot.slane %v3452, 4
        %v3455 = vshll.u32 %v3116, 16
        %v3457 = vrot.slane %v3455, 5
        %v3458 = vsel %vm952, %v3453, %v3457
        %v3460 = vshrl.u32 %v3117, 16
        %v3462 = vrot.slane %v3460, 4
        %v3463 = vshll.u32 %v3117, 16
        %v3465 = vrot.slane %v3463, 5
        %v3466 = vor.u32 %v3462, %v3465
        %v3467 = vrot.slane %v3466, 4
        %v3469 = vshll.u32 %v3118, 16
        %v3471 = vrot.slane %v3469, 5
        %v3472 = vsel %vm952, %v3467, %v3471
        %v3473 = vshrl.u32 %v3118, 16
        %v3475 = vrot.slane %v3473, 4
        %v3476 = vor.u32 %v3475, %v3471
        %v3477 = vrot.slane %v3476, 4
        %v3479 = vshll.u32 %v3119, 16
        %v3481 = vrot.slane %v3479, 5
        %v3482 = vsel %vm952, %v3477, %v3481
        %v3484 = vshrl.u32 %v3120, 16
        %v3486 = vrot.slane %v3484, 4
        %v3487 = vshll.u32 %v3120, 16
        %v3489 = vrot.slane %v3487, 5
        %v3490 = vor.u32 %v3486, %v3489
        %v3491 = vrot.slane %v3490, 4
        %v3493 = vshll.u32 %v3121, 16
        %v3495 = vrot.slane %v3493, 5
        %v3496 = vsel %vm952, %v3491, %v3495
        %v3497 = vshrl.u32 %v3121, 16
        %v3499 = vrot.slane %v3497, 4
        %v3500 = vor.u32 %v3499, %v3495
        %v3501 = vrot.slane %v3500, 4
        %v3503 = vshll.u32 %v3122, 16
        %v3505 = vrot.slane %v3503, 5
        %v3506 = vsel %vm952, %v3501, %v3505
        %s3507 = scalar_lea.vmem %s1, 12
        %v3508 = vld [vmem:[%s3507] sm:$0x3]
        %v3509 = vunpack.c.l.b16 %v3136
        %v3510 = vunpack.c.l.b16 %v3146
        %v3511 = vunpack.c.l.b16 %v3160
        %v3512 = vunpack.c.l.b16 %v3170
        %v3513 = vunpack.c.l.b16 %v3184
        %v3514 = vunpack.c.l.b16 %v3194
        %v3515 = vunpack.c.l.b16 %v3208
        %v3516 = vunpack.c.l.b16 %v3218
        %v3517 = vunpack.c.l.b16 %v3232
        %v3518 = vunpack.c.l.b16 %v3242
        %v3519 = vunpack.c.l.b16 %v3256
        %v3520 = vunpack.c.l.b16 %v3266
        %v3521 = vunpack.c.l.b16 %v3280
        %v3522 = vunpack.c.l.b16 %v3290
        %v3523 = vunpack.c.l.b16 %v3304
        %v3524 = vunpack.c.l.b16 %v3314
        %v3525 = vunpack.c.l.b16 %v3328
        %v3526 = vunpack.c.l.b16 %v3338
        %v3527 = vunpack.c.l.b16 %v3352
        %v3528 = vunpack.c.l.b16 %v3362
        %v3529 = vunpack.c.l.b16 %v3376
        %v3530 = vunpack.c.l.b16 %v3386
        %v3531 = vunpack.c.l.b16 %v3400
        %v3532 = vunpack.c.l.b16 %v3410
        %v3533 = vunpack.c.l.b16 %v3424
        %v3534 = vunpack.c.l.b16 %v3434
        %v3535 = vunpack.c.l.b16 %v3448
        %v3536 = vunpack.c.l.b16 %v3458
        %v3537 = vunpack.c.l.b16 %v3472
        %v3538 = vunpack.c.l.b16 %v3482
        %v3539 = vunpack.c.l.b16 %v3496
        %v3540 = vunpack.c.l.b16 %v3506
        %v3541 = vpack.c.b16 %v3510, %v3509
        %v3542 = vpack.c.b16 %v3512, %v3511
        %v3543 = vpack.c.b16 %v3514, %v3513
        %v3544 = vpack.c.b16 %v3516, %v3515
        %v3545 = vpack.c.b16 %v3518, %v3517
        %v3546 = vpack.c.b16 %v3520, %v3519
        %v3547 = vpack.c.b16 %v3522, %v3521
        %v3548 = vpack.c.b16 %v3524, %v3523
        %v3549 = vpack.c.b16 %v3526, %v3525
        %v3550 = vpack.c.b16 %v3528, %v3527
        %v3551 = vpack.c.b16 %v3530, %v3529
        %v3552 = vpack.c.b16 %v3532, %v3531
        %v3553 = vpack.c.b16 %v3534, %v3533
        %v3554 = vpack.c.b16 %v3536, %v3535
        %v3555 = vpack.c.b16 %v3538, %v3537
        %v3556 = vpack.c.b16 %v3540, %v3539
        %v3558 = vsel %vm396, %v3541, 0
        %v3561 = vsel %vm396, %v3542, 0
        %v3564 = vsel %vm396, %v3543, 0
        %v3567 = vsel %vm396, %v3544, 0
        %v3570 = vsel %vm396, %v3545, 0
        %v3573 = vsel %vm396, %v3546, 0
        %v3576 = vsel %vm396, %v3547, 0
        %v3579 = vsel %vm396, %v3548, 0
        %v3582 = vsel %vm396, %v3549, 0
        %v3585 = vsel %vm396, %v3550, 0
        %v3588 = vsel %vm396, %v3551, 0
        %v3591 = vsel %vm396, %v3552, 0
        %v3594 = vsel %vm396, %v3553, 0
        %v3597 = vsel %vm396, %v3554, 0
        %v3600 = vsel %vm396, %v3555, 0
        %v3603 = vsel %vm396, %v3556, 0
        %v3606 = vsel %vm445, %v3508, 0
        %3608 = vmatprep.subr.bf16.mxu0 0
        %3609 = vmatpush1.bf16.msra.mxu0 0
        %3610 = vmatprep.subr.bf16.mxu0 0
        %3611 = vmatpush1.bf16.msra.mxu0 0
        %3612 = vmatprep.subr.bf16.mxu0 0
        %3613 = vmatpush1.bf16.msra.mxu0 0
        %3614 = vmatprep.subr.bf16.mxu0 0
        %3615 = vmatpush1.bf16.msra.mxu0 0
        %3616 = vmatprep.subr.bf16.mxu0 0
        %3617 = vmatpush1.bf16.msra.mxu0 0
        %3618 = vmatprep.subr.bf16.mxu0 0
        %3619 = vmatpush1.bf16.msra.mxu0 0
        %3620 = vmatprep.subr.bf16.mxu0 0
        %3621 = vmatpush1.bf16.msra.mxu0 0
        %3622 = vmatprep.subr.bf16.mxu0 0
        %3623 = vmatpush1.bf16.msra.mxu0 %v3606
        %3624 = vmatprep.subr.bf16.mxu0 0
        %3625 = vmatpush2.bf16.msra.mxu0 0
        %3626 = vmatprep.subr.bf16.mxu0 0
        %3627 = vmatpush2.bf16.msra.mxu0 0
        %3628 = vmatprep.subr.bf16.mxu0 0
        %3629 = vmatpush2.bf16.msra.mxu0 0
        %3630 = vmatprep.subr.bf16.mxu0 0
        %3631 = vmatpush2.bf16.msra.mxu0 0
        %3632 = vmatprep.subr.bf16.mxu0 0
        %3633 = vmatpush2.bf16.msra.mxu0 0
        %3634 = vmatprep.subr.bf16.mxu0 0
        %3635 = vmatpush2.bf16.msra.mxu0 0
        %3636 = vmatprep.subr.bf16.mxu0 0
        %3637 = vmatpush2.bf16.msra.mxu0 0
        %3638 = vmatprep.subr.bf16.mxu0 0
        %3639 = vmatpush2.bf16.msra.mxu0 0
        %3640 = vmatprep.mubr.bf16.mxu0 0
        %3641 = vmatmul.mubr.bf16.gmra.mxu0 %v3558
        %v3642 = vpop.f32.mrf.mxu0
        %v3643 = vadd.f32 0.0, %v3642
        %v3644 = vpop.f32.mrf.mxu0
        %v3645 = vpop.f32.mrf.mxu0
        %v3646 = vadd.f32 0.0, %v3645
        %v3647 = vpop.f32.mrf.mxu0
        %3648 = vmatprep.mubr.bf16.mxu0 0
        %3649 = vmatmul.mubr.bf16.gmra.mxu0 %v3561
        %v3650 = vpop.f32.mrf.mxu0
        %v3651 = vadd.f32 0.0, %v3650
        %v3652 = vpop.f32.mrf.mxu0
        %v3653 = vpop.f32.mrf.mxu0
        %v3654 = vadd.f32 0.0, %v3653
        %v3655 = vpop.f32.mrf.mxu0
        %3656 = vmatprep.mubr.bf16.mxu0 0
        %3657 = vmatmul.mubr.bf16.gmra.mxu0 %v3564
        %v3658 = vpop.f32.mrf.mxu0
        %v3659 = vadd.f32 0.0, %v3658
        %v3660 = vpop.f32.mrf.mxu0
        %v3661 = vpop.f32.mrf.mxu0
        %v3662 = vadd.f32 0.0, %v3661
        %v3663 = vpop.f32.mrf.mxu0
        %3664 = vmatprep.mubr.bf16.mxu0 0
        %3665 = vmatmul.mubr.bf16.gmra.mxu0 %v3567
        %v3666 = vpop.f32.mrf.mxu0
        %v3667 = vadd.f32 0.0, %v3666
        %v3668 = vpop.f32.mrf.mxu0
        %v3669 = vpop.f32.mrf.mxu0
        %v3670 = vadd.f32 0.0, %v3669
        %v3671 = vpop.f32.mrf.mxu0
        %3672 = vmatprep.mubr.bf16.mxu0 0
        %3673 = vmatmul.mubr.bf16.gmra.mxu0 %v3570
        %v3674 = vpop.f32.mrf.mxu0
        %v3675 = vadd.f32 0.0, %v3674
        %v3676 = vpop.f32.mrf.mxu0
        %v3677 = vpop.f32.mrf.mxu0
        %v3678 = vadd.f32 0.0, %v3677
        %v3679 = vpop.f32.mrf.mxu0
        %3680 = vmatprep.mubr.bf16.mxu0 0
        %3681 = vmatmul.mubr.bf16.gmra.mxu0 %v3573
        %v3682 = vpop.f32.mrf.mxu0
        %v3683 = vadd.f32 0.0, %v3682
        %v3684 = vpop.f32.mrf.mxu0
        %v3685 = vpop.f32.mrf.mxu0
        %v3686 = vadd.f32 0.0, %v3685
        %v3687 = vpop.f32.mrf.mxu0
        %3688 = vmatprep.mubr.bf16.mxu0 0
        %3689 = vmatmul.mubr.bf16.gmra.mxu0 %v3576
        %v3690 = vpop.f32.mrf.mxu0
        %v3691 = vadd.f32 0.0, %v3690
        %v3692 = vpop.f32.mrf.mxu0
        %v3693 = vpop.f32.mrf.mxu0
        %v3694 = vadd.f32 0.0, %v3693
        %v3695 = vpop.f32.mrf.mxu0
        %3696 = vmatprep.mubr.bf16.mxu0 0
        %3697 = vmatmul.mubr.bf16.gmra.mxu0 %v3579
        %v3698 = vpop.f32.mrf.mxu0
        %v3699 = vadd.f32 0.0, %v3698
        %v3700 = vpop.f32.mrf.mxu0
        %v3701 = vpop.f32.mrf.mxu0
        %v3702 = vadd.f32 0.0, %v3701
        %v3703 = vpop.f32.mrf.mxu0
        %3704 = vmatprep.mubr.bf16.mxu0 0
        %3705 = vmatmul.mubr.bf16.gmra.mxu0 %v3582
        %v3706 = vpop.f32.mrf.mxu0
        %v3707 = vadd.f32 0.0, %v3706
        %v3708 = vpop.f32.mrf.mxu0
        %v3709 = vpop.f32.mrf.mxu0
        %v3710 = vadd.f32 0.0, %v3709
        %v3711 = vpop.f32.mrf.mxu0
        %3712 = vmatprep.mubr.bf16.mxu0 0
        %3713 = vmatmul.mubr.bf16.gmra.mxu0 %v3585
        %v3714 = vpop.f32.mrf.mxu0
        %v3715 = vadd.f32 0.0, %v3714
        %v3716 = vpop.f32.mrf.mxu0
        %v3717 = vpop.f32.mrf.mxu0
        %v3718 = vadd.f32 0.0, %v3717
        %v3719 = vpop.f32.mrf.mxu0
        %3720 = vmatprep.mubr.bf16.mxu0 0
        %3721 = vmatmul.mubr.bf16.gmra.mxu0 %v3588
        %v3722 = vpop.f32.mrf.mxu0
        %v3723 = vadd.f32 0.0, %v3722
        %v3724 = vpop.f32.mrf.mxu0
        %v3725 = vpop.f32.mrf.mxu0
        %v3726 = vadd.f32 0.0, %v3725
        %v3727 = vpop.f32.mrf.mxu0
        %3728 = vmatprep.mubr.bf16.mxu0 0
        %3729 = vmatmul.mubr.bf16.gmra.mxu0 %v3591
        %v3730 = vpop.f32.mrf.mxu0
        %v3731 = vadd.f32 0.0, %v3730
        %v3732 = vpop.f32.mrf.mxu0
        %v3733 = vpop.f32.mrf.mxu0
        %v3734 = vadd.f32 0.0, %v3733
        %v3735 = vpop.f32.mrf.mxu0
        %3736 = vmatprep.mubr.bf16.mxu0 0
        %3737 = vmatmul.mubr.bf16.gmra.mxu0 %v3594
        %v3738 = vpop.f32.mrf.mxu0
        %v3739 = vadd.f32 0.0, %v3738
        %v3740 = vpop.f32.mrf.mxu0
        %v3741 = vpop.f32.mrf.mxu0
        %v3742 = vadd.f32 0.0, %v3741
        %v3743 = vpop.f32.mrf.mxu0
        %3744 = vmatprep.mubr.bf16.mxu0 0
        %3745 = vmatmul.mubr.bf16.gmra.mxu0 %v3597
        %v3746 = vpop.f32.mrf.mxu0
        %v3747 = vadd.f32 0.0, %v3746
        %v3748 = vpop.f32.mrf.mxu0
        %v3749 = vpop.f32.mrf.mxu0
        %v3750 = vadd.f32 0.0, %v3749
        %v3751 = vpop.f32.mrf.mxu0
        %3752 = vmatprep.mubr.bf16.mxu0 0
        %3753 = vmatmul.mubr.bf16.gmra.mxu0 %v3600
        %v3754 = vpop.f32.mrf.mxu0
        %v3755 = vadd.f32 0.0, %v3754
        %v3756 = vpop.f32.mrf.mxu0
        %v3757 = vpop.f32.mrf.mxu0
        %v3758 = vadd.f32 0.0, %v3757
        %v3759 = vpop.f32.mrf.mxu0
        %3760 = vmatprep.mubr.bf16.mxu0 0
        %3761 = vmatmul.mubr.bf16.gmra.mxu0 %v3603
        %v3762 = vpop.f32.mrf.mxu0
        %v3763 = vadd.f32 0.0, %v3762
        %v3764 = vpop.f32.mrf.mxu0
        %v3765 = vpop.f32.mrf.mxu0
        %v3766 = vadd.f32 0.0, %v3765
        %v3767 = vpop.f32.mrf.mxu0
        %3768 = vdwg.mxu0
        %v3769 = vadd.f32 %v3043, %v3643
        %v3770 = vadd.f32 %v3044, %v3646
        %v3771 = vadd.f32 %v3045, %v3651
        %v3772 = vadd.f32 %v3046, %v3654
        %v3773 = vadd.f32 %v3047, %v3659
        %v3774 = vadd.f32 %v3048, %v3662
        %v3775 = vadd.f32 %v3049, %v3667
        %v3776 = vadd.f32 %v3050, %v3670
        %v3777 = vadd.f32 %v3051, %v3675
        %v3778 = vadd.f32 %v3052, %v3678
        %v3779 = vadd.f32 %v3053, %v3683
        %v3780 = vadd.f32 %v3054, %v3686
        %v3781 = vadd.f32 %v3055, %v3691
        %v3782 = vadd.f32 %v3056, %v3694
        %v3783 = vadd.f32 %v3057, %v3699
        %v3784 = vadd.f32 %v3058, %v3702
        %v3785 = vadd.f32 %v3059, %v3707
        %v3786 = vadd.f32 %v3060, %v3710
        %v3787 = vadd.f32 %v3061, %v3715
        %v3788 = vadd.f32 %v3062, %v3718
        %v3789 = vadd.f32 %v3063, %v3723
        %v3790 = vadd.f32 %v3064, %v3726
        %v3791 = vadd.f32 %v3065, %v3731
        %v3792 = vadd.f32 %v3066, %v3734
        %v3793 = vadd.f32 %v3067, %v3739
        %v3794 = vadd.f32 %v3068, %v3742
        %v3795 = vadd.f32 %v3069, %v3747
        %v3796 = vadd.f32 %v3070, %v3750
        %v3797 = vadd.f32 %v3071, %v3755
        %v3798 = vadd.f32 %v3072, %v3758
        %v3799 = vadd.f32 %v3073, %v3763
        %v3800 = vadd.f32 %v3074, %v3766
        %v3801 = vld [vmem:[%s2716] sm:$0xf]
        %v3802 = vld [vmem:[%s2716 + $0x4] sm:$0xf]
        %v3803 = vld [vmem:[%s2716 + $0x8] sm:$0x1]
        %v3804 = vld [vmem:[%s2716 + $0xc] sm:$0xf]
        %v3805 = vld [vmem:[%s2716 + $0x10] sm:$0xf]
        %v3806 = vld [vmem:[%s2716 + $0x14] sm:$0x1]
        %v3807 = vld [vmem:[%s2716 + $0x18] sm:$0xf]
        %v3808 = vld [vmem:[%s2716 + $0x1c] sm:$0xf]
        %v3809 = vld [vmem:[%s2716 + $0x20] sm:$0x1]
        %v3810 = vld [vmem:[%s2716 + $0x24] sm:$0xf]
        %v3811 = vld [vmem:[%s2716 + $0x28] sm:$0xf]
        %v3812 = vld [vmem:[%s2716 + $0x2c] sm:$0x1]
        %v3813 = vld [vmem:[%s2716 + $0x30] sm:$0xf]
        %v3814 = vld [vmem:[%s2716 + $0x34] sm:$0xf]
        %v3815 = vld [vmem:[%s2716 + $0x38] sm:$0x1]
        %v3816 = vld [vmem:[%s2716 + $0x3c] sm:$0xf]
        %v3817 = vld [vmem:[%s2716 + $0x40] sm:$0xf]
        %v3818 = vld [vmem:[%s2716 + $0x44] sm:$0x1]
        %v3819 = vld [vmem:[%s2716 + $0x48] sm:$0xf]
        %v3820 = vld [vmem:[%s2716 + $0x4c] sm:$0xf]
        %v3821 = vld [vmem:[%s2716 + $0x50] sm:$0x1]
        %v3822 = vld [vmem:[%s2716 + $0x54] sm:$0xf]
        %v3823 = vld [vmem:[%s2716 + $0x58] sm:$0xf]
        %v3824 = vld [vmem:[%s2716 + $0x5c] sm:$0x1]
        %v3825 = vld [vmem:[%s2716 + $0x60] sm:$0xf]
        %v3826 = vld [vmem:[%s2716 + $0x64] sm:$0xf]
        %v3827 = vld [vmem:[%s2716 + $0x68] sm:$0x1]
        %v3828 = vld [vmem:[%s2716 + $0x6c] sm:$0xf]
        %v3829 = vld [vmem:[%s2716 + $0x70] sm:$0xf]
        %v3830 = vld [vmem:[%s2716 + $0x74] sm:$0x1]
        %v3831 = vld [vmem:[%s2716 + $0x78] sm:$0xf]
        %v3832 = vld [vmem:[%s2716 + $0x7c] sm:$0xf]
        %v3833 = vld [vmem:[%s2716 + $0x80] sm:$0x1]
        %v3834 = vld [vmem:[%s2716 + $0x84] sm:$0xf]
        %v3835 = vld [vmem:[%s2716 + $0x88] sm:$0xf]
        %v3836 = vld [vmem:[%s2716 + $0x8c] sm:$0x1]
        %v3837 = vld [vmem:[%s2716 + $0x90] sm:$0xf]
        %v3838 = vld [vmem:[%s2716 + $0x94] sm:$0xf]
        %v3839 = vld [vmem:[%s2716 + $0x98] sm:$0x1]
        %v3840 = vld [vmem:[%s2716 + $0x9c] sm:$0xf]
        %v3841 = vld [vmem:[%s2716 + $0xa0] sm:$0xf]
        %v3842 = vld [vmem:[%s2716 + $0xa4] sm:$0x1]
        %v3843 = vld [vmem:[%s2716 + $0xa8] sm:$0xf]
        %v3844 = vld [vmem:[%s2716 + $0xac] sm:$0xf]
        %v3845 = vld [vmem:[%s2716 + $0xb0] sm:$0x1]
        %v3846 = vld [vmem:[%s2716 + $0xb4] sm:$0xf]
        %v3847 = vld [vmem:[%s2716 + $0xb8] sm:$0xf]
        %v3848 = vld [vmem:[%s2716 + $0xbc] sm:$0x1]
        %v3850 = vshrl.u32 %v3801, 16
        %v3852 = vrot.slane %v3850, 4
        %v3853 = vshll.u32 %v3801, 16
        %v3855 = vrot.slane %v3853, 5
        %v3856 = vor.u32 %v3852, %v3855
        %v3857 = vrot.slane %v3856, 4
        %v3859 = vshll.u32 %v3802, 16
        %v3861 = vrot.slane %v3859, 5
        %v3862 = vsel %vm952, %v3857, %v3861
        %v3863 = vshrl.u32 %v3802, 16
        %v3865 = vrot.slane %v3863, 4
        %v3866 = vor.u32 %v3865, %v3861
        %v3867 = vrot.slane %v3866, 4
        %v3869 = vshll.u32 %v3803, 16
        %v3871 = vrot.slane %v3869, 5
        %v3872 = vsel %vm952, %v3867, %v3871
        %v3874 = vshrl.u32 %v3804, 16
        %v3876 = vrot.slane %v3874, 4
        %v3877 = vshll.u32 %v3804, 16
        %v3879 = vrot.slane %v3877, 5
        %v3880 = vor.u32 %v3876, %v3879
        %v3881 = vrot.slane %v3880, 4
        %v3883 = vshll.u32 %v3805, 16
        %v3885 = vrot.slane %v3883, 5
        %v3886 = vsel %vm952, %v3881, %v3885
        %v3887 = vshrl.u32 %v3805, 16
        %v3889 = vrot.slane %v3887, 4
        %v3890 = vor.u32 %v3889, %v3885
        %v3891 = vrot.slane %v3890, 4
        %v3893 = vshll.u32 %v3806, 16
        %v3895 = vrot.slane %v3893, 5
        %v3896 = vsel %vm952, %v3891, %v3895
        %v3898 = vshrl.u32 %v3807, 16
        %v3900 = vrot.slane %v3898, 4
        %v3901 = vshll.u32 %v3807, 16
        %v3903 = vrot.slane %v3901, 5
        %v3904 = vor.u32 %v3900, %v3903
        %v3905 = vrot.slane %v3904, 4
        %v3907 = vshll.u32 %v3808, 16
        %v3909 = vrot.slane %v3907, 5
        %v3910 = vsel %vm952, %v3905, %v3909
        %v3911 = vshrl.u32 %v3808, 16
        %v3913 = vrot.slane %v3911, 4
        %v3914 = vor.u32 %v3913, %v3909
        %v3915 = vrot.slane %v3914, 4
        %v3917 = vshll.u32 %v3809, 16
        %v3919 = vrot.slane %v3917, 5
        %v3920 = vsel %vm952, %v3915, %v3919
        %v3922 = vshrl.u32 %v3810, 16
        %v3924 = vrot.slane %v3922, 4
        %v3925 = vshll.u32 %v3810, 16
        %v3927 = vrot.slane %v3925, 5
        %v3928 = vor.u32 %v3924, %v3927
        %v3929 = vrot.slane %v3928, 4
        %v3931 = vshll.u32 %v3811, 16
        %v3933 = vrot.slane %v3931, 5
        %v3934 = vsel %vm952, %v3929, %v3933
        %v3935 = vshrl.u32 %v3811, 16
        %v3937 = vrot.slane %v3935, 4
        %v3938 = vor.u32 %v3937, %v3933
        %v3939 = vrot.slane %v3938, 4
        %v3941 = vshll.u32 %v3812, 16
        %v3943 = vrot.slane %v3941, 5
        %v3944 = vsel %vm952, %v3939, %v3943
        %v3946 = vshrl.u32 %v3813, 16
        %v3948 = vrot.slane %v3946, 4
        %v3949 = vshll.u32 %v3813, 16
        %v3951 = vrot.slane %v3949, 5
        %v3952 = vor.u32 %v3948, %v3951
        %v3953 = vrot.slane %v3952, 4
        %v3955 = vshll.u32 %v3814, 16
        %v3957 = vrot.slane %v3955, 5
        %v3958 = vsel %vm952, %v3953, %v3957
        %v3959 = vshrl.u32 %v3814, 16
        %v3961 = vrot.slane %v3959, 4
        %v3962 = vor.u32 %v3961, %v3957
        %v3963 = vrot.slane %v3962, 4
        %v3965 = vshll.u32 %v3815, 16
        %v3967 = vrot.slane %v3965, 5
        %v3968 = vsel %vm952, %v3963, %v3967
        %v3970 = vshrl.u32 %v3816, 16
        %v3972 = vrot.slane %v3970, 4
        %v3973 = vshll.u32 %v3816, 16
        %v3975 = vrot.slane %v3973, 5
        %v3976 = vor.u32 %v3972, %v3975
        %v3977 = vrot.slane %v3976, 4
        %v3979 = vshll.u32 %v3817, 16
        %v3981 = vrot.slane %v3979, 5
        %v3982 = vsel %vm952, %v3977, %v3981
        %v3983 = vshrl.u32 %v3817, 16
        %v3985 = vrot.slane %v3983, 4
        %v3986 = vor.u32 %v3985, %v3981
        %v3987 = vrot.slane %v3986, 4
        %v3989 = vshll.u32 %v3818, 16
        %v3991 = vrot.slane %v3989, 5
        %v3992 = vsel %vm952, %v3987, %v3991
        %v3994 = vshrl.u32 %v3819, 16
        %v3996 = vrot.slane %v3994, 4
        %v3997 = vshll.u32 %v3819, 16
        %v3999 = vrot.slane %v3997, 5
        %v4000 = vor.u32 %v3996, %v3999
        %v4001 = vrot.slane %v4000, 4
        %v4003 = vshll.u32 %v3820, 16
        %v4005 = vrot.slane %v4003, 5
        %v4006 = vsel %vm952, %v4001, %v4005
        %v4007 = vshrl.u32 %v3820, 16
        %v4009 = vrot.slane %v4007, 4
        %v4010 = vor.u32 %v4009, %v4005
        %v4011 = vrot.slane %v4010, 4
        %v4013 = vshll.u32 %v3821, 16
        %v4015 = vrot.slane %v4013, 5
        %v4016 = vsel %vm952, %v4011, %v4015
        %v4018 = vshrl.u32 %v3822, 16
        %v4020 = vrot.slane %v4018, 4
        %v4021 = vshll.u32 %v3822, 16
        %v4023 = vrot.slane %v4021, 5
        %v4024 = vor.u32 %v4020, %v4023
        %v4025 = vrot.slane %v4024, 4
        %v4027 = vshll.u32 %v3823, 16
        %v4029 = vrot.slane %v4027, 5
        %v4030 = vsel %vm952, %v4025, %v4029
        %v4031 = vshrl.u32 %v3823, 16
        %v4033 = vrot.slane %v4031, 4
        %v4034 = vor.u32 %v4033, %v4029
        %v4035 = vrot.slane %v4034, 4
        %v4037 = vshll.u32 %v3824, 16
        %v4039 = vrot.slane %v4037, 5
        %v4040 = vsel %vm952, %v4035, %v4039
        %v4042 = vshrl.u32 %v3825, 16
        %v4044 = vrot.slane %v4042, 4
        %v4045 = vshll.u32 %v3825, 16
        %v4047 = vrot.slane %v4045, 5
        %v4048 = vor.u32 %v4044, %v4047
        %v4049 = vrot.slane %v4048, 4
        %v4051 = vshll.u32 %v3826, 16
        %v4053 = vrot.slane %v4051, 5
        %v4054 = vsel %vm952, %v4049, %v4053
        %v4055 = vshrl.u32 %v3826, 16
        %v4057 = vrot.slane %v4055, 4
        %v4058 = vor.u32 %v4057, %v4053
        %v4059 = vrot.slane %v4058, 4
        %v4061 = vshll.u32 %v3827, 16
        %v4063 = vrot.slane %v4061, 5
        %v4064 = vsel %vm952, %v4059, %v4063
        %v4066 = vshrl.u32 %v3828, 16
        %v4068 = vrot.slane %v4066, 4
        %v4069 = vshll.u32 %v3828, 16
        %v4071 = vrot.slane %v4069, 5
        %v4072 = vor.u32 %v4068, %v4071
        %v4073 = vrot.slane %v4072, 4
        %v4075 = vshll.u32 %v3829, 16
        %v4077 = vrot.slane %v4075, 5
        %v4078 = vsel %vm952, %v4073, %v4077
        %v4079 = vshrl.u32 %v3829, 16
        %v4081 = vrot.slane %v4079, 4
        %v4082 = vor.u32 %v4081, %v4077
        %v4083 = vrot.slane %v4082, 4
        %v4085 = vshll.u32 %v3830, 16
        %v4087 = vrot.slane %v4085, 5
        %v4088 = vsel %vm952, %v4083, %v4087
        %v4090 = vshrl.u32 %v3831, 16
        %v4092 = vrot.slane %v4090, 4
        %v4093 = vshll.u32 %v3831, 16
        %v4095 = vrot.slane %v4093, 5
        %v4096 = vor.u32 %v4092, %v4095
        %v4097 = vrot.slane %v4096, 4
        %v4099 = vshll.u32 %v3832, 16
        %v4101 = vrot.slane %v4099, 5
        %v4102 = vsel %vm952, %v4097, %v4101
        %v4103 = vshrl.u32 %v3832, 16
        %v4105 = vrot.slane %v4103, 4
        %v4106 = vor.u32 %v4105, %v4101
        %v4107 = vrot.slane %v4106, 4
        %v4109 = vshll.u32 %v3833, 16
        %v4111 = vrot.slane %v4109, 5
        %v4112 = vsel %vm952, %v4107, %v4111
        %v4114 = vshrl.u32 %v3834, 16
        %v4116 = vrot.slane %v4114, 4
        %v4117 = vshll.u32 %v3834, 16
        %v4119 = vrot.slane %v4117, 5
        %v4120 = vor.u32 %v4116, %v4119
        %v4121 = vrot.slane %v4120, 4
        %v4123 = vshll.u32 %v3835, 16
        %v4125 = vrot.slane %v4123, 5
        %v4126 = vsel %vm952, %v4121, %v4125
        %v4127 = vshrl.u32 %v3835, 16
        %v4129 = vrot.slane %v4127, 4
        %v4130 = vor.u32 %v4129, %v4125
        %v4131 = vrot.slane %v4130, 4
        %v4133 = vshll.u32 %v3836, 16
        %v4135 = vrot.slane %v4133, 5
        %v4136 = vsel %vm952, %v4131, %v4135
        %v4138 = vshrl.u32 %v3837, 16
        %v4140 = vrot.slane %v4138, 4
        %v4141 = vshll.u32 %v3837, 16
        %v4143 = vrot.slane %v4141, 5
        %v4144 = vor.u32 %v4140, %v4143
        %v4145 = vrot.slane %v4144, 4
        %v4147 = vshll.u32 %v3838, 16
        %v4149 = vrot.slane %v4147, 5
        %v4150 = vsel %vm952, %v4145, %v4149
        %v4151 = vshrl.u32 %v3838, 16
        %v4153 = vrot.slane %v4151, 4
        %v4154 = vor.u32 %v4153, %v4149
        %v4155 = vrot.slane %v4154, 4
        %v4157 = vshll.u32 %v3839, 16
        %v4159 = vrot.slane %v4157, 5
        %v4160 = vsel %vm952, %v4155, %v4159
        %v4162 = vshrl.u32 %v3840, 16
        %v4164 = vrot.slane %v4162, 4
        %v4165 = vshll.u32 %v3840, 16
        %v4167 = vrot.slane %v4165, 5
        %v4168 = vor.u32 %v4164, %v4167
        %v4169 = vrot.slane %v4168, 4
        %v4171 = vshll.u32 %v3841, 16
        %v4173 = vrot.slane %v4171, 5
        %v4174 = vsel %vm952, %v4169, %v4173
        %v4175 = vshrl.u32 %v3841, 16
        %v4177 = vrot.slane %v4175, 4
        %v4178 = vor.u32 %v4177, %v4173
        %v4179 = vrot.slane %v4178, 4
        %v4181 = vshll.u32 %v3842, 16
        %v4183 = vrot.slane %v4181, 5
        %v4184 = vsel %vm952, %v4179, %v4183
        %v4186 = vshrl.u32 %v3843, 16
        %v4188 = vrot.slane %v4186, 4
        %v4189 = vshll.u32 %v3843, 16
        %v4191 = vrot.slane %v4189, 5
        %v4192 = vor.u32 %v4188, %v4191
        %v4193 = vrot.slane %v4192, 4
        %v4195 = vshll.u32 %v3844, 16
        %v4197 = vrot.slane %v4195, 5
        %v4198 = vsel %vm952, %v4193, %v4197
        %v4199 = vshrl.u32 %v3844, 16
        %v4201 = vrot.slane %v4199, 4
        %v4202 = vor.u32 %v4201, %v4197
        %v4203 = vrot.slane %v4202, 4
        %v4205 = vshll.u32 %v3845, 16
        %v4207 = vrot.slane %v4205, 5
        %v4208 = vsel %vm952, %v4203, %v4207
        %v4210 = vshrl.u32 %v3846, 16
        %v4212 = vrot.slane %v4210, 4
        %v4213 = vshll.u32 %v3846, 16
        %v4215 = vrot.slane %v4213, 5
        %v4216 = vor.u32 %v4212, %v4215
        %v4217 = vrot.slane %v4216, 4
        %v4219 = vshll.u32 %v3847, 16
        %v4221 = vrot.slane %v4219, 5
        %v4222 = vsel %vm952, %v4217, %v4221
        %v4223 = vshrl.u32 %v3847, 16
        %v4225 = vrot.slane %v4223, 4
        %v4226 = vor.u32 %v4225, %v4221
        %v4227 = vrot.slane %v4226, 4
        %v4229 = vshll.u32 %v3848, 16
        %v4231 = vrot.slane %v4229, 5
        %v4232 = vsel %vm952, %v4227, %v4231
        %s4233 = scalar_lea.vmem %s1, 14
        %v4234 = vld [vmem:[%s4233] sm:$0x3]
        %v4235 = vunpack.c.l.b16 %v3862
        %v4236 = vunpack.c.l.b16 %v3872
        %v4237 = vunpack.c.l.b16 %v3886
        %v4238 = vunpack.c.l.b16 %v3896
        %v4239 = vunpack.c.l.b16 %v3910
        %v4240 = vunpack.c.l.b16 %v3920
        %v4241 = vunpack.c.l.b16 %v3934
        %v4242 = vunpack.c.l.b16 %v3944
        %v4243 = vunpack.c.l.b16 %v3958
        %v4244 = vunpack.c.l.b16 %v3968
        %v4245 = vunpack.c.l.b16 %v3982
        %v4246 = vunpack.c.l.b16 %v3992
        %v4247 = vunpack.c.l.b16 %v4006
        %v4248 = vunpack.c.l.b16 %v4016
        %v4249 = vunpack.c.l.b16 %v4030
        %v4250 = vunpack.c.l.b16 %v4040
        %v4251 = vunpack.c.l.b16 %v4054
        %v4252 = vunpack.c.l.b16 %v4064
        %v4253 = vunpack.c.l.b16 %v4078
        %v4254 = vunpack.c.l.b16 %v4088
        %v4255 = vunpack.c.l.b16 %v4102
        %v4256 = vunpack.c.l.b16 %v4112
        %v4257 = vunpack.c.l.b16 %v4126
        %v4258 = vunpack.c.l.b16 %v4136
        %v4259 = vunpack.c.l.b16 %v4150
        %v4260 = vunpack.c.l.b16 %v4160
        %v4261 = vunpack.c.l.b16 %v4174
        %v4262 = vunpack.c.l.b16 %v4184
        %v4263 = vunpack.c.l.b16 %v4198
        %v4264 = vunpack.c.l.b16 %v4208
        %v4265 = vunpack.c.l.b16 %v4222
        %v4266 = vunpack.c.l.b16 %v4232
        %v4267 = vpack.c.b16 %v4236, %v4235
        %v4268 = vpack.c.b16 %v4238, %v4237
        %v4269 = vpack.c.b16 %v4240, %v4239
        %v4270 = vpack.c.b16 %v4242, %v4241
        %v4271 = vpack.c.b16 %v4244, %v4243
        %v4272 = vpack.c.b16 %v4246, %v4245
        %v4273 = vpack.c.b16 %v4248, %v4247
        %v4274 = vpack.c.b16 %v4250, %v4249
        %v4275 = vpack.c.b16 %v4252, %v4251
        %v4276 = vpack.c.b16 %v4254, %v4253
        %v4277 = vpack.c.b16 %v4256, %v4255
        %v4278 = vpack.c.b16 %v4258, %v4257
        %v4279 = vpack.c.b16 %v4260, %v4259
        %v4280 = vpack.c.b16 %v4262, %v4261
        %v4281 = vpack.c.b16 %v4264, %v4263
        %v4282 = vpack.c.b16 %v4266, %v4265
        %v4284 = vsel %vm396, %v4267, 0
        %v4287 = vsel %vm396, %v4268, 0
        %v4290 = vsel %vm396, %v4269, 0
        %v4293 = vsel %vm396, %v4270, 0
        %v4296 = vsel %vm396, %v4271, 0
        %v4299 = vsel %vm396, %v4272, 0
        %v4302 = vsel %vm396, %v4273, 0
        %v4305 = vsel %vm396, %v4274, 0
        %v4308 = vsel %vm396, %v4275, 0
        %v4311 = vsel %vm396, %v4276, 0
        %v4314 = vsel %vm396, %v4277, 0
        %v4317 = vsel %vm396, %v4278, 0
        %v4320 = vsel %vm396, %v4279, 0
        %v4323 = vsel %vm396, %v4280, 0
        %v4326 = vsel %vm396, %v4281, 0
        %v4329 = vsel %vm396, %v4282, 0
        %v4332 = vsel %vm445, %v4234, 0
        %4334 = vmatprep.subr.bf16.mxu0 0
        %4335 = vmatpush1.bf16.msra.mxu0 0
        %4336 = vmatprep.subr.bf16.mxu0 0
        %4337 = vmatpush1.bf16.msra.mxu0 0
        %4338 = vmatprep.subr.bf16.mxu0 0
        %4339 = vmatpush1.bf16.msra.mxu0 0
        %4340 = vmatprep.subr.bf16.mxu0 0
        %4341 = vmatpush1.bf16.msra.mxu0 0
        %4342 = vmatprep.subr.bf16.mxu0 0
        %4343 = vmatpush1.bf16.msra.mxu0 0
        %4344 = vmatprep.subr.bf16.mxu0 0
        %4345 = vmatpush1.bf16.msra.mxu0 0
        %4346 = vmatprep.subr.bf16.mxu0 0
        %4347 = vmatpush1.bf16.msra.mxu0 0
        %4348 = vmatprep.subr.bf16.mxu0 0
        %4349 = vmatpush1.bf16.msra.mxu0 %v4332
        %4350 = vmatprep.subr.bf16.mxu0 0
        %4351 = vmatpush2.bf16.msra.mxu0 0
        %4352 = vmatprep.subr.bf16.mxu0 0
        %4353 = vmatpush2.bf16.msra.mxu0 0
        %4354 = vmatprep.subr.bf16.mxu0 0
        %4355 = vmatpush2.bf16.msra.mxu0 0
        %4356 = vmatprep.subr.bf16.mxu0 0
        %4357 = vmatpush2.bf16.msra.mxu0 0
        %4358 = vmatprep.subr.bf16.mxu0 0
        %4359 = vmatpush2.bf16.msra.mxu0 0
        %4360 = vmatprep.subr.bf16.mxu0 0
        %4361 = vmatpush2.bf16.msra.mxu0 0
        %4362 = vmatprep.subr.bf16.mxu0 0
        %4363 = vmatpush2.bf16.msra.mxu0 0
        %4364 = vmatprep.subr.bf16.mxu0 0
        %4365 = vmatpush2.bf16.msra.mxu0 0
        %4366 = vmatprep.mubr.bf16.mxu0 0
        %4367 = vmatmul.mubr.bf16.gmra.mxu0 %v4284
        %v4368 = vpop.f32.mrf.mxu0
        %v4369 = vadd.f32 0.0, %v4368
        %v4370 = vpop.f32.mrf.mxu0
        %v4371 = vpop.f32.mrf.mxu0
        %v4372 = vadd.f32 0.0, %v4371
        %v4373 = vpop.f32.mrf.mxu0
        %4374 = vmatprep.mubr.bf16.mxu0 0
        %4375 = vmatmul.mubr.bf16.gmra.mxu0 %v4287
        %v4376 = vpop.f32.mrf.mxu0
        %v4377 = vadd.f32 0.0, %v4376
        %v4378 = vpop.f32.mrf.mxu0
        %v4379 = vpop.f32.mrf.mxu0
        %v4380 = vadd.f32 0.0, %v4379
        %v4381 = vpop.f32.mrf.mxu0
        %4382 = vmatprep.mubr.bf16.mxu0 0
        %4383 = vmatmul.mubr.bf16.gmra.mxu0 %v4290
        %v4384 = vpop.f32.mrf.mxu0
        %v4385 = vadd.f32 0.0, %v4384
        %v4386 = vpop.f32.mrf.mxu0
        %v4387 = vpop.f32.mrf.mxu0
        %v4388 = vadd.f32 0.0, %v4387
        %v4389 = vpop.f32.mrf.mxu0
        %4390 = vmatprep.mubr.bf16.mxu0 0
        %4391 = vmatmul.mubr.bf16.gmra.mxu0 %v4293
        %v4392 = vpop.f32.mrf.mxu0
        %v4393 = vadd.f32 0.0, %v4392
        %v4394 = vpop.f32.mrf.mxu0
        %v4395 = vpop.f32.mrf.mxu0
        %v4396 = vadd.f32 0.0, %v4395
        %v4397 = vpop.f32.mrf.mxu0
        %4398 = vmatprep.mubr.bf16.mxu0 0
        %4399 = vmatmul.mubr.bf16.gmra.mxu0 %v4296
        %v4400 = vpop.f32.mrf.mxu0
        %v4401 = vadd.f32 0.0, %v4400
        %v4402 = vpop.f32.mrf.mxu0
        %v4403 = vpop.f32.mrf.mxu0
        %v4404 = vadd.f32 0.0, %v4403
        %v4405 = vpop.f32.mrf.mxu0
        %4406 = vmatprep.mubr.bf16.mxu0 0
        %4407 = vmatmul.mubr.bf16.gmra.mxu0 %v4299
        %v4408 = vpop.f32.mrf.mxu0
        %v4409 = vadd.f32 0.0, %v4408
        %v4410 = vpop.f32.mrf.mxu0
        %v4411 = vpop.f32.mrf.mxu0
        %v4412 = vadd.f32 0.0, %v4411
        %v4413 = vpop.f32.mrf.mxu0
        %4414 = vmatprep.mubr.bf16.mxu0 0
        %4415 = vmatmul.mubr.bf16.gmra.mxu0 %v4302
        %v4416 = vpop.f32.mrf.mxu0
        %v4417 = vadd.f32 0.0, %v4416
        %v4418 = vpop.f32.mrf.mxu0
        %v4419 = vpop.f32.mrf.mxu0
        %v4420 = vadd.f32 0.0, %v4419
        %v4421 = vpop.f32.mrf.mxu0
        %4422 = vmatprep.mubr.bf16.mxu0 0
        %4423 = vmatmul.mubr.bf16.gmra.mxu0 %v4305
        %v4424 = vpop.f32.mrf.mxu0
        %v4425 = vadd.f32 0.0, %v4424
        %v4426 = vpop.f32.mrf.mxu0
        %v4427 = vpop.f32.mrf.mxu0
        %v4428 = vadd.f32 0.0, %v4427
        %v4429 = vpop.f32.mrf.mxu0
        %4430 = vmatprep.mubr.bf16.mxu0 0
        %4431 = vmatmul.mubr.bf16.gmra.mxu0 %v4308
        %v4432 = vpop.f32.mrf.mxu0
        %v4433 = vadd.f32 0.0, %v4432
        %v4434 = vpop.f32.mrf.mxu0
        %v4435 = vpop.f32.mrf.mxu0
        %v4436 = vadd.f32 0.0, %v4435
        %v4437 = vpop.f32.mrf.mxu0
        %4438 = vmatprep.mubr.bf16.mxu0 0
        %4439 = vmatmul.mubr.bf16.gmra.mxu0 %v4311
        %v4440 = vpop.f32.mrf.mxu0
        %v4441 = vadd.f32 0.0, %v4440
        %v4442 = vpop.f32.mrf.mxu0
        %v4443 = vpop.f32.mrf.mxu0
        %v4444 = vadd.f32 0.0, %v4443
        %v4445 = vpop.f32.mrf.mxu0
        %4446 = vmatprep.mubr.bf16.mxu0 0
        %4447 = vmatmul.mubr.bf16.gmra.mxu0 %v4314
        %v4448 = vpop.f32.mrf.mxu0
        %v4449 = vadd.f32 0.0, %v4448
        %v4450 = vpop.f32.mrf.mxu0
        %v4451 = vpop.f32.mrf.mxu0
        %v4452 = vadd.f32 0.0, %v4451
        %v4453 = vpop.f32.mrf.mxu0
        %4454 = vmatprep.mubr.bf16.mxu0 0
        %4455 = vmatmul.mubr.bf16.gmra.mxu0 %v4317
        %v4456 = vpop.f32.mrf.mxu0
        %v4457 = vadd.f32 0.0, %v4456
        %v4458 = vpop.f32.mrf.mxu0
        %v4459 = vpop.f32.mrf.mxu0
        %v4460 = vadd.f32 0.0, %v4459
        %v4461 = vpop.f32.mrf.mxu0
        %4462 = vmatprep.mubr.bf16.mxu0 0
        %4463 = vmatmul.mubr.bf16.gmra.mxu0 %v4320
        %v4464 = vpop.f32.mrf.mxu0
        %v4465 = vadd.f32 0.0, %v4464
        %v4466 = vpop.f32.mrf.mxu0
        %v4467 = vpop.f32.mrf.mxu0
        %v4468 = vadd.f32 0.0, %v4467
        %v4469 = vpop.f32.mrf.mxu0
        %4470 = vmatprep.mubr.bf16.mxu0 0
        %4471 = vmatmul.mubr.bf16.gmra.mxu0 %v4323
        %v4472 = vpop.f32.mrf.mxu0
        %v4473 = vadd.f32 0.0, %v4472
        %v4474 = vpop.f32.mrf.mxu0
        %v4475 = vpop.f32.mrf.mxu0
        %v4476 = vadd.f32 0.0, %v4475
        %v4477 = vpop.f32.mrf.mxu0
        %4478 = vmatprep.mubr.bf16.mxu0 0
        %4479 = vmatmul.mubr.bf16.gmra.mxu0 %v4326
        %v4480 = vpop.f32.mrf.mxu0
        %v4481 = vadd.f32 0.0, %v4480
        %v4482 = vpop.f32.mrf.mxu0
        %v4483 = vpop.f32.mrf.mxu0
        %v4484 = vadd.f32 0.0, %v4483
        %v4485 = vpop.f32.mrf.mxu0
        %4486 = vmatprep.mubr.bf16.mxu0 0
        %4487 = vmatmul.mubr.bf16.gmra.mxu0 %v4329
        %v4488 = vpop.f32.mrf.mxu0
        %v4489 = vadd.f32 0.0, %v4488
        %v4490 = vpop.f32.mrf.mxu0
        %v4491 = vpop.f32.mrf.mxu0
        %v4492 = vadd.f32 0.0, %v4491
        %v4493 = vpop.f32.mrf.mxu0
        %4494 = vdwg.mxu0
        %v4495 = vadd.f32 %v3769, %v4369
        %v4496 = vadd.f32 %v3770, %v4372
        %v4497 = vadd.f32 %v3771, %v4377
        %v4498 = vadd.f32 %v3772, %v4380
        %v4499 = vadd.f32 %v3773, %v4385
        %v4500 = vadd.f32 %v3774, %v4388
        %v4501 = vadd.f32 %v3775, %v4393
        %v4502 = vadd.f32 %v3776, %v4396
        %v4503 = vadd.f32 %v3777, %v4401
        %v4504 = vadd.f32 %v3778, %v4404
        %v4505 = vadd.f32 %v3779, %v4409
        %v4506 = vadd.f32 %v3780, %v4412
        %v4507 = vadd.f32 %v3781, %v4417
        %v4508 = vadd.f32 %v3782, %v4420
        %v4509 = vadd.f32 %v3783, %v4425
        %v4510 = vadd.f32 %v3784, %v4428
        %v4511 = vadd.f32 %v3785, %v4433
        %v4512 = vadd.f32 %v3786, %v4436
        %v4513 = vadd.f32 %v3787, %v4441
        %v4514 = vadd.f32 %v3788, %v4444
        %v4515 = vadd.f32 %v3789, %v4449
        %v4516 = vadd.f32 %v3790, %v4452
        %v4517 = vadd.f32 %v3791, %v4457
        %v4518 = vadd.f32 %v3792, %v4460
        %v4519 = vadd.f32 %v3793, %v4465
        %v4520 = vadd.f32 %v3794, %v4468
        %v4521 = vadd.f32 %v3795, %v4473
        %v4522 = vadd.f32 %v3796, %v4476
        %v4523 = vadd.f32 %v3797, %v4481
        %v4524 = vadd.f32 %v3798, %v4484
        %v4525 = vadd.f32 %v3799, %v4489
        %v4526 = vadd.f32 %v3800, %v4492
        %s4527 = scalar_lea.vmem %s232, 12
        %v4528 = vld [vmem:[%s4527] sm:$0xf]
        %v4529 = vld [vmem:[%s4527 + $0x4] sm:$0xf]
        %v4530 = vld [vmem:[%s4527 + $0xc] sm:$0xf]
        %v4531 = vld [vmem:[%s4527 + $0x10] sm:$0xf]
        %v4532 = vld [vmem:[%s4527 + $0x18] sm:$0xf]
        %v4533 = vld [vmem:[%s4527 + $0x1c] sm:$0xf]
        %v4534 = vld [vmem:[%s4527 + $0x24] sm:$0xf]
        %v4535 = vld [vmem:[%s4527 + $0x28] sm:$0xf]
        %v4536 = vld [vmem:[%s4527 + $0x30] sm:$0xf]
        %v4537 = vld [vmem:[%s4527 + $0x34] sm:$0xf]
        %v4538 = vld [vmem:[%s4527 + $0x3c] sm:$0xf]
        %v4539 = vld [vmem:[%s4527 + $0x40] sm:$0xf]
        %v4540 = vld [vmem:[%s4527 + $0x48] sm:$0xf]
        %v4541 = vld [vmem:[%s4527 + $0x4c] sm:$0xf]
        %v4542 = vld [vmem:[%s4527 + $0x54] sm:$0xf]
        %v4543 = vld [vmem:[%s4527 + $0x58] sm:$0xf]
        %v4544 = vld [vmem:[%s4527 + $0x60] sm:$0xf]
        %v4545 = vld [vmem:[%s4527 + $0x64] sm:$0xf]
        %v4546 = vld [vmem:[%s4527 + $0x6c] sm:$0xf]
        %v4547 = vld [vmem:[%s4527 + $0x70] sm:$0xf]
        %v4548 = vld [vmem:[%s4527 + $0x78] sm:$0xf]
        %v4549 = vld [vmem:[%s4527 + $0x7c] sm:$0xf]
        %v4550 = vld [vmem:[%s4527 + $0x84] sm:$0xf]
        %v4551 = vld [vmem:[%s4527 + $0x88] sm:$0xf]
        %v4552 = vld [vmem:[%s4527 + $0x90] sm:$0xf]
        %v4553 = vld [vmem:[%s4527 + $0x94] sm:$0xf]
        %v4554 = vld [vmem:[%s4527 + $0x9c] sm:$0xf]
        %v4555 = vld [vmem:[%s4527 + $0xa0] sm:$0xf]
        %v4556 = vld [vmem:[%s4527 + $0xa8] sm:$0xf]
        %v4557 = vld [vmem:[%s4527 + $0xac] sm:$0xf]
        %v4558 = vld [vmem:[%s4527 + $0xb4] sm:$0xf]
        %v4559 = vld [vmem:[%s4527 + $0xb8] sm:$0xf]
        %s4560 = scalar_lea.vmem %s1, 16
        %v4561 = vld [vmem:[%s4560] sm:$0x3]
        %v4594 = vunpack.c.l.b16 %v4528
        %v4595 = vunpack.c.l.b16 %v4529
        %v4596 = vunpack.c.l.b16 %v4530
        %v4597 = vunpack.c.l.b16 %v4531
        %v4598 = vunpack.c.l.b16 %v4532
        %v4599 = vunpack.c.l.b16 %v4533
        %v4600 = vunpack.c.l.b16 %v4534
        %v4601 = vunpack.c.l.b16 %v4535
        %v4602 = vunpack.c.l.b16 %v4536
        %v4603 = vunpack.c.l.b16 %v4537
        %v4604 = vunpack.c.l.b16 %v4538
        %v4605 = vunpack.c.l.b16 %v4539
        %v4606 = vunpack.c.l.b16 %v4540
        %v4607 = vunpack.c.l.b16 %v4541
        %v4608 = vunpack.c.l.b16 %v4542
        %v4609 = vunpack.c.l.b16 %v4543
        %v4610 = vunpack.c.l.b16 %v4544
        %v4611 = vunpack.c.l.b16 %v4545
        %v4612 = vunpack.c.l.b16 %v4546
        %v4613 = vunpack.c.l.b16 %v4547
        %v4614 = vunpack.c.l.b16 %v4548
        %v4615 = vunpack.c.l.b16 %v4549
        %v4616 = vunpack.c.l.b16 %v4550
        %v4617 = vunpack.c.l.b16 %v4551
        %v4618 = vunpack.c.l.b16 %v4552
        %v4619 = vunpack.c.l.b16 %v4553
        %v4620 = vunpack.c.l.b16 %v4554
        %v4621 = vunpack.c.l.b16 %v4555
        %v4622 = vunpack.c.l.b16 %v4556
        %v4623 = vunpack.c.l.b16 %v4557
        %v4624 = vunpack.c.l.b16 %v4558
        %v4625 = vunpack.c.l.b16 %v4559
        %v4626 = vpack.c.b16 %v4595, %v4594
        %v4627 = vpack.c.b16 %v4597, %v4596
        %v4628 = vpack.c.b16 %v4599, %v4598
        %v4629 = vpack.c.b16 %v4601, %v4600
        %v4630 = vpack.c.b16 %v4603, %v4602
        %v4631 = vpack.c.b16 %v4605, %v4604
        %v4632 = vpack.c.b16 %v4607, %v4606
        %v4633 = vpack.c.b16 %v4609, %v4608
        %v4634 = vpack.c.b16 %v4611, %v4610
        %v4635 = vpack.c.b16 %v4613, %v4612
        %v4636 = vpack.c.b16 %v4615, %v4614
        %v4637 = vpack.c.b16 %v4617, %v4616
        %v4638 = vpack.c.b16 %v4619, %v4618
        %v4639 = vpack.c.b16 %v4621, %v4620
        %v4640 = vpack.c.b16 %v4623, %v4622
        %v4641 = vpack.c.b16 %v4625, %v4624
        %v4643 = vsel %vm396, %v4626, 0
        %v4646 = vsel %vm396, %v4627, 0
        %v4649 = vsel %vm396, %v4628, 0
        %v4652 = vsel %vm396, %v4629, 0
        %v4655 = vsel %vm396, %v4630, 0
        %v4658 = vsel %vm396, %v4631, 0
        %v4661 = vsel %vm396, %v4632, 0
        %v4664 = vsel %vm396, %v4633, 0
        %v4667 = vsel %vm396, %v4634, 0
        %v4670 = vsel %vm396, %v4635, 0
        %v4673 = vsel %vm396, %v4636, 0
        %v4676 = vsel %vm396, %v4637, 0
        %v4679 = vsel %vm396, %v4638, 0
        %v4682 = vsel %vm396, %v4639, 0
        %v4685 = vsel %vm396, %v4640, 0
        %v4688 = vsel %vm396, %v4641, 0
        %v4691 = vsel %vm445, %v4561, 0
        %4693 = vmatprep.subr.bf16.mxu0 0
        %4694 = vmatpush1.bf16.msra.mxu0 0
        %4695 = vmatprep.subr.bf16.mxu0 0
        %4696 = vmatpush1.bf16.msra.mxu0 0
        %4697 = vmatprep.subr.bf16.mxu0 0
        %4698 = vmatpush1.bf16.msra.mxu0 0
        %4699 = vmatprep.subr.bf16.mxu0 0
        %4700 = vmatpush1.bf16.msra.mxu0 0
        %4701 = vmatprep.subr.bf16.mxu0 0
        %4702 = vmatpush1.bf16.msra.mxu0 0
        %4703 = vmatprep.subr.bf16.mxu0 0
        %4704 = vmatpush1.bf16.msra.mxu0 0
        %4705 = vmatprep.subr.bf16.mxu0 0
        %4706 = vmatpush1.bf16.msra.mxu0 0
        %4707 = vmatprep.subr.bf16.mxu0 0
        %4708 = vmatpush1.bf16.msra.mxu0 %v4691
        %4709 = vmatprep.subr.bf16.mxu0 0
        %4710 = vmatpush2.bf16.msra.mxu0 0
        %4711 = vmatprep.subr.bf16.mxu0 0
        %4712 = vmatpush2.bf16.msra.mxu0 0
        %4713 = vmatprep.subr.bf16.mxu0 0
        %4714 = vmatpush2.bf16.msra.mxu0 0
        %4715 = vmatprep.subr.bf16.mxu0 0
        %4716 = vmatpush2.bf16.msra.mxu0 0
        %4717 = vmatprep.subr.bf16.mxu0 0
        %4718 = vmatpush2.bf16.msra.mxu0 0
        %4719 = vmatprep.subr.bf16.mxu0 0
        %4720 = vmatpush2.bf16.msra.mxu0 0
        %4721 = vmatprep.subr.bf16.mxu0 0
        %4722 = vmatpush2.bf16.msra.mxu0 0
        %4723 = vmatprep.subr.bf16.mxu0 0
        %4724 = vmatpush2.bf16.msra.mxu0 0
        %4725 = vmatprep.mubr.bf16.mxu0 0
        %4726 = vmatmul.mubr.bf16.gmra.mxu0 %v4643
        %v4727 = vpop.f32.mrf.mxu0
        %v4728 = vadd.f32 0.0, %v4727
        %v4729 = vpop.f32.mrf.mxu0
        %v4730 = vpop.f32.mrf.mxu0
        %v4731 = vadd.f32 0.0, %v4730
        %v4732 = vpop.f32.mrf.mxu0
        %4733 = vmatprep.mubr.bf16.mxu0 0
        %4734 = vmatmul.mubr.bf16.gmra.mxu0 %v4646
        %v4735 = vpop.f32.mrf.mxu0
        %v4736 = vadd.f32 0.0, %v4735
        %v4737 = vpop.f32.mrf.mxu0
        %v4738 = vpop.f32.mrf.mxu0
        %v4739 = vadd.f32 0.0, %v4738
        %v4740 = vpop.f32.mrf.mxu0
        %4741 = vmatprep.mubr.bf16.mxu0 0
        %4742 = vmatmul.mubr.bf16.gmra.mxu0 %v4649
        %v4743 = vpop.f32.mrf.mxu0
        %v4744 = vadd.f32 0.0, %v4743
        %v4745 = vpop.f32.mrf.mxu0
        %v4746 = vpop.f32.mrf.mxu0
        %v4747 = vadd.f32 0.0, %v4746
        %v4748 = vpop.f32.mrf.mxu0
        %4749 = vmatprep.mubr.bf16.mxu0 0
        %4750 = vmatmul.mubr.bf16.gmra.mxu0 %v4652
        %v4751 = vpop.f32.mrf.mxu0
        %v4752 = vadd.f32 0.0, %v4751
        %v4753 = vpop.f32.mrf.mxu0
        %v4754 = vpop.f32.mrf.mxu0
        %v4755 = vadd.f32 0.0, %v4754
        %v4756 = vpop.f32.mrf.mxu0
        %4757 = vmatprep.mubr.bf16.mxu0 0
        %4758 = vmatmul.mubr.bf16.gmra.mxu0 %v4655
        %v4759 = vpop.f32.mrf.mxu0
        %v4760 = vadd.f32 0.0, %v4759
        %v4761 = vpop.f32.mrf.mxu0
        %v4762 = vpop.f32.mrf.mxu0
        %v4763 = vadd.f32 0.0, %v4762
        %v4764 = vpop.f32.mrf.mxu0
        %4765 = vmatprep.mubr.bf16.mxu0 0
        %4766 = vmatmul.mubr.bf16.gmra.mxu0 %v4658
        %v4767 = vpop.f32.mrf.mxu0
        %v4768 = vadd.f32 0.0, %v4767
        %v4769 = vpop.f32.mrf.mxu0
        %v4770 = vpop.f32.mrf.mxu0
        %v4771 = vadd.f32 0.0, %v4770
        %v4772 = vpop.f32.mrf.mxu0
        %4773 = vmatprep.mubr.bf16.mxu0 0
        %4774 = vmatmul.mubr.bf16.gmra.mxu0 %v4661
        %v4775 = vpop.f32.mrf.mxu0
        %v4776 = vadd.f32 0.0, %v4775
        %v4777 = vpop.f32.mrf.mxu0
        %v4778 = vpop.f32.mrf.mxu0
        %v4779 = vadd.f32 0.0, %v4778
        %v4780 = vpop.f32.mrf.mxu0
        %4781 = vmatprep.mubr.bf16.mxu0 0
        %4782 = vmatmul.mubr.bf16.gmra.mxu0 %v4664
        %v4783 = vpop.f32.mrf.mxu0
        %v4784 = vadd.f32 0.0, %v4783
        %v4785 = vpop.f32.mrf.mxu0
        %v4786 = vpop.f32.mrf.mxu0
        %v4787 = vadd.f32 0.0, %v4786
        %v4788 = vpop.f32.mrf.mxu0
        %4789 = vmatprep.mubr.bf16.mxu0 0
        %4790 = vmatmul.mubr.bf16.gmra.mxu0 %v4667
        %v4791 = vpop.f32.mrf.mxu0
        %v4792 = vadd.f32 0.0, %v4791
        %v4793 = vpop.f32.mrf.mxu0
        %v4794 = vpop.f32.mrf.mxu0
        %v4795 = vadd.f32 0.0, %v4794
        %v4796 = vpop.f32.mrf.mxu0
        %4797 = vmatprep.mubr.bf16.mxu0 0
        %4798 = vmatmul.mubr.bf16.gmra.mxu0 %v4670
        %v4799 = vpop.f32.mrf.mxu0
        %v4800 = vadd.f32 0.0, %v4799
        %v4801 = vpop.f32.mrf.mxu0
        %v4802 = vpop.f32.mrf.mxu0
        %v4803 = vadd.f32 0.0, %v4802
        %v4804 = vpop.f32.mrf.mxu0
        %4805 = vmatprep.mubr.bf16.mxu0 0
        %4806 = vmatmul.mubr.bf16.gmra.mxu0 %v4673
        %v4807 = vpop.f32.mrf.mxu0
        %v4808 = vadd.f32 0.0, %v4807
        %v4809 = vpop.f32.mrf.mxu0
        %v4810 = vpop.f32.mrf.mxu0
        %v4811 = vadd.f32 0.0, %v4810
        %v4812 = vpop.f32.mrf.mxu0
        %4813 = vmatprep.mubr.bf16.mxu0 0
        %4814 = vmatmul.mubr.bf16.gmra.mxu0 %v4676
        %v4815 = vpop.f32.mrf.mxu0
        %v4816 = vadd.f32 0.0, %v4815
        %v4817 = vpop.f32.mrf.mxu0
        %v4818 = vpop.f32.mrf.mxu0
        %v4819 = vadd.f32 0.0, %v4818
        %v4820 = vpop.f32.mrf.mxu0
        %4821 = vmatprep.mubr.bf16.mxu0 0
        %4822 = vmatmul.mubr.bf16.gmra.mxu0 %v4679
        %v4823 = vpop.f32.mrf.mxu0
        %v4824 = vadd.f32 0.0, %v4823
        %v4825 = vpop.f32.mrf.mxu0
        %v4826 = vpop.f32.mrf.mxu0
        %v4827 = vadd.f32 0.0, %v4826
        %v4828 = vpop.f32.mrf.mxu0
        %4829 = vmatprep.mubr.bf16.mxu0 0
        %4830 = vmatmul.mubr.bf16.gmra.mxu0 %v4682
        %v4831 = vpop.f32.mrf.mxu0
        %v4832 = vadd.f32 0.0, %v4831
        %v4833 = vpop.f32.mrf.mxu0
        %v4834 = vpop.f32.mrf.mxu0
        %v4835 = vadd.f32 0.0, %v4834
        %v4836 = vpop.f32.mrf.mxu0
        %4837 = vmatprep.mubr.bf16.mxu0 0
        %4838 = vmatmul.mubr.bf16.gmra.mxu0 %v4685
        %v4839 = vpop.f32.mrf.mxu0
        %v4840 = vadd.f32 0.0, %v4839
        %v4841 = vpop.f32.mrf.mxu0
        %v4842 = vpop.f32.mrf.mxu0
        %v4843 = vadd.f32 0.0, %v4842
        %v4844 = vpop.f32.mrf.mxu0
        %4845 = vmatprep.mubr.bf16.mxu0 0
        %4846 = vmatmul.mubr.bf16.gmra.mxu0 %v4688
        %v4847 = vpop.f32.mrf.mxu0
        %v4848 = vadd.f32 0.0, %v4847
        %v4849 = vpop.f32.mrf.mxu0
        %v4850 = vpop.f32.mrf.mxu0
        %v4851 = vadd.f32 0.0, %v4850
        %v4852 = vpop.f32.mrf.mxu0
        %4853 = vdwg.mxu0
        %v4854 = vadd.f32 %v4495, %v4728
        %v4855 = vadd.f32 %v4496, %v4731
        %v4856 = vadd.f32 %v4497, %v4736
        %v4857 = vadd.f32 %v4498, %v4739
        %v4858 = vadd.f32 %v4499, %v4744
        %v4859 = vadd.f32 %v4500, %v4747
        %v4860 = vadd.f32 %v4501, %v4752
        %v4861 = vadd.f32 %v4502, %v4755
        %v4862 = vadd.f32 %v4503, %v4760
        %v4863 = vadd.f32 %v4504, %v4763
        %v4864 = vadd.f32 %v4505, %v4768
        %v4865 = vadd.f32 %v4506, %v4771
        %v4866 = vadd.f32 %v4507, %v4776
        %v4867 = vadd.f32 %v4508, %v4779
        %v4868 = vadd.f32 %v4509, %v4784
        %v4869 = vadd.f32 %v4510, %v4787
        %v4870 = vadd.f32 %v4511, %v4792
        %v4871 = vadd.f32 %v4512, %v4795
        %v4872 = vadd.f32 %v4513, %v4800
        %v4873 = vadd.f32 %v4514, %v4803
        %v4874 = vadd.f32 %v4515, %v4808
        %v4875 = vadd.f32 %v4516, %v4811
        %v4876 = vadd.f32 %v4517, %v4816
        %v4877 = vadd.f32 %v4518, %v4819
        %v4878 = vadd.f32 %v4519, %v4824
        %v4879 = vadd.f32 %v4520, %v4827
        %v4880 = vadd.f32 %v4521, %v4832
        %v4881 = vadd.f32 %v4522, %v4835
        %v4882 = vadd.f32 %v4523, %v4840
        %v4883 = vadd.f32 %v4524, %v4843
        %v4884 = vadd.f32 %v4525, %v4848
        %v4885 = vadd.f32 %v4526, %v4851
        %s4886 = scalar_lea.vmem %s232, 216
        %v4887 = vld [vmem:[%s4886] sm:$0xf]
        %v4888 = vld [vmem:[%s4886 + $0x4] sm:$0xf]
        %v4889 = vld [vmem:[%s4886 + $0xc] sm:$0xf]
        %v4890 = vld [vmem:[%s4886 + $0x10] sm:$0xf]
        %v4891 = vld [vmem:[%s4886 + $0x18] sm:$0xf]
        %v4892 = vld [vmem:[%s4886 + $0x1c] sm:$0xf]
        %v4893 = vld [vmem:[%s4886 + $0x24] sm:$0xf]
        %v4894 = vld [vmem:[%s4886 + $0x28] sm:$0xf]
        %v4895 = vld [vmem:[%s4886 + $0x30] sm:$0xf]
        %v4896 = vld [vmem:[%s4886 + $0x34] sm:$0xf]
        %v4897 = vld [vmem:[%s4886 + $0x3c] sm:$0xf]
        %v4898 = vld [vmem:[%s4886 + $0x40] sm:$0xf]
        %v4899 = vld [vmem:[%s4886 + $0x48] sm:$0xf]
        %v4900 = vld [vmem:[%s4886 + $0x4c] sm:$0xf]
        %v4901 = vld [vmem:[%s4886 + $0x54] sm:$0xf]
        %v4902 = vld [vmem:[%s4886 + $0x58] sm:$0xf]
        %v4903 = vld [vmem:[%s4886 + $0x60] sm:$0xf]
        %v4904 = vld [vmem:[%s4886 + $0x64] sm:$0xf]
        %v4905 = vld [vmem:[%s4886 + $0x6c] sm:$0xf]
        %v4906 = vld [vmem:[%s4886 + $0x70] sm:$0xf]
        %v4907 = vld [vmem:[%s4886 + $0x78] sm:$0xf]
        %v4908 = vld [vmem:[%s4886 + $0x7c] sm:$0xf]
        %v4909 = vld [vmem:[%s4886 + $0x84] sm:$0xf]
        %v4910 = vld [vmem:[%s4886 + $0x88] sm:$0xf]
        %v4911 = vld [vmem:[%s4886 + $0x90] sm:$0xf]
        %v4912 = vld [vmem:[%s4886 + $0x94] sm:$0xf]
        %v4913 = vld [vmem:[%s4886 + $0x9c] sm:$0xf]
        %v4914 = vld [vmem:[%s4886 + $0xa0] sm:$0xf]
        %v4915 = vld [vmem:[%s4886 + $0xa8] sm:$0xf]
        %v4916 = vld [vmem:[%s4886 + $0xac] sm:$0xf]
        %v4917 = vld [vmem:[%s4886 + $0xb4] sm:$0xf]
        %v4918 = vld [vmem:[%s4886 + $0xb8] sm:$0xf]
        %s4919 = scalar_lea.vmem %s1, 18
        %v4920 = vld [vmem:[%s4919] sm:$0x3]
        %v4953 = vunpack.c.l.b16 %v4887
        %v4954 = vunpack.c.l.b16 %v4888
        %v4955 = vunpack.c.l.b16 %v4889
        %v4956 = vunpack.c.l.b16 %v4890
        %v4957 = vunpack.c.l.b16 %v4891
        %v4958 = vunpack.c.l.b16 %v4892
        %v4959 = vunpack.c.l.b16 %v4893
        %v4960 = vunpack.c.l.b16 %v4894
        %v4961 = vunpack.c.l.b16 %v4895
        %v4962 = vunpack.c.l.b16 %v4896
        %v4963 = vunpack.c.l.b16 %v4897
        %v4964 = vunpack.c.l.b16 %v4898
        %v4965 = vunpack.c.l.b16 %v4899
        %v4966 = vunpack.c.l.b16 %v4900
        %v4967 = vunpack.c.l.b16 %v4901
        %v4968 = vunpack.c.l.b16 %v4902
        %v4969 = vunpack.c.l.b16 %v4903
        %v4970 = vunpack.c.l.b16 %v4904
        %v4971 = vunpack.c.l.b16 %v4905
        %v4972 = vunpack.c.l.b16 %v4906
        %v4973 = vunpack.c.l.b16 %v4907
        %v4974 = vunpack.c.l.b16 %v4908
        %v4975 = vunpack.c.l.b16 %v4909
        %v4976 = vunpack.c.l.b16 %v4910
        %v4977 = vunpack.c.l.b16 %v4911
        %v4978 = vunpack.c.l.b16 %v4912
        %v4979 = vunpack.c.l.b16 %v4913
        %v4980 = vunpack.c.l.b16 %v4914
        %v4981 = vunpack.c.l.b16 %v4915
        %v4982 = vunpack.c.l.b16 %v4916
        %v4983 = vunpack.c.l.b16 %v4917
        %v4984 = vunpack.c.l.b16 %v4918
        %v4985 = vpack.c.b16 %v4954, %v4953
        %v4986 = vpack.c.b16 %v4956, %v4955
        %v4987 = vpack.c.b16 %v4958, %v4957
        %v4988 = vpack.c.b16 %v4960, %v4959
        %v4989 = vpack.c.b16 %v4962, %v4961
        %v4990 = vpack.c.b16 %v4964, %v4963
        %v4991 = vpack.c.b16 %v4966, %v4965
        %v4992 = vpack.c.b16 %v4968, %v4967
        %v4993 = vpack.c.b16 %v4970, %v4969
        %v4994 = vpack.c.b16 %v4972, %v4971
        %v4995 = vpack.c.b16 %v4974, %v4973
        %v4996 = vpack.c.b16 %v4976, %v4975
        %v4997 = vpack.c.b16 %v4978, %v4977
        %v4998 = vpack.c.b16 %v4980, %v4979
        %v4999 = vpack.c.b16 %v4982, %v4981
        %v5000 = vpack.c.b16 %v4984, %v4983
        %v5002 = vsel %vm396, %v4985, 0
        %v5005 = vsel %vm396, %v4986, 0
        %v5008 = vsel %vm396, %v4987, 0
        %v5011 = vsel %vm396, %v4988, 0
        %v5014 = vsel %vm396, %v4989, 0
        %v5017 = vsel %vm396, %v4990, 0
        %v5020 = vsel %vm396, %v4991, 0
        %v5023 = vsel %vm396, %v4992, 0
        %v5026 = vsel %vm396, %v4993, 0
        %v5029 = vsel %vm396, %v4994, 0
        %v5032 = vsel %vm396, %v4995, 0
        %v5035 = vsel %vm396, %v4996, 0
        %v5038 = vsel %vm396, %v4997, 0
        %v5041 = vsel %vm396, %v4998, 0
        %v5044 = vsel %vm396, %v4999, 0
        %v5047 = vsel %vm396, %v5000, 0
        %v5050 = vsel %vm445, %v4920, 0
        %5052 = vmatprep.subr.bf16.mxu0 0
        %5053 = vmatpush1.bf16.msra.mxu0 0
        %5054 = vmatprep.subr.bf16.mxu0 0
        %5055 = vmatpush1.bf16.msra.mxu0 0
        %5056 = vmatprep.subr.bf16.mxu0 0
        %5057 = vmatpush1.bf16.msra.mxu0 0
        %5058 = vmatprep.subr.bf16.mxu0 0
        %5059 = vmatpush1.bf16.msra.mxu0 0
        %5060 = vmatprep.subr.bf16.mxu0 0
        %5061 = vmatpush1.bf16.msra.mxu0 0
        %5062 = vmatprep.subr.bf16.mxu0 0
        %5063 = vmatpush1.bf16.msra.mxu0 0
        %5064 = vmatprep.subr.bf16.mxu0 0
        %5065 = vmatpush1.bf16.msra.mxu0 0
        %5066 = vmatprep.subr.bf16.mxu0 0
        %5067 = vmatpush1.bf16.msra.mxu0 %v5050
        %5068 = vmatprep.subr.bf16.mxu0 0
        %5069 = vmatpush2.bf16.msra.mxu0 0
        %5070 = vmatprep.subr.bf16.mxu0 0
        %5071 = vmatpush2.bf16.msra.mxu0 0
        %5072 = vmatprep.subr.bf16.mxu0 0
        %5073 = vmatpush2.bf16.msra.mxu0 0
        %5074 = vmatprep.subr.bf16.mxu0 0
        %5075 = vmatpush2.bf16.msra.mxu0 0
        %5076 = vmatprep.subr.bf16.mxu0 0
        %5077 = vmatpush2.bf16.msra.mxu0 0
        %5078 = vmatprep.subr.bf16.mxu0 0
        %5079 = vmatpush2.bf16.msra.mxu0 0
        %5080 = vmatprep.subr.bf16.mxu0 0
        %5081 = vmatpush2.bf16.msra.mxu0 0
        %5082 = vmatprep.subr.bf16.mxu0 0
        %5083 = vmatpush2.bf16.msra.mxu0 0
        %5084 = vmatprep.mubr.bf16.mxu0 0
        %5085 = vmatmul.mubr.bf16.gmra.mxu0 %v5002
        %v5086 = vpop.f32.mrf.mxu0
        %v5087 = vadd.f32 0.0, %v5086
        %v5088 = vpop.f32.mrf.mxu0
        %v5089 = vpop.f32.mrf.mxu0
        %v5090 = vadd.f32 0.0, %v5089
        %v5091 = vpop.f32.mrf.mxu0
        %5092 = vmatprep.mubr.bf16.mxu0 0
        %5093 = vmatmul.mubr.bf16.gmra.mxu0 %v5005
        %v5094 = vpop.f32.mrf.mxu0
        %v5095 = vadd.f32 0.0, %v5094
        %v5096 = vpop.f32.mrf.mxu0
        %v5097 = vpop.f32.mrf.mxu0
        %v5098 = vadd.f32 0.0, %v5097
        %v5099 = vpop.f32.mrf.mxu0
        %5100 = vmatprep.mubr.bf16.mxu0 0
        %5101 = vmatmul.mubr.bf16.gmra.mxu0 %v5008
        %v5102 = vpop.f32.mrf.mxu0
        %v5103 = vadd.f32 0.0, %v5102
        %v5104 = vpop.f32.mrf.mxu0
        %v5105 = vpop.f32.mrf.mxu0
        %v5106 = vadd.f32 0.0, %v5105
        %v5107 = vpop.f32.mrf.mxu0
        %5108 = vmatprep.mubr.bf16.mxu0 0
        %5109 = vmatmul.mubr.bf16.gmra.mxu0 %v5011
        %v5110 = vpop.f32.mrf.mxu0
        %v5111 = vadd.f32 0.0, %v5110
        %v5112 = vpop.f32.mrf.mxu0
        %v5113 = vpop.f32.mrf.mxu0
        %v5114 = vadd.f32 0.0, %v5113
        %v5115 = vpop.f32.mrf.mxu0
        %5116 = vmatprep.mubr.bf16.mxu0 0
        %5117 = vmatmul.mubr.bf16.gmra.mxu0 %v5014
        %v5118 = vpop.f32.mrf.mxu0
        %v5119 = vadd.f32 0.0, %v5118
        %v5120 = vpop.f32.mrf.mxu0
        %v5121 = vpop.f32.mrf.mxu0
        %v5122 = vadd.f32 0.0, %v5121
        %v5123 = vpop.f32.mrf.mxu0
        %5124 = vmatprep.mubr.bf16.mxu0 0
        %5125 = vmatmul.mubr.bf16.gmra.mxu0 %v5017
        %v5126 = vpop.f32.mrf.mxu0
        %v5127 = vadd.f32 0.0, %v5126
        %v5128 = vpop.f32.mrf.mxu0
        %v5129 = vpop.f32.mrf.mxu0
        %v5130 = vadd.f32 0.0, %v5129
        %v5131 = vpop.f32.mrf.mxu0
        %5132 = vmatprep.mubr.bf16.mxu0 0
        %5133 = vmatmul.mubr.bf16.gmra.mxu0 %v5020
        %v5134 = vpop.f32.mrf.mxu0
        %v5135 = vadd.f32 0.0, %v5134
        %v5136 = vpop.f32.mrf.mxu0
        %v5137 = vpop.f32.mrf.mxu0
        %v5138 = vadd.f32 0.0, %v5137
        %v5139 = vpop.f32.mrf.mxu0
        %5140 = vmatprep.mubr.bf16.mxu0 0
        %5141 = vmatmul.mubr.bf16.gmra.mxu0 %v5023
        %v5142 = vpop.f32.mrf.mxu0
        %v5143 = vadd.f32 0.0, %v5142
        %v5144 = vpop.f32.mrf.mxu0
        %v5145 = vpop.f32.mrf.mxu0
        %v5146 = vadd.f32 0.0, %v5145
        %v5147 = vpop.f32.mrf.mxu0
        %5148 = vmatprep.mubr.bf16.mxu0 0
        %5149 = vmatmul.mubr.bf16.gmra.mxu0 %v5026
        %v5150 = vpop.f32.mrf.mxu0
        %v5151 = vadd.f32 0.0, %v5150
        %v5152 = vpop.f32.mrf.mxu0
        %v5153 = vpop.f32.mrf.mxu0
        %v5154 = vadd.f32 0.0, %v5153
        %v5155 = vpop.f32.mrf.mxu0
        %5156 = vmatprep.mubr.bf16.mxu0 0
        %5157 = vmatmul.mubr.bf16.gmra.mxu0 %v5029
        %v5158 = vpop.f32.mrf.mxu0
        %v5159 = vadd.f32 0.0, %v5158
        %v5160 = vpop.f32.mrf.mxu0
        %v5161 = vpop.f32.mrf.mxu0
        %v5162 = vadd.f32 0.0, %v5161
        %v5163 = vpop.f32.mrf.mxu0
        %5164 = vmatprep.mubr.bf16.mxu0 0
        %5165 = vmatmul.mubr.bf16.gmra.mxu0 %v5032
        %v5166 = vpop.f32.mrf.mxu0
        %v5167 = vadd.f32 0.0, %v5166
        %v5168 = vpop.f32.mrf.mxu0
        %v5169 = vpop.f32.mrf.mxu0
        %v5170 = vadd.f32 0.0, %v5169
        %v5171 = vpop.f32.mrf.mxu0
        %5172 = vmatprep.mubr.bf16.mxu0 0
        %5173 = vmatmul.mubr.bf16.gmra.mxu0 %v5035
        %v5174 = vpop.f32.mrf.mxu0
        %v5175 = vadd.f32 0.0, %v5174
        %v5176 = vpop.f32.mrf.mxu0
        %v5177 = vpop.f32.mrf.mxu0
        %v5178 = vadd.f32 0.0, %v5177
        %v5179 = vpop.f32.mrf.mxu0
        %5180 = vmatprep.mubr.bf16.mxu0 0
        %5181 = vmatmul.mubr.bf16.gmra.mxu0 %v5038
        %v5182 = vpop.f32.mrf.mxu0
        %v5183 = vadd.f32 0.0, %v5182
        %v5184 = vpop.f32.mrf.mxu0
        %v5185 = vpop.f32.mrf.mxu0
        %v5186 = vadd.f32 0.0, %v5185
        %v5187 = vpop.f32.mrf.mxu0
        %5188 = vmatprep.mubr.bf16.mxu0 0
        %5189 = vmatmul.mubr.bf16.gmra.mxu0 %v5041
        %v5190 = vpop.f32.mrf.mxu0
        %v5191 = vadd.f32 0.0, %v5190
        %v5192 = vpop.f32.mrf.mxu0
        %v5193 = vpop.f32.mrf.mxu0
        %v5194 = vadd.f32 0.0, %v5193
        %v5195 = vpop.f32.mrf.mxu0
        %5196 = vmatprep.mubr.bf16.mxu0 0
        %5197 = vmatmul.mubr.bf16.gmra.mxu0 %v5044
        %v5198 = vpop.f32.mrf.mxu0
        %v5199 = vadd.f32 0.0, %v5198
        %v5200 = vpop.f32.mrf.mxu0
        %v5201 = vpop.f32.mrf.mxu0
        %v5202 = vadd.f32 0.0, %v5201
        %v5203 = vpop.f32.mrf.mxu0
        %5204 = vmatprep.mubr.bf16.mxu0 0
        %5205 = vmatmul.mubr.bf16.gmra.mxu0 %v5047
        %v5206 = vpop.f32.mrf.mxu0
        %v5207 = vadd.f32 0.0, %v5206
        %v5208 = vpop.f32.mrf.mxu0
        %v5209 = vpop.f32.mrf.mxu0
        %v5210 = vadd.f32 0.0, %v5209
        %v5211 = vpop.f32.mrf.mxu0
        %5212 = vdwg.mxu0
        %v5213 = vadd.f32 %v4854, %v5087
        %v5214 = vadd.f32 %v4855, %v5090
        %v5215 = vadd.f32 %v4856, %v5095
        %v5216 = vadd.f32 %v4857, %v5098
        %v5217 = vadd.f32 %v4858, %v5103
        %v5218 = vadd.f32 %v4859, %v5106
        %v5219 = vadd.f32 %v4860, %v5111
        %v5220 = vadd.f32 %v4861, %v5114
        %v5221 = vadd.f32 %v4862, %v5119
        %v5222 = vadd.f32 %v4863, %v5122
        %v5223 = vadd.f32 %v4864, %v5127
        %v5224 = vadd.f32 %v4865, %v5130
        %v5225 = vadd.f32 %v4866, %v5135
        %v5226 = vadd.f32 %v4867, %v5138
        %v5227 = vadd.f32 %v4868, %v5143
        %v5228 = vadd.f32 %v4869, %v5146
        %v5229 = vadd.f32 %v4870, %v5151
        %v5230 = vadd.f32 %v4871, %v5154
        %v5231 = vadd.f32 %v4872, %v5159
        %v5232 = vadd.f32 %v4873, %v5162
        %v5233 = vadd.f32 %v4874, %v5167
        %v5234 = vadd.f32 %v4875, %v5170
        %v5235 = vadd.f32 %v4876, %v5175
        %v5236 = vadd.f32 %v4877, %v5178
        %v5237 = vadd.f32 %v4878, %v5183
        %v5238 = vadd.f32 %v4879, %v5186
        %v5239 = vadd.f32 %v4880, %v5191
        %v5240 = vadd.f32 %v4881, %v5194
        %v5241 = vadd.f32 %v4882, %v5199
        %v5242 = vadd.f32 %v4883, %v5202
        %v5243 = vadd.f32 %v4884, %v5207
        %v5244 = vadd.f32 %v4885, %v5210
        %v5245 = vld [vmem:[%s4527] sm:$0xf]
        %v5246 = vld [vmem:[%s4527 + $0x4] sm:$0xf]
        %v5247 = vld [vmem:[%s4527 + $0x8] sm:$0x1]
        %v5248 = vld [vmem:[%s4527 + $0xc] sm:$0xf]
        %v5249 = vld [vmem:[%s4527 + $0x10] sm:$0xf]
        %v5250 = vld [vmem:[%s4527 + $0x14] sm:$0x1]
        %v5251 = vld [vmem:[%s4527 + $0x18] sm:$0xf]
        %v5252 = vld [vmem:[%s4527 + $0x1c] sm:$0xf]
        %v5253 = vld [vmem:[%s4527 + $0x20] sm:$0x1]
        %v5254 = vld [vmem:[%s4527 + $0x24] sm:$0xf]
        %v5255 = vld [vmem:[%s4527 + $0x28] sm:$0xf]
        %v5256 = vld [vmem:[%s4527 + $0x2c] sm:$0x1]
        %v5257 = vld [vmem:[%s4527 + $0x30] sm:$0xf]
        %v5258 = vld [vmem:[%s4527 + $0x34] sm:$0xf]
        %v5259 = vld [vmem:[%s4527 + $0x38] sm:$0x1]
        %v5260 = vld [vmem:[%s4527 + $0x3c] sm:$0xf]
        %v5261 = vld [vmem:[%s4527 + $0x40] sm:$0xf]
        %v5262 = vld [vmem:[%s4527 + $0x44] sm:$0x1]
        %v5263 = vld [vmem:[%s4527 + $0x48] sm:$0xf]
        %v5264 = vld [vmem:[%s4527 + $0x4c] sm:$0xf]
        %v5265 = vld [vmem:[%s4527 + $0x50] sm:$0x1]
        %v5266 = vld [vmem:[%s4527 + $0x54] sm:$0xf]
        %v5267 = vld [vmem:[%s4527 + $0x58] sm:$0xf]
        %v5268 = vld [vmem:[%s4527 + $0x5c] sm:$0x1]
        %v5269 = vld [vmem:[%s4527 + $0x60] sm:$0xf]
        %v5270 = vld [vmem:[%s4527 + $0x64] sm:$0xf]
        %v5271 = vld [vmem:[%s4527 + $0x68] sm:$0x1]
        %v5272 = vld [vmem:[%s4527 + $0x6c] sm:$0xf]
        %v5273 = vld [vmem:[%s4527 + $0x70] sm:$0xf]
        %v5274 = vld [vmem:[%s4527 + $0x74] sm:$0x1]
        %v5275 = vld [vmem:[%s4527 + $0x78] sm:$0xf]
        %v5276 = vld [vmem:[%s4527 + $0x7c] sm:$0xf]
        %v5277 = vld [vmem:[%s4527 + $0x80] sm:$0x1]
        %v5278 = vld [vmem:[%s4527 + $0x84] sm:$0xf]
        %v5279 = vld [vmem:[%s4527 + $0x88] sm:$0xf]
        %v5280 = vld [vmem:[%s4527 + $0x8c] sm:$0x1]
        %v5281 = vld [vmem:[%s4527 + $0x90] sm:$0xf]
        %v5282 = vld [vmem:[%s4527 + $0x94] sm:$0xf]
        %v5283 = vld [vmem:[%s4527 + $0x98] sm:$0x1]
        %v5284 = vld [vmem:[%s4527 + $0x9c] sm:$0xf]
        %v5285 = vld [vmem:[%s4527 + $0xa0] sm:$0xf]
        %v5286 = vld [vmem:[%s4527 + $0xa4] sm:$0x1]
        %v5287 = vld [vmem:[%s4527 + $0xa8] sm:$0xf]
        %v5288 = vld [vmem:[%s4527 + $0xac] sm:$0xf]
        %v5289 = vld [vmem:[%s4527 + $0xb0] sm:$0x1]
        %v5290 = vld [vmem:[%s4527 + $0xb4] sm:$0xf]
        %v5291 = vld [vmem:[%s4527 + $0xb8] sm:$0xf]
        %v5292 = vld [vmem:[%s4527 + $0xbc] sm:$0x1]
        %v5294 = vshrl.u32 %v5245, 16
        %v5296 = vrot.slane %v5294, 4
        %v5297 = vshll.u32 %v5245, 16
        %v5299 = vrot.slane %v5297, 5
        %v5300 = vor.u32 %v5296, %v5299
        %v5301 = vrot.slane %v5300, 4
        %v5303 = vshll.u32 %v5246, 16
        %v5305 = vrot.slane %v5303, 5
        %v5306 = vsel %vm952, %v5301, %v5305
        %v5307 = vshrl.u32 %v5246, 16
        %v5309 = vrot.slane %v5307, 4
        %v5310 = vor.u32 %v5309, %v5305
        %v5311 = vrot.slane %v5310, 4
        %v5313 = vshll.u32 %v5247, 16
        %v5315 = vrot.slane %v5313, 5
        %v5316 = vsel %vm952, %v5311, %v5315
        %v5318 = vshrl.u32 %v5248, 16
        %v5320 = vrot.slane %v5318, 4
        %v5321 = vshll.u32 %v5248, 16
        %v5323 = vrot.slane %v5321, 5
        %v5324 = vor.u32 %v5320, %v5323
        %v5325 = vrot.slane %v5324, 4
        %v5327 = vshll.u32 %v5249, 16
        %v5329 = vrot.slane %v5327, 5
        %v5330 = vsel %vm952, %v5325, %v5329
        %v5331 = vshrl.u32 %v5249, 16
        %v5333 = vrot.slane %v5331, 4
        %v5334 = vor.u32 %v5333, %v5329
        %v5335 = vrot.slane %v5334, 4
        %v5337 = vshll.u32 %v5250, 16
        %v5339 = vrot.slane %v5337, 5
        %v5340 = vsel %vm952, %v5335, %v5339
        %v5342 = vshrl.u32 %v5251, 16
        %v5344 = vrot.slane %v5342, 4
        %v5345 = vshll.u32 %v5251, 16
        %v5347 = vrot.slane %v5345, 5
        %v5348 = vor.u32 %v5344, %v5347
        %v5349 = vrot.slane %v5348, 4
        %v5351 = vshll.u32 %v5252, 16
        %v5353 = vrot.slane %v5351, 5
        %v5354 = vsel %vm952, %v5349, %v5353
        %v5355 = vshrl.u32 %v5252, 16
        %v5357 = vrot.slane %v5355, 4
        %v5358 = vor.u32 %v5357, %v5353
        %v5359 = vrot.slane %v5358, 4
        %v5361 = vshll.u32 %v5253, 16
        %v5363 = vrot.slane %v5361, 5
        %v5364 = vsel %vm952, %v5359, %v5363
        %v5366 = vshrl.u32 %v5254, 16
        %v5368 = vrot.slane %v5366, 4
        %v5369 = vshll.u32 %v5254, 16
        %v5371 = vrot.slane %v5369, 5
        %v5372 = vor.u32 %v5368, %v5371
        %v5373 = vrot.slane %v5372, 4
        %v5375 = vshll.u32 %v5255, 16
        %v5377 = vrot.slane %v5375, 5
        %v5378 = vsel %vm952, %v5373, %v5377
        %v5379 = vshrl.u32 %v5255, 16
        %v5381 = vrot.slane %v5379, 4
        %v5382 = vor.u32 %v5381, %v5377
        %v5383 = vrot.slane %v5382, 4
        %v5385 = vshll.u32 %v5256, 16
        %v5387 = vrot.slane %v5385, 5
        %v5388 = vsel %vm952, %v5383, %v5387
        %v5390 = vshrl.u32 %v5257, 16
        %v5392 = vrot.slane %v5390, 4
        %v5393 = vshll.u32 %v5257, 16
        %v5395 = vrot.slane %v5393, 5
        %v5396 = vor.u32 %v5392, %v5395
        %v5397 = vrot.slane %v5396, 4
        %v5399 = vshll.u32 %v5258, 16
        %v5401 = vrot.slane %v5399, 5
        %v5402 = vsel %vm952, %v5397, %v5401
        %v5403 = vshrl.u32 %v5258, 16
        %v5405 = vrot.slane %v5403, 4
        %v5406 = vor.u32 %v5405, %v5401
        %v5407 = vrot.slane %v5406, 4
        %v5409 = vshll.u32 %v5259, 16
        %v5411 = vrot.slane %v5409, 5
        %v5412 = vsel %vm952, %v5407, %v5411
        %v5414 = vshrl.u32 %v5260, 16
        %v5416 = vrot.slane %v5414, 4
        %v5417 = vshll.u32 %v5260, 16
        %v5419 = vrot.slane %v5417, 5
        %v5420 = vor.u32 %v5416, %v5419
        %v5421 = vrot.slane %v5420, 4
        %v5423 = vshll.u32 %v5261, 16
        %v5425 = vrot.slane %v5423, 5
        %v5426 = vsel %vm952, %v5421, %v5425
        %v5427 = vshrl.u32 %v5261, 16
        %v5429 = vrot.slane %v5427, 4
        %v5430 = vor.u32 %v5429, %v5425
        %v5431 = vrot.slane %v5430, 4
        %v5433 = vshll.u32 %v5262, 16
        %v5435 = vrot.slane %v5433, 5
        %v5436 = vsel %vm952, %v5431, %v5435
        %v5438 = vshrl.u32 %v5263, 16
        %v5440 = vrot.slane %v5438, 4
        %v5441 = vshll.u32 %v5263, 16
        %v5443 = vrot.slane %v5441, 5
        %v5444 = vor.u32 %v5440, %v5443
        %v5445 = vrot.slane %v5444, 4
        %v5447 = vshll.u32 %v5264, 16
        %v5449 = vrot.slane %v5447, 5
        %v5450 = vsel %vm952, %v5445, %v5449
        %v5451 = vshrl.u32 %v5264, 16
        %v5453 = vrot.slane %v5451, 4
        %v5454 = vor.u32 %v5453, %v5449
        %v5455 = vrot.slane %v5454, 4
        %v5457 = vshll.u32 %v5265, 16
        %v5459 = vrot.slane %v5457, 5
        %v5460 = vsel %vm952, %v5455, %v5459
        %v5462 = vshrl.u32 %v5266, 16
        %v5464 = vrot.slane %v5462, 4
        %v5465 = vshll.u32 %v5266, 16
        %v5467 = vrot.slane %v5465, 5
        %v5468 = vor.u32 %v5464, %v5467
        %v5469 = vrot.slane %v5468, 4
        %v5471 = vshll.u32 %v5267, 16
        %v5473 = vrot.slane %v5471, 5
        %v5474 = vsel %vm952, %v5469, %v5473
        %v5475 = vshrl.u32 %v5267, 16
        %v5477 = vrot.slane %v5475, 4
        %v5478 = vor.u32 %v5477, %v5473
        %v5479 = vrot.slane %v5478, 4
        %v5481 = vshll.u32 %v5268, 16
        %v5483 = vrot.slane %v5481, 5
        %v5484 = vsel %vm952, %v5479, %v5483
        %v5486 = vshrl.u32 %v5269, 16
        %v5488 = vrot.slane %v5486, 4
        %v5489 = vshll.u32 %v5269, 16
        %v5491 = vrot.slane %v5489, 5
        %v5492 = vor.u32 %v5488, %v5491
        %v5493 = vrot.slane %v5492, 4
        %v5495 = vshll.u32 %v5270, 16
        %v5497 = vrot.slane %v5495, 5
        %v5498 = vsel %vm952, %v5493, %v5497
        %v5499 = vshrl.u32 %v5270, 16
        %v5501 = vrot.slane %v5499, 4
        %v5502 = vor.u32 %v5501, %v5497
        %v5503 = vrot.slane %v5502, 4
        %v5505 = vshll.u32 %v5271, 16
        %v5507 = vrot.slane %v5505, 5
        %v5508 = vsel %vm952, %v5503, %v5507
        %v5510 = vshrl.u32 %v5272, 16
        %v5512 = vrot.slane %v5510, 4
        %v5513 = vshll.u32 %v5272, 16
        %v5515 = vrot.slane %v5513, 5
        %v5516 = vor.u32 %v5512, %v5515
        %v5517 = vrot.slane %v5516, 4
        %v5519 = vshll.u32 %v5273, 16
        %v5521 = vrot.slane %v5519, 5
        %v5522 = vsel %vm952, %v5517, %v5521
        %v5523 = vshrl.u32 %v5273, 16
        %v5525 = vrot.slane %v5523, 4
        %v5526 = vor.u32 %v5525, %v5521
        %v5527 = vrot.slane %v5526, 4
        %v5529 = vshll.u32 %v5274, 16
        %v5531 = vrot.slane %v5529, 5
        %v5532 = vsel %vm952, %v5527, %v5531
        %v5534 = vshrl.u32 %v5275, 16
        %v5536 = vrot.slane %v5534, 4
        %v5537 = vshll.u32 %v5275, 16
        %v5539 = vrot.slane %v5537, 5
        %v5540 = vor.u32 %v5536, %v5539
        %v5541 = vrot.slane %v5540, 4
        %v5543 = vshll.u32 %v5276, 16
        %v5545 = vrot.slane %v5543, 5
        %v5546 = vsel %vm952, %v5541, %v5545
        %v5547 = vshrl.u32 %v5276, 16
        %v5549 = vrot.slane %v5547, 4
        %v5550 = vor.u32 %v5549, %v5545
        %v5551 = vrot.slane %v5550, 4
        %v5553 = vshll.u32 %v5277, 16
        %v5555 = vrot.slane %v5553, 5
        %v5556 = vsel %vm952, %v5551, %v5555
        %v5558 = vshrl.u32 %v5278, 16
        %v5560 = vrot.slane %v5558, 4
        %v5561 = vshll.u32 %v5278, 16
        %v5563 = vrot.slane %v5561, 5
        %v5564 = vor.u32 %v5560, %v5563
        %v5565 = vrot.slane %v5564, 4
        %v5567 = vshll.u32 %v5279, 16
        %v5569 = vrot.slane %v5567, 5
        %v5570 = vsel %vm952, %v5565, %v5569
        %v5571 = vshrl.u32 %v5279, 16
        %v5573 = vrot.slane %v5571, 4
        %v5574 = vor.u32 %v5573, %v5569
        %v5575 = vrot.slane %v5574, 4
        %v5577 = vshll.u32 %v5280, 16
        %v5579 = vrot.slane %v5577, 5
        %v5580 = vsel %vm952, %v5575, %v5579
        %v5582 = vshrl.u32 %v5281, 16
        %v5584 = vrot.slane %v5582, 4
        %v5585 = vshll.u32 %v5281, 16
        %v5587 = vrot.slane %v5585, 5
        %v5588 = vor.u32 %v5584, %v5587
        %v5589 = vrot.slane %v5588, 4
        %v5591 = vshll.u32 %v5282, 16
        %v5593 = vrot.slane %v5591, 5
        %v5594 = vsel %vm952, %v5589, %v5593
        %v5595 = vshrl.u32 %v5282, 16
        %v5597 = vrot.slane %v5595, 4
        %v5598 = vor.u32 %v5597, %v5593
        %v5599 = vrot.slane %v5598, 4
        %v5601 = vshll.u32 %v5283, 16
        %v5603 = vrot.slane %v5601, 5
        %v5604 = vsel %vm952, %v5599, %v5603
        %v5606 = vshrl.u32 %v5284, 16
        %v5608 = vrot.slane %v5606, 4
        %v5609 = vshll.u32 %v5284, 16
        %v5611 = vrot.slane %v5609, 5
        %v5612 = vor.u32 %v5608, %v5611
        %v5613 = vrot.slane %v5612, 4
        %v5615 = vshll.u32 %v5285, 16
        %v5617 = vrot.slane %v5615, 5
        %v5618 = vsel %vm952, %v5613, %v5617
        %v5619 = vshrl.u32 %v5285, 16
        %v5621 = vrot.slane %v5619, 4
        %v5622 = vor.u32 %v5621, %v5617
        %v5623 = vrot.slane %v5622, 4
        %v5625 = vshll.u32 %v5286, 16
        %v5627 = vrot.slane %v5625, 5
        %v5628 = vsel %vm952, %v5623, %v5627
        %v5630 = vshrl.u32 %v5287, 16
        %v5632 = vrot.slane %v5630, 4
        %v5633 = vshll.u32 %v5287, 16
        %v5635 = vrot.slane %v5633, 5
        %v5636 = vor.u32 %v5632, %v5635
        %v5637 = vrot.slane %v5636, 4
        %v5639 = vshll.u32 %v5288, 16
        %v5641 = vrot.slane %v5639, 5
        %v5642 = vsel %vm952, %v5637, %v5641
        %v5643 = vshrl.u32 %v5288, 16
        %v5645 = vrot.slane %v5643, 4
        %v5646 = vor.u32 %v5645, %v5641
        %v5647 = vrot.slane %v5646, 4
        %v5649 = vshll.u32 %v5289, 16
        %v5651 = vrot.slane %v5649, 5
        %v5652 = vsel %vm952, %v5647, %v5651
        %v5654 = vshrl.u32 %v5290, 16
        %v5656 = vrot.slane %v5654, 4
        %v5657 = vshll.u32 %v5290, 16
        %v5659 = vrot.slane %v5657, 5
        %v5660 = vor.u32 %v5656, %v5659
        %v5661 = vrot.slane %v5660, 4
        %v5663 = vshll.u32 %v5291, 16
        %v5665 = vrot.slane %v5663, 5
        %v5666 = vsel %vm952, %v5661, %v5665
        %v5667 = vshrl.u32 %v5291, 16
        %v5669 = vrot.slane %v5667, 4
        %v5670 = vor.u32 %v5669, %v5665
        %v5671 = vrot.slane %v5670, 4
        %v5673 = vshll.u32 %v5292, 16
        %v5675 = vrot.slane %v5673, 5
        %v5676 = vsel %vm952, %v5671, %v5675
        %s5677 = scalar_lea.vmem %s1, 20
        %v5678 = vld [vmem:[%s5677] sm:$0x3]
        %v5679 = vunpack.c.l.b16 %v5306
        %v5680 = vunpack.c.l.b16 %v5316
        %v5681 = vunpack.c.l.b16 %v5330
        %v5682 = vunpack.c.l.b16 %v5340
        %v5683 = vunpack.c.l.b16 %v5354
        %v5684 = vunpack.c.l.b16 %v5364
        %v5685 = vunpack.c.l.b16 %v5378
        %v5686 = vunpack.c.l.b16 %v5388
        %v5687 = vunpack.c.l.b16 %v5402
        %v5688 = vunpack.c.l.b16 %v5412
        %v5689 = vunpack.c.l.b16 %v5426
        %v5690 = vunpack.c.l.b16 %v5436
        %v5691 = vunpack.c.l.b16 %v5450
        %v5692 = vunpack.c.l.b16 %v5460
        %v5693 = vunpack.c.l.b16 %v5474
        %v5694 = vunpack.c.l.b16 %v5484
        %v5695 = vunpack.c.l.b16 %v5498
        %v5696 = vunpack.c.l.b16 %v5508
        %v5697 = vunpack.c.l.b16 %v5522
        %v5698 = vunpack.c.l.b16 %v5532
        %v5699 = vunpack.c.l.b16 %v5546
        %v5700 = vunpack.c.l.b16 %v5556
        %v5701 = vunpack.c.l.b16 %v5570
        %v5702 = vunpack.c.l.b16 %v5580
        %v5703 = vunpack.c.l.b16 %v5594
        %v5704 = vunpack.c.l.b16 %v5604
        %v5705 = vunpack.c.l.b16 %v5618
        %v5706 = vunpack.c.l.b16 %v5628
        %v5707 = vunpack.c.l.b16 %v5642
        %v5708 = vunpack.c.l.b16 %v5652
        %v5709 = vunpack.c.l.b16 %v5666
        %v5710 = vunpack.c.l.b16 %v5676
        %v5711 = vpack.c.b16 %v5680, %v5679
        %v5712 = vpack.c.b16 %v5682, %v5681
        %v5713 = vpack.c.b16 %v5684, %v5683
        %v5714 = vpack.c.b16 %v5686, %v5685
        %v5715 = vpack.c.b16 %v5688, %v5687
        %v5716 = vpack.c.b16 %v5690, %v5689
        %v5717 = vpack.c.b16 %v5692, %v5691
        %v5718 = vpack.c.b16 %v5694, %v5693
        %v5719 = vpack.c.b16 %v5696, %v5695
        %v5720 = vpack.c.b16 %v5698, %v5697
        %v5721 = vpack.c.b16 %v5700, %v5699
        %v5722 = vpack.c.b16 %v5702, %v5701
        %v5723 = vpack.c.b16 %v5704, %v5703
        %v5724 = vpack.c.b16 %v5706, %v5705
        %v5725 = vpack.c.b16 %v5708, %v5707
        %v5726 = vpack.c.b16 %v5710, %v5709
        %v5728 = vsel %vm396, %v5711, 0
        %v5731 = vsel %vm396, %v5712, 0
        %v5734 = vsel %vm396, %v5713, 0
        %v5737 = vsel %vm396, %v5714, 0
        %v5740 = vsel %vm396, %v5715, 0
        %v5743 = vsel %vm396, %v5716, 0
        %v5746 = vsel %vm396, %v5717, 0
        %v5749 = vsel %vm396, %v5718, 0
        %v5752 = vsel %vm396, %v5719, 0
        %v5755 = vsel %vm396, %v5720, 0
        %v5758 = vsel %vm396, %v5721, 0
        %v5761 = vsel %vm396, %v5722, 0
        %v5764 = vsel %vm396, %v5723, 0
        %v5767 = vsel %vm396, %v5724, 0
        %v5770 = vsel %vm396, %v5725, 0
        %v5773 = vsel %vm396, %v5726, 0
        %v5776 = vsel %vm445, %v5678, 0
        %5778 = vmatprep.subr.bf16.mxu0 0
        %5779 = vmatpush1.bf16.msra.mxu0 0
        %5780 = vmatprep.subr.bf16.mxu0 0
        %5781 = vmatpush1.bf16.msra.mxu0 0
        %5782 = vmatprep.subr.bf16.mxu0 0
        %5783 = vmatpush1.bf16.msra.mxu0 0
        %5784 = vmatprep.subr.bf16.mxu0 0
        %5785 = vmatpush1.bf16.msra.mxu0 0
        %5786 = vmatprep.subr.bf16.mxu0 0
        %5787 = vmatpush1.bf16.msra.mxu0 0
        %5788 = vmatprep.subr.bf16.mxu0 0
        %5789 = vmatpush1.bf16.msra.mxu0 0
        %5790 = vmatprep.subr.bf16.mxu0 0
        %5791 = vmatpush1.bf16.msra.mxu0 0
        %5792 = vmatprep.subr.bf16.mxu0 0
        %5793 = vmatpush1.bf16.msra.mxu0 %v5776
        %5794 = vmatprep.subr.bf16.mxu0 0
        %5795 = vmatpush2.bf16.msra.mxu0 0
        %5796 = vmatprep.subr.bf16.mxu0 0
        %5797 = vmatpush2.bf16.msra.mxu0 0
        %5798 = vmatprep.subr.bf16.mxu0 0
        %5799 = vmatpush2.bf16.msra.mxu0 0
        %5800 = vmatprep.subr.bf16.mxu0 0
        %5801 = vmatpush2.bf16.msra.mxu0 0
        %5802 = vmatprep.subr.bf16.mxu0 0
        %5803 = vmatpush2.bf16.msra.mxu0 0
        %5804 = vmatprep.subr.bf16.mxu0 0
        %5805 = vmatpush2.bf16.msra.mxu0 0
        %5806 = vmatprep.subr.bf16.mxu0 0
        %5807 = vmatpush2.bf16.msra.mxu0 0
        %5808 = vmatprep.subr.bf16.mxu0 0
        %5809 = vmatpush2.bf16.msra.mxu0 0
        %5810 = vmatprep.mubr.bf16.mxu0 0
        %5811 = vmatmul.mubr.bf16.gmra.mxu0 %v5728
        %v5812 = vpop.f32.mrf.mxu0
        %v5813 = vadd.f32 0.0, %v5812
        %v5814 = vpop.f32.mrf.mxu0
        %v5815 = vpop.f32.mrf.mxu0
        %v5816 = vadd.f32 0.0, %v5815
        %v5817 = vpop.f32.mrf.mxu0
        %5818 = vmatprep.mubr.bf16.mxu0 0
        %5819 = vmatmul.mubr.bf16.gmra.mxu0 %v5731
        %v5820 = vpop.f32.mrf.mxu0
        %v5821 = vadd.f32 0.0, %v5820
        %v5822 = vpop.f32.mrf.mxu0
        %v5823 = vpop.f32.mrf.mxu0
        %v5824 = vadd.f32 0.0, %v5823
        %v5825 = vpop.f32.mrf.mxu0
        %5826 = vmatprep.mubr.bf16.mxu0 0
        %5827 = vmatmul.mubr.bf16.gmra.mxu0 %v5734
        %v5828 = vpop.f32.mrf.mxu0
        %v5829 = vadd.f32 0.0, %v5828
        %v5830 = vpop.f32.mrf.mxu0
        %v5831 = vpop.f32.mrf.mxu0
        %v5832 = vadd.f32 0.0, %v5831
        %v5833 = vpop.f32.mrf.mxu0
        %5834 = vmatprep.mubr.bf16.mxu0 0
        %5835 = vmatmul.mubr.bf16.gmra.mxu0 %v5737
        %v5836 = vpop.f32.mrf.mxu0
        %v5837 = vadd.f32 0.0, %v5836
        %v5838 = vpop.f32.mrf.mxu0
        %v5839 = vpop.f32.mrf.mxu0
        %v5840 = vadd.f32 0.0, %v5839
        %v5841 = vpop.f32.mrf.mxu0
        %5842 = vmatprep.mubr.bf16.mxu0 0
        %5843 = vmatmul.mubr.bf16.gmra.mxu0 %v5740
        %v5844 = vpop.f32.mrf.mxu0
        %v5845 = vadd.f32 0.0, %v5844
        %v5846 = vpop.f32.mrf.mxu0
        %v5847 = vpop.f32.mrf.mxu0
        %v5848 = vadd.f32 0.0, %v5847
        %v5849 = vpop.f32.mrf.mxu0
        %5850 = vmatprep.mubr.bf16.mxu0 0
        %5851 = vmatmul.mubr.bf16.gmra.mxu0 %v5743
        %v5852 = vpop.f32.mrf.mxu0
        %v5853 = vadd.f32 0.0, %v5852
        %v5854 = vpop.f32.mrf.mxu0
        %v5855 = vpop.f32.mrf.mxu0
        %v5856 = vadd.f32 0.0, %v5855
        %v5857 = vpop.f32.mrf.mxu0
        %5858 = vmatprep.mubr.bf16.mxu0 0
        %5859 = vmatmul.mubr.bf16.gmra.mxu0 %v5746
        %v5860 = vpop.f32.mrf.mxu0
        %v5861 = vadd.f32 0.0, %v5860
        %v5862 = vpop.f32.mrf.mxu0
        %v5863 = vpop.f32.mrf.mxu0
        %v5864 = vadd.f32 0.0, %v5863
        %v5865 = vpop.f32.mrf.mxu0
        %5866 = vmatprep.mubr.bf16.mxu0 0
        %5867 = vmatmul.mubr.bf16.gmra.mxu0 %v5749
        %v5868 = vpop.f32.mrf.mxu0
        %v5869 = vadd.f32 0.0, %v5868
        %v5870 = vpop.f32.mrf.mxu0
        %v5871 = vpop.f32.mrf.mxu0
        %v5872 = vadd.f32 0.0, %v5871
        %v5873 = vpop.f32.mrf.mxu0
        %5874 = vmatprep.mubr.bf16.mxu0 0
        %5875 = vmatmul.mubr.bf16.gmra.mxu0 %v5752
        %v5876 = vpop.f32.mrf.mxu0
        %v5877 = vadd.f32 0.0, %v5876
        %v5878 = vpop.f32.mrf.mxu0
        %v5879 = vpop.f32.mrf.mxu0
        %v5880 = vadd.f32 0.0, %v5879
        %v5881 = vpop.f32.mrf.mxu0
        %5882 = vmatprep.mubr.bf16.mxu0 0
        %5883 = vmatmul.mubr.bf16.gmra.mxu0 %v5755
        %v5884 = vpop.f32.mrf.mxu0
        %v5885 = vadd.f32 0.0, %v5884
        %v5886 = vpop.f32.mrf.mxu0
        %v5887 = vpop.f32.mrf.mxu0
        %v5888 = vadd.f32 0.0, %v5887
        %v5889 = vpop.f32.mrf.mxu0
        %5890 = vmatprep.mubr.bf16.mxu0 0
        %5891 = vmatmul.mubr.bf16.gmra.mxu0 %v5758
        %v5892 = vpop.f32.mrf.mxu0
        %v5893 = vadd.f32 0.0, %v5892
        %v5894 = vpop.f32.mrf.mxu0
        %v5895 = vpop.f32.mrf.mxu0
        %v5896 = vadd.f32 0.0, %v5895
        %v5897 = vpop.f32.mrf.mxu0
        %5898 = vmatprep.mubr.bf16.mxu0 0
        %5899 = vmatmul.mubr.bf16.gmra.mxu0 %v5761
        %v5900 = vpop.f32.mrf.mxu0
        %v5901 = vadd.f32 0.0, %v5900
        %v5902 = vpop.f32.mrf.mxu0
        %v5903 = vpop.f32.mrf.mxu0
        %v5904 = vadd.f32 0.0, %v5903
        %v5905 = vpop.f32.mrf.mxu0
        %5906 = vmatprep.mubr.bf16.mxu0 0
        %5907 = vmatmul.mubr.bf16.gmra.mxu0 %v5764
        %v5908 = vpop.f32.mrf.mxu0
        %v5909 = vadd.f32 0.0, %v5908
        %v5910 = vpop.f32.mrf.mxu0
        %v5911 = vpop.f32.mrf.mxu0
        %v5912 = vadd.f32 0.0, %v5911
        %v5913 = vpop.f32.mrf.mxu0
        %5914 = vmatprep.mubr.bf16.mxu0 0
        %5915 = vmatmul.mubr.bf16.gmra.mxu0 %v5767
        %v5916 = vpop.f32.mrf.mxu0
        %v5917 = vadd.f32 0.0, %v5916
        %v5918 = vpop.f32.mrf.mxu0
        %v5919 = vpop.f32.mrf.mxu0
        %v5920 = vadd.f32 0.0, %v5919
        %v5921 = vpop.f32.mrf.mxu0
        %5922 = vmatprep.mubr.bf16.mxu0 0
        %5923 = vmatmul.mubr.bf16.gmra.mxu0 %v5770
        %v5924 = vpop.f32.mrf.mxu0
        %v5925 = vadd.f32 0.0, %v5924
        %v5926 = vpop.f32.mrf.mxu0
        %v5927 = vpop.f32.mrf.mxu0
        %v5928 = vadd.f32 0.0, %v5927
        %v5929 = vpop.f32.mrf.mxu0
        %5930 = vmatprep.mubr.bf16.mxu0 0
        %5931 = vmatmul.mubr.bf16.gmra.mxu0 %v5773
        %v5932 = vpop.f32.mrf.mxu0
        %v5933 = vadd.f32 0.0, %v5932
        %v5934 = vpop.f32.mrf.mxu0
        %v5935 = vpop.f32.mrf.mxu0
        %v5936 = vadd.f32 0.0, %v5935
        %v5937 = vpop.f32.mrf.mxu0
        %5938 = vdwg.mxu0
        %v5939 = vadd.f32 %v5213, %v5813
        %v5940 = vadd.f32 %v5214, %v5816
        %v5941 = vadd.f32 %v5215, %v5821
        %v5942 = vadd.f32 %v5216, %v5824
        %v5943 = vadd.f32 %v5217, %v5829
        %v5944 = vadd.f32 %v5218, %v5832
        %v5945 = vadd.f32 %v5219, %v5837
        %v5946 = vadd.f32 %v5220, %v5840
        %v5947 = vadd.f32 %v5221, %v5845
        %v5948 = vadd.f32 %v5222, %v5848
        %v5949 = vadd.f32 %v5223, %v5853
        %v5950 = vadd.f32 %v5224, %v5856
        %v5951 = vadd.f32 %v5225, %v5861
        %v5952 = vadd.f32 %v5226, %v5864
        %v5953 = vadd.f32 %v5227, %v5869
        %v5954 = vadd.f32 %v5228, %v5872
        %v5955 = vadd.f32 %v5229, %v5877
        %v5956 = vadd.f32 %v5230, %v5880
        %v5957 = vadd.f32 %v5231, %v5885
        %v5958 = vadd.f32 %v5232, %v5888
        %v5959 = vadd.f32 %v5233, %v5893
        %v5960 = vadd.f32 %v5234, %v5896
        %v5961 = vadd.f32 %v5235, %v5901
        %v5962 = vadd.f32 %v5236, %v5904
        %v5963 = vadd.f32 %v5237, %v5909
        %v5964 = vadd.f32 %v5238, %v5912
        %v5965 = vadd.f32 %v5239, %v5917
        %v5966 = vadd.f32 %v5240, %v5920
        %v5967 = vadd.f32 %v5241, %v5925
        %v5968 = vadd.f32 %v5242, %v5928
        %v5969 = vadd.f32 %v5243, %v5933
        %v5970 = vadd.f32 %v5244, %v5936
        %v5971 = vld [vmem:[%s4886] sm:$0xf]
        %v5972 = vld [vmem:[%s4886 + $0x4] sm:$0xf]
        %v5973 = vld [vmem:[%s4886 + $0x8] sm:$0x1]
        %v5974 = vld [vmem:[%s4886 + $0xc] sm:$0xf]
        %v5975 = vld [vmem:[%s4886 + $0x10] sm:$0xf]
        %v5976 = vld [vmem:[%s4886 + $0x14] sm:$0x1]
        %v5977 = vld [vmem:[%s4886 + $0x18] sm:$0xf]
        %v5978 = vld [vmem:[%s4886 + $0x1c] sm:$0xf]
        %v5979 = vld [vmem:[%s4886 + $0x20] sm:$0x1]
        %v5980 = vld [vmem:[%s4886 + $0x24] sm:$0xf]
        %v5981 = vld [vmem:[%s4886 + $0x28] sm:$0xf]
        %v5982 = vld [vmem:[%s4886 + $0x2c] sm:$0x1]
        %v5983 = vld [vmem:[%s4886 + $0x30] sm:$0xf]
        %v5984 = vld [vmem:[%s4886 + $0x34] sm:$0xf]
        %v5985 = vld [vmem:[%s4886 + $0x38] sm:$0x1]
        %v5986 = vld [vmem:[%s4886 + $0x3c] sm:$0xf]
        %v5987 = vld [vmem:[%s4886 + $0x40] sm:$0xf]
        %v5988 = vld [vmem:[%s4886 + $0x44] sm:$0x1]
        %v5989 = vld [vmem:[%s4886 + $0x48] sm:$0xf]
        %v5990 = vld [vmem:[%s4886 + $0x4c] sm:$0xf]
        %v5991 = vld [vmem:[%s4886 + $0x50] sm:$0x1]
        %v5992 = vld [vmem:[%s4886 + $0x54] sm:$0xf]
        %v5993 = vld [vmem:[%s4886 + $0x58] sm:$0xf]
        %v5994 = vld [vmem:[%s4886 + $0x5c] sm:$0x1]
        %v5995 = vld [vmem:[%s4886 + $0x60] sm:$0xf]
        %v5996 = vld [vmem:[%s4886 + $0x64] sm:$0xf]
        %v5997 = vld [vmem:[%s4886 + $0x68] sm:$0x1]
        %v5998 = vld [vmem:[%s4886 + $0x6c] sm:$0xf]
        %v5999 = vld [vmem:[%s4886 + $0x70] sm:$0xf]
        %v6000 = vld [vmem:[%s4886 + $0x74] sm:$0x1]
        %v6001 = vld [vmem:[%s4886 + $0x78] sm:$0xf]
        %v6002 = vld [vmem:[%s4886 + $0x7c] sm:$0xf]
        %v6003 = vld [vmem:[%s4886 + $0x80] sm:$0x1]
        %v6004 = vld [vmem:[%s4886 + $0x84] sm:$0xf]
        %v6005 = vld [vmem:[%s4886 + $0x88] sm:$0xf]
        %v6006 = vld [vmem:[%s4886 + $0x8c] sm:$0x1]
        %v6007 = vld [vmem:[%s4886 + $0x90] sm:$0xf]
        %v6008 = vld [vmem:[%s4886 + $0x94] sm:$0xf]
        %v6009 = vld [vmem:[%s4886 + $0x98] sm:$0x1]
        %v6010 = vld [vmem:[%s4886 + $0x9c] sm:$0xf]
        %v6011 = vld [vmem:[%s4886 + $0xa0] sm:$0xf]
        %v6012 = vld [vmem:[%s4886 + $0xa4] sm:$0x1]
        %v6013 = vld [vmem:[%s4886 + $0xa8] sm:$0xf]
        %v6014 = vld [vmem:[%s4886 + $0xac] sm:$0xf]
        %v6015 = vld [vmem:[%s4886 + $0xb0] sm:$0x1]
        %v6016 = vld [vmem:[%s4886 + $0xb4] sm:$0xf]
        %v6017 = vld [vmem:[%s4886 + $0xb8] sm:$0xf]
        %v6018 = vld [vmem:[%s4886 + $0xbc] sm:$0x1]
        %v6020 = vshrl.u32 %v5971, 16
        %v6022 = vrot.slane %v6020, 4
        %v6023 = vshll.u32 %v5971, 16
        %v6025 = vrot.slane %v6023, 5
        %v6026 = vor.u32 %v6022, %v6025
        %v6027 = vrot.slane %v6026, 4
        %v6029 = vshll.u32 %v5972, 16
        %v6031 = vrot.slane %v6029, 5
        %v6032 = vsel %vm952, %v6027, %v6031
        %v6033 = vshrl.u32 %v5972, 16
        %v6035 = vrot.slane %v6033, 4
        %v6036 = vor.u32 %v6035, %v6031
        %v6037 = vrot.slane %v6036, 4
        %v6039 = vshll.u32 %v5973, 16
        %v6041 = vrot.slane %v6039, 5
        %v6042 = vsel %vm952, %v6037, %v6041
        %v6044 = vshrl.u32 %v5974, 16
        %v6046 = vrot.slane %v6044, 4
        %v6047 = vshll.u32 %v5974, 16
        %v6049 = vrot.slane %v6047, 5
        %v6050 = vor.u32 %v6046, %v6049
        %v6051 = vrot.slane %v6050, 4
        %v6053 = vshll.u32 %v5975, 16
        %v6055 = vrot.slane %v6053, 5
        %v6056 = vsel %vm952, %v6051, %v6055
        %v6057 = vshrl.u32 %v5975, 16
        %v6059 = vrot.slane %v6057, 4
        %v6060 = vor.u32 %v6059, %v6055
        %v6061 = vrot.slane %v6060, 4
        %v6063 = vshll.u32 %v5976, 16
        %v6065 = vrot.slane %v6063, 5
        %v6066 = vsel %vm952, %v6061, %v6065
        %v6068 = vshrl.u32 %v5977, 16
        %v6070 = vrot.slane %v6068, 4
        %v6071 = vshll.u32 %v5977, 16
        %v6073 = vrot.slane %v6071, 5
        %v6074 = vor.u32 %v6070, %v6073
        %v6075 = vrot.slane %v6074, 4
        %v6077 = vshll.u32 %v5978, 16
        %v6079 = vrot.slane %v6077, 5
        %v6080 = vsel %vm952, %v6075, %v6079
        %v6081 = vshrl.u32 %v5978, 16
        %v6083 = vrot.slane %v6081, 4
        %v6084 = vor.u32 %v6083, %v6079
        %v6085 = vrot.slane %v6084, 4
        %v6087 = vshll.u32 %v5979, 16
        %v6089 = vrot.slane %v6087, 5
        %v6090 = vsel %vm952, %v6085, %v6089
        %v6092 = vshrl.u32 %v5980, 16
        %v6094 = vrot.slane %v6092, 4
        %v6095 = vshll.u32 %v5980, 16
        %v6097 = vrot.slane %v6095, 5
        %v6098 = vor.u32 %v6094, %v6097
        %v6099 = vrot.slane %v6098, 4
        %v6101 = vshll.u32 %v5981, 16
        %v6103 = vrot.slane %v6101, 5
        %v6104 = vsel %vm952, %v6099, %v6103
        %v6105 = vshrl.u32 %v5981, 16
        %v6107 = vrot.slane %v6105, 4
        %v6108 = vor.u32 %v6107, %v6103
        %v6109 = vrot.slane %v6108, 4
        %v6111 = vshll.u32 %v5982, 16
        %v6113 = vrot.slane %v6111, 5
        %v6114 = vsel %vm952, %v6109, %v6113
        %v6116 = vshrl.u32 %v5983, 16
        %v6118 = vrot.slane %v6116, 4
        %v6119 = vshll.u32 %v5983, 16
        %v6121 = vrot.slane %v6119, 5
        %v6122 = vor.u32 %v6118, %v6121
        %v6123 = vrot.slane %v6122, 4
        %v6125 = vshll.u32 %v5984, 16
        %v6127 = vrot.slane %v6125, 5
        %v6128 = vsel %vm952, %v6123, %v6127
        %v6129 = vshrl.u32 %v5984, 16
        %v6131 = vrot.slane %v6129, 4
        %v6132 = vor.u32 %v6131, %v6127
        %v6133 = vrot.slane %v6132, 4
        %v6135 = vshll.u32 %v5985, 16
        %v6137 = vrot.slane %v6135, 5
        %v6138 = vsel %vm952, %v6133, %v6137
        %v6140 = vshrl.u32 %v5986, 16
        %v6142 = vrot.slane %v6140, 4
        %v6143 = vshll.u32 %v5986, 16
        %v6145 = vrot.slane %v6143, 5
        %v6146 = vor.u32 %v6142, %v6145
        %v6147 = vrot.slane %v6146, 4
        %v6149 = vshll.u32 %v5987, 16
        %v6151 = vrot.slane %v6149, 5
        %v6152 = vsel %vm952, %v6147, %v6151
        %v6153 = vshrl.u32 %v5987, 16
        %v6155 = vrot.slane %v6153, 4
        %v6156 = vor.u32 %v6155, %v6151
        %v6157 = vrot.slane %v6156, 4
        %v6159 = vshll.u32 %v5988, 16
        %v6161 = vrot.slane %v6159, 5
        %v6162 = vsel %vm952, %v6157, %v6161
        %v6164 = vshrl.u32 %v5989, 16
        %v6166 = vrot.slane %v6164, 4
        %v6167 = vshll.u32 %v5989, 16
        %v6169 = vrot.slane %v6167, 5
        %v6170 = vor.u32 %v6166, %v6169
        %v6171 = vrot.slane %v6170, 4
        %v6173 = vshll.u32 %v5990, 16
        %v6175 = vrot.slane %v6173, 5
        %v6176 = vsel %vm952, %v6171, %v6175
        %v6177 = vshrl.u32 %v5990, 16
        %v6179 = vrot.slane %v6177, 4
        %v6180 = vor.u32 %v6179, %v6175
        %v6181 = vrot.slane %v6180, 4
        %v6183 = vshll.u32 %v5991, 16
        %v6185 = vrot.slane %v6183, 5
        %v6186 = vsel %vm952, %v6181, %v6185
        %v6188 = vshrl.u32 %v5992, 16
        %v6190 = vrot.slane %v6188, 4
        %v6191 = vshll.u32 %v5992, 16
        %v6193 = vrot.slane %v6191, 5
        %v6194 = vor.u32 %v6190, %v6193
        %v6195 = vrot.slane %v6194, 4
        %v6197 = vshll.u32 %v5993, 16
        %v6199 = vrot.slane %v6197, 5
        %v6200 = vsel %vm952, %v6195, %v6199
        %v6201 = vshrl.u32 %v5993, 16
        %v6203 = vrot.slane %v6201, 4
        %v6204 = vor.u32 %v6203, %v6199
        %v6205 = vrot.slane %v6204, 4
        %v6207 = vshll.u32 %v5994, 16
        %v6209 = vrot.slane %v6207, 5
        %v6210 = vsel %vm952, %v6205, %v6209
        %v6212 = vshrl.u32 %v5995, 16
        %v6214 = vrot.slane %v6212, 4
        %v6215 = vshll.u32 %v5995, 16
        %v6217 = vrot.slane %v6215, 5
        %v6218 = vor.u32 %v6214, %v6217
        %v6219 = vrot.slane %v6218, 4
        %v6221 = vshll.u32 %v5996, 16
        %v6223 = vrot.slane %v6221, 5
        %v6224 = vsel %vm952, %v6219, %v6223
        %v6225 = vshrl.u32 %v5996, 16
        %v6227 = vrot.slane %v6225, 4
        %v6228 = vor.u32 %v6227, %v6223
        %v6229 = vrot.slane %v6228, 4
        %v6231 = vshll.u32 %v5997, 16
        %v6233 = vrot.slane %v6231, 5
        %v6234 = vsel %vm952, %v6229, %v6233
        %v6236 = vshrl.u32 %v5998, 16
        %v6238 = vrot.slane %v6236, 4
        %v6239 = vshll.u32 %v5998, 16
        %v6241 = vrot.slane %v6239, 5
        %v6242 = vor.u32 %v6238, %v6241
        %v6243 = vrot.slane %v6242, 4
        %v6245 = vshll.u32 %v5999, 16
        %v6247 = vrot.slane %v6245, 5
        %v6248 = vsel %vm952, %v6243, %v6247
        %v6249 = vshrl.u32 %v5999, 16
        %v6251 = vrot.slane %v6249, 4
        %v6252 = vor.u32 %v6251, %v6247
        %v6253 = vrot.slane %v6252, 4
        %v6255 = vshll.u32 %v6000, 16
        %v6257 = vrot.slane %v6255, 5
        %v6258 = vsel %vm952, %v6253, %v6257
        %v6260 = vshrl.u32 %v6001, 16
        %v6262 = vrot.slane %v6260, 4
        %v6263 = vshll.u32 %v6001, 16
        %v6265 = vrot.slane %v6263, 5
        %v6266 = vor.u32 %v6262, %v6265
        %v6267 = vrot.slane %v6266, 4
        %v6269 = vshll.u32 %v6002, 16
        %v6271 = vrot.slane %v6269, 5
        %v6272 = vsel %vm952, %v6267, %v6271
        %v6273 = vshrl.u32 %v6002, 16
        %v6275 = vrot.slane %v6273, 4
        %v6276 = vor.u32 %v6275, %v6271
        %v6277 = vrot.slane %v6276, 4
        %v6279 = vshll.u32 %v6003, 16
        %v6281 = vrot.slane %v6279, 5
        %v6282 = vsel %vm952, %v6277, %v6281
        %v6284 = vshrl.u32 %v6004, 16
        %v6286 = vrot.slane %v6284, 4
        %v6287 = vshll.u32 %v6004, 16
        %v6289 = vrot.slane %v6287, 5
        %v6290 = vor.u32 %v6286, %v6289
        %v6291 = vrot.slane %v6290, 4
        %v6293 = vshll.u32 %v6005, 16
        %v6295 = vrot.slane %v6293, 5
        %v6296 = vsel %vm952, %v6291, %v6295
        %v6297 = vshrl.u32 %v6005, 16
        %v6299 = vrot.slane %v6297, 4
        %v6300 = vor.u32 %v6299, %v6295
        %v6301 = vrot.slane %v6300, 4
        %v6303 = vshll.u32 %v6006, 16
        %v6305 = vrot.slane %v6303, 5
        %v6306 = vsel %vm952, %v6301, %v6305
        %v6308 = vshrl.u32 %v6007, 16
        %v6310 = vrot.slane %v6308, 4
        %v6311 = vshll.u32 %v6007, 16
        %v6313 = vrot.slane %v6311, 5
        %v6314 = vor.u32 %v6310, %v6313
        %v6315 = vrot.slane %v6314, 4
        %v6317 = vshll.u32 %v6008, 16
        %v6319 = vrot.slane %v6317, 5
        %v6320 = vsel %vm952, %v6315, %v6319
        %v6321 = vshrl.u32 %v6008, 16
        %v6323 = vrot.slane %v6321, 4
        %v6324 = vor.u32 %v6323, %v6319
        %v6325 = vrot.slane %v6324, 4
        %v6327 = vshll.u32 %v6009, 16
        %v6329 = vrot.slane %v6327, 5
        %v6330 = vsel %vm952, %v6325, %v6329
        %v6332 = vshrl.u32 %v6010, 16
        %v6334 = vrot.slane %v6332, 4
        %v6335 = vshll.u32 %v6010, 16
        %v6337 = vrot.slane %v6335, 5
        %v6338 = vor.u32 %v6334, %v6337
        %v6339 = vrot.slane %v6338, 4
        %v6341 = vshll.u32 %v6011, 16
        %v6343 = vrot.slane %v6341, 5
        %v6344 = vsel %vm952, %v6339, %v6343
        %v6345 = vshrl.u32 %v6011, 16
        %v6347 = vrot.slane %v6345, 4
        %v6348 = vor.u32 %v6347, %v6343
        %v6349 = vrot.slane %v6348, 4
        %v6351 = vshll.u32 %v6012, 16
        %v6353 = vrot.slane %v6351, 5
        %v6354 = vsel %vm952, %v6349, %v6353
        %v6356 = vshrl.u32 %v6013, 16
        %v6358 = vrot.slane %v6356, 4
        %v6359 = vshll.u32 %v6013, 16
        %v6361 = vrot.slane %v6359, 5
        %v6362 = vor.u32 %v6358, %v6361
        %v6363 = vrot.slane %v6362, 4
        %v6365 = vshll.u32 %v6014, 16
        %v6367 = vrot.slane %v6365, 5
        %v6368 = vsel %vm952, %v6363, %v6367
        %v6369 = vshrl.u32 %v6014, 16
        %v6371 = vrot.slane %v6369, 4
        %v6372 = vor.u32 %v6371, %v6367
        %v6373 = vrot.slane %v6372, 4
        %v6375 = vshll.u32 %v6015, 16
        %v6377 = vrot.slane %v6375, 5
        %v6378 = vsel %vm952, %v6373, %v6377
        %v6380 = vshrl.u32 %v6016, 16
        %v6382 = vrot.slane %v6380, 4
        %v6383 = vshll.u32 %v6016, 16
        %v6385 = vrot.slane %v6383, 5
        %v6386 = vor.u32 %v6382, %v6385
        %v6387 = vrot.slane %v6386, 4
        %v6389 = vshll.u32 %v6017, 16
        %v6391 = vrot.slane %v6389, 5
        %v6392 = vsel %vm952, %v6387, %v6391
        %v6393 = vshrl.u32 %v6017, 16
        %v6395 = vrot.slane %v6393, 4
        %v6396 = vor.u32 %v6395, %v6391
        %v6397 = vrot.slane %v6396, 4
        %v6399 = vshll.u32 %v6018, 16
        %v6401 = vrot.slane %v6399, 5
        %v6402 = vsel %vm952, %v6397, %v6401
        %s6403 = scalar_lea.vmem %s1, 22
        %v6404 = vld [vmem:[%s6403] sm:$0x3]
        %v6405 = vunpack.c.l.b16 %v6032
        %v6406 = vunpack.c.l.b16 %v6042
        %v6407 = vunpack.c.l.b16 %v6056
        %v6408 = vunpack.c.l.b16 %v6066
        %v6409 = vunpack.c.l.b16 %v6080
        %v6410 = vunpack.c.l.b16 %v6090
        %v6411 = vunpack.c.l.b16 %v6104
        %v6412 = vunpack.c.l.b16 %v6114
        %v6413 = vunpack.c.l.b16 %v6128
        %v6414 = vunpack.c.l.b16 %v6138
        %v6415 = vunpack.c.l.b16 %v6152
        %v6416 = vunpack.c.l.b16 %v6162
        %v6417 = vunpack.c.l.b16 %v6176
        %v6418 = vunpack.c.l.b16 %v6186
        %v6419 = vunpack.c.l.b16 %v6200
        %v6420 = vunpack.c.l.b16 %v6210
        %v6421 = vunpack.c.l.b16 %v6224
        %v6422 = vunpack.c.l.b16 %v6234
        %v6423 = vunpack.c.l.b16 %v6248
        %v6424 = vunpack.c.l.b16 %v6258
        %v6425 = vunpack.c.l.b16 %v6272
        %v6426 = vunpack.c.l.b16 %v6282
        %v6427 = vunpack.c.l.b16 %v6296
        %v6428 = vunpack.c.l.b16 %v6306
        %v6429 = vunpack.c.l.b16 %v6320
        %v6430 = vunpack.c.l.b16 %v6330
        %v6431 = vunpack.c.l.b16 %v6344
        %v6432 = vunpack.c.l.b16 %v6354
        %v6433 = vunpack.c.l.b16 %v6368
        %v6434 = vunpack.c.l.b16 %v6378
        %v6435 = vunpack.c.l.b16 %v6392
        %v6436 = vunpack.c.l.b16 %v6402
        %v6437 = vpack.c.b16 %v6406, %v6405
        %v6438 = vpack.c.b16 %v6408, %v6407
        %v6439 = vpack.c.b16 %v6410, %v6409
        %v6440 = vpack.c.b16 %v6412, %v6411
        %v6441 = vpack.c.b16 %v6414, %v6413
        %v6442 = vpack.c.b16 %v6416, %v6415
        %v6443 = vpack.c.b16 %v6418, %v6417
        %v6444 = vpack.c.b16 %v6420, %v6419
        %v6445 = vpack.c.b16 %v6422, %v6421
        %v6446 = vpack.c.b16 %v6424, %v6423
        %v6447 = vpack.c.b16 %v6426, %v6425
        %v6448 = vpack.c.b16 %v6428, %v6427
        %v6449 = vpack.c.b16 %v6430, %v6429
        %v6450 = vpack.c.b16 %v6432, %v6431
        %v6451 = vpack.c.b16 %v6434, %v6433
        %v6452 = vpack.c.b16 %v6436, %v6435
        %v6454 = vsel %vm396, %v6437, 0
        %v6457 = vsel %vm396, %v6438, 0
        %v6460 = vsel %vm396, %v6439, 0
        %v6463 = vsel %vm396, %v6440, 0
        %v6466 = vsel %vm396, %v6441, 0
        %v6469 = vsel %vm396, %v6442, 0
        %v6472 = vsel %vm396, %v6443, 0
        %v6475 = vsel %vm396, %v6444, 0
        %v6478 = vsel %vm396, %v6445, 0
        %v6481 = vsel %vm396, %v6446, 0
        %v6484 = vsel %vm396, %v6447, 0
        %v6487 = vsel %vm396, %v6448, 0
        %v6490 = vsel %vm396, %v6449, 0
        %v6493 = vsel %vm396, %v6450, 0
        %v6496 = vsel %vm396, %v6451, 0
        %v6499 = vsel %vm396, %v6452, 0
        %v6502 = vsel %vm445, %v6404, 0
        %6504 = vmatprep.subr.bf16.mxu0 0
        %6505 = vmatpush1.bf16.msra.mxu0 0
        %6506 = vmatprep.subr.bf16.mxu0 0
        %6507 = vmatpush1.bf16.msra.mxu0 0
        %6508 = vmatprep.subr.bf16.mxu0 0
        %6509 = vmatpush1.bf16.msra.mxu0 0
        %6510 = vmatprep.subr.bf16.mxu0 0
        %6511 = vmatpush1.bf16.msra.mxu0 0
        %6512 = vmatprep.subr.bf16.mxu0 0
        %6513 = vmatpush1.bf16.msra.mxu0 0
        %6514 = vmatprep.subr.bf16.mxu0 0
        %6515 = vmatpush1.bf16.msra.mxu0 0
        %6516 = vmatprep.subr.bf16.mxu0 0
        %6517 = vmatpush1.bf16.msra.mxu0 0
        %6518 = vmatprep.subr.bf16.mxu0 0
        %6519 = vmatpush1.bf16.msra.mxu0 %v6502
        %6520 = vmatprep.subr.bf16.mxu0 0
        %6521 = vmatpush2.bf16.msra.mxu0 0
        %6522 = vmatprep.subr.bf16.mxu0 0
        %6523 = vmatpush2.bf16.msra.mxu0 0
        %6524 = vmatprep.subr.bf16.mxu0 0
        %6525 = vmatpush2.bf16.msra.mxu0 0
        %6526 = vmatprep.subr.bf16.mxu0 0
        %6527 = vmatpush2.bf16.msra.mxu0 0
        %6528 = vmatprep.subr.bf16.mxu0 0
        %6529 = vmatpush2.bf16.msra.mxu0 0
        %6530 = vmatprep.subr.bf16.mxu0 0
        %6531 = vmatpush2.bf16.msra.mxu0 0
        %6532 = vmatprep.subr.bf16.mxu0 0
        %6533 = vmatpush2.bf16.msra.mxu0 0
        %6534 = vmatprep.subr.bf16.mxu0 0
        %6535 = vmatpush2.bf16.msra.mxu0 0
        %6536 = vmatprep.mubr.bf16.mxu0 0
        %6537 = vmatmul.mubr.bf16.gmra.mxu0 %v6454
        %v6538 = vpop.f32.mrf.mxu0
        %v6539 = vadd.f32 0.0, %v6538
        %v6540 = vpop.f32.mrf.mxu0
        %v6541 = vpop.f32.mrf.mxu0
        %v6542 = vadd.f32 0.0, %v6541
        %v6543 = vpop.f32.mrf.mxu0
        %6544 = vmatprep.mubr.bf16.mxu0 0
        %6545 = vmatmul.mubr.bf16.gmra.mxu0 %v6457
        %v6546 = vpop.f32.mrf.mxu0
        %v6547 = vadd.f32 0.0, %v6546
        %v6548 = vpop.f32.mrf.mxu0
        %v6549 = vpop.f32.mrf.mxu0
        %v6550 = vadd.f32 0.0, %v6549
        %v6551 = vpop.f32.mrf.mxu0
        %6552 = vmatprep.mubr.bf16.mxu0 0
        %6553 = vmatmul.mubr.bf16.gmra.mxu0 %v6460
        %v6554 = vpop.f32.mrf.mxu0
        %v6555 = vadd.f32 0.0, %v6554
        %v6556 = vpop.f32.mrf.mxu0
        %v6557 = vpop.f32.mrf.mxu0
        %v6558 = vadd.f32 0.0, %v6557
        %v6559 = vpop.f32.mrf.mxu0
        %6560 = vmatprep.mubr.bf16.mxu0 0
        %6561 = vmatmul.mubr.bf16.gmra.mxu0 %v6463
        %v6562 = vpop.f32.mrf.mxu0
        %v6563 = vadd.f32 0.0, %v6562
        %v6564 = vpop.f32.mrf.mxu0
        %v6565 = vpop.f32.mrf.mxu0
        %v6566 = vadd.f32 0.0, %v6565
        %v6567 = vpop.f32.mrf.mxu0
        %6568 = vmatprep.mubr.bf16.mxu0 0
        %6569 = vmatmul.mubr.bf16.gmra.mxu0 %v6466
        %v6570 = vpop.f32.mrf.mxu0
        %v6571 = vadd.f32 0.0, %v6570
        %v6572 = vpop.f32.mrf.mxu0
        %v6573 = vpop.f32.mrf.mxu0
        %v6574 = vadd.f32 0.0, %v6573
        %v6575 = vpop.f32.mrf.mxu0
        %6576 = vmatprep.mubr.bf16.mxu0 0
        %6577 = vmatmul.mubr.bf16.gmra.mxu0 %v6469
        %v6578 = vpop.f32.mrf.mxu0
        %v6579 = vadd.f32 0.0, %v6578
        %v6580 = vpop.f32.mrf.mxu0
        %v6581 = vpop.f32.mrf.mxu0
        %v6582 = vadd.f32 0.0, %v6581
        %v6583 = vpop.f32.mrf.mxu0
        %6584 = vmatprep.mubr.bf16.mxu0 0
        %6585 = vmatmul.mubr.bf16.gmra.mxu0 %v6472
        %v6586 = vpop.f32.mrf.mxu0
        %v6587 = vadd.f32 0.0, %v6586
        %v6588 = vpop.f32.mrf.mxu0
        %v6589 = vpop.f32.mrf.mxu0
        %v6590 = vadd.f32 0.0, %v6589
        %v6591 = vpop.f32.mrf.mxu0
        %6592 = vmatprep.mubr.bf16.mxu0 0
        %6593 = vmatmul.mubr.bf16.gmra.mxu0 %v6475
        %v6594 = vpop.f32.mrf.mxu0
        %v6595 = vadd.f32 0.0, %v6594
        %v6596 = vpop.f32.mrf.mxu0
        %v6597 = vpop.f32.mrf.mxu0
        %v6598 = vadd.f32 0.0, %v6597
        %v6599 = vpop.f32.mrf.mxu0
        %6600 = vmatprep.mubr.bf16.mxu0 0
        %6601 = vmatmul.mubr.bf16.gmra.mxu0 %v6478
        %v6602 = vpop.f32.mrf.mxu0
        %v6603 = vadd.f32 0.0, %v6602
        %v6604 = vpop.f32.mrf.mxu0
        %v6605 = vpop.f32.mrf.mxu0
        %v6606 = vadd.f32 0.0, %v6605
        %v6607 = vpop.f32.mrf.mxu0
        %6608 = vmatprep.mubr.bf16.mxu0 0
        %6609 = vmatmul.mubr.bf16.gmra.mxu0 %v6481
        %v6610 = vpop.f32.mrf.mxu0
        %v6611 = vadd.f32 0.0, %v6610
        %v6612 = vpop.f32.mrf.mxu0
        %v6613 = vpop.f32.mrf.mxu0
        %v6614 = vadd.f32 0.0, %v6613
        %v6615 = vpop.f32.mrf.mxu0
        %6616 = vmatprep.mubr.bf16.mxu0 0
        %6617 = vmatmul.mubr.bf16.gmra.mxu0 %v6484
        %v6618 = vpop.f32.mrf.mxu0
        %v6619 = vadd.f32 0.0, %v6618
        %v6620 = vpop.f32.mrf.mxu0
        %v6621 = vpop.f32.mrf.mxu0
        %v6622 = vadd.f32 0.0, %v6621
        %v6623 = vpop.f32.mrf.mxu0
        %6624 = vmatprep.mubr.bf16.mxu0 0
        %6625 = vmatmul.mubr.bf16.gmra.mxu0 %v6487
        %v6626 = vpop.f32.mrf.mxu0
        %v6627 = vadd.f32 0.0, %v6626
        %v6628 = vpop.f32.mrf.mxu0
        %v6629 = vpop.f32.mrf.mxu0
        %v6630 = vadd.f32 0.0, %v6629
        %v6631 = vpop.f32.mrf.mxu0
        %6632 = vmatprep.mubr.bf16.mxu0 0
        %6633 = vmatmul.mubr.bf16.gmra.mxu0 %v6490
        %v6634 = vpop.f32.mrf.mxu0
        %v6635 = vadd.f32 0.0, %v6634
        %v6636 = vpop.f32.mrf.mxu0
        %v6637 = vpop.f32.mrf.mxu0
        %v6638 = vadd.f32 0.0, %v6637
        %v6639 = vpop.f32.mrf.mxu0
        %6640 = vmatprep.mubr.bf16.mxu0 0
        %6641 = vmatmul.mubr.bf16.gmra.mxu0 %v6493
        %v6642 = vpop.f32.mrf.mxu0
        %v6643 = vadd.f32 0.0, %v6642
        %v6644 = vpop.f32.mrf.mxu0
        %v6645 = vpop.f32.mrf.mxu0
        %v6646 = vadd.f32 0.0, %v6645
        %v6647 = vpop.f32.mrf.mxu0
        %6648 = vmatprep.mubr.bf16.mxu0 0
        %6649 = vmatmul.mubr.bf16.gmra.mxu0 %v6496
        %v6650 = vpop.f32.mrf.mxu0
        %v6651 = vadd.f32 0.0, %v6650
        %v6652 = vpop.f32.mrf.mxu0
        %v6653 = vpop.f32.mrf.mxu0
        %v6654 = vadd.f32 0.0, %v6653
        %v6655 = vpop.f32.mrf.mxu0
        %6656 = vmatprep.mubr.bf16.mxu0 0
        %6657 = vmatmul.mubr.bf16.gmra.mxu0 %v6499
        %v6658 = vpop.f32.mrf.mxu0
        %v6659 = vadd.f32 0.0, %v6658
        %v6660 = vpop.f32.mrf.mxu0
        %v6661 = vpop.f32.mrf.mxu0
        %v6662 = vadd.f32 0.0, %v6661
        %v6663 = vpop.f32.mrf.mxu0
        %6664 = vdwg.mxu0
        %v6665 = vadd.f32 %v5939, %v6539
        %v6666 = vadd.f32 %v5940, %v6542
        %v6667 = vadd.f32 %v5941, %v6547
        %v6668 = vadd.f32 %v5942, %v6550
        %v6669 = vadd.f32 %v5943, %v6555
        %v6670 = vadd.f32 %v5944, %v6558
        %v6671 = vadd.f32 %v5945, %v6563
        %v6672 = vadd.f32 %v5946, %v6566
        %v6673 = vadd.f32 %v5947, %v6571
        %v6674 = vadd.f32 %v5948, %v6574
        %v6675 = vadd.f32 %v5949, %v6579
        %v6676 = vadd.f32 %v5950, %v6582
        %v6677 = vadd.f32 %v5951, %v6587
        %v6678 = vadd.f32 %v5952, %v6590
        %v6679 = vadd.f32 %v5953, %v6595
        %v6680 = vadd.f32 %v5954, %v6598
        %v6681 = vadd.f32 %v5955, %v6603
        %v6682 = vadd.f32 %v5956, %v6606
        %v6683 = vadd.f32 %v5957, %v6611
        %v6684 = vadd.f32 %v5958, %v6614
        %v6685 = vadd.f32 %v5959, %v6619
        %v6686 = vadd.f32 %v5960, %v6622
        %v6687 = vadd.f32 %v5961, %v6627
        %v6688 = vadd.f32 %v5962, %v6630
        %v6689 = vadd.f32 %v5963, %v6635
        %v6690 = vadd.f32 %v5964, %v6638
        %v6691 = vadd.f32 %v5965, %v6643
        %v6692 = vadd.f32 %v5966, %v6646
        %v6693 = vadd.f32 %v5967, %v6651
        %v6694 = vadd.f32 %v5968, %v6654
        %v6695 = vadd.f32 %v5969, %v6659
        %v6696 = vadd.f32 %v5970, %v6662
        %s6697 = scalar_lea.vmem %s232, 420
        %v6698 = vld [vmem:[%s6697] sm:$0xf]
        %v6699 = vld [vmem:[%s6697 + $0x4] sm:$0xf]
        %v6700 = vld [vmem:[%s6697 + $0xc] sm:$0xf]
        %v6701 = vld [vmem:[%s6697 + $0x10] sm:$0xf]
        %v6702 = vld [vmem:[%s6697 + $0x18] sm:$0xf]
        %v6703 = vld [vmem:[%s6697 + $0x1c] sm:$0xf]
        %v6704 = vld [vmem:[%s6697 + $0x24] sm:$0xf]
        %v6705 = vld [vmem:[%s6697 + $0x28] sm:$0xf]
        %v6706 = vld [vmem:[%s6697 + $0x30] sm:$0xf]
        %v6707 = vld [vmem:[%s6697 + $0x34] sm:$0xf]
        %v6708 = vld [vmem:[%s6697 + $0x3c] sm:$0xf]
        %v6709 = vld [vmem:[%s6697 + $0x40] sm:$0xf]
        %v6710 = vld [vmem:[%s6697 + $0x48] sm:$0xf]
        %v6711 = vld [vmem:[%s6697 + $0x4c] sm:$0xf]
        %v6712 = vld [vmem:[%s6697 + $0x54] sm:$0xf]
        %v6713 = vld [vmem:[%s6697 + $0x58] sm:$0xf]
        %v6714 = vld [vmem:[%s6697 + $0x60] sm:$0xf]
        %v6715 = vld [vmem:[%s6697 + $0x64] sm:$0xf]
        %v6716 = vld [vmem:[%s6697 + $0x6c] sm:$0xf]
        %v6717 = vld [vmem:[%s6697 + $0x70] sm:$0xf]
        %v6718 = vld [vmem:[%s6697 + $0x78] sm:$0xf]
        %v6719 = vld [vmem:[%s6697 + $0x7c] sm:$0xf]
        %v6720 = vld [vmem:[%s6697 + $0x84] sm:$0xf]
        %v6721 = vld [vmem:[%s6697 + $0x88] sm:$0xf]
        %v6722 = vld [vmem:[%s6697 + $0x90] sm:$0xf]
        %v6723 = vld [vmem:[%s6697 + $0x94] sm:$0xf]
        %v6724 = vld [vmem:[%s6697 + $0x9c] sm:$0xf]
        %v6725 = vld [vmem:[%s6697 + $0xa0] sm:$0xf]
        %v6726 = vld [vmem:[%s6697 + $0xa8] sm:$0xf]
        %v6727 = vld [vmem:[%s6697 + $0xac] sm:$0xf]
        %v6728 = vld [vmem:[%s6697 + $0xb4] sm:$0xf]
        %v6729 = vld [vmem:[%s6697 + $0xb8] sm:$0xf]
        %s6730 = scalar_lea.vmem %s1, 24
        %v6731 = vld [vmem:[%s6730] sm:$0x3]
        %v6764 = vunpack.c.l.b16 %v6698
        %v6765 = vunpack.c.l.b16 %v6699
        %v6766 = vunpack.c.l.b16 %v6700
        %v6767 = vunpack.c.l.b16 %v6701
        %v6768 = vunpack.c.l.b16 %v6702
        %v6769 = vunpack.c.l.b16 %v6703
        %v6770 = vunpack.c.l.b16 %v6704
        %v6771 = vunpack.c.l.b16 %v6705
        %v6772 = vunpack.c.l.b16 %v6706
        %v6773 = vunpack.c.l.b16 %v6707
        %v6774 = vunpack.c.l.b16 %v6708
        %v6775 = vunpack.c.l.b16 %v6709
        %v6776 = vunpack.c.l.b16 %v6710
        %v6777 = vunpack.c.l.b16 %v6711
        %v6778 = vunpack.c.l.b16 %v6712
        %v6779 = vunpack.c.l.b16 %v6713
        %v6780 = vunpack.c.l.b16 %v6714
        %v6781 = vunpack.c.l.b16 %v6715
        %v6782 = vunpack.c.l.b16 %v6716
        %v6783 = vunpack.c.l.b16 %v6717
        %v6784 = vunpack.c.l.b16 %v6718
        %v6785 = vunpack.c.l.b16 %v6719
        %v6786 = vunpack.c.l.b16 %v6720
        %v6787 = vunpack.c.l.b16 %v6721
        %v6788 = vunpack.c.l.b16 %v6722
        %v6789 = vunpack.c.l.b16 %v6723
        %v6790 = vunpack.c.l.b16 %v6724
        %v6791 = vunpack.c.l.b16 %v6725
        %v6792 = vunpack.c.l.b16 %v6726
        %v6793 = vunpack.c.l.b16 %v6727
        %v6794 = vunpack.c.l.b16 %v6728
        %v6795 = vunpack.c.l.b16 %v6729
        %v6796 = vpack.c.b16 %v6765, %v6764
        %v6797 = vpack.c.b16 %v6767, %v6766
        %v6798 = vpack.c.b16 %v6769, %v6768
        %v6799 = vpack.c.b16 %v6771, %v6770
        %v6800 = vpack.c.b16 %v6773, %v6772
        %v6801 = vpack.c.b16 %v6775, %v6774
        %v6802 = vpack.c.b16 %v6777, %v6776
        %v6803 = vpack.c.b16 %v6779, %v6778
        %v6804 = vpack.c.b16 %v6781, %v6780
        %v6805 = vpack.c.b16 %v6783, %v6782
        %v6806 = vpack.c.b16 %v6785, %v6784
        %v6807 = vpack.c.b16 %v6787, %v6786
        %v6808 = vpack.c.b16 %v6789, %v6788
        %v6809 = vpack.c.b16 %v6791, %v6790
        %v6810 = vpack.c.b16 %v6793, %v6792
        %v6811 = vpack.c.b16 %v6795, %v6794
        %v6813 = vsel %vm396, %v6796, 0
        %v6816 = vsel %vm396, %v6797, 0
        %v6819 = vsel %vm396, %v6798, 0
        %v6822 = vsel %vm396, %v6799, 0
        %v6825 = vsel %vm396, %v6800, 0
        %v6828 = vsel %vm396, %v6801, 0
        %v6831 = vsel %vm396, %v6802, 0
        %v6834 = vsel %vm396, %v6803, 0
        %v6837 = vsel %vm396, %v6804, 0
        %v6840 = vsel %vm396, %v6805, 0
        %v6843 = vsel %vm396, %v6806, 0
        %v6846 = vsel %vm396, %v6807, 0
        %v6849 = vsel %vm396, %v6808, 0
        %v6852 = vsel %vm396, %v6809, 0
        %v6855 = vsel %vm396, %v6810, 0
        %v6858 = vsel %vm396, %v6811, 0
        %v6861 = vsel %vm445, %v6731, 0
        %6863 = vmatprep.subr.bf16.mxu0 0
        %6864 = vmatpush1.bf16.msra.mxu0 0
        %6865 = vmatprep.subr.bf16.mxu0 0
        %6866 = vmatpush1.bf16.msra.mxu0 0
        %6867 = vmatprep.subr.bf16.mxu0 0
        %6868 = vmatpush1.bf16.msra.mxu0 0
        %6869 = vmatprep.subr.bf16.mxu0 0
        %6870 = vmatpush1.bf16.msra.mxu0 0
        %6871 = vmatprep.subr.bf16.mxu0 0
        %6872 = vmatpush1.bf16.msra.mxu0 0
        %6873 = vmatprep.subr.bf16.mxu0 0
        %6874 = vmatpush1.bf16.msra.mxu0 0
        %6875 = vmatprep.subr.bf16.mxu0 0
        %6876 = vmatpush1.bf16.msra.mxu0 0
        %6877 = vmatprep.subr.bf16.mxu0 0
        %6878 = vmatpush1.bf16.msra.mxu0 %v6861
        %6879 = vmatprep.subr.bf16.mxu0 0
        %6880 = vmatpush2.bf16.msra.mxu0 0
        %6881 = vmatprep.subr.bf16.mxu0 0
        %6882 = vmatpush2.bf16.msra.mxu0 0
        %6883 = vmatprep.subr.bf16.mxu0 0
        %6884 = vmatpush2.bf16.msra.mxu0 0
        %6885 = vmatprep.subr.bf16.mxu0 0
        %6886 = vmatpush2.bf16.msra.mxu0 0
        %6887 = vmatprep.subr.bf16.mxu0 0
        %6888 = vmatpush2.bf16.msra.mxu0 0
        %6889 = vmatprep.subr.bf16.mxu0 0
        %6890 = vmatpush2.bf16.msra.mxu0 0
        %6891 = vmatprep.subr.bf16.mxu0 0
        %6892 = vmatpush2.bf16.msra.mxu0 0
        %6893 = vmatprep.subr.bf16.mxu0 0
        %6894 = vmatpush2.bf16.msra.mxu0 0
        %6895 = vmatprep.mubr.bf16.mxu0 0
        %6896 = vmatmul.mubr.bf16.gmra.mxu0 %v6813
        %v6897 = vpop.f32.mrf.mxu0
        %v6898 = vadd.f32 0.0, %v6897
        %v6899 = vpop.f32.mrf.mxu0
        %v6900 = vpop.f32.mrf.mxu0
        %v6901 = vadd.f32 0.0, %v6900
        %v6902 = vpop.f32.mrf.mxu0
        %6903 = vmatprep.mubr.bf16.mxu0 0
        %6904 = vmatmul.mubr.bf16.gmra.mxu0 %v6816
        %v6905 = vpop.f32.mrf.mxu0
        %v6906 = vadd.f32 0.0, %v6905
        %v6907 = vpop.f32.mrf.mxu0
        %v6908 = vpop.f32.mrf.mxu0
        %v6909 = vadd.f32 0.0, %v6908
        %v6910 = vpop.f32.mrf.mxu0
        %6911 = vmatprep.mubr.bf16.mxu0 0
        %6912 = vmatmul.mubr.bf16.gmra.mxu0 %v6819
        %v6913 = vpop.f32.mrf.mxu0
        %v6914 = vadd.f32 0.0, %v6913
        %v6915 = vpop.f32.mrf.mxu0
        %v6916 = vpop.f32.mrf.mxu0
        %v6917 = vadd.f32 0.0, %v6916
        %v6918 = vpop.f32.mrf.mxu0
        %6919 = vmatprep.mubr.bf16.mxu0 0
        %6920 = vmatmul.mubr.bf16.gmra.mxu0 %v6822
        %v6921 = vpop.f32.mrf.mxu0
        %v6922 = vadd.f32 0.0, %v6921
        %v6923 = vpop.f32.mrf.mxu0
        %v6924 = vpop.f32.mrf.mxu0
        %v6925 = vadd.f32 0.0, %v6924
        %v6926 = vpop.f32.mrf.mxu0
        %6927 = vmatprep.mubr.bf16.mxu0 0
        %6928 = vmatmul.mubr.bf16.gmra.mxu0 %v6825
        %v6929 = vpop.f32.mrf.mxu0
        %v6930 = vadd.f32 0.0, %v6929
        %v6931 = vpop.f32.mrf.mxu0
        %v6932 = vpop.f32.mrf.mxu0
        %v6933 = vadd.f32 0.0, %v6932
        %v6934 = vpop.f32.mrf.mxu0
        %6935 = vmatprep.mubr.bf16.mxu0 0
        %6936 = vmatmul.mubr.bf16.gmra.mxu0 %v6828
        %v6937 = vpop.f32.mrf.mxu0
        %v6938 = vadd.f32 0.0, %v6937
        %v6939 = vpop.f32.mrf.mxu0
        %v6940 = vpop.f32.mrf.mxu0
        %v6941 = vadd.f32 0.0, %v6940
        %v6942 = vpop.f32.mrf.mxu0
        %6943 = vmatprep.mubr.bf16.mxu0 0
        %6944 = vmatmul.mubr.bf16.gmra.mxu0 %v6831
        %v6945 = vpop.f32.mrf.mxu0
        %v6946 = vadd.f32 0.0, %v6945
        %v6947 = vpop.f32.mrf.mxu0
        %v6948 = vpop.f32.mrf.mxu0
        %v6949 = vadd.f32 0.0, %v6948
        %v6950 = vpop.f32.mrf.mxu0
        %6951 = vmatprep.mubr.bf16.mxu0 0
        %6952 = vmatmul.mubr.bf16.gmra.mxu0 %v6834
        %v6953 = vpop.f32.mrf.mxu0
        %v6954 = vadd.f32 0.0, %v6953
        %v6955 = vpop.f32.mrf.mxu0
        %v6956 = vpop.f32.mrf.mxu0
        %v6957 = vadd.f32 0.0, %v6956
        %v6958 = vpop.f32.mrf.mxu0
        %6959 = vmatprep.mubr.bf16.mxu0 0
        %6960 = vmatmul.mubr.bf16.gmra.mxu0 %v6837
        %v6961 = vpop.f32.mrf.mxu0
        %v6962 = vadd.f32 0.0, %v6961
        %v6963 = vpop.f32.mrf.mxu0
        %v6964 = vpop.f32.mrf.mxu0
        %v6965 = vadd.f32 0.0, %v6964
        %v6966 = vpop.f32.mrf.mxu0
        %6967 = vmatprep.mubr.bf16.mxu0 0
        %6968 = vmatmul.mubr.bf16.gmra.mxu0 %v6840
        %v6969 = vpop.f32.mrf.mxu0
        %v6970 = vadd.f32 0.0, %v6969
        %v6971 = vpop.f32.mrf.mxu0
        %v6972 = vpop.f32.mrf.mxu0
        %v6973 = vadd.f32 0.0, %v6972
        %v6974 = vpop.f32.mrf.mxu0
        %6975 = vmatprep.mubr.bf16.mxu0 0
        %6976 = vmatmul.mubr.bf16.gmra.mxu0 %v6843
        %v6977 = vpop.f32.mrf.mxu0
        %v6978 = vadd.f32 0.0, %v6977
        %v6979 = vpop.f32.mrf.mxu0
        %v6980 = vpop.f32.mrf.mxu0
        %v6981 = vadd.f32 0.0, %v6980
        %v6982 = vpop.f32.mrf.mxu0
        %6983 = vmatprep.mubr.bf16.mxu0 0
        %6984 = vmatmul.mubr.bf16.gmra.mxu0 %v6846
        %v6985 = vpop.f32.mrf.mxu0
        %v6986 = vadd.f32 0.0, %v6985
        %v6987 = vpop.f32.mrf.mxu0
        %v6988 = vpop.f32.mrf.mxu0
        %v6989 = vadd.f32 0.0, %v6988
        %v6990 = vpop.f32.mrf.mxu0
        %6991 = vmatprep.mubr.bf16.mxu0 0
        %6992 = vmatmul.mubr.bf16.gmra.mxu0 %v6849
        %v6993 = vpop.f32.mrf.mxu0
        %v6994 = vadd.f32 0.0, %v6993
        %v6995 = vpop.f32.mrf.mxu0
        %v6996 = vpop.f32.mrf.mxu0
        %v6997 = vadd.f32 0.0, %v6996
        %v6998 = vpop.f32.mrf.mxu0
        %6999 = vmatprep.mubr.bf16.mxu0 0
        %7000 = vmatmul.mubr.bf16.gmra.mxu0 %v6852
        %v7001 = vpop.f32.mrf.mxu0
        %v7002 = vadd.f32 0.0, %v7001
        %v7003 = vpop.f32.mrf.mxu0
        %v7004 = vpop.f32.mrf.mxu0
        %v7005 = vadd.f32 0.0, %v7004
        %v7006 = vpop.f32.mrf.mxu0
        %7007 = vmatprep.mubr.bf16.mxu0 0
        %7008 = vmatmul.mubr.bf16.gmra.mxu0 %v6855
        %v7009 = vpop.f32.mrf.mxu0
        %v7010 = vadd.f32 0.0, %v7009
        %v7011 = vpop.f32.mrf.mxu0
        %v7012 = vpop.f32.mrf.mxu0
        %v7013 = vadd.f32 0.0, %v7012
        %v7014 = vpop.f32.mrf.mxu0
        %7015 = vmatprep.mubr.bf16.mxu0 0
        %7016 = vmatmul.mubr.bf16.gmra.mxu0 %v6858
        %v7017 = vpop.f32.mrf.mxu0
        %v7018 = vadd.f32 0.0, %v7017
        %v7019 = vpop.f32.mrf.mxu0
        %v7020 = vpop.f32.mrf.mxu0
        %v7021 = vadd.f32 0.0, %v7020
        %v7022 = vpop.f32.mrf.mxu0
        %7023 = vdwg.mxu0
        %v7024 = vadd.f32 %v6665, %v6898
        %v7025 = vadd.f32 %v6666, %v6901
        %v7026 = vadd.f32 %v6667, %v6906
        %v7027 = vadd.f32 %v6668, %v6909
        %v7028 = vadd.f32 %v6669, %v6914
        %v7029 = vadd.f32 %v6670, %v6917
        %v7030 = vadd.f32 %v6671, %v6922
        %v7031 = vadd.f32 %v6672, %v6925
        %v7032 = vadd.f32 %v6673, %v6930
        %v7033 = vadd.f32 %v6674, %v6933
        %v7034 = vadd.f32 %v6675, %v6938
        %v7035 = vadd.f32 %v6676, %v6941
        %v7036 = vadd.f32 %v6677, %v6946
        %v7037 = vadd.f32 %v6678, %v6949
        %v7038 = vadd.f32 %v6679, %v6954
        %v7039 = vadd.f32 %v6680, %v6957
        %v7040 = vadd.f32 %v6681, %v6962
        %v7041 = vadd.f32 %v6682, %v6965
        %v7042 = vadd.f32 %v6683, %v6970
        %v7043 = vadd.f32 %v6684, %v6973
        %v7044 = vadd.f32 %v6685, %v6978
        %v7045 = vadd.f32 %v6686, %v6981
        %v7046 = vadd.f32 %v6687, %v6986
        %v7047 = vadd.f32 %v6688, %v6989
        %v7048 = vadd.f32 %v6689, %v6994
        %v7049 = vadd.f32 %v6690, %v6997
        %v7050 = vadd.f32 %v6691, %v7002
        %v7051 = vadd.f32 %v6692, %v7005
        %v7052 = vadd.f32 %v6693, %v7010
        %v7053 = vadd.f32 %v6694, %v7013
        %v7054 = vadd.f32 %v6695, %v7018
        %v7055 = vadd.f32 %v6696, %v7021
        %s7056 = scalar_lea.vmem %s232, 624
        %v7057 = vld [vmem:[%s7056] sm:$0xf]
        %v7058 = vld [vmem:[%s7056 + $0x4] sm:$0xf]
        %v7059 = vld [vmem:[%s7056 + $0xc] sm:$0xf]
        %v7060 = vld [vmem:[%s7056 + $0x10] sm:$0xf]
        %v7061 = vld [vmem:[%s7056 + $0x18] sm:$0xf]
        %v7062 = vld [vmem:[%s7056 + $0x1c] sm:$0xf]
        %v7063 = vld [vmem:[%s7056 + $0x24] sm:$0xf]
        %v7064 = vld [vmem:[%s7056 + $0x28] sm:$0xf]
        %v7065 = vld [vmem:[%s7056 + $0x30] sm:$0xf]
        %v7066 = vld [vmem:[%s7056 + $0x34] sm:$0xf]
        %v7067 = vld [vmem:[%s7056 + $0x3c] sm:$0xf]
        %v7068 = vld [vmem:[%s7056 + $0x40] sm:$0xf]
        %v7069 = vld [vmem:[%s7056 + $0x48] sm:$0xf]
        %v7070 = vld [vmem:[%s7056 + $0x4c] sm:$0xf]
        %v7071 = vld [vmem:[%s7056 + $0x54] sm:$0xf]
        %v7072 = vld [vmem:[%s7056 + $0x58] sm:$0xf]
        %v7073 = vld [vmem:[%s7056 + $0x60] sm:$0xf]
        %v7074 = vld [vmem:[%s7056 + $0x64] sm:$0xf]
        %v7075 = vld [vmem:[%s7056 + $0x6c] sm:$0xf]
        %v7076 = vld [vmem:[%s7056 + $0x70] sm:$0xf]
        %v7077 = vld [vmem:[%s7056 + $0x78] sm:$0xf]
        %v7078 = vld [vmem:[%s7056 + $0x7c] sm:$0xf]
        %v7079 = vld [vmem:[%s7056 + $0x84] sm:$0xf]
        %v7080 = vld [vmem:[%s7056 + $0x88] sm:$0xf]
        %v7081 = vld [vmem:[%s7056 + $0x90] sm:$0xf]
        %v7082 = vld [vmem:[%s7056 + $0x94] sm:$0xf]
        %v7083 = vld [vmem:[%s7056 + $0x9c] sm:$0xf]
        %v7084 = vld [vmem:[%s7056 + $0xa0] sm:$0xf]
        %v7085 = vld [vmem:[%s7056 + $0xa8] sm:$0xf]
        %v7086 = vld [vmem:[%s7056 + $0xac] sm:$0xf]
        %v7087 = vld [vmem:[%s7056 + $0xb4] sm:$0xf]
        %v7088 = vld [vmem:[%s7056 + $0xb8] sm:$0xf]
        %s7089 = scalar_lea.vmem %s1, 26
        %v7090 = vld [vmem:[%s7089] sm:$0x3]
        %v7123 = vunpack.c.l.b16 %v7057
        %v7124 = vunpack.c.l.b16 %v7058
        %v7125 = vunpack.c.l.b16 %v7059
        %v7126 = vunpack.c.l.b16 %v7060
        %v7127 = vunpack.c.l.b16 %v7061
        %v7128 = vunpack.c.l.b16 %v7062
        %v7129 = vunpack.c.l.b16 %v7063
        %v7130 = vunpack.c.l.b16 %v7064
        %v7131 = vunpack.c.l.b16 %v7065
        %v7132 = vunpack.c.l.b16 %v7066
        %v7133 = vunpack.c.l.b16 %v7067
        %v7134 = vunpack.c.l.b16 %v7068
        %v7135 = vunpack.c.l.b16 %v7069
        %v7136 = vunpack.c.l.b16 %v7070
        %v7137 = vunpack.c.l.b16 %v7071
        %v7138 = vunpack.c.l.b16 %v7072
        %v7139 = vunpack.c.l.b16 %v7073
        %v7140 = vunpack.c.l.b16 %v7074
        %v7141 = vunpack.c.l.b16 %v7075
        %v7142 = vunpack.c.l.b16 %v7076
        %v7143 = vunpack.c.l.b16 %v7077
        %v7144 = vunpack.c.l.b16 %v7078
        %v7145 = vunpack.c.l.b16 %v7079
        %v7146 = vunpack.c.l.b16 %v7080
        %v7147 = vunpack.c.l.b16 %v7081
        %v7148 = vunpack.c.l.b16 %v7082
        %v7149 = vunpack.c.l.b16 %v7083
        %v7150 = vunpack.c.l.b16 %v7084
        %v7151 = vunpack.c.l.b16 %v7085
        %v7152 = vunpack.c.l.b16 %v7086
        %v7153 = vunpack.c.l.b16 %v7087
        %v7154 = vunpack.c.l.b16 %v7088
        %v7155 = vpack.c.b16 %v7124, %v7123
        %v7156 = vpack.c.b16 %v7126, %v7125
        %v7157 = vpack.c.b16 %v7128, %v7127
        %v7158 = vpack.c.b16 %v7130, %v7129
        %v7159 = vpack.c.b16 %v7132, %v7131
        %v7160 = vpack.c.b16 %v7134, %v7133
        %v7161 = vpack.c.b16 %v7136, %v7135
        %v7162 = vpack.c.b16 %v7138, %v7137
        %v7163 = vpack.c.b16 %v7140, %v7139
        %v7164 = vpack.c.b16 %v7142, %v7141
        %v7165 = vpack.c.b16 %v7144, %v7143
        %v7166 = vpack.c.b16 %v7146, %v7145
        %v7167 = vpack.c.b16 %v7148, %v7147
        %v7168 = vpack.c.b16 %v7150, %v7149
        %v7169 = vpack.c.b16 %v7152, %v7151
        %v7170 = vpack.c.b16 %v7154, %v7153
        %v7172 = vsel %vm396, %v7155, 0
        %v7175 = vsel %vm396, %v7156, 0
        %v7178 = vsel %vm396, %v7157, 0
        %v7181 = vsel %vm396, %v7158, 0
        %v7184 = vsel %vm396, %v7159, 0
        %v7187 = vsel %vm396, %v7160, 0
        %v7190 = vsel %vm396, %v7161, 0
        %v7193 = vsel %vm396, %v7162, 0
        %v7196 = vsel %vm396, %v7163, 0
        %v7199 = vsel %vm396, %v7164, 0
        %v7202 = vsel %vm396, %v7165, 0
        %v7205 = vsel %vm396, %v7166, 0
        %v7208 = vsel %vm396, %v7167, 0
        %v7211 = vsel %vm396, %v7168, 0
        %v7214 = vsel %vm396, %v7169, 0
        %v7217 = vsel %vm396, %v7170, 0
        %v7220 = vsel %vm445, %v7090, 0
        %7222 = vmatprep.subr.bf16.mxu0 0
        %7223 = vmatpush1.bf16.msra.mxu0 0
        %7224 = vmatprep.subr.bf16.mxu0 0
        %7225 = vmatpush1.bf16.msra.mxu0 0
        %7226 = vmatprep.subr.bf16.mxu0 0
        %7227 = vmatpush1.bf16.msra.mxu0 0
        %7228 = vmatprep.subr.bf16.mxu0 0
        %7229 = vmatpush1.bf16.msra.mxu0 0
        %7230 = vmatprep.subr.bf16.mxu0 0
        %7231 = vmatpush1.bf16.msra.mxu0 0
        %7232 = vmatprep.subr.bf16.mxu0 0
        %7233 = vmatpush1.bf16.msra.mxu0 0
        %7234 = vmatprep.subr.bf16.mxu0 0
        %7235 = vmatpush1.bf16.msra.mxu0 0
        %7236 = vmatprep.subr.bf16.mxu0 0
        %7237 = vmatpush1.bf16.msra.mxu0 %v7220
        %7238 = vmatprep.subr.bf16.mxu0 0
        %7239 = vmatpush2.bf16.msra.mxu0 0
        %7240 = vmatprep.subr.bf16.mxu0 0
        %7241 = vmatpush2.bf16.msra.mxu0 0
        %7242 = vmatprep.subr.bf16.mxu0 0
        %7243 = vmatpush2.bf16.msra.mxu0 0
        %7244 = vmatprep.subr.bf16.mxu0 0
        %7245 = vmatpush2.bf16.msra.mxu0 0
        %7246 = vmatprep.subr.bf16.mxu0 0
        %7247 = vmatpush2.bf16.msra.mxu0 0
        %7248 = vmatprep.subr.bf16.mxu0 0
        %7249 = vmatpush2.bf16.msra.mxu0 0
        %7250 = vmatprep.subr.bf16.mxu0 0
        %7251 = vmatpush2.bf16.msra.mxu0 0
        %7252 = vmatprep.subr.bf16.mxu0 0
        %7253 = vmatpush2.bf16.msra.mxu0 0
        %7254 = vmatprep.mubr.bf16.mxu0 0
        %7255 = vmatmul.mubr.bf16.gmra.mxu0 %v7172
        %v7256 = vpop.f32.mrf.mxu0
        %v7257 = vadd.f32 0.0, %v7256
        %v7258 = vpop.f32.mrf.mxu0
        %v7259 = vpop.f32.mrf.mxu0
        %v7260 = vadd.f32 0.0, %v7259
        %v7261 = vpop.f32.mrf.mxu0
        %7262 = vmatprep.mubr.bf16.mxu0 0
        %7263 = vmatmul.mubr.bf16.gmra.mxu0 %v7175
        %v7264 = vpop.f32.mrf.mxu0
        %v7265 = vadd.f32 0.0, %v7264
        %v7266 = vpop.f32.mrf.mxu0
        %v7267 = vpop.f32.mrf.mxu0
        %v7268 = vadd.f32 0.0, %v7267
        %v7269 = vpop.f32.mrf.mxu0
        %7270 = vmatprep.mubr.bf16.mxu0 0
        %7271 = vmatmul.mubr.bf16.gmra.mxu0 %v7178
        %v7272 = vpop.f32.mrf.mxu0
        %v7273 = vadd.f32 0.0, %v7272
        %v7274 = vpop.f32.mrf.mxu0
        %v7275 = vpop.f32.mrf.mxu0
        %v7276 = vadd.f32 0.0, %v7275
        %v7277 = vpop.f32.mrf.mxu0
        %7278 = vmatprep.mubr.bf16.mxu0 0
        %7279 = vmatmul.mubr.bf16.gmra.mxu0 %v7181
        %v7280 = vpop.f32.mrf.mxu0
        %v7281 = vadd.f32 0.0, %v7280
        %v7282 = vpop.f32.mrf.mxu0
        %v7283 = vpop.f32.mrf.mxu0
        %v7284 = vadd.f32 0.0, %v7283
        %v7285 = vpop.f32.mrf.mxu0
        %7286 = vmatprep.mubr.bf16.mxu0 0
        %7287 = vmatmul.mubr.bf16.gmra.mxu0 %v7184
        %v7288 = vpop.f32.mrf.mxu0
        %v7289 = vadd.f32 0.0, %v7288
        %v7290 = vpop.f32.mrf.mxu0
        %v7291 = vpop.f32.mrf.mxu0
        %v7292 = vadd.f32 0.0, %v7291
        %v7293 = vpop.f32.mrf.mxu0
        %7294 = vmatprep.mubr.bf16.mxu0 0
        %7295 = vmatmul.mubr.bf16.gmra.mxu0 %v7187
        %v7296 = vpop.f32.mrf.mxu0
        %v7297 = vadd.f32 0.0, %v7296
        %v7298 = vpop.f32.mrf.mxu0
        %v7299 = vpop.f32.mrf.mxu0
        %v7300 = vadd.f32 0.0, %v7299
        %v7301 = vpop.f32.mrf.mxu0
        %7302 = vmatprep.mubr.bf16.mxu0 0
        %7303 = vmatmul.mubr.bf16.gmra.mxu0 %v7190
        %v7304 = vpop.f32.mrf.mxu0
        %v7305 = vadd.f32 0.0, %v7304
        %v7306 = vpop.f32.mrf.mxu0
        %v7307 = vpop.f32.mrf.mxu0
        %v7308 = vadd.f32 0.0, %v7307
        %v7309 = vpop.f32.mrf.mxu0
        %7310 = vmatprep.mubr.bf16.mxu0 0
        %7311 = vmatmul.mubr.bf16.gmra.mxu0 %v7193
        %v7312 = vpop.f32.mrf.mxu0
        %v7313 = vadd.f32 0.0, %v7312
        %v7314 = vpop.f32.mrf.mxu0
        %v7315 = vpop.f32.mrf.mxu0
        %v7316 = vadd.f32 0.0, %v7315
        %v7317 = vpop.f32.mrf.mxu0
        %7318 = vmatprep.mubr.bf16.mxu0 0
        %7319 = vmatmul.mubr.bf16.gmra.mxu0 %v7196
        %v7320 = vpop.f32.mrf.mxu0
        %v7321 = vadd.f32 0.0, %v7320
        %v7322 = vpop.f32.mrf.mxu0
        %v7323 = vpop.f32.mrf.mxu0
        %v7324 = vadd.f32 0.0, %v7323
        %v7325 = vpop.f32.mrf.mxu0
        %7326 = vmatprep.mubr.bf16.mxu0 0
        %7327 = vmatmul.mubr.bf16.gmra.mxu0 %v7199
        %v7328 = vpop.f32.mrf.mxu0
        %v7329 = vadd.f32 0.0, %v7328
        %v7330 = vpop.f32.mrf.mxu0
        %v7331 = vpop.f32.mrf.mxu0
        %v7332 = vadd.f32 0.0, %v7331
        %v7333 = vpop.f32.mrf.mxu0
        %7334 = vmatprep.mubr.bf16.mxu0 0
        %7335 = vmatmul.mubr.bf16.gmra.mxu0 %v7202
        %v7336 = vpop.f32.mrf.mxu0
        %v7337 = vadd.f32 0.0, %v7336
        %v7338 = vpop.f32.mrf.mxu0
        %v7339 = vpop.f32.mrf.mxu0
        %v7340 = vadd.f32 0.0, %v7339
        %v7341 = vpop.f32.mrf.mxu0
        %7342 = vmatprep.mubr.bf16.mxu0 0
        %7343 = vmatmul.mubr.bf16.gmra.mxu0 %v7205
        %v7344 = vpop.f32.mrf.mxu0
        %v7345 = vadd.f32 0.0, %v7344
        %v7346 = vpop.f32.mrf.mxu0
        %v7347 = vpop.f32.mrf.mxu0
        %v7348 = vadd.f32 0.0, %v7347
        %v7349 = vpop.f32.mrf.mxu0
        %7350 = vmatprep.mubr.bf16.mxu0 0
        %7351 = vmatmul.mubr.bf16.gmra.mxu0 %v7208
        %v7352 = vpop.f32.mrf.mxu0
        %v7353 = vadd.f32 0.0, %v7352
        %v7354 = vpop.f32.mrf.mxu0
        %v7355 = vpop.f32.mrf.mxu0
        %v7356 = vadd.f32 0.0, %v7355
        %v7357 = vpop.f32.mrf.mxu0
        %7358 = vmatprep.mubr.bf16.mxu0 0
        %7359 = vmatmul.mubr.bf16.gmra.mxu0 %v7211
        %v7360 = vpop.f32.mrf.mxu0
        %v7361 = vadd.f32 0.0, %v7360
        %v7362 = vpop.f32.mrf.mxu0
        %v7363 = vpop.f32.mrf.mxu0
        %v7364 = vadd.f32 0.0, %v7363
        %v7365 = vpop.f32.mrf.mxu0
        %7366 = vmatprep.mubr.bf16.mxu0 0
        %7367 = vmatmul.mubr.bf16.gmra.mxu0 %v7214
        %v7368 = vpop.f32.mrf.mxu0
        %v7369 = vadd.f32 0.0, %v7368
        %v7370 = vpop.f32.mrf.mxu0
        %v7371 = vpop.f32.mrf.mxu0
        %v7372 = vadd.f32 0.0, %v7371
        %v7373 = vpop.f32.mrf.mxu0
        %7374 = vmatprep.mubr.bf16.mxu0 0
        %7375 = vmatmul.mubr.bf16.gmra.mxu0 %v7217
        %v7376 = vpop.f32.mrf.mxu0
        %v7377 = vadd.f32 0.0, %v7376
        %v7378 = vpop.f32.mrf.mxu0
        %v7379 = vpop.f32.mrf.mxu0
        %v7380 = vadd.f32 0.0, %v7379
        %v7381 = vpop.f32.mrf.mxu0
        %7382 = vdwg.mxu0
        %v7383 = vadd.f32 %v7024, %v7257
        %v7384 = vadd.f32 %v7025, %v7260
        %v7385 = vadd.f32 %v7026, %v7265
        %v7386 = vadd.f32 %v7027, %v7268
        %v7387 = vadd.f32 %v7028, %v7273
        %v7388 = vadd.f32 %v7029, %v7276
        %v7389 = vadd.f32 %v7030, %v7281
        %v7390 = vadd.f32 %v7031, %v7284
        %v7391 = vadd.f32 %v7032, %v7289
        %v7392 = vadd.f32 %v7033, %v7292
        %v7393 = vadd.f32 %v7034, %v7297
        %v7394 = vadd.f32 %v7035, %v7300
        %v7395 = vadd.f32 %v7036, %v7305
        %v7396 = vadd.f32 %v7037, %v7308
        %v7397 = vadd.f32 %v7038, %v7313
        %v7398 = vadd.f32 %v7039, %v7316
        %v7399 = vadd.f32 %v7040, %v7321
        %v7400 = vadd.f32 %v7041, %v7324
        %v7401 = vadd.f32 %v7042, %v7329
        %v7402 = vadd.f32 %v7043, %v7332
        %v7403 = vadd.f32 %v7044, %v7337
        %v7404 = vadd.f32 %v7045, %v7340
        %v7405 = vadd.f32 %v7046, %v7345
        %v7406 = vadd.f32 %v7047, %v7348
        %v7407 = vadd.f32 %v7048, %v7353
        %v7408 = vadd.f32 %v7049, %v7356
        %v7409 = vadd.f32 %v7050, %v7361
        %v7410 = vadd.f32 %v7051, %v7364
        %v7411 = vadd.f32 %v7052, %v7369
        %v7412 = vadd.f32 %v7053, %v7372
        %v7413 = vadd.f32 %v7054, %v7377
        %v7414 = vadd.f32 %v7055, %v7380
        %v7415 = vld [vmem:[%s6697] sm:$0xf]
        %v7416 = vld [vmem:[%s6697 + $0x4] sm:$0xf]
        %v7417 = vld [vmem:[%s6697 + $0x8] sm:$0x1]
        %v7418 = vld [vmem:[%s6697 + $0xc] sm:$0xf]
        %v7419 = vld [vmem:[%s6697 + $0x10] sm:$0xf]
        %v7420 = vld [vmem:[%s6697 + $0x14] sm:$0x1]
        %v7421 = vld [vmem:[%s6697 + $0x18] sm:$0xf]
        %v7422 = vld [vmem:[%s6697 + $0x1c] sm:$0xf]
        %v7423 = vld [vmem:[%s6697 + $0x20] sm:$0x1]
        %v7424 = vld [vmem:[%s6697 + $0x24] sm:$0xf]
        %v7425 = vld [vmem:[%s6697 + $0x28] sm:$0xf]
        %v7426 = vld [vmem:[%s6697 + $0x2c] sm:$0x1]
        %v7427 = vld [vmem:[%s6697 + $0x30] sm:$0xf]
        %v7428 = vld [vmem:[%s6697 + $0x34] sm:$0xf]
        %v7429 = vld [vmem:[%s6697 + $0x38] sm:$0x1]
        %v7430 = vld [vmem:[%s6697 + $0x3c] sm:$0xf]
        %v7431 = vld [vmem:[%s6697 + $0x40] sm:$0xf]
        %v7432 = vld [vmem:[%s6697 + $0x44] sm:$0x1]
        %v7433 = vld [vmem:[%s6697 + $0x48] sm:$0xf]
        %v7434 = vld [vmem:[%s6697 + $0x4c] sm:$0xf]
        %v7435 = vld [vmem:[%s6697 + $0x50] sm:$0x1]
        %v7436 = vld [vmem:[%s6697 + $0x54] sm:$0xf]
        %v7437 = vld [vmem:[%s6697 + $0x58] sm:$0xf]
        %v7438 = vld [vmem:[%s6697 + $0x5c] sm:$0x1]
        %v7439 = vld [vmem:[%s6697 + $0x60] sm:$0xf]
        %v7440 = vld [vmem:[%s6697 + $0x64] sm:$0xf]
        %v7441 = vld [vmem:[%s6697 + $0x68] sm:$0x1]
        %v7442 = vld [vmem:[%s6697 + $0x6c] sm:$0xf]
        %v7443 = vld [vmem:[%s6697 + $0x70] sm:$0xf]
        %v7444 = vld [vmem:[%s6697 + $0x74] sm:$0x1]
        %v7445 = vld [vmem:[%s6697 + $0x78] sm:$0xf]
        %v7446 = vld [vmem:[%s6697 + $0x7c] sm:$0xf]
        %v7447 = vld [vmem:[%s6697 + $0x80] sm:$0x1]
        %v7448 = vld [vmem:[%s6697 + $0x84] sm:$0xf]
        %v7449 = vld [vmem:[%s6697 + $0x88] sm:$0xf]
        %v7450 = vld [vmem:[%s6697 + $0x8c] sm:$0x1]
        %v7451 = vld [vmem:[%s6697 + $0x90] sm:$0xf]
        %v7452 = vld [vmem:[%s6697 + $0x94] sm:$0xf]
        %v7453 = vld [vmem:[%s6697 + $0x98] sm:$0x1]
        %v7454 = vld [vmem:[%s6697 + $0x9c] sm:$0xf]
        %v7455 = vld [vmem:[%s6697 + $0xa0] sm:$0xf]
        %v7456 = vld [vmem:[%s6697 + $0xa4] sm:$0x1]
        %v7457 = vld [vmem:[%s6697 + $0xa8] sm:$0xf]
        %v7458 = vld [vmem:[%s6697 + $0xac] sm:$0xf]
        %v7459 = vld [vmem:[%s6697 + $0xb0] sm:$0x1]
        %v7460 = vld [vmem:[%s6697 + $0xb4] sm:$0xf]
        %v7461 = vld [vmem:[%s6697 + $0xb8] sm:$0xf]
        %v7462 = vld [vmem:[%s6697 + $0xbc] sm:$0x1]
        %v7464 = vshrl.u32 %v7415, 16
        %v7466 = vrot.slane %v7464, 4
        %v7467 = vshll.u32 %v7415, 16
        %v7469 = vrot.slane %v7467, 5
        %v7470 = vor.u32 %v7466, %v7469
        %v7471 = vrot.slane %v7470, 4
        %v7473 = vshll.u32 %v7416, 16
        %v7475 = vrot.slane %v7473, 5
        %v7476 = vsel %vm952, %v7471, %v7475
        %v7477 = vshrl.u32 %v7416, 16
        %v7479 = vrot.slane %v7477, 4
        %v7480 = vor.u32 %v7479, %v7475
        %v7481 = vrot.slane %v7480, 4
        %v7483 = vshll.u32 %v7417, 16
        %v7485 = vrot.slane %v7483, 5
        %v7486 = vsel %vm952, %v7481, %v7485
        %v7488 = vshrl.u32 %v7418, 16
        %v7490 = vrot.slane %v7488, 4
        %v7491 = vshll.u32 %v7418, 16
        %v7493 = vrot.slane %v7491, 5
        %v7494 = vor.u32 %v7490, %v7493
        %v7495 = vrot.slane %v7494, 4
        %v7497 = vshll.u32 %v7419, 16
        %v7499 = vrot.slane %v7497, 5
        %v7500 = vsel %vm952, %v7495, %v7499
        %v7501 = vshrl.u32 %v7419, 16
        %v7503 = vrot.slane %v7501, 4
        %v7504 = vor.u32 %v7503, %v7499
        %v7505 = vrot.slane %v7504, 4
        %v7507 = vshll.u32 %v7420, 16
        %v7509 = vrot.slane %v7507, 5
        %v7510 = vsel %vm952, %v7505, %v7509
        %v7512 = vshrl.u32 %v7421, 16
        %v7514 = vrot.slane %v7512, 4
        %v7515 = vshll.u32 %v7421, 16
        %v7517 = vrot.slane %v7515, 5
        %v7518 = vor.u32 %v7514, %v7517
        %v7519 = vrot.slane %v7518, 4
        %v7521 = vshll.u32 %v7422, 16
        %v7523 = vrot.slane %v7521, 5
        %v7524 = vsel %vm952, %v7519, %v7523
        %v7525 = vshrl.u32 %v7422, 16
        %v7527 = vrot.slane %v7525, 4
        %v7528 = vor.u32 %v7527, %v7523
        %v7529 = vrot.slane %v7528, 4
        %v7531 = vshll.u32 %v7423, 16
        %v7533 = vrot.slane %v7531, 5
        %v7534 = vsel %vm952, %v7529, %v7533
        %v7536 = vshrl.u32 %v7424, 16
        %v7538 = vrot.slane %v7536, 4
        %v7539 = vshll.u32 %v7424, 16
        %v7541 = vrot.slane %v7539, 5
        %v7542 = vor.u32 %v7538, %v7541
        %v7543 = vrot.slane %v7542, 4
        %v7545 = vshll.u32 %v7425, 16
        %v7547 = vrot.slane %v7545, 5
        %v7548 = vsel %vm952, %v7543, %v7547
        %v7549 = vshrl.u32 %v7425, 16
        %v7551 = vrot.slane %v7549, 4
        %v7552 = vor.u32 %v7551, %v7547
        %v7553 = vrot.slane %v7552, 4
        %v7555 = vshll.u32 %v7426, 16
        %v7557 = vrot.slane %v7555, 5
        %v7558 = vsel %vm952, %v7553, %v7557
        %v7560 = vshrl.u32 %v7427, 16
        %v7562 = vrot.slane %v7560, 4
        %v7563 = vshll.u32 %v7427, 16
        %v7565 = vrot.slane %v7563, 5
        %v7566 = vor.u32 %v7562, %v7565
        %v7567 = vrot.slane %v7566, 4
        %v7569 = vshll.u32 %v7428, 16
        %v7571 = vrot.slane %v7569, 5
        %v7572 = vsel %vm952, %v7567, %v7571
        %v7573 = vshrl.u32 %v7428, 16
        %v7575 = vrot.slane %v7573, 4
        %v7576 = vor.u32 %v7575, %v7571
        %v7577 = vrot.slane %v7576, 4
        %v7579 = vshll.u32 %v7429, 16
        %v7581 = vrot.slane %v7579, 5
        %v7582 = vsel %vm952, %v7577, %v7581
        %v7584 = vshrl.u32 %v7430, 16
        %v7586 = vrot.slane %v7584, 4
        %v7587 = vshll.u32 %v7430, 16
        %v7589 = vrot.slane %v7587, 5
        %v7590 = vor.u32 %v7586, %v7589
        %v7591 = vrot.slane %v7590, 4
        %v7593 = vshll.u32 %v7431, 16
        %v7595 = vrot.slane %v7593, 5
        %v7596 = vsel %vm952, %v7591, %v7595
        %v7597 = vshrl.u32 %v7431, 16
        %v7599 = vrot.slane %v7597, 4
        %v7600 = vor.u32 %v7599, %v7595
        %v7601 = vrot.slane %v7600, 4
        %v7603 = vshll.u32 %v7432, 16
        %v7605 = vrot.slane %v7603, 5
        %v7606 = vsel %vm952, %v7601, %v7605
        %v7608 = vshrl.u32 %v7433, 16
        %v7610 = vrot.slane %v7608, 4
        %v7611 = vshll.u32 %v7433, 16
        %v7613 = vrot.slane %v7611, 5
        %v7614 = vor.u32 %v7610, %v7613
        %v7615 = vrot.slane %v7614, 4
        %v7617 = vshll.u32 %v7434, 16
        %v7619 = vrot.slane %v7617, 5
        %v7620 = vsel %vm952, %v7615, %v7619
        %v7621 = vshrl.u32 %v7434, 16
        %v7623 = vrot.slane %v7621, 4
        %v7624 = vor.u32 %v7623, %v7619
        %v7625 = vrot.slane %v7624, 4
        %v7627 = vshll.u32 %v7435, 16
        %v7629 = vrot.slane %v7627, 5
        %v7630 = vsel %vm952, %v7625, %v7629
        %v7632 = vshrl.u32 %v7436, 16
        %v7634 = vrot.slane %v7632, 4
        %v7635 = vshll.u32 %v7436, 16
        %v7637 = vrot.slane %v7635, 5
        %v7638 = vor.u32 %v7634, %v7637
        %v7639 = vrot.slane %v7638, 4
        %v7641 = vshll.u32 %v7437, 16
        %v7643 = vrot.slane %v7641, 5
        %v7644 = vsel %vm952, %v7639, %v7643
        %v7645 = vshrl.u32 %v7437, 16
        %v7647 = vrot.slane %v7645, 4
        %v7648 = vor.u32 %v7647, %v7643
        %v7649 = vrot.slane %v7648, 4
        %v7651 = vshll.u32 %v7438, 16
        %v7653 = vrot.slane %v7651, 5
        %v7654 = vsel %vm952, %v7649, %v7653
        %v7656 = vshrl.u32 %v7439, 16
        %v7658 = vrot.slane %v7656, 4
        %v7659 = vshll.u32 %v7439, 16
        %v7661 = vrot.slane %v7659, 5
        %v7662 = vor.u32 %v7658, %v7661
        %v7663 = vrot.slane %v7662, 4
        %v7665 = vshll.u32 %v7440, 16
        %v7667 = vrot.slane %v7665, 5
        %v7668 = vsel %vm952, %v7663, %v7667
        %v7669 = vshrl.u32 %v7440, 16
        %v7671 = vrot.slane %v7669, 4
        %v7672 = vor.u32 %v7671, %v7667
        %v7673 = vrot.slane %v7672, 4
        %v7675 = vshll.u32 %v7441, 16
        %v7677 = vrot.slane %v7675, 5
        %v7678 = vsel %vm952, %v7673, %v7677
        %v7680 = vshrl.u32 %v7442, 16
        %v7682 = vrot.slane %v7680, 4
        %v7683 = vshll.u32 %v7442, 16
        %v7685 = vrot.slane %v7683, 5
        %v7686 = vor.u32 %v7682, %v7685
        %v7687 = vrot.slane %v7686, 4
        %v7689 = vshll.u32 %v7443, 16
        %v7691 = vrot.slane %v7689, 5
        %v7692 = vsel %vm952, %v7687, %v7691
        %v7693 = vshrl.u32 %v7443, 16
        %v7695 = vrot.slane %v7693, 4
        %v7696 = vor.u32 %v7695, %v7691
        %v7697 = vrot.slane %v7696, 4
        %v7699 = vshll.u32 %v7444, 16
        %v7701 = vrot.slane %v7699, 5
        %v7702 = vsel %vm952, %v7697, %v7701
        %v7704 = vshrl.u32 %v7445, 16
        %v7706 = vrot.slane %v7704, 4
        %v7707 = vshll.u32 %v7445, 16
        %v7709 = vrot.slane %v7707, 5
        %v7710 = vor.u32 %v7706, %v7709
        %v7711 = vrot.slane %v7710, 4
        %v7713 = vshll.u32 %v7446, 16
        %v7715 = vrot.slane %v7713, 5
        %v7716 = vsel %vm952, %v7711, %v7715
        %v7717 = vshrl.u32 %v7446, 16
        %v7719 = vrot.slane %v7717, 4
        %v7720 = vor.u32 %v7719, %v7715
        %v7721 = vrot.slane %v7720, 4
        %v7723 = vshll.u32 %v7447, 16
        %v7725 = vrot.slane %v7723, 5
        %v7726 = vsel %vm952, %v7721, %v7725
        %v7728 = vshrl.u32 %v7448, 16
        %v7730 = vrot.slane %v7728, 4
        %v7731 = vshll.u32 %v7448, 16
        %v7733 = vrot.slane %v7731, 5
        %v7734 = vor.u32 %v7730, %v7733
        %v7735 = vrot.slane %v7734, 4
        %v7737 = vshll.u32 %v7449, 16
        %v7739 = vrot.slane %v7737, 5
        %v7740 = vsel %vm952, %v7735, %v7739
        %v7741 = vshrl.u32 %v7449, 16
        %v7743 = vrot.slane %v7741, 4
        %v7744 = vor.u32 %v7743, %v7739
        %v7745 = vrot.slane %v7744, 4
        %v7747 = vshll.u32 %v7450, 16
        %v7749 = vrot.slane %v7747, 5
        %v7750 = vsel %vm952, %v7745, %v7749
        %v7752 = vshrl.u32 %v7451, 16
        %v7754 = vrot.slane %v7752, 4
        %v7755 = vshll.u32 %v7451, 16
        %v7757 = vrot.slane %v7755, 5
        %v7758 = vor.u32 %v7754, %v7757
        %v7759 = vrot.slane %v7758, 4
        %v7761 = vshll.u32 %v7452, 16
        %v7763 = vrot.slane %v7761, 5
        %v7764 = vsel %vm952, %v7759, %v7763
        %v7765 = vshrl.u32 %v7452, 16
        %v7767 = vrot.slane %v7765, 4
        %v7768 = vor.u32 %v7767, %v7763
        %v7769 = vrot.slane %v7768, 4
        %v7771 = vshll.u32 %v7453, 16
        %v7773 = vrot.slane %v7771, 5
        %v7774 = vsel %vm952, %v7769, %v7773
        %v7776 = vshrl.u32 %v7454, 16
        %v7778 = vrot.slane %v7776, 4
        %v7779 = vshll.u32 %v7454, 16
        %v7781 = vrot.slane %v7779, 5
        %v7782 = vor.u32 %v7778, %v7781
        %v7783 = vrot.slane %v7782, 4
        %v7785 = vshll.u32 %v7455, 16
        %v7787 = vrot.slane %v7785, 5
        %v7788 = vsel %vm952, %v7783, %v7787
        %v7789 = vshrl.u32 %v7455, 16
        %v7791 = vrot.slane %v7789, 4
        %v7792 = vor.u32 %v7791, %v7787
        %v7793 = vrot.slane %v7792, 4
        %v7795 = vshll.u32 %v7456, 16
        %v7797 = vrot.slane %v7795, 5
        %v7798 = vsel %vm952, %v7793, %v7797
        %v7800 = vshrl.u32 %v7457, 16
        %v7802 = vrot.slane %v7800, 4
        %v7803 = vshll.u32 %v7457, 16
        %v7805 = vrot.slane %v7803, 5
        %v7806 = vor.u32 %v7802, %v7805
        %v7807 = vrot.slane %v7806, 4
        %v7809 = vshll.u32 %v7458, 16
        %v7811 = vrot.slane %v7809, 5
        %v7812 = vsel %vm952, %v7807, %v7811
        %v7813 = vshrl.u32 %v7458, 16
        %v7815 = vrot.slane %v7813, 4
        %v7816 = vor.u32 %v7815, %v7811
        %v7817 = vrot.slane %v7816, 4
        %v7819 = vshll.u32 %v7459, 16
        %v7821 = vrot.slane %v7819, 5
        %v7822 = vsel %vm952, %v7817, %v7821
        %v7824 = vshrl.u32 %v7460, 16
        %v7826 = vrot.slane %v7824, 4
        %v7827 = vshll.u32 %v7460, 16
        %v7829 = vrot.slane %v7827, 5
        %v7830 = vor.u32 %v7826, %v7829
        %v7831 = vrot.slane %v7830, 4
        %v7833 = vshll.u32 %v7461, 16
        %v7835 = vrot.slane %v7833, 5
        %v7836 = vsel %vm952, %v7831, %v7835
        %v7837 = vshrl.u32 %v7461, 16
        %v7839 = vrot.slane %v7837, 4
        %v7840 = vor.u32 %v7839, %v7835
        %v7841 = vrot.slane %v7840, 4
        %v7843 = vshll.u32 %v7462, 16
        %v7845 = vrot.slane %v7843, 5
        %v7846 = vsel %vm952, %v7841, %v7845
        %s7847 = scalar_lea.vmem %s1, 28
        %v7848 = vld [vmem:[%s7847] sm:$0x3]
        %v7849 = vunpack.c.l.b16 %v7476
        %v7850 = vunpack.c.l.b16 %v7486
        %v7851 = vunpack.c.l.b16 %v7500
        %v7852 = vunpack.c.l.b16 %v7510
        %v7853 = vunpack.c.l.b16 %v7524
        %v7854 = vunpack.c.l.b16 %v7534
        %v7855 = vunpack.c.l.b16 %v7548
        %v7856 = vunpack.c.l.b16 %v7558
        %v7857 = vunpack.c.l.b16 %v7572
        %v7858 = vunpack.c.l.b16 %v7582
        %v7859 = vunpack.c.l.b16 %v7596
        %v7860 = vunpack.c.l.b16 %v7606
        %v7861 = vunpack.c.l.b16 %v7620
        %v7862 = vunpack.c.l.b16 %v7630
        %v7863 = vunpack.c.l.b16 %v7644
        %v7864 = vunpack.c.l.b16 %v7654
        %v7865 = vunpack.c.l.b16 %v7668
        %v7866 = vunpack.c.l.b16 %v7678
        %v7867 = vunpack.c.l.b16 %v7692
        %v7868 = vunpack.c.l.b16 %v7702
        %v7869 = vunpack.c.l.b16 %v7716
        %v7870 = vunpack.c.l.b16 %v7726
        %v7871 = vunpack.c.l.b16 %v7740
        %v7872 = vunpack.c.l.b16 %v7750
        %v7873 = vunpack.c.l.b16 %v7764
        %v7874 = vunpack.c.l.b16 %v7774
        %v7875 = vunpack.c.l.b16 %v7788
        %v7876 = vunpack.c.l.b16 %v7798
        %v7877 = vunpack.c.l.b16 %v7812
        %v7878 = vunpack.c.l.b16 %v7822
        %v7879 = vunpack.c.l.b16 %v7836
        %v7880 = vunpack.c.l.b16 %v7846
        %v7881 = vpack.c.b16 %v7850, %v7849
        %v7882 = vpack.c.b16 %v7852, %v7851
        %v7883 = vpack.c.b16 %v7854, %v7853
        %v7884 = vpack.c.b16 %v7856, %v7855
        %v7885 = vpack.c.b16 %v7858, %v7857
        %v7886 = vpack.c.b16 %v7860, %v7859
        %v7887 = vpack.c.b16 %v7862, %v7861
        %v7888 = vpack.c.b16 %v7864, %v7863
        %v7889 = vpack.c.b16 %v7866, %v7865
        %v7890 = vpack.c.b16 %v7868, %v7867
        %v7891 = vpack.c.b16 %v7870, %v7869
        %v7892 = vpack.c.b16 %v7872, %v7871
        %v7893 = vpack.c.b16 %v7874, %v7873
        %v7894 = vpack.c.b16 %v7876, %v7875
        %v7895 = vpack.c.b16 %v7878, %v7877
        %v7896 = vpack.c.b16 %v7880, %v7879
        %v7898 = vsel %vm396, %v7881, 0
        %v7901 = vsel %vm396, %v7882, 0
        %v7904 = vsel %vm396, %v7883, 0
        %v7907 = vsel %vm396, %v7884, 0
        %v7910 = vsel %vm396, %v7885, 0
        %v7913 = vsel %vm396, %v7886, 0
        %v7916 = vsel %vm396, %v7887, 0
        %v7919 = vsel %vm396, %v7888, 0
        %v7922 = vsel %vm396, %v7889, 0
        %v7925 = vsel %vm396, %v7890, 0
        %v7928 = vsel %vm396, %v7891, 0
        %v7931 = vsel %vm396, %v7892, 0
        %v7934 = vsel %vm396, %v7893, 0
        %v7937 = vsel %vm396, %v7894, 0
        %v7940 = vsel %vm396, %v7895, 0
        %v7943 = vsel %vm396, %v7896, 0
        %v7946 = vsel %vm445, %v7848, 0
        %7948 = vmatprep.subr.bf16.mxu0 0
        %7949 = vmatpush1.bf16.msra.mxu0 0
        %7950 = vmatprep.subr.bf16.mxu0 0
        %7951 = vmatpush1.bf16.msra.mxu0 0
        %7952 = vmatprep.subr.bf16.mxu0 0
        %7953 = vmatpush1.bf16.msra.mxu0 0
        %7954 = vmatprep.subr.bf16.mxu0 0
        %7955 = vmatpush1.bf16.msra.mxu0 0
        %7956 = vmatprep.subr.bf16.mxu0 0
        %7957 = vmatpush1.bf16.msra.mxu0 0
        %7958 = vmatprep.subr.bf16.mxu0 0
        %7959 = vmatpush1.bf16.msra.mxu0 0
        %7960 = vmatprep.subr.bf16.mxu0 0
        %7961 = vmatpush1.bf16.msra.mxu0 0
        %7962 = vmatprep.subr.bf16.mxu0 0
        %7963 = vmatpush1.bf16.msra.mxu0 %v7946
        %7964 = vmatprep.subr.bf16.mxu0 0
        %7965 = vmatpush2.bf16.msra.mxu0 0
        %7966 = vmatprep.subr.bf16.mxu0 0
        %7967 = vmatpush2.bf16.msra.mxu0 0
        %7968 = vmatprep.subr.bf16.mxu0 0
        %7969 = vmatpush2.bf16.msra.mxu0 0
        %7970 = vmatprep.subr.bf16.mxu0 0
        %7971 = vmatpush2.bf16.msra.mxu0 0
        %7972 = vmatprep.subr.bf16.mxu0 0
        %7973 = vmatpush2.bf16.msra.mxu0 0
        %7974 = vmatprep.subr.bf16.mxu0 0
        %7975 = vmatpush2.bf16.msra.mxu0 0
        %7976 = vmatprep.subr.bf16.mxu0 0
        %7977 = vmatpush2.bf16.msra.mxu0 0
        %7978 = vmatprep.subr.bf16.mxu0 0
        %7979 = vmatpush2.bf16.msra.mxu0 0
        %7980 = vmatprep.mubr.bf16.mxu0 0
        %7981 = vmatmul.mubr.bf16.gmra.mxu0 %v7898
        %v7982 = vpop.f32.mrf.mxu0
        %v7983 = vadd.f32 0.0, %v7982
        %v7984 = vpop.f32.mrf.mxu0
        %v7985 = vpop.f32.mrf.mxu0
        %v7986 = vadd.f32 0.0, %v7985
        %v7987 = vpop.f32.mrf.mxu0
        %7988 = vmatprep.mubr.bf16.mxu0 0
        %7989 = vmatmul.mubr.bf16.gmra.mxu0 %v7901
        %v7990 = vpop.f32.mrf.mxu0
        %v7991 = vadd.f32 0.0, %v7990
        %v7992 = vpop.f32.mrf.mxu0
        %v7993 = vpop.f32.mrf.mxu0
        %v7994 = vadd.f32 0.0, %v7993
        %v7995 = vpop.f32.mrf.mxu0
        %7996 = vmatprep.mubr.bf16.mxu0 0
        %7997 = vmatmul.mubr.bf16.gmra.mxu0 %v7904
        %v7998 = vpop.f32.mrf.mxu0
        %v7999 = vadd.f32 0.0, %v7998
        %v8000 = vpop.f32.mrf.mxu0
        %v8001 = vpop.f32.mrf.mxu0
        %v8002 = vadd.f32 0.0, %v8001
        %v8003 = vpop.f32.mrf.mxu0
        %8004 = vmatprep.mubr.bf16.mxu0 0
        %8005 = vmatmul.mubr.bf16.gmra.mxu0 %v7907
        %v8006 = vpop.f32.mrf.mxu0
        %v8007 = vadd.f32 0.0, %v8006
        %v8008 = vpop.f32.mrf.mxu0
        %v8009 = vpop.f32.mrf.mxu0
        %v8010 = vadd.f32 0.0, %v8009
        %v8011 = vpop.f32.mrf.mxu0
        %8012 = vmatprep.mubr.bf16.mxu0 0
        %8013 = vmatmul.mubr.bf16.gmra.mxu0 %v7910
        %v8014 = vpop.f32.mrf.mxu0
        %v8015 = vadd.f32 0.0, %v8014
        %v8016 = vpop.f32.mrf.mxu0
        %v8017 = vpop.f32.mrf.mxu0
        %v8018 = vadd.f32 0.0, %v8017
        %v8019 = vpop.f32.mrf.mxu0
        %8020 = vmatprep.mubr.bf16.mxu0 0
        %8021 = vmatmul.mubr.bf16.gmra.mxu0 %v7913
        %v8022 = vpop.f32.mrf.mxu0
        %v8023 = vadd.f32 0.0, %v8022
        %v8024 = vpop.f32.mrf.mxu0
        %v8025 = vpop.f32.mrf.mxu0
        %v8026 = vadd.f32 0.0, %v8025
        %v8027 = vpop.f32.mrf.mxu0
        %8028 = vmatprep.mubr.bf16.mxu0 0
        %8029 = vmatmul.mubr.bf16.gmra.mxu0 %v7916
        %v8030 = vpop.f32.mrf.mxu0
        %v8031 = vadd.f32 0.0, %v8030
        %v8032 = vpop.f32.mrf.mxu0
        %v8033 = vpop.f32.mrf.mxu0
        %v8034 = vadd.f32 0.0, %v8033
        %v8035 = vpop.f32.mrf.mxu0
        %8036 = vmatprep.mubr.bf16.mxu0 0
        %8037 = vmatmul.mubr.bf16.gmra.mxu0 %v7919
        %v8038 = vpop.f32.mrf.mxu0
        %v8039 = vadd.f32 0.0, %v8038
        %v8040 = vpop.f32.mrf.mxu0
        %v8041 = vpop.f32.mrf.mxu0
        %v8042 = vadd.f32 0.0, %v8041
        %v8043 = vpop.f32.mrf.mxu0
        %8044 = vmatprep.mubr.bf16.mxu0 0
        %8045 = vmatmul.mubr.bf16.gmra.mxu0 %v7922
        %v8046 = vpop.f32.mrf.mxu0
        %v8047 = vadd.f32 0.0, %v8046
        %v8048 = vpop.f32.mrf.mxu0
        %v8049 = vpop.f32.mrf.mxu0
        %v8050 = vadd.f32 0.0, %v8049
        %v8051 = vpop.f32.mrf.mxu0
        %8052 = vmatprep.mubr.bf16.mxu0 0
        %8053 = vmatmul.mubr.bf16.gmra.mxu0 %v7925
        %v8054 = vpop.f32.mrf.mxu0
        %v8055 = vadd.f32 0.0, %v8054
        %v8056 = vpop.f32.mrf.mxu0
        %v8057 = vpop.f32.mrf.mxu0
        %v8058 = vadd.f32 0.0, %v8057
        %v8059 = vpop.f32.mrf.mxu0
        %8060 = vmatprep.mubr.bf16.mxu0 0
        %8061 = vmatmul.mubr.bf16.gmra.mxu0 %v7928
        %v8062 = vpop.f32.mrf.mxu0
        %v8063 = vadd.f32 0.0, %v8062
        %v8064 = vpop.f32.mrf.mxu0
        %v8065 = vpop.f32.mrf.mxu0
        %v8066 = vadd.f32 0.0, %v8065
        %v8067 = vpop.f32.mrf.mxu0
        %8068 = vmatprep.mubr.bf16.mxu0 0
        %8069 = vmatmul.mubr.bf16.gmra.mxu0 %v7931
        %v8070 = vpop.f32.mrf.mxu0
        %v8071 = vadd.f32 0.0, %v8070
        %v8072 = vpop.f32.mrf.mxu0
        %v8073 = vpop.f32.mrf.mxu0
        %v8074 = vadd.f32 0.0, %v8073
        %v8075 = vpop.f32.mrf.mxu0
        %8076 = vmatprep.mubr.bf16.mxu0 0
        %8077 = vmatmul.mubr.bf16.gmra.mxu0 %v7934
        %v8078 = vpop.f32.mrf.mxu0
        %v8079 = vadd.f32 0.0, %v8078
        %v8080 = vpop.f32.mrf.mxu0
        %v8081 = vpop.f32.mrf.mxu0
        %v8082 = vadd.f32 0.0, %v8081
        %v8083 = vpop.f32.mrf.mxu0
        %8084 = vmatprep.mubr.bf16.mxu0 0
        %8085 = vmatmul.mubr.bf16.gmra.mxu0 %v7937
        %v8086 = vpop.f32.mrf.mxu0
        %v8087 = vadd.f32 0.0, %v8086
        %v8088 = vpop.f32.mrf.mxu0
        %v8089 = vpop.f32.mrf.mxu0
        %v8090 = vadd.f32 0.0, %v8089
        %v8091 = vpop.f32.mrf.mxu0
        %8092 = vmatprep.mubr.bf16.mxu0 0
        %8093 = vmatmul.mubr.bf16.gmra.mxu0 %v7940
        %v8094 = vpop.f32.mrf.mxu0
        %v8095 = vadd.f32 0.0, %v8094
        %v8096 = vpop.f32.mrf.mxu0
        %v8097 = vpop.f32.mrf.mxu0
        %v8098 = vadd.f32 0.0, %v8097
        %v8099 = vpop.f32.mrf.mxu0
        %8100 = vmatprep.mubr.bf16.mxu0 0
        %8101 = vmatmul.mubr.bf16.gmra.mxu0 %v7943
        %v8102 = vpop.f32.mrf.mxu0
        %v8103 = vadd.f32 0.0, %v8102
        %v8104 = vpop.f32.mrf.mxu0
        %v8105 = vpop.f32.mrf.mxu0
        %v8106 = vadd.f32 0.0, %v8105
        %v8107 = vpop.f32.mrf.mxu0
        %8108 = vdwg.mxu0
        %v8109 = vadd.f32 %v7383, %v7983
        %v8110 = vadd.f32 %v7384, %v7986
        %v8111 = vadd.f32 %v7385, %v7991
        %v8112 = vadd.f32 %v7386, %v7994
        %v8113 = vadd.f32 %v7387, %v7999
        %v8114 = vadd.f32 %v7388, %v8002
        %v8115 = vadd.f32 %v7389, %v8007
        %v8116 = vadd.f32 %v7390, %v8010
        %v8117 = vadd.f32 %v7391, %v8015
        %v8118 = vadd.f32 %v7392, %v8018
        %v8119 = vadd.f32 %v7393, %v8023
        %v8120 = vadd.f32 %v7394, %v8026
        %v8121 = vadd.f32 %v7395, %v8031
        %v8122 = vadd.f32 %v7396, %v8034
        %v8123 = vadd.f32 %v7397, %v8039
        %v8124 = vadd.f32 %v7398, %v8042
        %v8125 = vadd.f32 %v7399, %v8047
        %v8126 = vadd.f32 %v7400, %v8050
        %v8127 = vadd.f32 %v7401, %v8055
        %v8128 = vadd.f32 %v7402, %v8058
        %v8129 = vadd.f32 %v7403, %v8063
        %v8130 = vadd.f32 %v7404, %v8066
        %v8131 = vadd.f32 %v7405, %v8071
        %v8132 = vadd.f32 %v7406, %v8074
        %v8133 = vadd.f32 %v7407, %v8079
        %v8134 = vadd.f32 %v7408, %v8082
        %v8135 = vadd.f32 %v7409, %v8087
        %v8136 = vadd.f32 %v7410, %v8090
        %v8137 = vadd.f32 %v7411, %v8095
        %v8138 = vadd.f32 %v7412, %v8098
        %v8139 = vadd.f32 %v7413, %v8103
        %v8140 = vadd.f32 %v7414, %v8106
        %v8141 = vld [vmem:[%s7056] sm:$0xf]
        %v8142 = vld [vmem:[%s7056 + $0x4] sm:$0xf]
        %v8143 = vld [vmem:[%s7056 + $0x8] sm:$0x1]
        %v8144 = vld [vmem:[%s7056 + $0xc] sm:$0xf]
        %v8145 = vld [vmem:[%s7056 + $0x10] sm:$0xf]
        %v8146 = vld [vmem:[%s7056 + $0x14] sm:$0x1]
        %v8147 = vld [vmem:[%s7056 + $0x18] sm:$0xf]
        %v8148 = vld [vmem:[%s7056 + $0x1c] sm:$0xf]
        %v8149 = vld [vmem:[%s7056 + $0x20] sm:$0x1]
        %v8150 = vld [vmem:[%s7056 + $0x24] sm:$0xf]
        %v8151 = vld [vmem:[%s7056 + $0x28] sm:$0xf]
        %v8152 = vld [vmem:[%s7056 + $0x2c] sm:$0x1]
        %v8153 = vld [vmem:[%s7056 + $0x30] sm:$0xf]
        %v8154 = vld [vmem:[%s7056 + $0x34] sm:$0xf]
        %v8155 = vld [vmem:[%s7056 + $0x38] sm:$0x1]
        %v8156 = vld [vmem:[%s7056 + $0x3c] sm:$0xf]
        %v8157 = vld [vmem:[%s7056 + $0x40] sm:$0xf]
        %v8158 = vld [vmem:[%s7056 + $0x44] sm:$0x1]
        %v8159 = vld [vmem:[%s7056 + $0x48] sm:$0xf]
        %v8160 = vld [vmem:[%s7056 + $0x4c] sm:$0xf]
        %v8161 = vld [vmem:[%s7056 + $0x50] sm:$0x1]
        %v8162 = vld [vmem:[%s7056 + $0x54] sm:$0xf]
        %v8163 = vld [vmem:[%s7056 + $0x58] sm:$0xf]
        %v8164 = vld [vmem:[%s7056 + $0x5c] sm:$0x1]
        %v8165 = vld [vmem:[%s7056 + $0x60] sm:$0xf]
        %v8166 = vld [vmem:[%s7056 + $0x64] sm:$0xf]
        %v8167 = vld [vmem:[%s7056 + $0x68] sm:$0x1]
        %v8168 = vld [vmem:[%s7056 + $0x6c] sm:$0xf]
        %v8169 = vld [vmem:[%s7056 + $0x70] sm:$0xf]
        %v8170 = vld [vmem:[%s7056 + $0x74] sm:$0x1]
        %v8171 = vld [vmem:[%s7056 + $0x78] sm:$0xf]
        %v8172 = vld [vmem:[%s7056 + $0x7c] sm:$0xf]
        %v8173 = vld [vmem:[%s7056 + $0x80] sm:$0x1]
        %v8174 = vld [vmem:[%s7056 + $0x84] sm:$0xf]
        %v8175 = vld [vmem:[%s7056 + $0x88] sm:$0xf]
        %v8176 = vld [vmem:[%s7056 + $0x8c] sm:$0x1]
        %v8177 = vld [vmem:[%s7056 + $0x90] sm:$0xf]
        %v8178 = vld [vmem:[%s7056 + $0x94] sm:$0xf]
        %v8179 = vld [vmem:[%s7056 + $0x98] sm:$0x1]
        %v8180 = vld [vmem:[%s7056 + $0x9c] sm:$0xf]
        %v8181 = vld [vmem:[%s7056 + $0xa0] sm:$0xf]
        %v8182 = vld [vmem:[%s7056 + $0xa4] sm:$0x1]
        %v8183 = vld [vmem:[%s7056 + $0xa8] sm:$0xf]
        %v8184 = vld [vmem:[%s7056 + $0xac] sm:$0xf]
        %v8185 = vld [vmem:[%s7056 + $0xb0] sm:$0x1]
        %v8186 = vld [vmem:[%s7056 + $0xb4] sm:$0xf]
        %v8187 = vld [vmem:[%s7056 + $0xb8] sm:$0xf]
        %v8188 = vld [vmem:[%s7056 + $0xbc] sm:$0x1]
        %v8190 = vshrl.u32 %v8141, 16
        %v8192 = vrot.slane %v8190, 4
        %v8193 = vshll.u32 %v8141, 16
        %v8195 = vrot.slane %v8193, 5
        %v8196 = vor.u32 %v8192, %v8195
        %v8197 = vrot.slane %v8196, 4
        %v8199 = vshll.u32 %v8142, 16
        %v8201 = vrot.slane %v8199, 5
        %v8202 = vsel %vm952, %v8197, %v8201
        %v8203 = vshrl.u32 %v8142, 16
        %v8205 = vrot.slane %v8203, 4
        %v8206 = vor.u32 %v8205, %v8201
        %v8207 = vrot.slane %v8206, 4
        %v8209 = vshll.u32 %v8143, 16
        %v8211 = vrot.slane %v8209, 5
        %v8212 = vsel %vm952, %v8207, %v8211
        %v8214 = vshrl.u32 %v8144, 16
        %v8216 = vrot.slane %v8214, 4
        %v8217 = vshll.u32 %v8144, 16
        %v8219 = vrot.slane %v8217, 5
        %v8220 = vor.u32 %v8216, %v8219
        %v8221 = vrot.slane %v8220, 4
        %v8223 = vshll.u32 %v8145, 16
        %v8225 = vrot.slane %v8223, 5
        %v8226 = vsel %vm952, %v8221, %v8225
        %v8227 = vshrl.u32 %v8145, 16
        %v8229 = vrot.slane %v8227, 4
        %v8230 = vor.u32 %v8229, %v8225
        %v8231 = vrot.slane %v8230, 4
        %v8233 = vshll.u32 %v8146, 16
        %v8235 = vrot.slane %v8233, 5
        %v8236 = vsel %vm952, %v8231, %v8235
        %v8238 = vshrl.u32 %v8147, 16
        %v8240 = vrot.slane %v8238, 4
        %v8241 = vshll.u32 %v8147, 16
        %v8243 = vrot.slane %v8241, 5
        %v8244 = vor.u32 %v8240, %v8243
        %v8245 = vrot.slane %v8244, 4
        %v8247 = vshll.u32 %v8148, 16
        %v8249 = vrot.slane %v8247, 5
        %v8250 = vsel %vm952, %v8245, %v8249
        %v8251 = vshrl.u32 %v8148, 16
        %v8253 = vrot.slane %v8251, 4
        %v8254 = vor.u32 %v8253, %v8249
        %v8255 = vrot.slane %v8254, 4
        %v8257 = vshll.u32 %v8149, 16
        %v8259 = vrot.slane %v8257, 5
        %v8260 = vsel %vm952, %v8255, %v8259
        %v8262 = vshrl.u32 %v8150, 16
        %v8264 = vrot.slane %v8262, 4
        %v8265 = vshll.u32 %v8150, 16
        %v8267 = vrot.slane %v8265, 5
        %v8268 = vor.u32 %v8264, %v8267
        %v8269 = vrot.slane %v8268, 4
        %v8271 = vshll.u32 %v8151, 16
        %v8273 = vrot.slane %v8271, 5
        %v8274 = vsel %vm952, %v8269, %v8273
        %v8275 = vshrl.u32 %v8151, 16
        %v8277 = vrot.slane %v8275, 4
        %v8278 = vor.u32 %v8277, %v8273
        %v8279 = vrot.slane %v8278, 4
        %v8281 = vshll.u32 %v8152, 16
        %v8283 = vrot.slane %v8281, 5
        %v8284 = vsel %vm952, %v8279, %v8283
        %v8286 = vshrl.u32 %v8153, 16
        %v8288 = vrot.slane %v8286, 4
        %v8289 = vshll.u32 %v8153, 16
        %v8291 = vrot.slane %v8289, 5
        %v8292 = vor.u32 %v8288, %v8291
        %v8293 = vrot.slane %v8292, 4
        %v8295 = vshll.u32 %v8154, 16
        %v8297 = vrot.slane %v8295, 5
        %v8298 = vsel %vm952, %v8293, %v8297
        %v8299 = vshrl.u32 %v8154, 16
        %v8301 = vrot.slane %v8299, 4
        %v8302 = vor.u32 %v8301, %v8297
        %v8303 = vrot.slane %v8302, 4
        %v8305 = vshll.u32 %v8155, 16
        %v8307 = vrot.slane %v8305, 5
        %v8308 = vsel %vm952, %v8303, %v8307
        %v8310 = vshrl.u32 %v8156, 16
        %v8312 = vrot.slane %v8310, 4
        %v8313 = vshll.u32 %v8156, 16
        %v8315 = vrot.slane %v8313, 5
        %v8316 = vor.u32 %v8312, %v8315
        %v8317 = vrot.slane %v8316, 4
        %v8319 = vshll.u32 %v8157, 16
        %v8321 = vrot.slane %v8319, 5
        %v8322 = vsel %vm952, %v8317, %v8321
        %v8323 = vshrl.u32 %v8157, 16
        %v8325 = vrot.slane %v8323, 4
        %v8326 = vor.u32 %v8325, %v8321
        %v8327 = vrot.slane %v8326, 4
        %v8329 = vshll.u32 %v8158, 16
        %v8331 = vrot.slane %v8329, 5
        %v8332 = vsel %vm952, %v8327, %v8331
        %v8334 = vshrl.u32 %v8159, 16
        %v8336 = vrot.slane %v8334, 4
        %v8337 = vshll.u32 %v8159, 16
        %v8339 = vrot.slane %v8337, 5
        %v8340 = vor.u32 %v8336, %v8339
        %v8341 = vrot.slane %v8340, 4
        %v8343 = vshll.u32 %v8160, 16
        %v8345 = vrot.slane %v8343, 5
        %v8346 = vsel %vm952, %v8341, %v8345
        %v8347 = vshrl.u32 %v8160, 16
        %v8349 = vrot.slane %v8347, 4
        %v8350 = vor.u32 %v8349, %v8345
        %v8351 = vrot.slane %v8350, 4
        %v8353 = vshll.u32 %v8161, 16
        %v8355 = vrot.slane %v8353, 5
        %v8356 = vsel %vm952, %v8351, %v8355
        %v8358 = vshrl.u32 %v8162, 16
        %v8360 = vrot.slane %v8358, 4
        %v8361 = vshll.u32 %v8162, 16
        %v8363 = vrot.slane %v8361, 5
        %v8364 = vor.u32 %v8360, %v8363
        %v8365 = vrot.slane %v8364, 4
        %v8367 = vshll.u32 %v8163, 16
        %v8369 = vrot.slane %v8367, 5
        %v8370 = vsel %vm952, %v8365, %v8369
        %v8371 = vshrl.u32 %v8163, 16
        %v8373 = vrot.slane %v8371, 4
        %v8374 = vor.u32 %v8373, %v8369
        %v8375 = vrot.slane %v8374, 4
        %v8377 = vshll.u32 %v8164, 16
        %v8379 = vrot.slane %v8377, 5
        %v8380 = vsel %vm952, %v8375, %v8379
        %v8382 = vshrl.u32 %v8165, 16
        %v8384 = vrot.slane %v8382, 4
        %v8385 = vshll.u32 %v8165, 16
        %v8387 = vrot.slane %v8385, 5
        %v8388 = vor.u32 %v8384, %v8387
        %v8389 = vrot.slane %v8388, 4
        %v8391 = vshll.u32 %v8166, 16
        %v8393 = vrot.slane %v8391, 5
        %v8394 = vsel %vm952, %v8389, %v8393
        %v8395 = vshrl.u32 %v8166, 16
        %v8397 = vrot.slane %v8395, 4
        %v8398 = vor.u32 %v8397, %v8393
        %v8399 = vrot.slane %v8398, 4
        %v8401 = vshll.u32 %v8167, 16
        %v8403 = vrot.slane %v8401, 5
        %v8404 = vsel %vm952, %v8399, %v8403
        %v8406 = vshrl.u32 %v8168, 16
        %v8408 = vrot.slane %v8406, 4
        %v8409 = vshll.u32 %v8168, 16
        %v8411 = vrot.slane %v8409, 5
        %v8412 = vor.u32 %v8408, %v8411
        %v8413 = vrot.slane %v8412, 4
        %v8415 = vshll.u32 %v8169, 16
        %v8417 = vrot.slane %v8415, 5
        %v8418 = vsel %vm952, %v8413, %v8417
        %v8419 = vshrl.u32 %v8169, 16
        %v8421 = vrot.slane %v8419, 4
        %v8422 = vor.u32 %v8421, %v8417
        %v8423 = vrot.slane %v8422, 4
        %v8425 = vshll.u32 %v8170, 16
        %v8427 = vrot.slane %v8425, 5
        %v8428 = vsel %vm952, %v8423, %v8427
        %v8430 = vshrl.u32 %v8171, 16
        %v8432 = vrot.slane %v8430, 4
        %v8433 = vshll.u32 %v8171, 16
        %v8435 = vrot.slane %v8433, 5
        %v8436 = vor.u32 %v8432, %v8435
        %v8437 = vrot.slane %v8436, 4
        %v8439 = vshll.u32 %v8172, 16
        %v8441 = vrot.slane %v8439, 5
        %v8442 = vsel %vm952, %v8437, %v8441
        %v8443 = vshrl.u32 %v8172, 16
        %v8445 = vrot.slane %v8443, 4
        %v8446 = vor.u32 %v8445, %v8441
        %v8447 = vrot.slane %v8446, 4
        %v8449 = vshll.u32 %v8173, 16
        %v8451 = vrot.slane %v8449, 5
        %v8452 = vsel %vm952, %v8447, %v8451
        %v8454 = vshrl.u32 %v8174, 16
        %v8456 = vrot.slane %v8454, 4
        %v8457 = vshll.u32 %v8174, 16
        %v8459 = vrot.slane %v8457, 5
        %v8460 = vor.u32 %v8456, %v8459
        %v8461 = vrot.slane %v8460, 4
        %v8463 = vshll.u32 %v8175, 16
        %v8465 = vrot.slane %v8463, 5
        %v8466 = vsel %vm952, %v8461, %v8465
        %v8467 = vshrl.u32 %v8175, 16
        %v8469 = vrot.slane %v8467, 4
        %v8470 = vor.u32 %v8469, %v8465
        %v8471 = vrot.slane %v8470, 4
        %v8473 = vshll.u32 %v8176, 16
        %v8475 = vrot.slane %v8473, 5
        %v8476 = vsel %vm952, %v8471, %v8475
        %v8478 = vshrl.u32 %v8177, 16
        %v8480 = vrot.slane %v8478, 4
        %v8481 = vshll.u32 %v8177, 16
        %v8483 = vrot.slane %v8481, 5
        %v8484 = vor.u32 %v8480, %v8483
        %v8485 = vrot.slane %v8484, 4
        %v8487 = vshll.u32 %v8178, 16
        %v8489 = vrot.slane %v8487, 5
        %v8490 = vsel %vm952, %v8485, %v8489
        %v8491 = vshrl.u32 %v8178, 16
        %v8493 = vrot.slane %v8491, 4
        %v8494 = vor.u32 %v8493, %v8489
        %v8495 = vrot.slane %v8494, 4
        %v8497 = vshll.u32 %v8179, 16
        %v8499 = vrot.slane %v8497, 5
        %v8500 = vsel %vm952, %v8495, %v8499
        %v8502 = vshrl.u32 %v8180, 16
        %v8504 = vrot.slane %v8502, 4
        %v8505 = vshll.u32 %v8180, 16
        %v8507 = vrot.slane %v8505, 5
        %v8508 = vor.u32 %v8504, %v8507
        %v8509 = vrot.slane %v8508, 4
        %v8511 = vshll.u32 %v8181, 16
        %v8513 = vrot.slane %v8511, 5
        %v8514 = vsel %vm952, %v8509, %v8513
        %v8515 = vshrl.u32 %v8181, 16
        %v8517 = vrot.slane %v8515, 4
        %v8518 = vor.u32 %v8517, %v8513
        %v8519 = vrot.slane %v8518, 4
        %v8521 = vshll.u32 %v8182, 16
        %v8523 = vrot.slane %v8521, 5
        %v8524 = vsel %vm952, %v8519, %v8523
        %v8526 = vshrl.u32 %v8183, 16
        %v8528 = vrot.slane %v8526, 4
        %v8529 = vshll.u32 %v8183, 16
        %v8531 = vrot.slane %v8529, 5
        %v8532 = vor.u32 %v8528, %v8531
        %v8533 = vrot.slane %v8532, 4
        %v8535 = vshll.u32 %v8184, 16
        %v8537 = vrot.slane %v8535, 5
        %v8538 = vsel %vm952, %v8533, %v8537
        %v8539 = vshrl.u32 %v8184, 16
        %v8541 = vrot.slane %v8539, 4
        %v8542 = vor.u32 %v8541, %v8537
        %v8543 = vrot.slane %v8542, 4
        %v8545 = vshll.u32 %v8185, 16
        %v8547 = vrot.slane %v8545, 5
        %v8548 = vsel %vm952, %v8543, %v8547
        %v8550 = vshrl.u32 %v8186, 16
        %v8552 = vrot.slane %v8550, 4
        %v8553 = vshll.u32 %v8186, 16
        %v8555 = vrot.slane %v8553, 5
        %v8556 = vor.u32 %v8552, %v8555
        %v8557 = vrot.slane %v8556, 4
        %v8559 = vshll.u32 %v8187, 16
        %v8561 = vrot.slane %v8559, 5
        %v8562 = vsel %vm952, %v8557, %v8561
        %v8563 = vshrl.u32 %v8187, 16
        %v8565 = vrot.slane %v8563, 4
        %v8566 = vor.u32 %v8565, %v8561
        %v8567 = vrot.slane %v8566, 4
        %v8569 = vshll.u32 %v8188, 16
        %v8571 = vrot.slane %v8569, 5
        %v8572 = vsel %vm952, %v8567, %v8571
        %s8573 = scalar_lea.vmem %s1, 30
        %v8574 = vld [vmem:[%s8573] sm:$0x3]
        %v8575 = vunpack.c.l.b16 %v8202
        %v8576 = vunpack.c.l.b16 %v8212
        %v8577 = vunpack.c.l.b16 %v8226
        %v8578 = vunpack.c.l.b16 %v8236
        %v8579 = vunpack.c.l.b16 %v8250
        %v8580 = vunpack.c.l.b16 %v8260
        %v8581 = vunpack.c.l.b16 %v8274
        %v8582 = vunpack.c.l.b16 %v8284
        %v8583 = vunpack.c.l.b16 %v8298
        %v8584 = vunpack.c.l.b16 %v8308
        %v8585 = vunpack.c.l.b16 %v8322
        %v8586 = vunpack.c.l.b16 %v8332
        %v8587 = vunpack.c.l.b16 %v8346
        %v8588 = vunpack.c.l.b16 %v8356
        %v8589 = vunpack.c.l.b16 %v8370
        %v8590 = vunpack.c.l.b16 %v8380
        %v8591 = vunpack.c.l.b16 %v8394
        %v8592 = vunpack.c.l.b16 %v8404
        %v8593 = vunpack.c.l.b16 %v8418
        %v8594 = vunpack.c.l.b16 %v8428
        %v8595 = vunpack.c.l.b16 %v8442
        %v8596 = vunpack.c.l.b16 %v8452
        %v8597 = vunpack.c.l.b16 %v8466
        %v8598 = vunpack.c.l.b16 %v8476
        %v8599 = vunpack.c.l.b16 %v8490
        %v8600 = vunpack.c.l.b16 %v8500
        %v8601 = vunpack.c.l.b16 %v8514
        %v8602 = vunpack.c.l.b16 %v8524
        %v8603 = vunpack.c.l.b16 %v8538
        %v8604 = vunpack.c.l.b16 %v8548
        %v8605 = vunpack.c.l.b16 %v8562
        %v8606 = vunpack.c.l.b16 %v8572
        %v8607 = vpack.c.b16 %v8576, %v8575
        %v8608 = vpack.c.b16 %v8578, %v8577
        %v8609 = vpack.c.b16 %v8580, %v8579
        %v8610 = vpack.c.b16 %v8582, %v8581
        %v8611 = vpack.c.b16 %v8584, %v8583
        %v8612 = vpack.c.b16 %v8586, %v8585
        %v8613 = vpack.c.b16 %v8588, %v8587
        %v8614 = vpack.c.b16 %v8590, %v8589
        %v8615 = vpack.c.b16 %v8592, %v8591
        %v8616 = vpack.c.b16 %v8594, %v8593
        %v8617 = vpack.c.b16 %v8596, %v8595
        %v8618 = vpack.c.b16 %v8598, %v8597
        %v8619 = vpack.c.b16 %v8600, %v8599
        %v8620 = vpack.c.b16 %v8602, %v8601
        %v8621 = vpack.c.b16 %v8604, %v8603
        %v8622 = vpack.c.b16 %v8606, %v8605
        %v8624 = vsel %vm396, %v8607, 0
        %v8627 = vsel %vm396, %v8608, 0
        %v8630 = vsel %vm396, %v8609, 0
        %v8633 = vsel %vm396, %v8610, 0
        %v8636 = vsel %vm396, %v8611, 0
        %v8639 = vsel %vm396, %v8612, 0
        %v8642 = vsel %vm396, %v8613, 0
        %v8645 = vsel %vm396, %v8614, 0
        %v8648 = vsel %vm396, %v8615, 0
        %v8651 = vsel %vm396, %v8616, 0
        %v8654 = vsel %vm396, %v8617, 0
        %v8657 = vsel %vm396, %v8618, 0
        %v8660 = vsel %vm396, %v8619, 0
        %v8663 = vsel %vm396, %v8620, 0
        %v8666 = vsel %vm396, %v8621, 0
        %v8669 = vsel %vm396, %v8622, 0
        %v8672 = vsel %vm445, %v8574, 0
        %8674 = vmatprep.subr.bf16.mxu0 0
        %8675 = vmatpush1.bf16.msra.mxu0 0
        %8676 = vmatprep.subr.bf16.mxu0 0
        %8677 = vmatpush1.bf16.msra.mxu0 0
        %8678 = vmatprep.subr.bf16.mxu0 0
        %8679 = vmatpush1.bf16.msra.mxu0 0
        %8680 = vmatprep.subr.bf16.mxu0 0
        %8681 = vmatpush1.bf16.msra.mxu0 0
        %8682 = vmatprep.subr.bf16.mxu0 0
        %8683 = vmatpush1.bf16.msra.mxu0 0
        %8684 = vmatprep.subr.bf16.mxu0 0
        %8685 = vmatpush1.bf16.msra.mxu0 0
        %8686 = vmatprep.subr.bf16.mxu0 0
        %8687 = vmatpush1.bf16.msra.mxu0 0
        %8688 = vmatprep.subr.bf16.mxu0 0
        %8689 = vmatpush1.bf16.msra.mxu0 %v8672
        %8690 = vmatprep.subr.bf16.mxu0 0
        %8691 = vmatpush2.bf16.msra.mxu0 0
        %8692 = vmatprep.subr.bf16.mxu0 0
        %8693 = vmatpush2.bf16.msra.mxu0 0
        %8694 = vmatprep.subr.bf16.mxu0 0
        %8695 = vmatpush2.bf16.msra.mxu0 0
        %8696 = vmatprep.subr.bf16.mxu0 0
        %8697 = vmatpush2.bf16.msra.mxu0 0
        %8698 = vmatprep.subr.bf16.mxu0 0
        %8699 = vmatpush2.bf16.msra.mxu0 0
        %8700 = vmatprep.subr.bf16.mxu0 0
        %8701 = vmatpush2.bf16.msra.mxu0 0
        %8702 = vmatprep.subr.bf16.mxu0 0
        %8703 = vmatpush2.bf16.msra.mxu0 0
        %8704 = vmatprep.subr.bf16.mxu0 0
        %8705 = vmatpush2.bf16.msra.mxu0 0
        %8706 = vmatprep.mubr.bf16.mxu0 0
        %8707 = vmatmul.mubr.bf16.gmra.mxu0 %v8624
        %v8708 = vpop.f32.mrf.mxu0
        %v8709 = vadd.f32 0.0, %v8708
        %v8710 = vpop.f32.mrf.mxu0
        %v8711 = vpop.f32.mrf.mxu0
        %v8712 = vadd.f32 0.0, %v8711
        %v8713 = vpop.f32.mrf.mxu0
        %8714 = vmatprep.mubr.bf16.mxu0 0
        %8715 = vmatmul.mubr.bf16.gmra.mxu0 %v8627
        %v8716 = vpop.f32.mrf.mxu0
        %v8717 = vadd.f32 0.0, %v8716
        %v8718 = vpop.f32.mrf.mxu0
        %v8719 = vpop.f32.mrf.mxu0
        %v8720 = vadd.f32 0.0, %v8719
        %v8721 = vpop.f32.mrf.mxu0
        %8722 = vmatprep.mubr.bf16.mxu0 0
        %8723 = vmatmul.mubr.bf16.gmra.mxu0 %v8630
        %v8724 = vpop.f32.mrf.mxu0
        %v8725 = vadd.f32 0.0, %v8724
        %v8726 = vpop.f32.mrf.mxu0
        %v8727 = vpop.f32.mrf.mxu0
        %v8728 = vadd.f32 0.0, %v8727
        %v8729 = vpop.f32.mrf.mxu0
        %8730 = vmatprep.mubr.bf16.mxu0 0
        %8731 = vmatmul.mubr.bf16.gmra.mxu0 %v8633
        %v8732 = vpop.f32.mrf.mxu0
        %v8733 = vadd.f32 0.0, %v8732
        %v8734 = vpop.f32.mrf.mxu0
        %v8735 = vpop.f32.mrf.mxu0
        %v8736 = vadd.f32 0.0, %v8735
        %v8737 = vpop.f32.mrf.mxu0
        %8738 = vmatprep.mubr.bf16.mxu0 0
        %8739 = vmatmul.mubr.bf16.gmra.mxu0 %v8636
        %v8740 = vpop.f32.mrf.mxu0
        %v8741 = vadd.f32 0.0, %v8740
        %v8742 = vpop.f32.mrf.mxu0
        %v8743 = vpop.f32.mrf.mxu0
        %v8744 = vadd.f32 0.0, %v8743
        %v8745 = vpop.f32.mrf.mxu0
        %8746 = vmatprep.mubr.bf16.mxu0 0
        %8747 = vmatmul.mubr.bf16.gmra.mxu0 %v8639
        %v8748 = vpop.f32.mrf.mxu0
        %v8749 = vadd.f32 0.0, %v8748
        %v8750 = vpop.f32.mrf.mxu0
        %v8751 = vpop.f32.mrf.mxu0
        %v8752 = vadd.f32 0.0, %v8751
        %v8753 = vpop.f32.mrf.mxu0
        %8754 = vmatprep.mubr.bf16.mxu0 0
        %8755 = vmatmul.mubr.bf16.gmra.mxu0 %v8642
        %v8756 = vpop.f32.mrf.mxu0
        %v8757 = vadd.f32 0.0, %v8756
        %v8758 = vpop.f32.mrf.mxu0
        %v8759 = vpop.f32.mrf.mxu0
        %v8760 = vadd.f32 0.0, %v8759
        %v8761 = vpop.f32.mrf.mxu0
        %8762 = vmatprep.mubr.bf16.mxu0 0
        %8763 = vmatmul.mubr.bf16.gmra.mxu0 %v8645
        %v8764 = vpop.f32.mrf.mxu0
        %v8765 = vadd.f32 0.0, %v8764
        %v8766 = vpop.f32.mrf.mxu0
        %v8767 = vpop.f32.mrf.mxu0
        %v8768 = vadd.f32 0.0, %v8767
        %v8769 = vpop.f32.mrf.mxu0
        %8770 = vmatprep.mubr.bf16.mxu0 0
        %8771 = vmatmul.mubr.bf16.gmra.mxu0 %v8648
        %v8772 = vpop.f32.mrf.mxu0
        %v8773 = vadd.f32 0.0, %v8772
        %v8774 = vpop.f32.mrf.mxu0
        %v8775 = vpop.f32.mrf.mxu0
        %v8776 = vadd.f32 0.0, %v8775
        %v8777 = vpop.f32.mrf.mxu0
        %8778 = vmatprep.mubr.bf16.mxu0 0
        %8779 = vmatmul.mubr.bf16.gmra.mxu0 %v8651
        %v8780 = vpop.f32.mrf.mxu0
        %v8781 = vadd.f32 0.0, %v8780
        %v8782 = vpop.f32.mrf.mxu0
        %v8783 = vpop.f32.mrf.mxu0
        %v8784 = vadd.f32 0.0, %v8783
        %v8785 = vpop.f32.mrf.mxu0
        %8786 = vmatprep.mubr.bf16.mxu0 0
        %8787 = vmatmul.mubr.bf16.gmra.mxu0 %v8654
        %v8788 = vpop.f32.mrf.mxu0
        %v8789 = vadd.f32 0.0, %v8788
        %v8790 = vpop.f32.mrf.mxu0
        %v8791 = vpop.f32.mrf.mxu0
        %v8792 = vadd.f32 0.0, %v8791
        %v8793 = vpop.f32.mrf.mxu0
        %8794 = vmatprep.mubr.bf16.mxu0 0
        %8795 = vmatmul.mubr.bf16.gmra.mxu0 %v8657
        %v8796 = vpop.f32.mrf.mxu0
        %v8797 = vadd.f32 0.0, %v8796
        %v8798 = vpop.f32.mrf.mxu0
        %v8799 = vpop.f32.mrf.mxu0
        %v8800 = vadd.f32 0.0, %v8799
        %v8801 = vpop.f32.mrf.mxu0
        %8802 = vmatprep.mubr.bf16.mxu0 0
        %8803 = vmatmul.mubr.bf16.gmra.mxu0 %v8660
        %v8804 = vpop.f32.mrf.mxu0
        %v8805 = vadd.f32 0.0, %v8804
        %v8806 = vpop.f32.mrf.mxu0
        %v8807 = vpop.f32.mrf.mxu0
        %v8808 = vadd.f32 0.0, %v8807
        %v8809 = vpop.f32.mrf.mxu0
        %8810 = vmatprep.mubr.bf16.mxu0 0
        %8811 = vmatmul.mubr.bf16.gmra.mxu0 %v8663
        %v8812 = vpop.f32.mrf.mxu0
        %v8813 = vadd.f32 0.0, %v8812
        %v8814 = vpop.f32.mrf.mxu0
        %v8815 = vpop.f32.mrf.mxu0
        %v8816 = vadd.f32 0.0, %v8815
        %v8817 = vpop.f32.mrf.mxu0
        %8818 = vmatprep.mubr.bf16.mxu0 0
        %8819 = vmatmul.mubr.bf16.gmra.mxu0 %v8666
        %v8820 = vpop.f32.mrf.mxu0
        %v8821 = vadd.f32 0.0, %v8820
        %v8822 = vpop.f32.mrf.mxu0
        %v8823 = vpop.f32.mrf.mxu0
        %v8824 = vadd.f32 0.0, %v8823
        %v8825 = vpop.f32.mrf.mxu0
        %8826 = vmatprep.mubr.bf16.mxu0 0
        %8827 = vmatmul.mubr.bf16.gmra.mxu0 %v8669
        %v8828 = vpop.f32.mrf.mxu0
        %v8829 = vadd.f32 0.0, %v8828
        %v8830 = vpop.f32.mrf.mxu0
        %v8831 = vpop.f32.mrf.mxu0
        %v8832 = vadd.f32 0.0, %v8831
        %v8833 = vpop.f32.mrf.mxu0
        %8834 = vdwg.mxu0
        %v8835 = vadd.f32 %v8109, %v8709
        %v8836 = vadd.f32 %v8110, %v8712
        %v8837 = vadd.f32 %v8111, %v8717
        %v8838 = vadd.f32 %v8112, %v8720
        %v8839 = vadd.f32 %v8113, %v8725
        %v8840 = vadd.f32 %v8114, %v8728
        %v8841 = vadd.f32 %v8115, %v8733
        %v8842 = vadd.f32 %v8116, %v8736
        %v8843 = vadd.f32 %v8117, %v8741
        %v8844 = vadd.f32 %v8118, %v8744
        %v8845 = vadd.f32 %v8119, %v8749
        %v8846 = vadd.f32 %v8120, %v8752
        %v8847 = vadd.f32 %v8121, %v8757
        %v8848 = vadd.f32 %v8122, %v8760
        %v8849 = vadd.f32 %v8123, %v8765
        %v8850 = vadd.f32 %v8124, %v8768
        %v8851 = vadd.f32 %v8125, %v8773
        %v8852 = vadd.f32 %v8126, %v8776
        %v8853 = vadd.f32 %v8127, %v8781
        %v8854 = vadd.f32 %v8128, %v8784
        %v8855 = vadd.f32 %v8129, %v8789
        %v8856 = vadd.f32 %v8130, %v8792
        %v8857 = vadd.f32 %v8131, %v8797
        %v8858 = vadd.f32 %v8132, %v8800
        %v8859 = vadd.f32 %v8133, %v8805
        %v8860 = vadd.f32 %v8134, %v8808
        %v8861 = vadd.f32 %v8135, %v8813
        %v8862 = vadd.f32 %v8136, %v8816
        %v8863 = vadd.f32 %v8137, %v8821
        %v8864 = vadd.f32 %v8138, %v8824
        %v8865 = vadd.f32 %v8139, %v8829
        %v8866 = vadd.f32 %v8140, %v8832
        %v8867 = vpack.c.bf16 %v8836, %v8835
        %v8868 = vpack.c.bf16 %v8838, %v8837
        %v8869 = vpack.c.bf16 %v8840, %v8839
        %v8870 = vpack.c.bf16 %v8842, %v8841
        %v8871 = vpack.c.bf16 %v8844, %v8843
        %v8872 = vpack.c.bf16 %v8846, %v8845
        %v8873 = vpack.c.bf16 %v8848, %v8847
        %v8874 = vpack.c.bf16 %v8850, %v8849
        %v8875 = vpack.c.bf16 %v8852, %v8851
        %v8876 = vpack.c.bf16 %v8854, %v8853
        %v8877 = vpack.c.bf16 %v8856, %v8855
        %v8878 = vpack.c.bf16 %v8858, %v8857
        %v8879 = vpack.c.bf16 %v8860, %v8859
        %v8880 = vpack.c.bf16 %v8862, %v8861
        %v8881 = vpack.c.bf16 %v8864, %v8863
        %v8882 = vpack.c.bf16 %v8866, %v8865
        %v8899 = vunpack.c.l.b16 %v8867
        %v8900 = vunpack.c.h.b16 %v8867
        %v8901 = vunpack.c.l.b16 %v8868
        %v8902 = vunpack.c.h.b16 %v8868
        %v8903 = vunpack.c.l.b16 %v8869
        %v8904 = vunpack.c.h.b16 %v8869
        %v8905 = vunpack.c.l.b16 %v8870
        %v8906 = vunpack.c.h.b16 %v8870
        %v8907 = vunpack.c.l.b16 %v8871
        %v8908 = vunpack.c.h.b16 %v8871
        %v8909 = vunpack.c.l.b16 %v8872
        %v8910 = vunpack.c.h.b16 %v8872
        %v8911 = vunpack.c.l.b16 %v8873
        %v8912 = vunpack.c.h.b16 %v8873
        %v8913 = vunpack.c.l.b16 %v8874
        %v8914 = vunpack.c.h.b16 %v8874
        %v8915 = vunpack.c.l.b16 %v8875
        %v8916 = vunpack.c.h.b16 %v8875
        %v8917 = vunpack.c.l.b16 %v8876
        %v8918 = vunpack.c.h.b16 %v8876
        %v8919 = vunpack.c.l.b16 %v8877
        %v8920 = vunpack.c.h.b16 %v8877
        %v8921 = vunpack.c.l.b16 %v8878
        %v8922 = vunpack.c.h.b16 %v8878
        %v8923 = vunpack.c.l.b16 %v8879
        %v8924 = vunpack.c.h.b16 %v8879
        %v8925 = vunpack.c.l.b16 %v8880
        %v8926 = vunpack.c.h.b16 %v8880
        %v8927 = vunpack.c.l.b16 %v8881
        %v8928 = vunpack.c.h.b16 %v8881
        %v8929 = vunpack.c.l.b16 %v8882
        %v8930 = vunpack.c.h.b16 %v8882
        %v8931 = vpack.c.b16 %v8899, %v8899
        %v8932 = vpack.c.b16 %v8900, %v8900
        %v8933 = vpack.c.b16 %v8901, %v8901
        %v8934 = vpack.c.b16 %v8902, %v8902
        %v8935 = vpack.c.b16 %v8903, %v8903
        %v8936 = vpack.c.b16 %v8904, %v8904
        %v8937 = vpack.c.b16 %v8905, %v8905
        %v8938 = vpack.c.b16 %v8906, %v8906
        %v8939 = vpack.c.b16 %v8907, %v8907
        %v8940 = vpack.c.b16 %v8908, %v8908
        %v8941 = vpack.c.b16 %v8909, %v8909
        %v8942 = vpack.c.b16 %v8910, %v8910
        %v8943 = vpack.c.b16 %v8911, %v8911
        %v8944 = vpack.c.b16 %v8912, %v8912
        %v8945 = vpack.c.b16 %v8913, %v8913
        %v8946 = vpack.c.b16 %v8914, %v8914
        %v8947 = vpack.c.b16 %v8915, %v8915
        %v8948 = vpack.c.b16 %v8916, %v8916
        %v8949 = vpack.c.b16 %v8917, %v8917
        %v8950 = vpack.c.b16 %v8918, %v8918
        %v8951 = vpack.c.b16 %v8919, %v8919
        %v8952 = vpack.c.b16 %v8920, %v8920
        %v8953 = vpack.c.b16 %v8921, %v8921
        %v8954 = vpack.c.b16 %v8922, %v8922
        %v8955 = vpack.c.b16 %v8923, %v8923
        %v8956 = vpack.c.b16 %v8924, %v8924
        %v8957 = vpack.c.b16 %v8925, %v8925
        %v8958 = vpack.c.b16 %v8926, %v8926
        %v8959 = vpack.c.b16 %v8927, %v8927
        %v8960 = vpack.c.b16 %v8928, %v8928
        %v8961 = vpack.c.b16 %v8929, %v8929
        %v8962 = vpack.c.b16 %v8930, %v8930
        %vm8995 = vcmask 519168
        %8996 = vst.msk [vmem:[%s239] sm:$0xf] %vm8995, %v8931
        %8997 = vst.msk [vmem:[%s239 + $0x4] sm:$0xf] %vm8995, %v8932
        %8998 = vst.msk [vmem:[%s239 + $0x8] sm:$0xf] %vm8995, %v8933
        %8999 = vst.msk [vmem:[%s239 + $0xc] sm:$0xf] %vm8995, %v8934
        %9000 = vst.msk [vmem:[%s239 + $0x10] sm:$0xf] %vm8995, %v8935
        %9001 = vst.msk [vmem:[%s239 + $0x14] sm:$0xf] %vm8995, %v8936
        %9002 = vst.msk [vmem:[%s239 + $0x18] sm:$0xf] %vm8995, %v8937
        %9003 = vst.msk [vmem:[%s239 + $0x1c] sm:$0xf] %vm8995, %v8938
        %9004 = vst.msk [vmem:[%s239 + $0x20] sm:$0xf] %vm8995, %v8939
        %9005 = vst.msk [vmem:[%s239 + $0x24] sm:$0xf] %vm8995, %v8940
        %9006 = vst.msk [vmem:[%s239 + $0x28] sm:$0xf] %vm8995, %v8941
        %9007 = vst.msk [vmem:[%s239 + $0x2c] sm:$0xf] %vm8995, %v8942
        %9008 = vst.msk [vmem:[%s239 + $0x30] sm:$0xf] %vm8995, %v8943
        %9009 = vst.msk [vmem:[%s239 + $0x34] sm:$0xf] %vm8995, %v8944
        %9010 = vst.msk [vmem:[%s239 + $0x38] sm:$0xf] %vm8995, %v8945
        %9011 = vst.msk [vmem:[%s239 + $0x3c] sm:$0xf] %vm8995, %v8946
        %9012 = vst.msk [vmem:[%s239 + $0x40] sm:$0xf] %vm8995, %v8947
        %9013 = vst.msk [vmem:[%s239 + $0x44] sm:$0xf] %vm8995, %v8948
        %9014 = vst.msk [vmem:[%s239 + $0x48] sm:$0xf] %vm8995, %v8949
        %9015 = vst.msk [vmem:[%s239 + $0x4c] sm:$0xf] %vm8995, %v8950
        %9016 = vst.msk [vmem:[%s239 + $0x50] sm:$0xf] %vm8995, %v8951
        %9017 = vst.msk [vmem:[%s239 + $0x54] sm:$0xf] %vm8995, %v8952
        %9018 = vst.msk [vmem:[%s239 + $0x58] sm:$0xf] %vm8995, %v8953
        %9019 = vst.msk [vmem:[%s239 + $0x5c] sm:$0xf] %vm8995, %v8954
        %9020 = vst.msk [vmem:[%s239 + $0x60] sm:$0xf] %vm8995, %v8955
        %9021 = vst.msk [vmem:[%s239 + $0x64] sm:$0xf] %vm8995, %v8956
        %9022 = vst.msk [vmem:[%s239 + $0x68] sm:$0xf] %vm8995, %v8957
        %9023 = vst.msk [vmem:[%s239 + $0x6c] sm:$0xf] %vm8995, %v8958
        %9024 = vst.msk [vmem:[%s239 + $0x70] sm:$0xf] %vm8995, %v8959
        %9025 = vst.msk [vmem:[%s239 + $0x74] sm:$0xf] %vm8995, %v8960
        %9026 = vst.msk [vmem:[%s239 + $0x78] sm:$0xf] %vm8995, %v8961
        %9027 = vst.msk [vmem:[%s239 + $0x7c] sm:$0xf] %vm8995, %v8962
        %v9028 = vld [vmem:[%s220] sm:$0x1]
        %v9029 = vadd.f32 %v8835, %v8836
        %v9030 = vadd.f32 %v9029, %v8837
        %v9031 = vadd.f32 %v9030, %v8838
        %v9032 = vadd.f32 %v9031, %v8839
        %v9033 = vadd.f32 %v9032, %v8840
        %v9034 = vadd.f32 %v9033, %v8841
        %v9035 = vadd.f32 %v9034, %v8842
        %v9036 = vadd.f32 %v9035, %v8843
        %v9037 = vadd.f32 %v9036, %v8844
        %v9038 = vadd.f32 %v9037, %v8845
        %v9039 = vadd.f32 %v9038, %v8846
        %v9040 = vadd.f32 %v9039, %v8847
        %v9041 = vadd.f32 %v9040, %v8848
        %v9042 = vadd.f32 %v9041, %v8849
        %v9043 = vadd.f32 %v9042, %v8850
        %v9044 = vadd.f32 %v9043, %v8851
        %v9045 = vadd.f32 %v9044, %v8852
        %v9046 = vadd.f32 %v9045, %v8853
        %v9047 = vadd.f32 %v9046, %v8854
        %v9048 = vadd.f32 %v9047, %v8855
        %v9049 = vadd.f32 %v9048, %v8856
        %v9050 = vadd.f32 %v9049, %v8857
        %v9051 = vadd.f32 %v9050, %v8858
        %v9052 = vadd.f32 %v9051, %v8859
        %v9053 = vadd.f32 %v9052, %v8860
        %v9054 = vadd.f32 %v9053, %v8861
        %v9055 = vadd.f32 %v9054, %v8862
        %v9056 = vadd.f32 %v9055, %v8863
        %v9057 = vadd.f32 %v9056, %v8864
        %v9058 = vadd.f32 %v9057, %v8865
        %v9059 = vadd.f32 %v9058, %v8866
        %v9060 = vrot.slane %v9059, 4
        %v9061 = vadd.f32 %v9059, %v9060
        %v9062 = vrot.slane %v9061, 2
        %v9063 = vadd.f32 %v9061, %v9062
        %v9064 = vrot.slane %v9063, 1
        %v9065 = vadd.f32 %v9063, %v9064
        %v9066 = vadd.f32 %v9028, %v9065
        %9067 = vst [vmem:[%s220] sm:$0x1] %v9066
        %v9068 = vld [vmem:[%s226] sm:$0x1]
        %v9069 = vmul.f32 %v8835, %v8835
        %v9070 = vmul.f32 %v8836, %v8836
        %v9071 = vmul.f32 %v8837, %v8837
        %v9072 = vmul.f32 %v8838, %v8838
        %v9073 = vmul.f32 %v8839, %v8839
        %v9074 = vmul.f32 %v8840, %v8840
        %v9075 = vmul.f32 %v8841, %v8841
        %v9076 = vmul.f32 %v8842, %v8842
        %v9077 = vmul.f32 %v8843, %v8843
        %v9078 = vmul.f32 %v8844, %v8844
        %v9079 = vmul.f32 %v8845, %v8845
        %v9080 = vmul.f32 %v8846, %v8846
        %v9081 = vmul.f32 %v8847, %v8847
        %v9082 = vmul.f32 %v8848, %v8848
        %v9083 = vmul.f32 %v8849, %v8849
        %v9084 = vmul.f32 %v8850, %v8850
        %v9085 = vmul.f32 %v8851, %v8851
        %v9086 = vmul.f32 %v8852, %v8852
        %v9087 = vmul.f32 %v8853, %v8853
        %v9088 = vmul.f32 %v8854, %v8854
        %v9089 = vmul.f32 %v8855, %v8855
        %v9090 = vmul.f32 %v8856, %v8856
        %v9091 = vmul.f32 %v8857, %v8857
        %v9092 = vmul.f32 %v8858, %v8858
        %v9093 = vmul.f32 %v8859, %v8859
        %v9094 = vmul.f32 %v8860, %v8860
        %v9095 = vmul.f32 %v8861, %v8861
        %v9096 = vmul.f32 %v8862, %v8862
        %v9097 = vmul.f32 %v8863, %v8863
        %v9098 = vmul.f32 %v8864, %v8864
        %v9099 = vmul.f32 %v8865, %v8865
        %v9100 = vmul.f32 %v8866, %v8866
        %v9101 = vadd.f32 %v9069, %v9070
        %v9102 = vadd.f32 %v9101, %v9071
        %v9103 = vadd.f32 %v9102, %v9072
        %v9104 = vadd.f32 %v9103, %v9073
        %v9105 = vadd.f32 %v9104, %v9074
        %v9106 = vadd.f32 %v9105, %v9075
        %v9107 = vadd.f32 %v9106, %v9076
        %v9108 = vadd.f32 %v9107, %v9077
        %v9109 = vadd.f32 %v9108, %v9078
        %v9110 = vadd.f32 %v9109, %v9079
        %v9111 = vadd.f32 %v9110, %v9080
        %v9112 = vadd.f32 %v9111, %v9081
        %v9113 = vadd.f32 %v9112, %v9082
        %v9114 = vadd.f32 %v9113, %v9083
        %v9115 = vadd.f32 %v9114, %v9084
        %v9116 = vadd.f32 %v9115, %v9085
        %v9117 = vadd.f32 %v9116, %v9086
        %v9118 = vadd.f32 %v9117, %v9087
        %v9119 = vadd.f32 %v9118, %v9088
        %v9120 = vadd.f32 %v9119, %v9089
        %v9121 = vadd.f32 %v9120, %v9090
        %v9122 = vadd.f32 %v9121, %v9091
        %v9123 = vadd.f32 %v9122, %v9092
        %v9124 = vadd.f32 %v9123, %v9093
        %v9125 = vadd.f32 %v9124, %v9094
        %v9126 = vadd.f32 %v9125, %v9095
        %v9127 = vadd.f32 %v9126, %v9096
        %v9128 = vadd.f32 %v9127, %v9097
        %v9129 = vadd.f32 %v9128, %v9098
        %v9130 = vadd.f32 %v9129, %v9099
        %v9131 = vadd.f32 %v9130, %v9100
        %v9132 = vrot.slane %v9131, 4
        %v9133 = vadd.f32 %v9131, %v9132
        %v9134 = vrot.slane %v9133, 2
        %v9135 = vadd.f32 %v9133, %v9134
        %v9136 = vrot.slane %v9135, 1
        %v9137 = vadd.f32 %v9135, %v9136
        %v9138 = vadd.f32 %v9068, %v9137
        %9139 = vst [vmem:[%s226] sm:$0x1] %v9138
        %s9140 = sadd.s32 %s26, %s27
        %p9141 = scmp.lt.s32.totalorder %s9140, 1
        %s9142 = scalar_select %p9141, %s9140, 1
        %s9143 = smul.addr %s9142, 32
        %s9144 = smul.addr %s9143, 4
        %s9145 = scalar_lea.vmem %s2, %s9144
        %s9146 = sand.u32 %s119, 1
        %s9147 = scalar_lea.sflag [#allocation3], %s9146
        %s9148 = sand.u32 %s119, 1
        %s9149 = scalar_lea.vmem [#allocation2], %s9148
        %s9150 = sand.u32 %s145, 1
        %s9151 = scalar_lea.sflag [#allocation5], %s9150
        %s9152 = sand.u32 %s145, 1
        %s9153 = scalar_lea.vmem [#allocation4], %s9152
        // Predicated region
        $region33: #{tpu_custom_call.1} parent=27 // pred_check
          %p9154 = pneg %p103
        $region34: #{tpu_custom_call.1} parent=27 // pred_check_branch
          %9156 = sbr.rel (%p9154) target = $region36
        $region35: #{tpu_custom_call.1} parent=27 // pred_region
          %s9157 = sadd.s32 %s26, %s27
        $region36: #{tpu_custom_call.1} parent=27 // pred_fallthru
          _
        // Predicated region
        $region37: #{tpu_custom_call.1} parent=27 // pred_check
          %p9158 = pneg %p129
        $region38: #{tpu_custom_call.1} parent=27 // pred_check_branch
          %9160 = sbr.rel (%p9158) target = $region40
        $region39: #{tpu_custom_call.1} parent=27 // pred_region
          %s9162 = ssub.s32 16, 16
          %9163 = vsyncadd %s9147, %s9162
          %s9164 = smul.addr %s26, 16
          %s9165 = scalar_lea.hbm %s3, %s9164
          %s9167 = sshll.u32 %s9149, 4
          %s9168 = int_to_ptr.vmem [resolvable:$true] %s9167
          %9170 = dma.vmem_to_hbm [thread:$0]  %s9168, 16, %s9165, %s9147
        $region40: #{tpu_custom_call.1} parent=27 // pred_fallthru
          _
        // Predicated region
        $region41: #{tpu_custom_call.1} parent=27 // pred_check
          %p9171 = pneg %p155
        $region42: #{tpu_custom_call.1} parent=27 // pred_check_branch
          %9173 = sbr.rel (%p9171) target = $region44
        $region43: #{tpu_custom_call.1} parent=27 // pred_region
          %s9175 = ssub.s32 16, 16
          %9176 = vsyncadd %s9151, %s9175
          %s9177 = smul.addr %s26, 16
          %s9178 = scalar_lea.hbm %s4, %s9177
          %s9180 = sshll.u32 %s9153, 4
          %s9181 = int_to_ptr.vmem [resolvable:$true] %s9180
          %9183 = dma.vmem_to_hbm [thread:$0]  %s9181, 16, %s9178, %s9151
        $region44: #{tpu_custom_call.1} parent=27 // pred_fallthru
          _
      $region28: #{tpu_custom_call.1} parent=5 // pred_fallthru
        _
      %p9184 = scmp.le.s32.totalorder 2, %s17
      // Predicated region
      $region45: #{tpu_custom_call.1} parent=5 // pred_check
        %p9185 = pneg %p9184
      $region46: #{tpu_custom_call.1} parent=5 // pred_check_branch
        %9187 = sbr.rel (%p9185) target = $region48
      $region47: #{tpu_custom_call.1} parent=5 // pred_region
        %s9188 = ssub.s32 %s17, 2
        // Predicated region
        $region49: #{tpu_custom_call.1} parent=47 // pred_check
          %p9189 = pneg %p109
        $region50: #{tpu_custom_call.1} parent=47 // pred_check_branch
          %9191 = sbr.rel (%p9189) target = $region52
        $region51: #{tpu_custom_call.1} parent=47 // pred_region
          %s9192 = sadd.s32 %s28, %s29
          %p9193 = scmp.lt.s32.totalorder %s9192, 1
          %s9194 = scalar_select %p9193, %s9192, 1
          %s9195 = smul.addr %s9194, 32
          %s9196 = smul.addr %s9195, 4
          %s9197 = scalar_lea.vmem %s2, %s9196
        $region52: #{tpu_custom_call.1} parent=47 // pred_fallthru
          _
        // Predicated region
        $region53: #{tpu_custom_call.1} parent=47 // pred_check
          %p9198 = pneg %p135
        $region54: #{tpu_custom_call.1} parent=47 // pred_check_branch
          %9200 = sbr.rel (%p9198) target = $region56
        $region55: #{tpu_custom_call.1} parent=47 // pred_region
          %s9201 = sand.u32 %s120, 1
          %s9202 = scalar_lea.sflag [#allocation3], %s9201
          %s9203 = sand.u32 %s120, 1
          %s9204 = scalar_lea.vmem [#allocation2], %s9203
          %9205 = dma.done %s9202, 16
        $region56: #{tpu_custom_call.1} parent=47 // pred_fallthru
          _
        // Predicated region
        $region57: #{tpu_custom_call.1} parent=47 // pred_check
          %p9206 = pneg %p161
        $region58: #{tpu_custom_call.1} parent=47 // pred_check_branch
          %9208 = sbr.rel (%p9206) target = $region60
        $region59: #{tpu_custom_call.1} parent=47 // pred_region
          %s9209 = sand.u32 %s146, 1
          %s9210 = scalar_lea.sflag [#allocation5], %s9209
          %s9211 = sand.u32 %s146, 1
          %s9212 = scalar_lea.vmem [#allocation4], %s9211
          %9213 = dma.done %s9210, 16
        $region60: #{tpu_custom_call.1} parent=47 // pred_fallthru
          _
      $region48: #{tpu_custom_call.1} parent=5 // pred_fallthru
        _
    $region6: #{tpu_custom_call.1} parent=1 // loop_footer
      %s21 = sadd.s32 1, %s17
    $region7: #{tpu_custom_call.1} parent=1 // loop_footer_branch
      %16 = sbr.rel target = $region3
    $region8: #{tpu_custom_call.1} parent=1 // loop_exit
      _
    %9214 = vsyncpa [#allocation3], 1
    %s9215 = scalar_lea.sflag [#allocation3], 1
    %9216 = vsyncpa %s9215, 1
    %9217 = vsyncpa [#allocation5], 1
    %s9218 = scalar_lea.sflag [#allocation5], 1
    %9219 = vsyncpa %s9218, 1

</llo_original>
